<compile_context>
chip_gen: v7x
topology: tpu7x:2x2x1
jax: 0.10.0
libtpu: 0.0.40
codegen_flags: <defaults>
</compile_context>

<pallas_src>
import functools

import jax
import jax.numpy as jnp
from jax.experimental import pallas as pl
from jax.experimental.pallas import tpu as pltpu


def _round_up(x, m):
    return ((x + m - 1) // m) * m


def _cdiv(a, b):
    return (a + b - 1) // b


def _tpu_params():
    """Return (mxu_depth, usable scoped-VMEM budget bytes) for the local TPU."""
    kind = ""
    try:
        kind = jax.devices()[0].device_kind.lower()
    except Exception:
        pass
    mxu = 256 if ("v6" in kind or "v7" in kind) else 128
    vmem_cap = None
    try:
        vmem_cap = int(pltpu.get_tpu_info().vmem_capacity_bytes)
    except Exception:
        vmem_cap = None
    if not vmem_cap:
        if "v7" in kind:
            vmem_cap = 64 << 20
        elif any(g in kind for g in ("v4", "v5", "v6")):
            vmem_cap = 128 << 20
        else:
            vmem_cap = 64 << 20
    if vmem_cap >= (128 << 20):
        usable = 100 << 20          # v5e / v6e: leave headroom below 128 MiB
    else:
        usable = min(56 << 20, (vmem_cap * 7) // 8)   # v7x-style 64 MiB parts
    return mxu, usable


def _vmem_need_bytes(toh, *, owp, wpk, cp, ocp, kp, kh, sh, esz):
    """Conservative per-step VMEM footprint estimate (counts lane padding)."""
    tih = (toh - 1) * sh + kh
    m = toh * owp
    in_b = tih * _round_up(wpk, 16) * _round_up(cp, 128) * esz  # lane-padded input block
    out_b = m * ocp * 4
    lhs_b = m * kp * esz
    w_b = kp * ocp * esz
    acc_b = m * ocp * 4
    return (2 * in_b + 2 * out_b + 3 * lhs_b + 2 * w_b + 2 * acc_b
            + 2 * ocp * 4 + (4 << 20))


def _tap_windows(x_ref, KH, KW, TOH, OWp, sh, sw):
    """List of KH*KW shifted (TOH, OWp, Cp) windows of the input block."""
    if sh == 1 and sw == 1:
        # Stride 1 (common case): read each window straight from the pipelined
        # VMEM block -- no whole-image value materialization.
        return [x_ref[kh:kh + TOH, kw:kw + OWp, :]
                for kh in range(KH) for kw in range(KW)]
    img = x_ref[...]
    return [img[kh:kh + (TOH - 1) * sh + 1:sh, kw:kw + (OWp - 1) * sw + 1:sw, :]
            for kh in range(KH) for kw in range(KW)]


def _conv_kernel_packed(x_ref, w_ref, shift_ref, o_ref, *,
                        KH, KW, TOH, OWp, sh, sw, Cp, Kp, leaky_slope):
    # x_ref: (TIH, WPk, Cp); w_ref: (Kp, OCp); shift_ref: (1, OCp); o_ref: (M, OCp)
    parts = _tap_windows(x_ref, KH, KW, TOH, OWp, sh, sw)
    K = KH * KW * Cp
    if Kp > K:
        parts = parts + [jnp.zeros((TOH, OWp, Kp - K), parts[0].dtype)]
    # In-VMEM im2col: one lane-dense lhs, one MXU matmul (f32 accumulation on-MXU).
    lhs = jnp.concatenate(parts, axis=-1).reshape(TOH * OWp, Kp)
    acc = jnp.dot(lhs, w_ref[...], preferred_element_type=jnp.float32)
    y = acc + shift_ref[...]                         # BN shift (scale folded into w)
    y = jnp.where(y >= 0.0, y, leaky_slope * y)      # LeakyReLU
    o_ref[...] = y.astype(o_ref.dtype)


def _conv_kernel_taps(x_ref, w_ref, shift_ref, o_ref, *,
                      KH, KW, TOH, OWp, sh, sw, Cp, Kp, leaky_slope):
    # Conservative fallback (previously validated): per-tap small-K matmuls.
    del Kp
    windows = _tap_windows(x_ref, KH, KW, TOH, OWp, sh, sw)
    M = TOH * OWp
    acc = jnp.zeros((M, o_ref.shape[-1]), jnp.float32)
    for t, win in enumerate(windows):
        acc = acc + jnp.dot(win.reshape(M, Cp), w_ref[t],
                            preferred_element_type=jnp.float32)
    y = acc + shift_ref[...]
    y = jnp.where(y >= 0.0, y, leaky_slope * y)
    o_ref[...] = y.astype(o_ref.dtype)


def conv2d_bn_leakyrelu(x, weight, gamma, beta, running_mean, running_var, *,
                        stride=1, leaky_slope=0.1, eps=1e-5,
                        compute_dtype=jnp.bfloat16,
                        input_is_nhwc=False, output_nhwc=False):
    """x: (N,C,H,W) (or NHWC); weight: (OC,C,KH,KW); returns f32 NCHW (or NHWC)."""
    if input_is_nhwc:
        N, H, W, C = x.shape
        x_nhwc = x
    else:
        N, C, H, W = x.shape
        x_nhwc = jnp.transpose(x, (0, 2, 3, 1))
    OC, Cw, KH, KW = weight.shape
    assert Cw == C, (Cw, C)
    if isinstance(stride, (tuple, list)):
        sh, sw = int(stride[0]), int(stride[1])
    else:
        sh = sw = int(stride)
    ph, pw = KH // 2, KW // 2                         # matches int(kernel_size / 2)
    OH = (H + 2 * ph - KH) // sh + 1
    OW = (W + 2 * pw - KW) // sw + 1

    mxu, usable_vmem = _tpu_params()
    esz = jnp.dtype(compute_dtype).itemsize

    Cp = _round_up(max(C, 8), 8)
    K = KH * KW * Cp
    Kp = _round_up(K, mxu)                            # fill the MXU contraction depth
    if mxu == 256 and OC > 128:
        OCp = _round_up(OC, 256)                      # fill the 256-wide MXU N dim
    else:
        OCp = _round_up(max(OC, 128), 128)            # lane-dense output stores
    OWp = _round_up(OW, 16)                           # tile-aligned (TOH,OWp,*)->(M,*) merge
    WPk = max(W + 2 * pw, (OWp - 1) * sw + KW)

    # ---- output-row tiling sized from the generation-aware VMEM budget ----
    need = functools.partial(_vmem_need_bytes, owp=OWp, wpk=WPk, cp=Cp, ocp=OCp,
                             kp=Kp, kh=KH, sh=sh, esz=esz)
    TOH = OH
    while TOH > 1 and need(TOH) > usable_vmem:
        TOH = (TOH + 1) // 2
    R = _cdiv(OH, TOH)
    TOH = _cdiv(OH, R)
    if N == 1 and R == 1 and OH > 1:                  # keep both v7x cores busy
        R = 2
        TOH = _cdiv(OH, R)
    OHp = R * TOH
    TIH = (TOH - 1) * sh + KH
    HPk = max(H + 2 * ph, (OHp - 1) * sh + KH)
    M = TOH * OWp

    # ---- input: channels-last, zero pad (spatial + channels), compute dtype ----
    xq = x_nhwc.astype(compute_dtype)
    xp = jnp.pad(xq, ((0, 0), (ph, HPk - H - ph), (pw, WPk - W - pw), (0, Cp - C)))
    if R == 1:
        x_tiles = xp[:, None, :TIH, :, :]             # (N, 1, TIH, WPk, Cp)
    else:
        row_idx = (jnp.arange(R, dtype=jnp.int32)[:, None] * (TOH * sh)
                   + jnp.arange(TIH, dtype=jnp.int32)[None, :])
        x_tiles = jnp.take(xp, row_idx, axis=1)       # (N, R, TIH, WPk, Cp) halo'd tiles

    # ---- BN (eval) fold: scale into the conv weight, shift as epilogue add ----
    scale = gamma / jnp.sqrt(running_var + eps)
    shift = beta - running_mean * scale
    wf = weight.astype(jnp.float32) * scale[:, None, None, None]      # (OC, C, KH, KW)
    wf = jnp.transpose(wf, (2, 3, 1, 0))                              # (KH, KW, C, OC)
    wf = jnp.pad(wf, ((0, 0), (0, 0), (0, Cp - C), (0, OCp - OC)))
    wf = wf.reshape(K, OCp)
    wf = jnp.pad(wf, ((0, Kp - K), (0, 0))).astype(compute_dtype)     # (Kp, OCp)
    w_taps = wf[:K].reshape(KH * KW, Cp, OCp)                         # fallback layout
    shift_p = jnp.pad(shift, (0, OCp - OC)).reshape(1, OCp).astype(jnp.float32)

    vmem_limit = int(min(usable_vmem, max(need(TOH), 32 << 20)))

    def _build(packed, single_buffer_resident):
        kern = functools.partial(
            _conv_kernel_packed if packed else _conv_kernel_taps,
            KH=KH, KW=KW, TOH=TOH, OWp=OWp, sh=sh, sw=sw, Cp=Cp, Kp=Kp,
            leaky_slope=float(leaky_slope))
        res_kw = {"pipeline_mode": pl.Buffered(1)} if single_buffer_resident else {}
        if packed:
            w_spec = pl.BlockSpec((Kp, OCp), lambda n, r: (0, 0), **res_kw)
        else:
            w_spec = pl.BlockSpec((KH * KW, Cp, OCp), lambda n, r: (0, 0, 0), **res_kw)
        in_specs = [
            pl.BlockSpec((None, None, TIH, WPk, Cp), lambda n, r: (n, r, 0, 0, 0)),
            w_spec,                                                    # resident weight
            pl.BlockSpec((1, OCp), lambda n, r: (0, 0), **res_kw),     # resident shift
        ]
        out_spec = pl.BlockSpec((None, None, M, OCp), lambda n, r: (n, r, 0, 0))
        return pl.pallas_call(
            kern,
            out_shape=jax.ShapeDtypeStruct((N, R, M, OCp), jnp.float32),
            grid_spec=pltpu.PrefetchScalarGridSpec(
                num_scalar_prefetch=0, grid=(N, R),
                in_specs=in_specs, out_specs=out_spec),
            compiler_params=pltpu.CompilerParams(
                dimension_semantics=("parallel", "parallel"),
                vmem_limit_bytes=vmem_limit),
        )

    out = None
    last_err = None
    # Most aggressive first; fall back if a feature is unsupported in this build.
    for packed, single_buf in ((True, True), (True, False), (False, False)):
        try:
            out = _build(packed, single_buf)(x_tiles, wf if packed else w_taps, shift_p)
            break
        except Exception as e:                        # noqa: BLE001 - deliberate fallback
            last_err = e
    if out is None:
        raise last_err

    out = out.reshape(N, R * TOH, OWp, OCp)[:, :OH, :OW, :OC]
    if not output_nhwc:
        out = jnp.transpose(out, (0, 3, 1, 2))        # NCHW to match the module
    return out


# ---------------------------- references (test only) ----------------------------

def _fold_bn(gamma, beta, mean, var, eps):
    scale = gamma / jnp.sqrt(var + eps)
    return scale, beta - mean * scale


def _reference_f32(x, weight, gamma, beta, mean, var, *, stride, leaky_slope, eps=1e-5):
    sh, sw = (stride, stride) if isinstance(stride, int) else stride
    KH, KW = weight.shape[2], weight.shape[3]
    y = jax.lax.conv_general_dilated(
        x, weight, window_strides=(sh, sw),
        padding=[(KH // 2, KH // 2), (KW // 2, KW // 2)],
        dimension_numbers=("NCHW", "OIHW", "NCHW"),
        precision=jax.lax.Precision.HIGHEST)
    scale, shift = _fold_bn(gamma, beta, mean, var, eps)
    y = y * scale[None, :, None, None] + shift[None, :, None, None]
    return jnp.where(y >= 0, y, leaky_slope * y)


def _reference_bf16(x, weight, gamma, beta, mean, var, *, stride, leaky_slope, eps=1e-5):
    # Mirrors the kernel's operand rounding: BN scale folded into the weight in f32,
    # both operands rounded to bf16, f32 accumulation.
    sh, sw = (stride, stride) if isinstance(stride, int) else stride
    KH, KW = weight.shape[2], weight.shape[3]
    scale, shift = _fold_bn(gamma, beta, mean, var, eps)
    wq = (weight * scale[:, None, None, None]).astype(jnp.bfloat16).astype(jnp.float32)
    xq = x.astype(jnp.bfloat16).astype(jnp.float32)
    y = jax.lax.conv_general_dilated(
        xq, wq, window_strides=(sh, sw),
        padding=[(KH // 2, KH // 2), (KW // 2, KW // 2)],
        dimension_numbers=("NCHW", "OIHW", "NCHW"),
        precision=jax.lax.Precision.HIGHEST)
    y = y + shift[None, :, None, None]
    return jnp.where(y >= 0, y, leaky_slope * y)


if __name__ == "__main__":
    key = jax.random.PRNGKey(0)

    def make_inputs(k, N, C, OC, H, W, KH, KW):
        k1, k2, k3, k4, k5, k6 = jax.random.split(k, 6)
        x = jax.random.normal(k1, (N, C, H, W), jnp.float32)
        w = 0.1 * jax.random.normal(k2, (OC, C, KH, KW), jnp.float32)
        gamma = 1.0 + 0.1 * jax.random.normal(k3, (OC,), jnp.float32)
        beta = 0.1 * jax.random.normal(k4, (OC,), jnp.float32)
        mean = 0.1 * jax.random.normal(k5, (OC,), jnp.float32)
        var = jnp.abs(jax.random.normal(k6, (OC,), jnp.float32)) + 0.5
        return x, w, gamma, beta, mean, var

    ka, kb = jax.random.split(key)

    # --- test 1: module-spec shapes (N=2, C=4, 16x16 -> OC=8, 3x3, stride 1) ---
    x, w, g, b, m, v = make_inputs(ka, N=2, C=4, OC=8, H=16, W=16, KH=3, KW=3)
    out = conv2d_bn_leakyrelu(x, w, g, b, m, v, stride=1, leaky_slope=0.1)
    out = jax.block_until_ready(out)
    assert out.shape == (2, 8, 16, 16), out.shape
    ref_bf = _reference_bf16(x, w, g, b, m, v, stride=1, leaky_slope=0.1)
    assert jnp.allclose(out, ref_bf, atol=2e-3, rtol=2e-3), \
        float(jnp.max(jnp.abs(out - ref_bf)))
    ref32 = _reference_f32(x, w, g, b, m, v, stride=1, leaky_slope=0.1)
    assert jnp.allclose(out, ref32, atol=5e-2, rtol=5e-2), \
        float(jnp.max(jnp.abs(out - ref32)))

    # --- test 2: N=1 (forces >=2 row tiles), odd C/OC, W not multiple of 16, NHWC I/O ---
    x, w, g, b, m, v = make_inputs(kb, N=1, C=3, OC=10, H=20, W=20, KH=3, KW=3)
    out_nhwc = conv2d_bn_leakyrelu(jnp.transpose(x, (0, 2, 3, 1)), w, g, b, m, v,
                                   stride=1, leaky_slope=0.1,
                                   input_is_nhwc=True, output_nhwc=True)
    out2 = jax.block_until_ready(jnp.transpose(out_nhwc, (0, 3, 1, 2)))
    assert out2.shape == (1, 10, 20, 20), out2.shape
    ref_bf = _reference_bf16(x, w, g, b, m, v, stride=1, leaky_slope=0.1)
    assert jnp.allclose(out2, ref_bf, atol=2e-3, rtol=2e-3), \
        float(jnp.max(jnp.abs(out2 - ref_bf)))

    # --- test 3: f32 operand path (closer to strict PyTorch f32 conv semantics) ---
    x, w, g, b, m, v = make_inputs(ka, N=2, C=4, OC=8, H=16, W=16, KH=3, KW=3)
    out3 = conv2d_bn_leakyrelu(x, w, g, b, m, v, stride=1, leaky_slope=0.1,
                               compute_dtype=jnp.float32)
    out3 = jax.block_until_ready(out3)
    ref32 = _reference_f32(x, w, g, b, m, v, stride=1, leaky_slope=0.1)
    assert jnp.allclose(out3, ref32, atol=2e-2, rtol=2e-2), \
        float(jnp.max(jnp.abs(out3 - ref32)))

    print("KERNEL_OK")
</pallas_src>

<mosaic_0001>
module attributes {stable_mosaic.version = 11 : i64} {
  func.func @_conv_kernel_packed(%arg0: i32, %arg1: i32, %arg2: memref<1x1x18x18x8xbf16, #tpu.memory_space<vmem>>, %arg3: memref<128x128xbf16, #tpu.memory_space<vmem>>, %arg4: memref<1x128xf32, #tpu.memory_space<vmem>>, %arg5: memref<1x1x256x128xf32, #tpu.memory_space<vmem>>) attributes {dimension_semantics = [#tpu.dimension_semantics<parallel>, #tpu.dimension_semantics<parallel>], iteration_bounds = array<i64: 2, 1>, scalar_prefetch = 0 : i64, scratch_operands = 0 : i64, tpu.core_type = #tpu.core_type<tc>, window_params = [{transform_indices = @transform_0, window_bounds = array<i64: 1, 1, 18, 18, 8>}, {pipeline_mode = #tpu.pipeline_mode<synchronous>, transform_indices = @transform_1, window_bounds = array<i64: 128, 128>}, {pipeline_mode = #tpu.pipeline_mode<synchronous>, transform_indices = @transform_2, window_bounds = array<i64: 1, 128>}, {transform_indices = @transform_3, window_bounds = array<i64: 1, 1, 256, 128>}]} {
    %c0 = arith.constant 0 : index
    %c0_0 = arith.constant 0 : index
    %c0_1 = arith.constant 0 : index
    %c0_2 = arith.constant 0 : index
    %c0_3 = arith.constant 0 : index
    %0 = vector.load %arg2[%c0, %c0_0, %c0_1, %c0_2, %c0_3] : memref<1x1x18x18x8xbf16, #tpu.memory_space<vmem>>, vector<1x1x16x16x8xbf16>
    %1 = vector.shape_cast %0 : vector<1x1x16x16x8xbf16> to vector<16x16x8xbf16>
    %c0_4 = arith.constant 0 : index
    %c0_5 = arith.constant 0 : index
    %c0_6 = arith.constant 0 : index
    %c1 = arith.constant 1 : index
    %c0_7 = arith.constant 0 : index
    %2 = vector.load %arg2[%c0_4, %c0_5, %c0_6, %c1, %c0_7] : memref<1x1x18x18x8xbf16, #tpu.memory_space<vmem>>, vector<1x1x16x16x8xbf16>
    %3 = vector.shape_cast %2 : vector<1x1x16x16x8xbf16> to vector<16x16x8xbf16>
    %c0_8 = arith.constant 0 : index
    %c0_9 = arith.constant 0 : index
    %c0_10 = arith.constant 0 : index
    %c2 = arith.constant 2 : index
    %c0_11 = arith.constant 0 : index
    %4 = vector.load %arg2[%c0_8, %c0_9, %c0_10, %c2, %c0_11] : memref<1x1x18x18x8xbf16, #tpu.memory_space<vmem>>, vector<1x1x16x16x8xbf16>
    %5 = vector.shape_cast %4 : vector<1x1x16x16x8xbf16> to vector<16x16x8xbf16>
    %c0_12 = arith.constant 0 : index
    %c0_13 = arith.constant 0 : index
    %c1_14 = arith.constant 1 : index
    %c0_15 = arith.constant 0 : index
    %c0_16 = arith.constant 0 : index
    %6 = vector.load %arg2[%c0_12, %c0_13, %c1_14, %c0_15, %c0_16] : memref<1x1x18x18x8xbf16, #tpu.memory_space<vmem>>, vector<1x1x16x16x8xbf16>
    %7 = vector.shape_cast %6 : vector<1x1x16x16x8xbf16> to vector<16x16x8xbf16>
    %c0_17 = arith.constant 0 : index
    %c0_18 = arith.constant 0 : index
    %c1_19 = arith.constant 1 : index
    %c1_20 = arith.constant 1 : index
    %c0_21 = arith.constant 0 : index
    %8 = vector.load %arg2[%c0_17, %c0_18, %c1_19, %c1_20, %c0_21] : memref<1x1x18x18x8xbf16, #tpu.memory_space<vmem>>, vector<1x1x16x16x8xbf16>
    %9 = vector.shape_cast %8 : vector<1x1x16x16x8xbf16> to vector<16x16x8xbf16>
    %c0_22 = arith.constant 0 : index
    %c0_23 = arith.constant 0 : index
    %c1_24 = arith.constant 1 : index
    %c2_25 = arith.constant 2 : index
    %c0_26 = arith.constant 0 : index
    %10 = vector.load %arg2[%c0_22, %c0_23, %c1_24, %c2_25, %c0_26] : memref<1x1x18x18x8xbf16, #tpu.memory_space<vmem>>, vector<1x1x16x16x8xbf16>
    %11 = vector.shape_cast %10 : vector<1x1x16x16x8xbf16> to vector<16x16x8xbf16>
    %c0_27 = arith.constant 0 : index
    %c0_28 = arith.constant 0 : index
    %c2_29 = arith.constant 2 : index
    %c0_30 = arith.constant 0 : index
    %c0_31 = arith.constant 0 : index
    %12 = vector.load %arg2[%c0_27, %c0_28, %c2_29, %c0_30, %c0_31] : memref<1x1x18x18x8xbf16, #tpu.memory_space<vmem>>, vector<1x1x16x16x8xbf16>
    %13 = vector.shape_cast %12 : vector<1x1x16x16x8xbf16> to vector<16x16x8xbf16>
    %c0_32 = arith.constant 0 : index
    %c0_33 = arith.constant 0 : index
    %c2_34 = arith.constant 2 : index
    %c1_35 = arith.constant 1 : index
    %c0_36 = arith.constant 0 : index
    %14 = vector.load %arg2[%c0_32, %c0_33, %c2_34, %c1_35, %c0_36] : memref<1x1x18x18x8xbf16, #tpu.memory_space<vmem>>, vector<1x1x16x16x8xbf16>
    %15 = vector.shape_cast %14 : vector<1x1x16x16x8xbf16> to vector<16x16x8xbf16>
    %c0_37 = arith.constant 0 : index
    %c0_38 = arith.constant 0 : index
    %c2_39 = arith.constant 2 : index
    %c2_40 = arith.constant 2 : index
    %c0_41 = arith.constant 0 : index
    %16 = vector.load %arg2[%c0_37, %c0_38, %c2_39, %c2_40, %c0_41] : memref<1x1x18x18x8xbf16, #tpu.memory_space<vmem>>, vector<1x1x16x16x8xbf16>
    %17 = vector.shape_cast %16 : vector<1x1x16x16x8xbf16> to vector<16x16x8xbf16>
    %cst = arith.constant 0.000000e+00 : bf16
    %18 = vector.broadcast %cst : bf16 to vector<16x16x56xbf16>
    %19 = tpu.concatenate %1, %3, %5, %7, %9, %11, %13, %15, %17, %18 in 2 : vector<16x16x8xbf16>, vector<16x16x8xbf16>, vector<16x16x8xbf16>, vector<16x16x8xbf16>, vector<16x16x8xbf16>, vector<16x16x8xbf16>, vector<16x16x8xbf16>, vector<16x16x8xbf16>, vector<16x16x8xbf16>, vector<16x16x56xbf16> -> vector<16x16x128xbf16>
    %20 = vector.shape_cast %19 : vector<16x16x128xbf16> to vector<256x128xbf16>
    %c0_42 = arith.constant 0 : index
    %c0_43 = arith.constant 0 : index
    %21 = vector.load %arg3[%c0_42, %c0_43] : memref<128x128xbf16, #tpu.memory_space<vmem>>, vector<128x128xbf16>
    %cst_44 = arith.constant dense<0.000000e+00> : vector<256x128xf32>
    %22 = tpu.matmul %20, %21, %cst_44 {dimension_numbers = #tpu.dot_dimension_numbers<[1], [0], [0], [1], [0, 0, 1, 1], [], []>} : vector<256x128xbf16>, vector<128x128xbf16>, vector<256x128xf32> -> vector<256x128xf32>
    %c0_45 = arith.constant 0 : index
    %c0_46 = arith.constant 0 : index
    %23 = vector.load %arg4[%c0_45, %c0_46] : memref<1x128xf32, #tpu.memory_space<vmem>>, vector<1x128xf32>
    %24 = vector.broadcast %23 : vector<1x128xf32> to vector<256x128xf32>
    %25 = arith.addf %22, %24 : vector<256x128xf32>
    %cst_47 = arith.constant 0.000000e+00 : f32
    %26 = vector.broadcast %cst_47 : f32 to vector<256x128xf32>
    %27 = arith.cmpf oge, %25, %26 : vector<256x128xf32>
    %cst_48 = arith.constant 1.000000e-01 : f32
    %28 = vector.broadcast %cst_48 : f32 to vector<256x128xf32>
    %29 = arith.mulf %28, %25 : vector<256x128xf32>
    %30 = arith.select %27, %25, %29 : vector<256x128xi1>, vector<256x128xf32>
    %c0_49 = arith.constant 0 : index
    %c0_50 = arith.constant 0 : index
    %c0_51 = arith.constant 0 : index
    %c0_52 = arith.constant 0 : index
    %31 = vector.load %arg5[%c0_49, %c0_50, %c0_51, %c0_52] : memref<1x1x256x128xf32, #tpu.memory_space<vmem>>, vector<1x1x256x128xf32>
    %32 = vector.shape_cast %31 : vector<1x1x256x128xf32> to vector<256x128xf32>
    %33 = vector.shape_cast %30 : vector<256x128xf32> to vector<1x1x256x128xf32>
    tpu.vector_store %arg5[%c0_49, %c0_50, %c0_51, %c0_52], %33 {strides = array<i32>} : memref<1x1x256x128xf32, #tpu.memory_space<vmem>>, vector<1x1x256x128xf32>,
    return
  }
  func.func @transform_0(%arg0: i32, %arg1: i32) -> (i32, i32, i32, i32, i32) {
    %c0_i32 = arith.constant 0 : i32
    %c0_i32_0 = arith.constant 0 : i32
    %c0_i32_1 = arith.constant 0 : i32
    %c0_i32_2 = arith.constant 0 : i32
    return %arg0, %arg1, %c0_i32, %c0_i32_0, %c0_i32_1 : i32, i32, i32, i32, i32
  }
  func.func @transform_1(%arg0: i32, %arg1: i32) -> (i32, i32) {
    %c0_i32 = arith.constant 0 : i32
    %c0_i32_0 = arith.constant 0 : i32
    %c0_i32_1 = arith.constant 0 : i32
    return %c0_i32, %c0_i32_0 : i32, i32
  }
  func.func @transform_2(%arg0: i32, %arg1: i32) -> (i32, i32) {
    %c0_i32 = arith.constant 0 : i32
    %c0_i32_0 = arith.constant 0 : i32
    %c0_i32_1 = arith.constant 0 : i32
    return %c0_i32, %c0_i32_0 : i32, i32
  }
  func.func @transform_3(%arg0: i32, %arg1: i32) -> (i32, i32, i32, i32) {
    %c0_i32 = arith.constant 0 : i32
    %c0_i32_0 = arith.constant 0 : i32
    %c0_i32_1 = arith.constant 0 : i32
    return %arg0, %arg1, %c0_i32, %c0_i32_0 : i32, i32, i32, i32
  }
}

module attributes {stable_mosaic.version = 11 : i64} {
  func.func @_conv_kernel_packed(%arg0: i32, %arg1: i32, %arg2: memref<1x1x18x18x8xbf16, #tpu.memory_space<vmem>>, %arg3: memref<128x128xbf16, #tpu.memory_space<vmem>>, %arg4: memref<1x128xf32, #tpu.memory_space<vmem>>, %arg5: memref<1x1x256x128xf32, #tpu.memory_space<vmem>>) attributes {dimension_semantics = [#tpu.dimension_semantics<parallel>, #tpu.dimension_semantics<parallel>], iteration_bounds = array<i64: 2, 1>, scalar_prefetch = 0 : i64, scratch_operands = 0 : i64, tpu.core_type = #tpu.core_type<tc>, window_params = [{transform_indices = @transform_0, window_bounds = array<i64: 1, 1, 18, 18, 8>}, {pipeline_mode = #tpu.pipeline_mode<synchronous>, transform_indices = @transform_1, window_bounds = array<i64: 128, 128>}, {pipeline_mode = #tpu.pipeline_mode<synchronous>, transform_indices = @transform_2, window_bounds = array<i64: 1, 128>}, {transform_indices = @transform_3, window_bounds = array<i64: 1, 1, 256, 128>}]} {
    %c0 = arith.constant 0 : index
    %c0_0 = arith.constant 0 : index
    %c0_1 = arith.constant 0 : index
    %c0_2 = arith.constant 0 : index
    %c0_3 = arith.constant 0 : index
    %0 = vector.load %arg2[%c0, %c0_0, %c0_1, %c0_2, %c0_3] : memref<1x1x18x18x8xbf16, #tpu.memory_space<vmem>>, vector<1x1x16x16x8xbf16>
    %1 = vector.shape_cast %0 : vector<1x1x16x16x8xbf16> to vector<16x16x8xbf16>
    %c0_4 = arith.constant 0 : index
    %c0_5 = arith.constant 0 : index
    %c0_6 = arith.constant 0 : index
    %c1 = arith.constant 1 : index
    %c0_7 = arith.constant 0 : index
    %2 = vector.load %arg2[%c0_4, %c0_5, %c0_6, %c1, %c0_7] : memref<1x1x18x18x8xbf16, #tpu.memory_space<vmem>>, vector<1x1x16x16x8xbf16>
    %3 = vector.shape_cast %2 : vector<1x1x16x16x8xbf16> to vector<16x16x8xbf16>
    %c0_8 = arith.constant 0 : index
    %c0_9 = arith.constant 0 : index
    %c0_10 = arith.constant 0 : index
    %c2 = arith.constant 2 : index
    %c0_11 = arith.constant 0 : index
    %4 = vector.load %arg2[%c0_8, %c0_9, %c0_10, %c2, %c0_11] : memref<1x1x18x18x8xbf16, #tpu.memory_space<vmem>>, vector<1x1x16x16x8xbf16>
    %5 = vector.shape_cast %4 : vector<1x1x16x16x8xbf16> to vector<16x16x8xbf16>
    %c0_12 = arith.constant 0 : index
    %c0_13 = arith.constant 0 : index
    %c1_14 = arith.constant 1 : index
    %c0_15 = arith.constant 0 : index
    %c0_16 = arith.constant 0 : index
    %6 = vector.load %arg2[%c0_12, %c0_13, %c1_14, %c0_15, %c0_16] : memref<1x1x18x18x8xbf16, #tpu.memory_space<vmem>>, vector<1x1x16x16x8xbf16>
    %7 = vector.shape_cast %6 : vector<1x1x16x16x8xbf16> to vector<16x16x8xbf16>
    %c0_17 = arith.constant 0 : index
    %c0_18 = arith.constant 0 : index
    %c1_19 = arith.constant 1 : index
    %c1_20 = arith.constant 1 : index
    %c0_21 = arith.constant 0 : index
    %8 = vector.load %arg2[%c0_17, %c0_18, %c1_19, %c1_20, %c0_21] : memref<1x1x18x18x8xbf16, #tpu.memory_space<vmem>>, vector<1x1x16x16x8xbf16>
    %9 = vector.shape_cast %8 : vector<1x1x16x16x8xbf16> to vector<16x16x8xbf16>
    %c0_22 = arith.constant 0 : index
    %c0_23 = arith.constant 0 : index
    %c1_24 = arith.constant 1 : index
    %c2_25 = arith.constant 2 : index
    %c0_26 = arith.constant 0 : index
    %10 = vector.load %arg2[%c0_22, %c0_23, %c1_24, %c2_25, %c0_26] : memref<1x1x18x18x8xbf16, #tpu.memory_space<vmem>>, vector<1x1x16x16x8xbf16>
    %11 = vector.shape_cast %10 : vector<1x1x16x16x8xbf16> to vector<16x16x8xbf16>
    %c0_27 = arith.constant 0 : index
    %c0_28 = arith.constant 0 : index
    %c2_29 = arith.constant 2 : index
    %c0_30 = arith.constant 0 : index
    %c0_31 = arith.constant 0 : index
    %12 = vector.load %arg2[%c0_27, %c0_28, %c2_29, %c0_30, %c0_31] : memref<1x1x18x18x8xbf16, #tpu.memory_space<vmem>>, vector<1x1x16x16x8xbf16>
    %13 = vector.shape_cast %12 : vector<1x1x16x16x8xbf16> to vector<16x16x8xbf16>
    %c0_32 = arith.constant 0 : index
    %c0_33 = arith.constant 0 : index
    %c2_34 = arith.constant 2 : index
    %c1_35 = arith.constant 1 : index
    %c0_36 = arith.constant 0 : index
    %14 = vector.load %arg2[%c0_32, %c0_33, %c2_34, %c1_35, %c0_36] : memref<1x1x18x18x8xbf16, #tpu.memory_space<vmem>>, vector<1x1x16x16x8xbf16>
    %15 = vector.shape_cast %14 : vector<1x1x16x16x8xbf16> to vector<16x16x8xbf16>
    %c0_37 = arith.constant 0 : index
    %c0_38 = arith.constant 0 : index
    %c2_39 = arith.constant 2 : index
    %c2_40 = arith.constant 2 : index
    %c0_41 = arith.constant 0 : index
    %16 = vector.load %arg2[%c0_37, %c0_38, %c2_39, %c2_40, %c0_41] : memref<1x1x18x18x8xbf16, #tpu.memory_space<vmem>>, vector<1x1x16x16x8xbf16>
    %17 = vector.shape_cast %16 : vector<1x1x16x16x8xbf16> to vector<16x16x8xbf16>
    %cst = arith.constant 0.000000e+00 : bf16
    %18 = vector.broadcast %cst : bf16 to vector<16x16x56xbf16>
    %19 = tpu.concatenate %1, %3, %5, %7, %9, %11, %13, %15, %17, %18 in 2 : vector<16x16x8xbf16>, vector<16x16x8xbf16>, vector<16x16x8xbf16>, vector<16x16x8xbf16>, vector<16x16x8xbf16>, vector<16x16x8xbf16>, vector<16x16x8xbf16>, vector<16x16x8xbf16>, vector<16x16x8xbf16>, vector<16x16x56xbf16> -> vector<16x16x128xbf16>
    %20 = vector.shape_cast %19 : vector<16x16x128xbf16> to vector<256x128xbf16>
    %c0_42 = arith.constant 0 : index
    %c0_43 = arith.constant 0 : index
    %21 = vector.load %arg3[%c0_42, %c0_43] : memref<128x128xbf16, #tpu.memory_space<vmem>>, vector<128x128xbf16>
    %cst_44 = arith.constant dense<0.000000e+00> : vector<256x128xf32>
    %22 = tpu.matmul %20, %21, %cst_44 {dimension_numbers = #tpu.dot_dimension_numbers<[1], [0], [0], [1], [0, 0, 1, 1], [], []>} : vector<256x128xbf16>, vector<128x128xbf16>, vector<256x128xf32> -> vector<256x128xf32>
    %c0_45 = arith.constant 0 : index
    %c0_46 = arith.constant 0 : index
    %23 = vector.load %arg4[%c0_45, %c0_46] : memref<1x128xf32, #tpu.memory_space<vmem>>, vector<1x128xf32>
    %24 = vector.broadcast %23 : vector<1x128xf32> to vector<256x128xf32>
    %25 = arith.addf %22, %24 : vector<256x128xf32>
    %cst_47 = arith.constant 0.000000e+00 : f32
    %26 = vector.broadcast %cst_47 : f32 to vector<256x128xf32>
    %27 = arith.cmpf oge, %25, %26 : vector<256x128xf32>
    %cst_48 = arith.constant 1.000000e-01 : f32
    %28 = vector.broadcast %cst_48 : f32 to vector<256x128xf32>
    %29 = arith.mulf %28, %25 : vector<256x128xf32>
    %30 = arith.select %27, %25, %29 : vector<256x128xi1>, vector<256x128xf32>
    %c0_49 = arith.constant 0 : index
    %c0_50 = arith.constant 0 : index
    %c0_51 = arith.constant 0 : index
    %c0_52 = arith.constant 0 : index
    %31 = vector.load %arg5[%c0_49, %c0_50, %c0_51, %c0_52] : memref<1x1x256x128xf32, #tpu.memory_space<vmem>>, vector<1x1x256x128xf32>
    %32 = vector.shape_cast %31 : vector<1x1x256x128xf32> to vector<256x128xf32>
    %33 = vector.shape_cast %30 : vector<256x128xf32> to vector<1x1x256x128xf32>
    tpu.vector_store %arg5[%c0_49, %c0_50, %c0_51, %c0_52], %33 {strides = array<i32>} : memref<1x1x256x128xf32, #tpu.memory_space<vmem>>, vector<1x1x256x128xf32>,
    return
  }
  func.func @transform_0(%arg0: i32, %arg1: i32) -> (i32, i32, i32, i32, i32) {
    %c0_i32 = arith.constant 0 : i32
    %c0_i32_0 = arith.constant 0 : i32
    %c0_i32_1 = arith.constant 0 : i32
    %c0_i32_2 = arith.constant 0 : i32
    return %arg0, %arg1, %c0_i32, %c0_i32_0, %c0_i32_1 : i32, i32, i32, i32, i32
  }
  func.func @transform_1(%arg0: i32, %arg1: i32) -> (i32, i32) {
    %c0_i32 = arith.constant 0 : i32
    %c0_i32_0 = arith.constant 0 : i32
    %c0_i32_1 = arith.constant 0 : i32
    return %c0_i32, %c0_i32_0 : i32, i32
  }
  func.func @transform_2(%arg0: i32, %arg1: i32) -> (i32, i32) {
    %c0_i32 = arith.constant 0 : i32
    %c0_i32_0 = arith.constant 0 : i32
    %c0_i32_1 = arith.constant 0 : i32
    return %c0_i32, %c0_i32_0 : i32, i32
  }
  func.func @transform_3(%arg0: i32, %arg1: i32) -> (i32, i32, i32, i32) {
    %c0_i32 = arith.constant 0 : i32
    %c0_i32_0 = arith.constant 0 : i32
    %c0_i32_1 = arith.constant 0 : i32
    return %arg0, %arg1, %c0_i32, %c0_i32_0 : i32, i32, i32, i32
  }
}

module attributes {stable_mosaic.version = 11 : i64} {
  func.func @_conv_kernel_taps(%arg0: i32, %arg1: i32, %arg2: memref<1x1x18x18x8xbf16, #tpu.memory_space<vmem>>, %arg3: memref<9x8x128xbf16, #tpu.memory_space<vmem>>, %arg4: memref<1x128xf32, #tpu.memory_space<vmem>>, %arg5: memref<1x1x256x128xf32, #tpu.memory_space<vmem>>) attributes {dimension_semantics = [#tpu.dimension_semantics<parallel>, #tpu.dimension_semantics<parallel>], iteration_bounds = array<i64: 2, 1>, scalar_prefetch = 0 : i64, scratch_operands = 0 : i64, tpu.core_type = #tpu.core_type<tc>, window_params = [{transform_indices = @transform_0, window_bounds = array<i64: 1, 1, 18, 18, 8>}, {pipeline_mode = #tpu.pipeline_mode<synchronous>, transform_indices = @transform_1, window_bounds = array<i64: 9, 8, 128>}, {pipeline_mode = #tpu.pipeline_mode<synchronous>, transform_indices = @transform_2, window_bounds = array<i64: 1, 128>}, {transform_indices = @transform_3, window_bounds = array<i64: 1, 1, 256, 128>}]} {
    %c0 = arith.constant 0 : index
    %c0_0 = arith.constant 0 : index
    %c0_1 = arith.constant 0 : index
    %c0_2 = arith.constant 0 : index
    %c0_3 = arith.constant 0 : index
    %0 = vector.load %arg2[%c0, %c0_0, %c0_1, %c0_2, %c0_3] : memref<1x1x18x18x8xbf16, #tpu.memory_space<vmem>>, vector<1x1x16x16x8xbf16>
    %1 = vector.shape_cast %0 : vector<1x1x16x16x8xbf16> to vector<16x16x8xbf16>
    %c0_4 = arith.constant 0 : index
    %c0_5 = arith.constant 0 : index
    %c0_6 = arith.constant 0 : index
    %c1 = arith.constant 1 : index
    %c0_7 = arith.constant 0 : index
    %2 = vector.load %arg2[%c0_4, %c0_5, %c0_6, %c1, %c0_7] : memref<1x1x18x18x8xbf16, #tpu.memory_space<vmem>>, vector<1x1x16x16x8xbf16>
    %3 = vector.shape_cast %2 : vector<1x1x16x16x8xbf16> to vector<16x16x8xbf16>
    %c0_8 = arith.constant 0 : index
    %c0_9 = arith.constant 0 : index
    %c0_10 = arith.constant 0 : index
    %c2 = arith.constant 2 : index
    %c0_11 = arith.constant 0 : index
    %4 = vector.load %arg2[%c0_8, %c0_9, %c0_10, %c2, %c0_11] : memref<1x1x18x18x8xbf16, #tpu.memory_space<vmem>>, vector<1x1x16x16x8xbf16>
    %5 = vector.shape_cast %4 : vector<1x1x16x16x8xbf16> to vector<16x16x8xbf16>
    %c0_12 = arith.constant 0 : index
    %c0_13 = arith.constant 0 : index
    %c1_14 = arith.constant 1 : index
    %c0_15 = arith.constant 0 : index
    %c0_16 = arith.constant 0 : index
    %6 = vector.load %arg2[%c0_12, %c0_13, %c1_14, %c0_15, %c0_16] : memref<1x1x18x18x8xbf16, #tpu.memory_space<vmem>>, vector<1x1x16x16x8xbf16>
    %7 = vector.shape_cast %6 : vector<1x1x16x16x8xbf16> to vector<16x16x8xbf16>
    %c0_17 = arith.constant 0 : index
    %c0_18 = arith.constant 0 : index
    %c1_19 = arith.constant 1 : index
    %c1_20 = arith.constant 1 : index
    %c0_21 = arith.constant 0 : index
    %8 = vector.load %arg2[%c0_17, %c0_18, %c1_19, %c1_20, %c0_21] : memref<1x1x18x18x8xbf16, #tpu.memory_space<vmem>>, vector<1x1x16x16x8xbf16>
    %9 = vector.shape_cast %8 : vector<1x1x16x16x8xbf16> to vector<16x16x8xbf16>
    %c0_22 = arith.constant 0 : index
    %c0_23 = arith.constant 0 : index
    %c1_24 = arith.constant 1 : index
    %c2_25 = arith.constant 2 : index
    %c0_26 = arith.constant 0 : index
    %10 = vector.load %arg2[%c0_22, %c0_23, %c1_24, %c2_25, %c0_26] : memref<1x1x18x18x8xbf16, #tpu.memory_space<vmem>>, vector<1x1x16x16x8xbf16>
    %11 = vector.shape_cast %10 : vector<1x1x16x16x8xbf16> to vector<16x16x8xbf16>
    %c0_27 = arith.constant 0 : index
    %c0_28 = arith.constant 0 : index
    %c2_29 = arith.constant 2 : index
    %c0_30 = arith.constant 0 : index
    %c0_31 = arith.constant 0 : index
    %12 = vector.load %arg2[%c0_27, %c0_28, %c2_29, %c0_30, %c0_31] : memref<1x1x18x18x8xbf16, #tpu.memory_space<vmem>>, vector<1x1x16x16x8xbf16>
    %13 = vector.shape_cast %12 : vector<1x1x16x16x8xbf16> to vector<16x16x8xbf16>
    %c0_32 = arith.constant 0 : index
    %c0_33 = arith.constant 0 : index
    %c2_34 = arith.constant 2 : index
    %c1_35 = arith.constant 1 : index
    %c0_36 = arith.constant 0 : index
    %14 = vector.load %arg2[%c0_32, %c0_33, %c2_34, %c1_35, %c0_36] : memref<1x1x18x18x8xbf16, #tpu.memory_space<vmem>>, vector<1x1x16x16x8xbf16>
    %15 = vector.shape_cast %14 : vector<1x1x16x16x8xbf16> to vector<16x16x8xbf16>
    %c0_37 = arith.constant 0 : index
    %c0_38 = arith.constant 0 : index
    %c2_39 = arith.constant 2 : index
    %c2_40 = arith.constant 2 : index
    %c0_41 = arith.constant 0 : index
    %16 = vector.load %arg2[%c0_37, %c0_38, %c2_39, %c2_40, %c0_41] : memref<1x1x18x18x8xbf16, #tpu.memory_space<vmem>>, vector<1x1x16x16x8xbf16>
    %17 = vector.shape_cast %16 : vector<1x1x16x16x8xbf16> to vector<16x16x8xbf16>
    %cst = arith.constant 0.000000e+00 : f32
    %18 = vector.broadcast %cst : f32 to vector<256x128xf32>
    %19 = vector.shape_cast %1 : vector<16x16x8xbf16> to vector<256x8xbf16>
    %c0_42 = arith.constant 0 : index
    %c0_43 = arith.constant 0 : index
    %c0_44 = arith.constant 0 : index
    %20 = vector.load %arg3[%c0_42, %c0_43, %c0_44] : memref<9x8x128xbf16, #tpu.memory_space<vmem>>, vector<1x8x128xbf16>
    %21 = vector.shape_cast %20 : vector<1x8x128xbf16> to vector<8x128xbf16>
    %cst_45 = arith.constant dense<0.000000e+00> : vector<256x128xf32>
    %22 = tpu.matmul %19, %21, %cst_45 {dimension_numbers = #tpu.dot_dimension_numbers<[1], [0], [0], [1], [0, 0, 1, 1], [], []>} : vector<256x8xbf16>, vector<8x128xbf16>, vector<256x128xf32> -> vector<256x128xf32>
    %23 = arith.addf %18, %22 : vector<256x128xf32>
    %24 = vector.shape_cast %3 : vector<16x16x8xbf16> to vector<256x8xbf16>
    %c1_46 = arith.constant 1 : index
    %c0_47 = arith.constant 0 : index
    %c0_48 = arith.constant 0 : index
    %25 = vector.load %arg3[%c1_46, %c0_47, %c0_48] : memref<9x8x128xbf16, #tpu.memory_space<vmem>>, vector<1x8x128xbf16>
    %26 = vector.shape_cast %25 : vector<1x8x128xbf16> to vector<8x128xbf16>
    %cst_49 = arith.constant dense<0.000000e+00> : vector<256x128xf32>
    %27 = tpu.matmul %24, %26, %cst_49 {dimension_numbers = #tpu.dot_dimension_numbers<[1], [0], [0], [1], [0, 0, 1, 1], [], []>} : vector<256x8xbf16>, vector<8x128xbf16>, vector<256x128xf32> -> vector<256x128xf32>
    %28 = arith.addf %23, %27 : vector<256x128xf32>
    %29 = vector.shape_cast %5 : vector<16x16x8xbf16> to vector<256x8xbf16>
    %c2_50 = arith.constant 2 : index
    %c0_51 = arith.constant 0 : index
    %c0_52 = arith.constant 0 : index
    %30 = vector.load %arg3[%c2_50, %c0_51, %c0_52] : memref<9x8x128xbf16, #tpu.memory_space<vmem>>, vector<1x8x128xbf16>
    %31 = vector.shape_cast %30 : vector<1x8x128xbf16> to vector<8x128xbf16>
    %cst_53 = arith.constant dense<0.000000e+00> : vector<256x128xf32>
    %32 = tpu.matmul %29, %31, %cst_53 {dimension_numbers = #tpu.dot_dimension_numbers<[1], [0], [0], [1], [0, 0, 1, 1], [], []>} : vector<256x8xbf16>, vector<8x128xbf16>, vector<256x128xf32> -> vector<256x128xf32>
    %33 = arith.addf %28, %32 : vector<256x128xf32>
    %34 = vector.shape_cast %7 : vector<16x16x8xbf16> to vector<256x8xbf16>
    %c3 = arith.constant 3 : index
    %c0_54 = arith.constant 0 : index
    %c0_55 = arith.constant 0 : index
    %35 = vector.load %arg3[%c3, %c0_54, %c0_55] : memref<9x8x128xbf16, #tpu.memory_space<vmem>>, vector<1x8x128xbf16>
    %36 = vector.shape_cast %35 : vector<1x8x128xbf16> to vector<8x128xbf16>
    %cst_56 = arith.constant dense<0.000000e+00> : vector<256x128xf32>
    %37 = tpu.matmul %34, %36, %cst_56 {dimension_numbers = #tpu.dot_dimension_numbers<[1], [0], [0], [1], [0, 0, 1, 1], [], []>} : vector<256x8xbf16>, vector<8x128xbf16>, vector<256x128xf32> -> vector<256x128xf32>
    %38 = arith.addf %33, %37 : vector<256x128xf32>
    %39 = vector.shape_cast %9 : vector<16x16x8xbf16> to vector<256x8xbf16>
    %c4 = arith.constant 4 : index
    %c0_57 = arith.constant 0 : index
    %c0_58 = arith.constant 0 : index
    %40 = vector.load %arg3[%c4, %c0_57, %c0_58] : memref<9x8x128xbf16, #tpu.memory_space<vmem>>, vector<1x8x128xbf16>
    %41 = vector.shape_cast %40 : vector<1x8x128xbf16> to vector<8x128xbf16>
    %cst_59 = arith.constant dense<0.000000e+00> : vector<256x128xf32>
    %42 = tpu.matmul %39, %41, %cst_59 {dimension_numbers = #tpu.dot_dimension_numbers<[1], [0], [0], [1], [0, 0, 1, 1], [], []>} : vector<256x8xbf16>, vector<8x128xbf16>, vector<256x128xf32> -> vector<256x128xf32>
    %43 = arith.addf %38, %42 : vector<256x128xf32>
    %44 = vector.shape_cast %11 : vector<16x16x8xbf16> to vector<256x8xbf16>
    %c5 = arith.constant 5 : index
    %c0_60 = arith.constant 0 : index
    %c0_61 = arith.constant 0 : index
    %45 = vector.load %arg3[%c5, %c0_60, %c0_61] : memref<9x8x128xbf16, #tpu.memory_space<vmem>>, vector<1x8x128xbf16>
    %46 = vector.shape_cast %45 : vector<1x8x128xbf16> to vector<8x128xbf16>
    %cst_62 = arith.constant dense<0.000000e+00> : vector<256x128xf32>
    %47 = tpu.matmul %44, %46, %cst_62 {dimension_numbers = #tpu.dot_dimension_numbers<[1], [0], [0], [1], [0, 0, 1, 1], [], []>} : vector<256x8xbf16>, vector<8x128xbf16>, vector<256x128xf32> -> vector<256x128xf32>
    %48 = arith.addf %43, %47 : vector<256x128xf32>
    %49 = vector.shape_cast %13 : vector<16x16x8xbf16> to vector<256x8xbf16>
    %c6 = arith.constant 6 : index
    %c0_63 = arith.constant 0 : index
    %c0_64 = arith.constant 0 : index
    %50 = vector.load %arg3[%c6, %c0_63, %c0_64] : memref<9x8x128xbf16, #tpu.memory_space<vmem>>, vector<1x8x128xbf16>
    %51 = vector.shape_cast %50 : vector<1x8x128xbf16> to vector<8x128xbf16>
    %cst_65 = arith.constant dense<0.000000e+00> : vector<256x128xf32>
    %52 = tpu.matmul %49, %51, %cst_65 {dimension_numbers = #tpu.dot_dimension_numbers<[1], [0], [0], [1], [0, 0, 1, 1], [], []>} : vector<256x8xbf16>, vector<8x128xbf16>, vector<256x128xf32> -> vector<256x128xf32>
    %53 = arith.addf %48, %52 : vector<256x128xf32>
    %54 = vector.shape_cast %15 : vector<16x16x8xbf16> to vector<256x8xbf16>
    %c7 = arith.constant 7 : index
    %c0_66 = arith.constant 0 : index
    %c0_67 = arith.constant 0 : index
    %55 = vector.load %arg3[%c7, %c0_66, %c0_67] : memref<9x8x128xbf16, #tpu.memory_space<vmem>>, vector<1x8x128xbf16>
    %56 = vector.shape_cast %55 : vector<1x8x128xbf16> to vector<8x128xbf16>
    %cst_68 = arith.constant dense<0.000000e+00> : vector<256x128xf32>
    %57 = tpu.matmul %54, %56, %cst_68 {dimension_numbers = #tpu.dot_dimension_numbers<[1], [0], [0], [1], [0, 0, 1, 1], [], []>} : vector<256x8xbf16>, vector<8x128xbf16>, vector<256x128xf32> -> vector<256x128xf32>
    %58 = arith.addf %53, %57 : vector<256x128xf32>
    %59 = vector.shape_cast %17 : vector<16x16x8xbf16> to vector<256x8xbf16>
    %c8 = arith.constant 8 : index
    %c0_69 = arith.constant 0 : index
    %c0_70 = arith.constant 0 : index
    %60 = vector.load %arg3[%c8, %c0_69, %c0_70] : memref<9x8x128xbf16, #tpu.memory_space<vmem>>, vector<1x8x128xbf16>
    %61 = vector.shape_cast %60 : vector<1x8x128xbf16> to vector<8x128xbf16>
    %cst_71 = arith.constant dense<0.000000e+00> : vector<256x128xf32>
    %62 = tpu.matmul %59, %61, %cst_71 {dimension_numbers = #tpu.dot_dimension_numbers<[1], [0], [0], [1], [0, 0, 1, 1], [], []>} : vector<256x8xbf16>, vector<8x128xbf16>, vector<256x128xf32> -> vector<256x128xf32>
    %63 = arith.addf %58, %62 : vector<256x128xf32>
    %c0_72 = arith.constant 0 : index
    %c0_73 = arith.constant 0 : index
    %64 = vector.load %arg4[%c0_72, %c0_73] : memref<1x128xf32, #tpu.memory_space<vmem>>, vector<1x128xf32>
    %65 = vector.broadcast %64 : vector<1x128xf32> to vector<256x128xf32>
    %66 = arith.addf %63, %65 : vector<256x128xf32>
    %cst_74 = arith.constant 0.000000e+00 : f32
    %67 = vector.broadcast %cst_74 : f32 to vector<256x128xf32>
    %68 = arith.cmpf oge, %66, %67 : vector<256x128xf32>
    %cst_75 = arith.constant 1.000000e-01 : f32
    %69 = vector.broadcast %cst_75 : f32 to vector<256x128xf32>
    %70 = arith.mulf %69, %66 : vector<256x128xf32>
    %71 = arith.select %68, %66, %70 : vector<256x128xi1>, vector<256x128xf32>
    %c0_76 = arith.constant 0 : index
    %c0_77 = arith.constant 0 : index
    %c0_78 = arith.constant 0 : index
    %c0_79 = arith.constant 0 : index
    %72 = vector.load %arg5[%c0_76, %c0_77, %c0_78, %c0_79] : memref<1x1x256x128xf32, #tpu.memory_space<vmem>>, vector<1x1x256x128xf32>
    %73 = vector.shape_cast %72 : vector<1x1x256x128xf32> to vector<256x128xf32>
    %74 = vector.shape_cast %71 : vector<256x128xf32> to vector<1x1x256x128xf32>
    tpu.vector_store %arg5[%c0_76, %c0_77, %c0_78, %c0_79], %74 {strides = array<i32>} : memref<1x1x256x128xf32, #tpu.memory_space<vmem>>, vector<1x1x256x128xf32>,
    return
  }
  func.func @transform_0(%arg0: i32, %arg1: i32) -> (i32, i32, i32, i32, i32) {
    %c0_i32 = arith.constant 0 : i32
    %c0_i32_0 = arith.constant 0 : i32
    %c0_i32_1 = arith.constant 0 : i32
    %c0_i32_2 = arith.constant 0 : i32
    return %arg0, %arg1, %c0_i32, %c0_i32_0, %c0_i32_1 : i32, i32, i32, i32, i32
  }
  func.func @transform_1(%arg0: i32, %arg1: i32) -> (i32, i32, i32) {
    %c0_i32 = arith.constant 0 : i32
    %c0_i32_0 = arith.constant 0 : i32
    %c0_i32_1 = arith.constant 0 : i32
    %c0_i32_2 = arith.constant 0 : i32
    return %c0_i32, %c0_i32_0, %c0_i32_1 : i32, i32, i32
  }
  func.func @transform_2(%arg0: i32, %arg1: i32) -> (i32, i32) {
    %c0_i32 = arith.constant 0 : i32
    %c0_i32_0 = arith.constant 0 : i32
    %c0_i32_1 = arith.constant 0 : i32
    return %c0_i32, %c0_i32_0 : i32, i32
  }
  func.func @transform_3(%arg0: i32, %arg1: i32) -> (i32, i32, i32, i32) {
    %c0_i32 = arith.constant 0 : i32
    %c0_i32_0 = arith.constant 0 : i32
    %c0_i32_1 = arith.constant 0 : i32
    return %arg0, %arg1, %c0_i32, %c0_i32_0 : i32, i32, i32, i32
  }
}

</mosaic_0001>

<llo_original>
// kernel: tpu_custom_call.1
$region0: #{tpu_custom_call.1}
  #allocation0 [shape = 'u32[]', space=smem, size = 0x4, offset = 0x4, fixed_abs, tag = 'smem constant byte address 0x4 - core index']
  #allocation1 [shape = 'u32[144,128]{1,0:T(1,128)}', space=vmem, size = 0x12000, scoped, tag = 'internal scratch']
  %s0 = inlined_call_operand.vmem [shape: bf16[2,1,18,18,8], index: 0, kind: input, shape index: {}]
  %s1 = inlined_call_operand.vmem [shape: bf16[128,128], index: 1, kind: input, shape index: {}]
  %s2 = inlined_call_operand.vmem [shape: f32[1,128], index: 2, kind: input, shape index: {}]
  %s3 = inlined_call_operand.hbm [shape: f32[2,1,256,128], index: 3, kind: output, shape index: {}]
  %s4 = sld [smem:[#allocation0]]
  $region45: #{tpu_custom_call.1} parent=0
    _
  %s6 = ssub.s32 1, %s4
  %s7 = scalar_select 0, %s6, %s4
  $region1: #{tpu_custom_call.1} parent=0
    #allocation2 [shape = 'u8[262144]{0}', space=vmem, size = 0x40000, scoped, tag = 'output window, operand 0']
    #allocation3 [shape = 's32[2]{0}', space=sflag, size = 0x8, scoped, tag = 'scoped memory for tpu_custom_call.1']
    %8 = vsyncpa [#allocation3], 0
    %s9 = scalar_lea.sflag [#allocation3], 1
    %10 = vsyncpa %s9, 0
    loop: start=0, step=1, limit=4
    $region2: #{tpu_custom_call.1} parent=1 // loop_pre_header
      _
    $region3: #{tpu_custom_call.1} parent=1 // loop_header
      %s12 = sphi 0, %s16
      %p13 = scmp.ge.s32.totalorder %s12, 4
      %s19 = sphi 0, %s31
      %s20 = sphi 0, %s27
      %s21 = sphi 0, %s19
      %s22 = sphi 0, %s20
      %s23 = sphi 0, %s21
      %s24 = sphi 0, %s22
      %s36 = sphi 0, %s38
      %s39 = sphi 0, %s36
      %s40 = sphi 0, %s39
      %s56 = sphi 0, %s40
      %s60 = sphi 0, %s60
      %s62 = sphi 0, %s60
      %s63 = sphi 0, %s62
      %s77 = sphi 0, %s63
      %s81 = sphi 0, %s81
      %s83 = sphi 0, %s81
      %s84 = sphi 0, %s83
      %s98 = sphi 0, %s84
      %s106 = sphi 0, %s108
      %s109 = sphi 0, %s106
      %s110 = sphi 0, %s109
      %s126 = sphi 0, %s110
    $region4: #{tpu_custom_call.1} parent=1 // loop_header_branch
      %15 = sbr.rel (%p13) target = $region8
    $region5: #{tpu_custom_call.1} parent=1 // loop_body
      %s17 = ssub.s32 %s12, 1
      %s18 = ssub.s32 %s12, 2
      %s25 = sadd.s32 1, %s20
      %p26 = scmp.ge.s32.totalorder %s25, 1
      %s27 = scalar_select %p26, 0, %s25
      %s28 = sadd.s32 1, %s19
      %s29 = scalar_select %p26, %s28, %s19
      %p30 = scmp.ge.s32.totalorder %s29, 2
      %s31 = scalar_select %p30, 0, %s29
      %s32 = ssub.s32 %s19, %s31
      %s33 = ssub.s32 %s20, %s27
      %s34 = sor.u32 %s32, %s33
      %p35 = scmp.eq.s32.totalorder %s34, 0
      %s37 = sadd.s32 %s36, 1
      %s38 = scalar_select %p35, %s36, %s37
      %p41 = pneg %p35
      %p42 = scmp.eq.s32.totalorder %s12, 1
      %p43 = por %p41, %p42
      %p44 = scmp.ne.s32.totalorder %s36, %s39
      %p45 = scmp.eq.s32.totalorder %s12, 0
      %p46 = por %p44, %p45
      %p47 = scmp.ne.s32.totalorder %s36, %s39
      %p48 = scmp.eq.s32.totalorder %s17, 1
      %p49 = por %p47, %p48
      %p50 = scmp.ne.s32.totalorder %s39, %s40
      %p51 = scmp.eq.s32.totalorder %s17, 0
      %p52 = por %p50, %p51
      %p53 = scmp.ne.s32.totalorder %s39, %s40
      %p54 = scmp.eq.s32.totalorder %s18, 1
      %p55 = por %p53, %p54
      %p57 = scmp.ne.s32.totalorder %s40, %s56
      %p58 = scmp.eq.s32.totalorder %s18, 0
      %p59 = por %p57, %p58
      %s61 = sadd.s32 %s60, 1
      %p64 = scmp.eq.s32.totalorder %s12, 1
      %p65 = scmp.ne.s32.totalorder %s60, %s62
      %p66 = scmp.eq.s32.totalorder %s12, 0
      %p67 = por %p65, %p66
      %p68 = scmp.ne.s32.totalorder %s60, %s62
      %p69 = scmp.eq.s32.totalorder %s17, 1
      %p70 = por %p68, %p69
      %p71 = scmp.ne.s32.totalorder %s62, %s63
      %p72 = scmp.eq.s32.totalorder %s17, 0
      %p73 = por %p71, %p72
      %p74 = scmp.ne.s32.totalorder %s62, %s63
      %p75 = scmp.eq.s32.totalorder %s18, 1
      %p76 = por %p74, %p75
      %p78 = scmp.ne.s32.totalorder %s63, %s77
      %p79 = scmp.eq.s32.totalorder %s18, 0
      %p80 = por %p78, %p79
      %s82 = sadd.s32 %s81, 1
      %p85 = scmp.eq.s32.totalorder %s12, 1
      %p86 = scmp.ne.s32.totalorder %s81, %s83
      %p87 = scmp.eq.s32.totalorder %s12, 0
      %p88 = por %p86, %p87
      %p89 = scmp.ne.s32.totalorder %s81, %s83
      %p90 = scmp.eq.s32.totalorder %s17, 1
      %p91 = por %p89, %p90
      %p92 = scmp.ne.s32.totalorder %s83, %s84
      %p93 = scmp.eq.s32.totalorder %s17, 0
      %p94 = por %p92, %p93
      %p95 = scmp.ne.s32.totalorder %s83, %s84
      %p96 = scmp.eq.s32.totalorder %s18, 1
      %p97 = por %p95, %p96
      %p99 = scmp.ne.s32.totalorder %s84, %s98
      %p100 = scmp.eq.s32.totalorder %s18, 0
      %p101 = por %p99, %p100
      %s102 = ssub.s32 %s19, %s31
      %s103 = ssub.s32 %s20, %s27
      %s104 = sor.u32 %s102, %s103
      %p105 = scmp.eq.s32.totalorder %s104, 0
      %s107 = sadd.s32 %s106, 1
      %s108 = scalar_select %p105, %s106, %s107
      %p111 = pneg %p105
      %p112 = scmp.eq.s32.totalorder %s12, 1
      %p113 = por %p111, %p112
      %p114 = scmp.ne.s32.totalorder %s106, %s109
      %p115 = scmp.eq.s32.totalorder %s12, 0
      %p116 = por %p114, %p115
      %p117 = scmp.ne.s32.totalorder %s106, %s109
      %p118 = scmp.eq.s32.totalorder %s17, 1
      %p119 = por %p117, %p118
      %p120 = scmp.ne.s32.totalorder %s109, %s110
      %p121 = scmp.eq.s32.totalorder %s17, 0
      %p122 = por %p120, %p121
      %p123 = scmp.ne.s32.totalorder %s109, %s110
      %p124 = scmp.eq.s32.totalorder %s18, 1
      %p125 = por %p123, %p124
      %p127 = scmp.ne.s32.totalorder %s110, %s126
      %p128 = scmp.eq.s32.totalorder %s18, 0
      %p129 = por %p127, %p128
      %p130 = scmp.le.s32.totalorder 1, %s12
      %p131 = scmp.lt.s32.totalorder %s12, 3
      %p132 = pnand %p130, %p131
      %p133 = pneg %p132
      // Predicated region
      $region9: #{tpu_custom_call.1} parent=5 // pred_check
        _
      $region10: #{tpu_custom_call.1} parent=5 // pred_check_branch
        %135 = sbr.rel (%p132) target = $region12
      $region11: #{tpu_custom_call.1} parent=5 // pred_region
        %s136 = ssub.s32 %s12, 1
        // Predicated region
        $region13: #{tpu_custom_call.1} parent=11 // pred_check
          %p137 = pneg %p73
        $region14: #{tpu_custom_call.1} parent=11 // pred_check_branch
          %139 = sbr.rel (%p137) target = $region16
        $region15: #{tpu_custom_call.1} parent=11 // pred_region
          _
        $region16: #{tpu_custom_call.1} parent=11 // pred_fallthru
          _
        // Predicated region
        $region17: #{tpu_custom_call.1} parent=11 // pred_check
          %p140 = pneg %p94
        $region18: #{tpu_custom_call.1} parent=11 // pred_check_branch
          %142 = sbr.rel (%p140) target = $region20
        $region19: #{tpu_custom_call.1} parent=11 // pred_region
          _
        $region20: #{tpu_custom_call.1} parent=11 // pred_fallthru
          _
      $region12: #{tpu_custom_call.1} parent=5 // pred_fallthru
        _
      %p143 = scmp.lt.s32.totalorder %s12, 2
      // Predicated region
      $region21: #{tpu_custom_call.1} parent=5 // pred_check
        %p144 = pneg %p143
      $region22: #{tpu_custom_call.1} parent=5 // pred_check_branch
        %146 = sbr.rel (%p144) target = $region24
      $region23: #{tpu_custom_call.1} parent=5 // pred_region
        // Predicated region
        $region25: #{tpu_custom_call.1} parent=23 // pred_check
          %p147 = pneg %p46
        $region26: #{tpu_custom_call.1} parent=23 // pred_check_branch
          %149 = sbr.rel (%p147) target = $region28
        $region27: #{tpu_custom_call.1} parent=23 // pred_region
          %p150 = scmp.lt.s32.totalorder %s19, 1
          %s151 = scalar_select %p150, %s19, 1
          %p152 = scmp.lt.s32.totalorder %s20, 0
          %s153 = scalar_select %p152, %s20, 0
          %s154 = smul.addr %s153, 54
          %s155 = smul.addr %s151, 54
          %s156 = sadd.s32 %s154, %s155
          %s157 = smul.addr %s156, 4
          %s158 = scalar_lea.vmem %s0, %s157
        $region28: #{tpu_custom_call.1} parent=23 // pred_fallthru
          _
      $region24: #{tpu_custom_call.1} parent=5 // pred_fallthru
        _
      %p159 = scmp.le.s32.totalorder 1, %s12
      %p160 = scmp.lt.s32.totalorder %s12, 3
      %p161 = pnand %p159, %p160
      %p162 = pneg %p161
      // Predicated region
      $region29: #{tpu_custom_call.1} parent=5 // pred_check
        _
      $region30: #{tpu_custom_call.1} parent=5 // pred_check_branch
        %164 = sbr.rel (%p161) target = $region32
      $region31: #{tpu_custom_call.1} parent=5 // pred_region
        %s165 = ssub.s32 %s12, 1
        %p166 = scmp.lt.s32.totalorder %s21, 1
        %s167 = scalar_select %p166, %s21, 1
        %p168 = scmp.lt.s32.totalorder %s22, 0
        %s169 = scalar_select %p168, %s22, 0
        %s170 = smul.addr %s169, 54
        %s171 = smul.addr %s167, 54
        %s172 = sadd.s32 %s170, %s171
        %s173 = smul.addr %s172, 4
        %s174 = scalar_lea.vmem %s0, %s173
        %p175 = pneg %p52
        %p176 = pneg %p49
        %p177 = pneg %p73
        %p178 = pneg %p70
        %p179 = pneg %p94
        %p180 = pneg %p91
        %p181 = pneg %p122
        %p182 = pneg %p119
        %s183 = sand.u32 %s109, 1
        %s184 = scalar_lea.sflag [#allocation3], %s183
        %s185 = sand.u32 %s109, 1
        %s186 = smul.addr %s185, 256
        %s187 = scalar_lea.vmem [#allocation2], %s186
        %p188 = scmp.lt.s32.totalorder %s21, 1
        %s189 = scalar_select %p188, %s21, 1
        %p190 = scmp.lt.s32.totalorder %s22, 0
        %s191 = scalar_select %p190, %s22, 0
        %s192 = smul.addr %s191, 54
        %s193 = smul.addr %s189, 54
        %s194 = sadd.s32 %s192, %s193
        %s195 = smul.addr %s194, 4
        %s196 = scalar_lea.vmem %s0, %s195
        %v198 = vld [vmem:[%s196] sm:$0xf]
        %v199 = vld [vmem:[%s196 + $0x4] sm:$0xf]
        %v200 = vld [vmem:[%s196 + $0xc] sm:$0xf]
        %v201 = vld [vmem:[%s196 + $0x10] sm:$0xf]
        %v202 = vld [vmem:[%s196 + $0x18] sm:$0xf]
        %v203 = vld [vmem:[%s196 + $0x1c] sm:$0xf]
        %v204 = vld [vmem:[%s196 + $0x24] sm:$0xf]
        %v205 = vld [vmem:[%s196 + $0x28] sm:$0xf]
        %v206 = vld [vmem:[%s196 + $0x30] sm:$0xf]
        %v207 = vld [vmem:[%s196 + $0x34] sm:$0xf]
        %v208 = vld [vmem:[%s196 + $0x3c] sm:$0xf]
        %v209 = vld [vmem:[%s196 + $0x40] sm:$0xf]
        %v210 = vld [vmem:[%s196 + $0x48] sm:$0xf]
        %v211 = vld [vmem:[%s196 + $0x4c] sm:$0xf]
        %v212 = vld [vmem:[%s196 + $0x54] sm:$0xf]
        %v213 = vld [vmem:[%s196 + $0x58] sm:$0xf]
        %v214 = vld [vmem:[%s196 + $0x60] sm:$0xf]
        %v215 = vld [vmem:[%s196 + $0x64] sm:$0xf]
        %v216 = vld [vmem:[%s196 + $0x6c] sm:$0xf]
        %v217 = vld [vmem:[%s196 + $0x70] sm:$0xf]
        %v218 = vld [vmem:[%s196 + $0x78] sm:$0xf]
        %v219 = vld [vmem:[%s196 + $0x7c] sm:$0xf]
        %v220 = vld [vmem:[%s196 + $0x84] sm:$0xf]
        %v221 = vld [vmem:[%s196 + $0x88] sm:$0xf]
        %v222 = vld [vmem:[%s196 + $0x90] sm:$0xf]
        %v223 = vld [vmem:[%s196 + $0x94] sm:$0xf]
        %v224 = vld [vmem:[%s196 + $0x9c] sm:$0xf]
        %v225 = vld [vmem:[%s196 + $0xa0] sm:$0xf]
        %v226 = vld [vmem:[%s196 + $0xa8] sm:$0xf]
        %v227 = vld [vmem:[%s196 + $0xac] sm:$0xf]
        %v228 = vld [vmem:[%s196 + $0xb4] sm:$0xf]
        %v229 = vld [vmem:[%s196 + $0xb8] sm:$0xf]
        %v230 = vld [vmem:[%s196 + $0x8] sm:$0x1]
        %v231 = vld [vmem:[%s196 + $0x14] sm:$0x1]
        %v232 = vld [vmem:[%s196 + $0x20] sm:$0x1]
        %v233 = vld [vmem:[%s196 + $0x2c] sm:$0x1]
        %v234 = vld [vmem:[%s196 + $0x38] sm:$0x1]
        %v235 = vld [vmem:[%s196 + $0x44] sm:$0x1]
        %v236 = vld [vmem:[%s196 + $0x50] sm:$0x1]
        %v237 = vld [vmem:[%s196 + $0x5c] sm:$0x1]
        %v238 = vld [vmem:[%s196 + $0x68] sm:$0x1]
        %v239 = vld [vmem:[%s196 + $0x74] sm:$0x1]
        %v240 = vld [vmem:[%s196 + $0x80] sm:$0x1]
        %v241 = vld [vmem:[%s196 + $0x8c] sm:$0x1]
        %v242 = vld [vmem:[%s196 + $0x98] sm:$0x1]
        %v243 = vld [vmem:[%s196 + $0xa4] sm:$0x1]
        %v244 = vld [vmem:[%s196 + $0xb0] sm:$0x1]
        %v245 = vld [vmem:[%s196 + $0xbc] sm:$0x1]
        %v246 = vld [vmem:[%s196] sm:$0xe]
        %v247 = vld [vmem:[%s196 + $0xc] sm:$0xe]
        %v248 = vld [vmem:[%s196 + $0x18] sm:$0xe]
        %v249 = vld [vmem:[%s196 + $0x24] sm:$0xe]
        %v250 = vld [vmem:[%s196 + $0x30] sm:$0xe]
        %v251 = vld [vmem:[%s196 + $0x3c] sm:$0xe]
        %v252 = vld [vmem:[%s196 + $0x48] sm:$0xe]
        %v253 = vld [vmem:[%s196 + $0x54] sm:$0xe]
        %v254 = vld [vmem:[%s196 + $0x60] sm:$0xe]
        %v255 = vld [vmem:[%s196 + $0x6c] sm:$0xe]
        %v256 = vld [vmem:[%s196 + $0x78] sm:$0xe]
        %v257 = vld [vmem:[%s196 + $0x84] sm:$0xe]
        %v258 = vld [vmem:[%s196 + $0x90] sm:$0xe]
        %v259 = vld [vmem:[%s196 + $0x9c] sm:$0xe]
        %v260 = vld [vmem:[%s196 + $0xa8] sm:$0xe]
        %v261 = vld [vmem:[%s196 + $0xb4] sm:$0xe]
        %s262 = scalar_lea.vmem %s196, 12
        %v263 = vld [vmem:[%s262] sm:$0xf]
        %v264 = vld [vmem:[%s262 + $0x4] sm:$0xf]
        %v265 = vld [vmem:[%s262 + $0xc] sm:$0xf]
        %v266 = vld [vmem:[%s262 + $0x10] sm:$0xf]
        %v267 = vld [vmem:[%s262 + $0x18] sm:$0xf]
        %v268 = vld [vmem:[%s262 + $0x1c] sm:$0xf]
        %v269 = vld [vmem:[%s262 + $0x24] sm:$0xf]
        %v270 = vld [vmem:[%s262 + $0x28] sm:$0xf]
        %v271 = vld [vmem:[%s262 + $0x30] sm:$0xf]
        %v272 = vld [vmem:[%s262 + $0x34] sm:$0xf]
        %v273 = vld [vmem:[%s262 + $0x3c] sm:$0xf]
        %v274 = vld [vmem:[%s262 + $0x40] sm:$0xf]
        %v275 = vld [vmem:[%s262 + $0x48] sm:$0xf]
        %v276 = vld [vmem:[%s262 + $0x4c] sm:$0xf]
        %v277 = vld [vmem:[%s262 + $0x54] sm:$0xf]
        %v278 = vld [vmem:[%s262 + $0x58] sm:$0xf]
        %v279 = vld [vmem:[%s262 + $0x60] sm:$0xf]
        %v280 = vld [vmem:[%s262 + $0x64] sm:$0xf]
        %v281 = vld [vmem:[%s262 + $0x6c] sm:$0xf]
        %v282 = vld [vmem:[%s262 + $0x70] sm:$0xf]
        %v283 = vld [vmem:[%s262 + $0x78] sm:$0xf]
        %v284 = vld [vmem:[%s262 + $0x7c] sm:$0xf]
        %v285 = vld [vmem:[%s262 + $0x84] sm:$0xf]
        %v286 = vld [vmem:[%s262 + $0x88] sm:$0xf]
        %v287 = vld [vmem:[%s262 + $0x90] sm:$0xf]
        %v288 = vld [vmem:[%s262 + $0x94] sm:$0xf]
        %v289 = vld [vmem:[%s262 + $0x9c] sm:$0xf]
        %v290 = vld [vmem:[%s262 + $0xa0] sm:$0xf]
        %v291 = vld [vmem:[%s262 + $0xa8] sm:$0xf]
        %v292 = vld [vmem:[%s262 + $0xac] sm:$0xf]
        %v293 = vld [vmem:[%s262 + $0xb4] sm:$0xf]
        %v294 = vld [vmem:[%s262 + $0xb8] sm:$0xf]
        %v295 = vld [vmem:[%s262 + $0x8] sm:$0x1]
        %v296 = vld [vmem:[%s262 + $0x14] sm:$0x1]
        %v297 = vld [vmem:[%s262 + $0x20] sm:$0x1]
        %v298 = vld [vmem:[%s262 + $0x2c] sm:$0x1]
        %v299 = vld [vmem:[%s262 + $0x38] sm:$0x1]
        %v300 = vld [vmem:[%s262 + $0x44] sm:$0x1]
        %v301 = vld [vmem:[%s262 + $0x50] sm:$0x1]
        %v302 = vld [vmem:[%s262 + $0x5c] sm:$0x1]
        %v303 = vld [vmem:[%s262 + $0x68] sm:$0x1]
        %v304 = vld [vmem:[%s262 + $0x74] sm:$0x1]
        %v305 = vld [vmem:[%s262 + $0x80] sm:$0x1]
        %v306 = vld [vmem:[%s262 + $0x8c] sm:$0x1]
        %v307 = vld [vmem:[%s262 + $0x98] sm:$0x1]
        %v308 = vld [vmem:[%s262 + $0xa4] sm:$0x1]
        %v309 = vld [vmem:[%s262 + $0xb0] sm:$0x1]
        %v310 = vld [vmem:[%s262 + $0xbc] sm:$0x1]
        %v311 = vld [vmem:[%s262] sm:$0xe]
        %v312 = vld [vmem:[%s262 + $0xc] sm:$0xe]
        %v313 = vld [vmem:[%s262 + $0x18] sm:$0xe]
        %v314 = vld [vmem:[%s262 + $0x24] sm:$0xe]
        %v315 = vld [vmem:[%s262 + $0x30] sm:$0xe]
        %v316 = vld [vmem:[%s262 + $0x3c] sm:$0xe]
        %v317 = vld [vmem:[%s262 + $0x48] sm:$0xe]
        %v318 = vld [vmem:[%s262 + $0x54] sm:$0xe]
        %v319 = vld [vmem:[%s262 + $0x60] sm:$0xe]
        %v320 = vld [vmem:[%s262 + $0x6c] sm:$0xe]
        %v321 = vld [vmem:[%s262 + $0x78] sm:$0xe]
        %v322 = vld [vmem:[%s262 + $0x84] sm:$0xe]
        %v323 = vld [vmem:[%s262 + $0x90] sm:$0xe]
        %v324 = vld [vmem:[%s262 + $0x9c] sm:$0xe]
        %v325 = vld [vmem:[%s262 + $0xa8] sm:$0xe]
        %v326 = vld [vmem:[%s262 + $0xb4] sm:$0xe]
        %s327 = scalar_lea.vmem %s196, 24
        %v328 = vld [vmem:[%s327] sm:$0xf]
        %v329 = vld [vmem:[%s327 + $0x4] sm:$0xf]
        %v330 = vld [vmem:[%s327 + $0xc] sm:$0xf]
        %v331 = vld [vmem:[%s327 + $0x10] sm:$0xf]
        %v332 = vld [vmem:[%s327 + $0x18] sm:$0xf]
        %v333 = vld [vmem:[%s327 + $0x1c] sm:$0xf]
        %v334 = vld [vmem:[%s327 + $0x24] sm:$0xf]
        %v335 = vld [vmem:[%s327 + $0x28] sm:$0xf]
        %v336 = vld [vmem:[%s327 + $0x30] sm:$0xf]
        %v337 = vld [vmem:[%s327 + $0x34] sm:$0xf]
        %v338 = vld [vmem:[%s327 + $0x3c] sm:$0xf]
        %v339 = vld [vmem:[%s327 + $0x40] sm:$0xf]
        %v340 = vld [vmem:[%s327 + $0x48] sm:$0xf]
        %v341 = vld [vmem:[%s327 + $0x4c] sm:$0xf]
        %v342 = vld [vmem:[%s327 + $0x54] sm:$0xf]
        %v343 = vld [vmem:[%s327 + $0x58] sm:$0xf]
        %v344 = vld [vmem:[%s327 + $0x60] sm:$0xf]
        %v345 = vld [vmem:[%s327 + $0x64] sm:$0xf]
        %v346 = vld [vmem:[%s327 + $0x6c] sm:$0xf]
        %v347 = vld [vmem:[%s327 + $0x70] sm:$0xf]
        %v348 = vld [vmem:[%s327 + $0x78] sm:$0xf]
        %v349 = vld [vmem:[%s327 + $0x7c] sm:$0xf]
        %v350 = vld [vmem:[%s327 + $0x84] sm:$0xf]
        %v351 = vld [vmem:[%s327 + $0x88] sm:$0xf]
        %v352 = vld [vmem:[%s327 + $0x90] sm:$0xf]
        %v353 = vld [vmem:[%s327 + $0x94] sm:$0xf]
        %v354 = vld [vmem:[%s327 + $0x9c] sm:$0xf]
        %v355 = vld [vmem:[%s327 + $0xa0] sm:$0xf]
        %v356 = vld [vmem:[%s327 + $0xa8] sm:$0xf]
        %v357 = vld [vmem:[%s327 + $0xac] sm:$0xf]
        %v358 = vld [vmem:[%s327 + $0xb4] sm:$0xf]
        %v359 = vld [vmem:[%s327 + $0xb8] sm:$0xf]
        %v360 = vld [vmem:[%s327 + $0x8] sm:$0x1]
        %v361 = vld [vmem:[%s327 + $0x14] sm:$0x1]
        %v362 = vld [vmem:[%s327 + $0x20] sm:$0x1]
        %v363 = vld [vmem:[%s327 + $0x2c] sm:$0x1]
        %v364 = vld [vmem:[%s327 + $0x38] sm:$0x1]
        %v365 = vld [vmem:[%s327 + $0x44] sm:$0x1]
        %v366 = vld [vmem:[%s327 + $0x50] sm:$0x1]
        %v367 = vld [vmem:[%s327 + $0x5c] sm:$0x1]
        %v368 = vld [vmem:[%s327 + $0x68] sm:$0x1]
        %v369 = vld [vmem:[%s327 + $0x74] sm:$0x1]
        %v370 = vld [vmem:[%s327 + $0x80] sm:$0x1]
        %v371 = vld [vmem:[%s327 + $0x8c] sm:$0x1]
        %v372 = vld [vmem:[%s327 + $0x98] sm:$0x1]
        %v373 = vld [vmem:[%s327 + $0xa4] sm:$0x1]
        %v374 = vld [vmem:[%s327 + $0xb0] sm:$0x1]
        %v375 = vld [vmem:[%s327 + $0xbc] sm:$0x1]
        %v376 = vld [vmem:[%s327] sm:$0xe]
        %v377 = vld [vmem:[%s327 + $0xc] sm:$0xe]
        %v378 = vld [vmem:[%s327 + $0x18] sm:$0xe]
        %v379 = vld [vmem:[%s327 + $0x24] sm:$0xe]
        %v380 = vld [vmem:[%s327 + $0x30] sm:$0xe]
        %v381 = vld [vmem:[%s327 + $0x3c] sm:$0xe]
        %v382 = vld [vmem:[%s327 + $0x48] sm:$0xe]
        %v383 = vld [vmem:[%s327 + $0x54] sm:$0xe]
        %v384 = vld [vmem:[%s327 + $0x60] sm:$0xe]
        %v385 = vld [vmem:[%s327 + $0x6c] sm:$0xe]
        %v386 = vld [vmem:[%s327 + $0x78] sm:$0xe]
        %v387 = vld [vmem:[%s327 + $0x84] sm:$0xe]
        %v388 = vld [vmem:[%s327 + $0x90] sm:$0xe]
        %v389 = vld [vmem:[%s327 + $0x9c] sm:$0xe]
        %v390 = vld [vmem:[%s327 + $0xa8] sm:$0xe]
        %v391 = vld [vmem:[%s327 + $0xb4] sm:$0xe]
        %v424 = vunpack.c.l.b16 %v198
        %v425 = vunpack.c.l.b16 %v199
        %v426 = vunpack.c.l.b16 %v200
        %v427 = vunpack.c.l.b16 %v201
        %v428 = vunpack.c.l.b16 %v202
        %v429 = vunpack.c.l.b16 %v203
        %v430 = vunpack.c.l.b16 %v204
        %v431 = vunpack.c.l.b16 %v205
        %v432 = vunpack.c.l.b16 %v206
        %v433 = vunpack.c.l.b16 %v207
        %v434 = vunpack.c.l.b16 %v208
        %v435 = vunpack.c.l.b16 %v209
        %v436 = vunpack.c.l.b16 %v210
        %v437 = vunpack.c.l.b16 %v211
        %v438 = vunpack.c.l.b16 %v212
        %v439 = vunpack.c.l.b16 %v213
        %v440 = vunpack.c.l.b16 %v214
        %v441 = vunpack.c.l.b16 %v215
        %v442 = vunpack.c.l.b16 %v216
        %v443 = vunpack.c.l.b16 %v217
        %v444 = vunpack.c.l.b16 %v218
        %v445 = vunpack.c.l.b16 %v219
        %v446 = vunpack.c.l.b16 %v220
        %v447 = vunpack.c.l.b16 %v221
        %v448 = vunpack.c.l.b16 %v222
        %v449 = vunpack.c.l.b16 %v223
        %v450 = vunpack.c.l.b16 %v224
        %v451 = vunpack.c.l.b16 %v225
        %v452 = vunpack.c.l.b16 %v226
        %v453 = vunpack.c.l.b16 %v227
        %v454 = vunpack.c.l.b16 %v228
        %v455 = vunpack.c.l.b16 %v229
        %v456 = vpack.c.b16 %v425, %v424
        %v457 = vpack.c.b16 %v427, %v426
        %v458 = vpack.c.b16 %v429, %v428
        %v459 = vpack.c.b16 %v431, %v430
        %v460 = vpack.c.b16 %v433, %v432
        %v461 = vpack.c.b16 %v435, %v434
        %v462 = vpack.c.b16 %v437, %v436
        %v463 = vpack.c.b16 %v439, %v438
        %v464 = vpack.c.b16 %v441, %v440
        %v465 = vpack.c.b16 %v443, %v442
        %v466 = vpack.c.b16 %v445, %v444
        %v467 = vpack.c.b16 %v447, %v446
        %v468 = vpack.c.b16 %v449, %v448
        %v469 = vpack.c.b16 %v451, %v450
        %v470 = vpack.c.b16 %v453, %v452
        %v471 = vpack.c.b16 %v455, %v454
        %v488 = vunpack.c.l.b16 %v230
        %v489 = vunpack.c.l.b16 %v231
        %v490 = vunpack.c.l.b16 %v232
        %v491 = vunpack.c.l.b16 %v233
        %v492 = vunpack.c.l.b16 %v234
        %v493 = vunpack.c.l.b16 %v235
        %v494 = vunpack.c.l.b16 %v236
        %v495 = vunpack.c.l.b16 %v237
        %v496 = vunpack.c.l.b16 %v238
        %v497 = vunpack.c.l.b16 %v239
        %v498 = vunpack.c.l.b16 %v240
        %v499 = vunpack.c.l.b16 %v241
        %v500 = vunpack.c.l.b16 %v242
        %v501 = vunpack.c.l.b16 %v243
        %v502 = vunpack.c.l.b16 %v244
        %v503 = vunpack.c.l.b16 %v245
        %v504 = vpack.c.b16 %v488, %v488
        %v505 = vpack.c.b16 %v489, %v489
        %v506 = vpack.c.b16 %v490, %v490
        %v507 = vpack.c.b16 %v491, %v491
        %v508 = vpack.c.b16 %v492, %v492
        %v509 = vpack.c.b16 %v493, %v493
        %v510 = vpack.c.b16 %v494, %v494
        %v511 = vpack.c.b16 %v495, %v495
        %v512 = vpack.c.b16 %v496, %v496
        %v513 = vpack.c.b16 %v497, %v497
        %v514 = vpack.c.b16 %v498, %v498
        %v515 = vpack.c.b16 %v499, %v499
        %v516 = vpack.c.b16 %v500, %v500
        %v517 = vpack.c.b16 %v501, %v501
        %v518 = vpack.c.b16 %v502, %v502
        %v519 = vpack.c.b16 %v503, %v503
        %vm520 = vsmask.f32 7424
        %v522 = vshrl.u32 %v456, 16
        %v524 = vshll.u32 %v456, 16
        %v526 = vrot.slane %v524, 1
        %v527 = vor.u32 %v522, %v526
        %v529 = vshll.u32 %v504, 16
        %v531 = vrot.slane %v529, 1
        %v532 = vsel %vm520, %v527, %v531
        %v534 = vshrl.u32 %v457, 16
        %v536 = vshll.u32 %v457, 16
        %v538 = vrot.slane %v536, 1
        %v539 = vor.u32 %v534, %v538
        %v541 = vshll.u32 %v505, 16
        %v543 = vrot.slane %v541, 1
        %v544 = vsel %vm520, %v539, %v543
        %v546 = vshrl.u32 %v458, 16
        %v548 = vshll.u32 %v458, 16
        %v550 = vrot.slane %v548, 1
        %v551 = vor.u32 %v546, %v550
        %v553 = vshll.u32 %v506, 16
        %v555 = vrot.slane %v553, 1
        %v556 = vsel %vm520, %v551, %v555
        %v558 = vshrl.u32 %v459, 16
        %v560 = vshll.u32 %v459, 16
        %v562 = vrot.slane %v560, 1
        %v563 = vor.u32 %v558, %v562
        %v565 = vshll.u32 %v507, 16
        %v567 = vrot.slane %v565, 1
        %v568 = vsel %vm520, %v563, %v567
        %v570 = vshrl.u32 %v460, 16
        %v572 = vshll.u32 %v460, 16
        %v574 = vrot.slane %v572, 1
        %v575 = vor.u32 %v570, %v574
        %v577 = vshll.u32 %v508, 16
        %v579 = vrot.slane %v577, 1
        %v580 = vsel %vm520, %v575, %v579
        %v582 = vshrl.u32 %v461, 16
        %v584 = vshll.u32 %v461, 16
        %v586 = vrot.slane %v584, 1
        %v587 = vor.u32 %v582, %v586
        %v589 = vshll.u32 %v509, 16
        %v591 = vrot.slane %v589, 1
        %v592 = vsel %vm520, %v587, %v591
        %v594 = vshrl.u32 %v462, 16
        %v596 = vshll.u32 %v462, 16
        %v598 = vrot.slane %v596, 1
        %v599 = vor.u32 %v594, %v598
        %v601 = vshll.u32 %v510, 16
        %v603 = vrot.slane %v601, 1
        %v604 = vsel %vm520, %v599, %v603
        %v606 = vshrl.u32 %v463, 16
        %v608 = vshll.u32 %v463, 16
        %v610 = vrot.slane %v608, 1
        %v611 = vor.u32 %v606, %v610
        %v613 = vshll.u32 %v511, 16
        %v615 = vrot.slane %v613, 1
        %v616 = vsel %vm520, %v611, %v615
        %v618 = vshrl.u32 %v464, 16
        %v620 = vshll.u32 %v464, 16
        %v622 = vrot.slane %v620, 1
        %v623 = vor.u32 %v618, %v622
        %v625 = vshll.u32 %v512, 16
        %v627 = vrot.slane %v625, 1
        %v628 = vsel %vm520, %v623, %v627
        %v630 = vshrl.u32 %v465, 16
        %v632 = vshll.u32 %v465, 16
        %v634 = vrot.slane %v632, 1
        %v635 = vor.u32 %v630, %v634
        %v637 = vshll.u32 %v513, 16
        %v639 = vrot.slane %v637, 1
        %v640 = vsel %vm520, %v635, %v639
        %v642 = vshrl.u32 %v466, 16
        %v644 = vshll.u32 %v466, 16
        %v646 = vrot.slane %v644, 1
        %v647 = vor.u32 %v642, %v646
        %v649 = vshll.u32 %v514, 16
        %v651 = vrot.slane %v649, 1
        %v652 = vsel %vm520, %v647, %v651
        %v654 = vshrl.u32 %v467, 16
        %v656 = vshll.u32 %v467, 16
        %v658 = vrot.slane %v656, 1
        %v659 = vor.u32 %v654, %v658
        %v661 = vshll.u32 %v515, 16
        %v663 = vrot.slane %v661, 1
        %v664 = vsel %vm520, %v659, %v663
        %v666 = vshrl.u32 %v468, 16
        %v668 = vshll.u32 %v468, 16
        %v670 = vrot.slane %v668, 1
        %v671 = vor.u32 %v666, %v670
        %v673 = vshll.u32 %v516, 16
        %v675 = vrot.slane %v673, 1
        %v676 = vsel %vm520, %v671, %v675
        %v678 = vshrl.u32 %v469, 16
        %v680 = vshll.u32 %v469, 16
        %v682 = vrot.slane %v680, 1
        %v683 = vor.u32 %v678, %v682
        %v685 = vshll.u32 %v517, 16
        %v687 = vrot.slane %v685, 1
        %v688 = vsel %vm520, %v683, %v687
        %v690 = vshrl.u32 %v470, 16
        %v692 = vshll.u32 %v470, 16
        %v694 = vrot.slane %v692, 1
        %v695 = vor.u32 %v690, %v694
        %v697 = vshll.u32 %v518, 16
        %v699 = vrot.slane %v697, 1
        %v700 = vsel %vm520, %v695, %v699
        %v702 = vshrl.u32 %v471, 16
        %v704 = vshll.u32 %v471, 16
        %v706 = vrot.slane %v704, 1
        %v707 = vor.u32 %v702, %v706
        %v709 = vshll.u32 %v519, 16
        %v711 = vrot.slane %v709, 1
        %v712 = vsel %vm520, %v707, %v711
        %713 = vrot.lane.b32.xlu0 %v532, 8
        %v714 = vpop.permute.xlu0 %713
        %715 = vrot.lane.b32.xlu0 %v544, 8
        %v716 = vpop.permute.xlu0 %715
        %717 = vrot.lane.b32.xlu0 %v556, 8
        %v718 = vpop.permute.xlu0 %717
        %719 = vrot.lane.b32.xlu0 %v568, 8
        %v720 = vpop.permute.xlu0 %719
        %721 = vrot.lane.b32.xlu0 %v580, 8
        %v722 = vpop.permute.xlu0 %721
        %723 = vrot.lane.b32.xlu0 %v592, 8
        %v724 = vpop.permute.xlu0 %723
        %725 = vrot.lane.b32.xlu0 %v604, 8
        %v726 = vpop.permute.xlu0 %725
        %727 = vrot.lane.b32.xlu0 %v616, 8
        %v728 = vpop.permute.xlu0 %727
        %729 = vrot.lane.b32.xlu0 %v628, 8
        %v730 = vpop.permute.xlu0 %729
        %731 = vrot.lane.b32.xlu0 %v640, 8
        %v732 = vpop.permute.xlu0 %731
        %733 = vrot.lane.b32.xlu0 %v652, 8
        %v734 = vpop.permute.xlu0 %733
        %735 = vrot.lane.b32.xlu0 %v664, 8
        %v736 = vpop.permute.xlu0 %735
        %737 = vrot.lane.b32.xlu0 %v676, 8
        %v738 = vpop.permute.xlu0 %737
        %739 = vrot.lane.b32.xlu0 %v688, 8
        %v740 = vpop.permute.xlu0 %739
        %741 = vrot.lane.b32.xlu0 %v700, 8
        %v742 = vpop.permute.xlu0 %741
        %743 = vrot.lane.b32.xlu0 %v712, 8
        %v744 = vpop.permute.xlu0 %743
        %v761 = vunpack.c.l.b16 %v246
        %v762 = vunpack.c.l.b16 %v247
        %v763 = vunpack.c.l.b16 %v248
        %v764 = vunpack.c.l.b16 %v249
        %v765 = vunpack.c.l.b16 %v250
        %v766 = vunpack.c.l.b16 %v251
        %v767 = vunpack.c.l.b16 %v252
        %v768 = vunpack.c.l.b16 %v253
        %v769 = vunpack.c.l.b16 %v254
        %v770 = vunpack.c.l.b16 %v255
        %v771 = vunpack.c.l.b16 %v256
        %v772 = vunpack.c.l.b16 %v257
        %v773 = vunpack.c.l.b16 %v258
        %v774 = vunpack.c.l.b16 %v259
        %v775 = vunpack.c.l.b16 %v260
        %v776 = vunpack.c.l.b16 %v261
        %v777 = vpack.c.b16 %v425, %v761
        %v778 = vpack.c.b16 %v427, %v762
        %v779 = vpack.c.b16 %v429, %v763
        %v780 = vpack.c.b16 %v431, %v764
        %v781 = vpack.c.b16 %v433, %v765
        %v782 = vpack.c.b16 %v435, %v766
        %v783 = vpack.c.b16 %v437, %v767
        %v784 = vpack.c.b16 %v439, %v768
        %v785 = vpack.c.b16 %v441, %v769
        %v786 = vpack.c.b16 %v443, %v770
        %v787 = vpack.c.b16 %v445, %v771
        %v788 = vpack.c.b16 %v447, %v772
        %v789 = vpack.c.b16 %v449, %v773
        %v790 = vpack.c.b16 %v451, %v774
        %v791 = vpack.c.b16 %v453, %v775
        %v792 = vpack.c.b16 %v455, %v776
        %vm793 = vcmask 1046528
        %v794 = vrot.slane %v777, 1
        %v795 = vrot.slane %v504, 1
        %v796 = vsel %vm793, %v794, %v795
        %v797 = vrot.slane %v778, 1
        %v798 = vrot.slane %v505, 1
        %v799 = vsel %vm793, %v797, %v798
        %v800 = vrot.slane %v779, 1
        %v801 = vrot.slane %v506, 1
        %v802 = vsel %vm793, %v800, %v801
        %v803 = vrot.slane %v780, 1
        %v804 = vrot.slane %v507, 1
        %v805 = vsel %vm793, %v803, %v804
        %v806 = vrot.slane %v781, 1
        %v807 = vrot.slane %v508, 1
        %v808 = vsel %vm793, %v806, %v807
        %v809 = vrot.slane %v782, 1
        %v810 = vrot.slane %v509, 1
        %v811 = vsel %vm793, %v809, %v810
        %v812 = vrot.slane %v783, 1
        %v813 = vrot.slane %v510, 1
        %v814 = vsel %vm793, %v812, %v813
        %v815 = vrot.slane %v784, 1
        %v816 = vrot.slane %v511, 1
        %v817 = vsel %vm793, %v815, %v816
        %v818 = vrot.slane %v785, 1
        %v819 = vrot.slane %v512, 1
        %v820 = vsel %vm793, %v818, %v819
        %v821 = vrot.slane %v786, 1
        %v822 = vrot.slane %v513, 1
        %v823 = vsel %vm793, %v821, %v822
        %v824 = vrot.slane %v787, 1
        %v825 = vrot.slane %v514, 1
        %v826 = vsel %vm793, %v824, %v825
        %v827 = vrot.slane %v788, 1
        %v828 = vrot.slane %v515, 1
        %v829 = vsel %vm793, %v827, %v828
        %v830 = vrot.slane %v789, 1
        %v831 = vrot.slane %v516, 1
        %v832 = vsel %vm793, %v830, %v831
        %v833 = vrot.slane %v790, 1
        %v834 = vrot.slane %v517, 1
        %v835 = vsel %vm793, %v833, %v834
        %v836 = vrot.slane %v791, 1
        %v837 = vrot.slane %v518, 1
        %v838 = vsel %vm793, %v836, %v837
        %v839 = vrot.slane %v792, 1
        %v840 = vrot.slane %v519, 1
        %v841 = vsel %vm793, %v839, %v840
        %842 = vrot.lane.b32.xlu0 %v796, 16
        %v843 = vpop.permute.xlu0 %842
        %844 = vrot.lane.b32.xlu0 %v799, 16
        %v845 = vpop.permute.xlu0 %844
        %846 = vrot.lane.b32.xlu0 %v802, 16
        %v847 = vpop.permute.xlu0 %846
        %848 = vrot.lane.b32.xlu0 %v805, 16
        %v849 = vpop.permute.xlu0 %848
        %850 = vrot.lane.b32.xlu0 %v808, 16
        %v851 = vpop.permute.xlu0 %850
        %852 = vrot.lane.b32.xlu0 %v811, 16
        %v853 = vpop.permute.xlu0 %852
        %854 = vrot.lane.b32.xlu0 %v814, 16
        %v855 = vpop.permute.xlu0 %854
        %856 = vrot.lane.b32.xlu0 %v817, 16
        %v857 = vpop.permute.xlu0 %856
        %858 = vrot.lane.b32.xlu0 %v820, 16
        %v859 = vpop.permute.xlu0 %858
        %860 = vrot.lane.b32.xlu0 %v823, 16
        %v861 = vpop.permute.xlu0 %860
        %862 = vrot.lane.b32.xlu0 %v826, 16
        %v863 = vpop.permute.xlu0 %862
        %864 = vrot.lane.b32.xlu0 %v829, 16
        %v865 = vpop.permute.xlu0 %864
        %866 = vrot.lane.b32.xlu0 %v832, 16
        %v867 = vpop.permute.xlu0 %866
        %868 = vrot.lane.b32.xlu0 %v835, 16
        %v869 = vpop.permute.xlu0 %868
        %870 = vrot.lane.b32.xlu0 %v838, 16
        %v871 = vpop.permute.xlu0 %870
        %872 = vrot.lane.b32.xlu0 %v841, 16
        %v873 = vpop.permute.xlu0 %872
        %v906 = vunpack.c.l.b16 %v263
        %v907 = vunpack.c.l.b16 %v264
        %v908 = vunpack.c.l.b16 %v265
        %v909 = vunpack.c.l.b16 %v266
        %v910 = vunpack.c.l.b16 %v267
        %v911 = vunpack.c.l.b16 %v268
        %v912 = vunpack.c.l.b16 %v269
        %v913 = vunpack.c.l.b16 %v270
        %v914 = vunpack.c.l.b16 %v271
        %v915 = vunpack.c.l.b16 %v272
        %v916 = vunpack.c.l.b16 %v273
        %v917 = vunpack.c.l.b16 %v274
        %v918 = vunpack.c.l.b16 %v275
        %v919 = vunpack.c.l.b16 %v276
        %v920 = vunpack.c.l.b16 %v277
        %v921 = vunpack.c.l.b16 %v278
        %v922 = vunpack.c.l.b16 %v279
        %v923 = vunpack.c.l.b16 %v280
        %v924 = vunpack.c.l.b16 %v281
        %v925 = vunpack.c.l.b16 %v282
        %v926 = vunpack.c.l.b16 %v283
        %v927 = vunpack.c.l.b16 %v284
        %v928 = vunpack.c.l.b16 %v285
        %v929 = vunpack.c.l.b16 %v286
        %v930 = vunpack.c.l.b16 %v287
        %v931 = vunpack.c.l.b16 %v288
        %v932 = vunpack.c.l.b16 %v289
        %v933 = vunpack.c.l.b16 %v290
        %v934 = vunpack.c.l.b16 %v291
        %v935 = vunpack.c.l.b16 %v292
        %v936 = vunpack.c.l.b16 %v293
        %v937 = vunpack.c.l.b16 %v294
        %v938 = vpack.c.b16 %v907, %v906
        %v939 = vpack.c.b16 %v909, %v908
        %v940 = vpack.c.b16 %v911, %v910
        %v941 = vpack.c.b16 %v913, %v912
        %v942 = vpack.c.b16 %v915, %v914
        %v943 = vpack.c.b16 %v917, %v916
        %v944 = vpack.c.b16 %v919, %v918
        %v945 = vpack.c.b16 %v921, %v920
        %v946 = vpack.c.b16 %v923, %v922
        %v947 = vpack.c.b16 %v925, %v924
        %v948 = vpack.c.b16 %v927, %v926
        %v949 = vpack.c.b16 %v929, %v928
        %v950 = vpack.c.b16 %v931, %v930
        %v951 = vpack.c.b16 %v933, %v932
        %v952 = vpack.c.b16 %v935, %v934
        %v953 = vpack.c.b16 %v937, %v936
        %954 = vrot.lane.b32.xlu0 %v938, 24
        %v955 = vpop.permute.xlu0 %954
        %956 = vrot.lane.b32.xlu0 %v939, 24
        %v957 = vpop.permute.xlu0 %956
        %958 = vrot.lane.b32.xlu0 %v940, 24
        %v959 = vpop.permute.xlu0 %958
        %960 = vrot.lane.b32.xlu0 %v941, 24
        %v961 = vpop.permute.xlu0 %960
        %962 = vrot.lane.b32.xlu0 %v942, 24
        %v963 = vpop.permute.xlu0 %962
        %964 = vrot.lane.b32.xlu0 %v943, 24
        %v965 = vpop.permute.xlu0 %964
        %966 = vrot.lane.b32.xlu0 %v944, 24
        %v967 = vpop.permute.xlu0 %966
        %968 = vrot.lane.b32.xlu0 %v945, 24
        %v969 = vpop.permute.xlu0 %968
        %970 = vrot.lane.b32.xlu0 %v946, 24
        %v971 = vpop.permute.xlu0 %970
        %972 = vrot.lane.b32.xlu0 %v947, 24
        %v973 = vpop.permute.xlu0 %972
        %974 = vrot.lane.b32.xlu0 %v948, 24
        %v975 = vpop.permute.xlu0 %974
        %976 = vrot.lane.b32.xlu0 %v949, 24
        %v977 = vpop.permute.xlu0 %976
        %978 = vrot.lane.b32.xlu0 %v950, 24
        %v979 = vpop.permute.xlu0 %978
        %980 = vrot.lane.b32.xlu0 %v951, 24
        %v981 = vpop.permute.xlu0 %980
        %982 = vrot.lane.b32.xlu0 %v952, 24
        %v983 = vpop.permute.xlu0 %982
        %984 = vrot.lane.b32.xlu0 %v953, 24
        %v985 = vpop.permute.xlu0 %984
        %v1002 = vunpack.c.l.b16 %v295
        %v1003 = vunpack.c.l.b16 %v296
        %v1004 = vunpack.c.l.b16 %v297
        %v1005 = vunpack.c.l.b16 %v298
        %v1006 = vunpack.c.l.b16 %v299
        %v1007 = vunpack.c.l.b16 %v300
        %v1008 = vunpack.c.l.b16 %v301
        %v1009 = vunpack.c.l.b16 %v302
        %v1010 = vunpack.c.l.b16 %v303
        %v1011 = vunpack.c.l.b16 %v304
        %v1012 = vunpack.c.l.b16 %v305
        %v1013 = vunpack.c.l.b16 %v306
        %v1014 = vunpack.c.l.b16 %v307
        %v1015 = vunpack.c.l.b16 %v308
        %v1016 = vunpack.c.l.b16 %v309
        %v1017 = vunpack.c.l.b16 %v310
        %v1018 = vpack.c.b16 %v1002, %v1002
        %v1019 = vpack.c.b16 %v1003, %v1003
        %v1020 = vpack.c.b16 %v1004, %v1004
        %v1021 = vpack.c.b16 %v1005, %v1005
        %v1022 = vpack.c.b16 %v1006, %v1006
        %v1023 = vpack.c.b16 %v1007, %v1007
        %v1024 = vpack.c.b16 %v1008, %v1008
        %v1025 = vpack.c.b16 %v1009, %v1009
        %v1026 = vpack.c.b16 %v1010, %v1010
        %v1027 = vpack.c.b16 %v1011, %v1011
        %v1028 = vpack.c.b16 %v1012, %v1012
        %v1029 = vpack.c.b16 %v1013, %v1013
        %v1030 = vpack.c.b16 %v1014, %v1014
        %v1031 = vpack.c.b16 %v1015, %v1015
        %v1032 = vpack.c.b16 %v1016, %v1016
        %v1033 = vpack.c.b16 %v1017, %v1017
        %v1035 = vshrl.u32 %v938, 16
        %v1037 = vshll.u32 %v938, 16
        %v1039 = vrot.slane %v1037, 1
        %v1040 = vor.u32 %v1035, %v1039
        %v1042 = vshll.u32 %v1018, 16
        %v1044 = vrot.slane %v1042, 1
        %v1045 = vsel %vm520, %v1040, %v1044
        %v1047 = vshrl.u32 %v939, 16
        %v1049 = vshll.u32 %v939, 16
        %v1051 = vrot.slane %v1049, 1
        %v1052 = vor.u32 %v1047, %v1051
        %v1054 = vshll.u32 %v1019, 16
        %v1056 = vrot.slane %v1054, 1
        %v1057 = vsel %vm520, %v1052, %v1056
        %v1059 = vshrl.u32 %v940, 16
        %v1061 = vshll.u32 %v940, 16
        %v1063 = vrot.slane %v1061, 1
        %v1064 = vor.u32 %v1059, %v1063
        %v1066 = vshll.u32 %v1020, 16
        %v1068 = vrot.slane %v1066, 1
        %v1069 = vsel %vm520, %v1064, %v1068
        %v1071 = vshrl.u32 %v941, 16
        %v1073 = vshll.u32 %v941, 16
        %v1075 = vrot.slane %v1073, 1
        %v1076 = vor.u32 %v1071, %v1075
        %v1078 = vshll.u32 %v1021, 16
        %v1080 = vrot.slane %v1078, 1
        %v1081 = vsel %vm520, %v1076, %v1080
        %v1083 = vshrl.u32 %v942, 16
        %v1085 = vshll.u32 %v942, 16
        %v1087 = vrot.slane %v1085, 1
        %v1088 = vor.u32 %v1083, %v1087
        %v1090 = vshll.u32 %v1022, 16
        %v1092 = vrot.slane %v1090, 1
        %v1093 = vsel %vm520, %v1088, %v1092
        %v1095 = vshrl.u32 %v943, 16
        %v1097 = vshll.u32 %v943, 16
        %v1099 = vrot.slane %v1097, 1
        %v1100 = vor.u32 %v1095, %v1099
        %v1102 = vshll.u32 %v1023, 16
        %v1104 = vrot.slane %v1102, 1
        %v1105 = vsel %vm520, %v1100, %v1104
        %v1107 = vshrl.u32 %v944, 16
        %v1109 = vshll.u32 %v944, 16
        %v1111 = vrot.slane %v1109, 1
        %v1112 = vor.u32 %v1107, %v1111
        %v1114 = vshll.u32 %v1024, 16
        %v1116 = vrot.slane %v1114, 1
        %v1117 = vsel %vm520, %v1112, %v1116
        %v1119 = vshrl.u32 %v945, 16
        %v1121 = vshll.u32 %v945, 16
        %v1123 = vrot.slane %v1121, 1
        %v1124 = vor.u32 %v1119, %v1123
        %v1126 = vshll.u32 %v1025, 16
        %v1128 = vrot.slane %v1126, 1
        %v1129 = vsel %vm520, %v1124, %v1128
        %v1131 = vshrl.u32 %v946, 16
        %v1133 = vshll.u32 %v946, 16
        %v1135 = vrot.slane %v1133, 1
        %v1136 = vor.u32 %v1131, %v1135
        %v1138 = vshll.u32 %v1026, 16
        %v1140 = vrot.slane %v1138, 1
        %v1141 = vsel %vm520, %v1136, %v1140
        %v1143 = vshrl.u32 %v947, 16
        %v1145 = vshll.u32 %v947, 16
        %v1147 = vrot.slane %v1145, 1
        %v1148 = vor.u32 %v1143, %v1147
        %v1150 = vshll.u32 %v1027, 16
        %v1152 = vrot.slane %v1150, 1
        %v1153 = vsel %vm520, %v1148, %v1152
        %v1155 = vshrl.u32 %v948, 16
        %v1157 = vshll.u32 %v948, 16
        %v1159 = vrot.slane %v1157, 1
        %v1160 = vor.u32 %v1155, %v1159
        %v1162 = vshll.u32 %v1028, 16
        %v1164 = vrot.slane %v1162, 1
        %v1165 = vsel %vm520, %v1160, %v1164
        %v1167 = vshrl.u32 %v949, 16
        %v1169 = vshll.u32 %v949, 16
        %v1171 = vrot.slane %v1169, 1
        %v1172 = vor.u32 %v1167, %v1171
        %v1174 = vshll.u32 %v1029, 16
        %v1176 = vrot.slane %v1174, 1
        %v1177 = vsel %vm520, %v1172, %v1176
        %v1179 = vshrl.u32 %v950, 16
        %v1181 = vshll.u32 %v950, 16
        %v1183 = vrot.slane %v1181, 1
        %v1184 = vor.u32 %v1179, %v1183
        %v1186 = vshll.u32 %v1030, 16
        %v1188 = vrot.slane %v1186, 1
        %v1189 = vsel %vm520, %v1184, %v1188
        %v1191 = vshrl.u32 %v951, 16
        %v1193 = vshll.u32 %v951, 16
        %v1195 = vrot.slane %v1193, 1
        %v1196 = vor.u32 %v1191, %v1195
        %v1198 = vshll.u32 %v1031, 16
        %v1200 = vrot.slane %v1198, 1
        %v1201 = vsel %vm520, %v1196, %v1200
        %v1203 = vshrl.u32 %v952, 16
        %v1205 = vshll.u32 %v952, 16
        %v1207 = vrot.slane %v1205, 1
        %v1208 = vor.u32 %v1203, %v1207
        %v1210 = vshll.u32 %v1032, 16
        %v1212 = vrot.slane %v1210, 1
        %v1213 = vsel %vm520, %v1208, %v1212
        %v1215 = vshrl.u32 %v953, 16
        %v1217 = vshll.u32 %v953, 16
        %v1219 = vrot.slane %v1217, 1
        %v1220 = vor.u32 %v1215, %v1219
        %v1222 = vshll.u32 %v1033, 16
        %v1224 = vrot.slane %v1222, 1
        %v1225 = vsel %vm520, %v1220, %v1224
        %1226 = vrot.lane.b32.xlu0 %v1045, 32
        %v1227 = vpop.permute.xlu0 %1226
        %1228 = vrot.lane.b32.xlu0 %v1057, 32
        %v1229 = vpop.permute.xlu0 %1228
        %1230 = vrot.lane.b32.xlu0 %v1069, 32
        %v1231 = vpop.permute.xlu0 %1230
        %1232 = vrot.lane.b32.xlu0 %v1081, 32
        %v1233 = vpop.permute.xlu0 %1232
        %1234 = vrot.lane.b32.xlu0 %v1093, 32
        %v1235 = vpop.permute.xlu0 %1234
        %1236 = vrot.lane.b32.xlu0 %v1105, 32
        %v1237 = vpop.permute.xlu0 %1236
        %1238 = vrot.lane.b32.xlu0 %v1117, 32
        %v1239 = vpop.permute.xlu0 %1238
        %1240 = vrot.lane.b32.xlu0 %v1129, 32
        %v1241 = vpop.permute.xlu0 %1240
        %1242 = vrot.lane.b32.xlu0 %v1141, 32
        %v1243 = vpop.permute.xlu0 %1242
        %1244 = vrot.lane.b32.xlu0 %v1153, 32
        %v1245 = vpop.permute.xlu0 %1244
        %1246 = vrot.lane.b32.xlu0 %v1165, 32
        %v1247 = vpop.permute.xlu0 %1246
        %1248 = vrot.lane.b32.xlu0 %v1177, 32
        %v1249 = vpop.permute.xlu0 %1248
        %1250 = vrot.lane.b32.xlu0 %v1189, 32
        %v1251 = vpop.permute.xlu0 %1250
        %1252 = vrot.lane.b32.xlu0 %v1201, 32
        %v1253 = vpop.permute.xlu0 %1252
        %1254 = vrot.lane.b32.xlu0 %v1213, 32
        %v1255 = vpop.permute.xlu0 %1254
        %1256 = vrot.lane.b32.xlu0 %v1225, 32
        %v1257 = vpop.permute.xlu0 %1256
        %v1274 = vunpack.c.l.b16 %v311
        %v1275 = vunpack.c.l.b16 %v312
        %v1276 = vunpack.c.l.b16 %v313
        %v1277 = vunpack.c.l.b16 %v314
        %v1278 = vunpack.c.l.b16 %v315
        %v1279 = vunpack.c.l.b16 %v316
        %v1280 = vunpack.c.l.b16 %v317
        %v1281 = vunpack.c.l.b16 %v318
        %v1282 = vunpack.c.l.b16 %v319
        %v1283 = vunpack.c.l.b16 %v320
        %v1284 = vunpack.c.l.b16 %v321
        %v1285 = vunpack.c.l.b16 %v322
        %v1286 = vunpack.c.l.b16 %v323
        %v1287 = vunpack.c.l.b16 %v324
        %v1288 = vunpack.c.l.b16 %v325
        %v1289 = vunpack.c.l.b16 %v326
        %v1290 = vpack.c.b16 %v907, %v1274
        %v1291 = vpack.c.b16 %v909, %v1275
        %v1292 = vpack.c.b16 %v911, %v1276
        %v1293 = vpack.c.b16 %v913, %v1277
        %v1294 = vpack.c.b16 %v915, %v1278
        %v1295 = vpack.c.b16 %v917, %v1279
        %v1296 = vpack.c.b16 %v919, %v1280
        %v1297 = vpack.c.b16 %v921, %v1281
        %v1298 = vpack.c.b16 %v923, %v1282
        %v1299 = vpack.c.b16 %v925, %v1283
        %v1300 = vpack.c.b16 %v927, %v1284
        %v1301 = vpack.c.b16 %v929, %v1285
        %v1302 = vpack.c.b16 %v931, %v1286
        %v1303 = vpack.c.b16 %v933, %v1287
        %v1304 = vpack.c.b16 %v935, %v1288
        %v1305 = vpack.c.b16 %v937, %v1289
        %v1306 = vrot.slane %v1290, 1
        %v1307 = vrot.slane %v1018, 1
        %v1308 = vsel %vm793, %v1306, %v1307
        %v1309 = vrot.slane %v1291, 1
        %v1310 = vrot.slane %v1019, 1
        %v1311 = vsel %vm793, %v1309, %v1310
        %v1312 = vrot.slane %v1292, 1
        %v1313 = vrot.slane %v1020, 1
        %v1314 = vsel %vm793, %v1312, %v1313
        %v1315 = vrot.slane %v1293, 1
        %v1316 = vrot.slane %v1021, 1
        %v1317 = vsel %vm793, %v1315, %v1316
        %v1318 = vrot.slane %v1294, 1
        %v1319 = vrot.slane %v1022, 1
        %v1320 = vsel %vm793, %v1318, %v1319
        %v1321 = vrot.slane %v1295, 1
        %v1322 = vrot.slane %v1023, 1
        %v1323 = vsel %vm793, %v1321, %v1322
        %v1324 = vrot.slane %v1296, 1
        %v1325 = vrot.slane %v1024, 1
        %v1326 = vsel %vm793, %v1324, %v1325
        %v1327 = vrot.slane %v1297, 1
        %v1328 = vrot.slane %v1025, 1
        %v1329 = vsel %vm793, %v1327, %v1328
        %v1330 = vrot.slane %v1298, 1
        %v1331 = vrot.slane %v1026, 1
        %v1332 = vsel %vm793, %v1330, %v1331
        %v1333 = vrot.slane %v1299, 1
        %v1334 = vrot.slane %v1027, 1
        %v1335 = vsel %vm793, %v1333, %v1334
        %v1336 = vrot.slane %v1300, 1
        %v1337 = vrot.slane %v1028, 1
        %v1338 = vsel %vm793, %v1336, %v1337
        %v1339 = vrot.slane %v1301, 1
        %v1340 = vrot.slane %v1029, 1
        %v1341 = vsel %vm793, %v1339, %v1340
        %v1342 = vrot.slane %v1302, 1
        %v1343 = vrot.slane %v1030, 1
        %v1344 = vsel %vm793, %v1342, %v1343
        %v1345 = vrot.slane %v1303, 1
        %v1346 = vrot.slane %v1031, 1
        %v1347 = vsel %vm793, %v1345, %v1346
        %v1348 = vrot.slane %v1304, 1
        %v1349 = vrot.slane %v1032, 1
        %v1350 = vsel %vm793, %v1348, %v1349
        %v1351 = vrot.slane %v1305, 1
        %v1352 = vrot.slane %v1033, 1
        %v1353 = vsel %vm793, %v1351, %v1352
        %1354 = vrot.lane.b32.xlu0 %v1308, 40
        %v1355 = vpop.permute.xlu0 %1354
        %1356 = vrot.lane.b32.xlu0 %v1311, 40
        %v1357 = vpop.permute.xlu0 %1356
        %1358 = vrot.lane.b32.xlu0 %v1314, 40
        %v1359 = vpop.permute.xlu0 %1358
        %1360 = vrot.lane.b32.xlu0 %v1317, 40
        %v1361 = vpop.permute.xlu0 %1360
        %1362 = vrot.lane.b32.xlu0 %v1320, 40
        %v1363 = vpop.permute.xlu0 %1362
        %1364 = vrot.lane.b32.xlu0 %v1323, 40
        %v1365 = vpop.permute.xlu0 %1364
        %1366 = vrot.lane.b32.xlu0 %v1326, 40
        %v1367 = vpop.permute.xlu0 %1366
        %1368 = vrot.lane.b32.xlu0 %v1329, 40
        %v1369 = vpop.permute.xlu0 %1368
        %1370 = vrot.lane.b32.xlu0 %v1332, 40
        %v1371 = vpop.permute.xlu0 %1370
        %1372 = vrot.lane.b32.xlu0 %v1335, 40
        %v1373 = vpop.permute.xlu0 %1372
        %1374 = vrot.lane.b32.xlu0 %v1338, 40
        %v1375 = vpop.permute.xlu0 %1374
        %1376 = vrot.lane.b32.xlu0 %v1341, 40
        %v1377 = vpop.permute.xlu0 %1376
        %1378 = vrot.lane.b32.xlu0 %v1344, 40
        %v1379 = vpop.permute.xlu0 %1378
        %1380 = vrot.lane.b32.xlu0 %v1347, 40
        %v1381 = vpop.permute.xlu0 %1380
        %1382 = vrot.lane.b32.xlu0 %v1350, 40
        %v1383 = vpop.permute.xlu0 %1382
        %1384 = vrot.lane.b32.xlu0 %v1353, 40
        %v1385 = vpop.permute.xlu0 %1384
        %v1418 = vunpack.c.l.b16 %v328
        %v1419 = vunpack.c.l.b16 %v329
        %v1420 = vunpack.c.l.b16 %v330
        %v1421 = vunpack.c.l.b16 %v331
        %v1422 = vunpack.c.l.b16 %v332
        %v1423 = vunpack.c.l.b16 %v333
        %v1424 = vunpack.c.l.b16 %v334
        %v1425 = vunpack.c.l.b16 %v335
        %v1426 = vunpack.c.l.b16 %v336
        %v1427 = vunpack.c.l.b16 %v337
        %v1428 = vunpack.c.l.b16 %v338
        %v1429 = vunpack.c.l.b16 %v339
        %v1430 = vunpack.c.l.b16 %v340
        %v1431 = vunpack.c.l.b16 %v341
        %v1432 = vunpack.c.l.b16 %v342
        %v1433 = vunpack.c.l.b16 %v343
        %v1434 = vunpack.c.l.b16 %v344
        %v1435 = vunpack.c.l.b16 %v345
        %v1436 = vunpack.c.l.b16 %v346
        %v1437 = vunpack.c.l.b16 %v347
        %v1438 = vunpack.c.l.b16 %v348
        %v1439 = vunpack.c.l.b16 %v349
        %v1440 = vunpack.c.l.b16 %v350
        %v1441 = vunpack.c.l.b16 %v351
        %v1442 = vunpack.c.l.b16 %v352
        %v1443 = vunpack.c.l.b16 %v353
        %v1444 = vunpack.c.l.b16 %v354
        %v1445 = vunpack.c.l.b16 %v355
        %v1446 = vunpack.c.l.b16 %v356
        %v1447 = vunpack.c.l.b16 %v357
        %v1448 = vunpack.c.l.b16 %v358
        %v1449 = vunpack.c.l.b16 %v359
        %v1450 = vpack.c.b16 %v1419, %v1418
        %v1451 = vpack.c.b16 %v1421, %v1420
        %v1452 = vpack.c.b16 %v1423, %v1422
        %v1453 = vpack.c.b16 %v1425, %v1424
        %v1454 = vpack.c.b16 %v1427, %v1426
        %v1455 = vpack.c.b16 %v1429, %v1428
        %v1456 = vpack.c.b16 %v1431, %v1430
        %v1457 = vpack.c.b16 %v1433, %v1432
        %v1458 = vpack.c.b16 %v1435, %v1434
        %v1459 = vpack.c.b16 %v1437, %v1436
        %v1460 = vpack.c.b16 %v1439, %v1438
        %v1461 = vpack.c.b16 %v1441, %v1440
        %v1462 = vpack.c.b16 %v1443, %v1442
        %v1463 = vpack.c.b16 %v1445, %v1444
        %v1464 = vpack.c.b16 %v1447, %v1446
        %v1465 = vpack.c.b16 %v1449, %v1448
        %1466 = vrot.lane.b32.xlu0 %v1450, 48
        %v1467 = vpop.permute.xlu0 %1466
        %1468 = vrot.lane.b32.xlu0 %v1451, 48
        %v1469 = vpop.permute.xlu0 %1468
        %1470 = vrot.lane.b32.xlu0 %v1452, 48
        %v1471 = vpop.permute.xlu0 %1470
        %1472 = vrot.lane.b32.xlu0 %v1453, 48
        %v1473 = vpop.permute.xlu0 %1472
        %1474 = vrot.lane.b32.xlu0 %v1454, 48
        %v1475 = vpop.permute.xlu0 %1474
        %1476 = vrot.lane.b32.xlu0 %v1455, 48
        %v1477 = vpop.permute.xlu0 %1476
        %1478 = vrot.lane.b32.xlu0 %v1456, 48
        %v1479 = vpop.permute.xlu0 %1478
        %1480 = vrot.lane.b32.xlu0 %v1457, 48
        %v1481 = vpop.permute.xlu0 %1480
        %1482 = vrot.lane.b32.xlu0 %v1458, 48
        %v1483 = vpop.permute.xlu0 %1482
        %1484 = vrot.lane.b32.xlu0 %v1459, 48
        %v1485 = vpop.permute.xlu0 %1484
        %1486 = vrot.lane.b32.xlu0 %v1460, 48
        %v1487 = vpop.permute.xlu0 %1486
        %1488 = vrot.lane.b32.xlu0 %v1461, 48
        %v1489 = vpop.permute.xlu0 %1488
        %1490 = vrot.lane.b32.xlu0 %v1462, 48
        %v1491 = vpop.permute.xlu0 %1490
        %1492 = vrot.lane.b32.xlu0 %v1463, 48
        %v1493 = vpop.permute.xlu0 %1492
        %1494 = vrot.lane.b32.xlu0 %v1464, 48
        %v1495 = vpop.permute.xlu0 %1494
        %1496 = vrot.lane.b32.xlu0 %v1465, 48
        %v1497 = vpop.permute.xlu0 %1496
        %v1514 = vunpack.c.l.b16 %v360
        %v1515 = vunpack.c.l.b16 %v361
        %v1516 = vunpack.c.l.b16 %v362
        %v1517 = vunpack.c.l.b16 %v363
        %v1518 = vunpack.c.l.b16 %v364
        %v1519 = vunpack.c.l.b16 %v365
        %v1520 = vunpack.c.l.b16 %v366
        %v1521 = vunpack.c.l.b16 %v367
        %v1522 = vunpack.c.l.b16 %v368
        %v1523 = vunpack.c.l.b16 %v369
        %v1524 = vunpack.c.l.b16 %v370
        %v1525 = vunpack.c.l.b16 %v371
        %v1526 = vunpack.c.l.b16 %v372
        %v1527 = vunpack.c.l.b16 %v373
        %v1528 = vunpack.c.l.b16 %v374
        %v1529 = vunpack.c.l.b16 %v375
        %v1530 = vpack.c.b16 %v1514, %v1514
        %v1531 = vpack.c.b16 %v1515, %v1515
        %v1532 = vpack.c.b16 %v1516, %v1516
        %v1533 = vpack.c.b16 %v1517, %v1517
        %v1534 = vpack.c.b16 %v1518, %v1518
        %v1535 = vpack.c.b16 %v1519, %v1519
        %v1536 = vpack.c.b16 %v1520, %v1520
        %v1537 = vpack.c.b16 %v1521, %v1521
        %v1538 = vpack.c.b16 %v1522, %v1522
        %v1539 = vpack.c.b16 %v1523, %v1523
        %v1540 = vpack.c.b16 %v1524, %v1524
        %v1541 = vpack.c.b16 %v1525, %v1525
        %v1542 = vpack.c.b16 %v1526, %v1526
        %v1543 = vpack.c.b16 %v1527, %v1527
        %v1544 = vpack.c.b16 %v1528, %v1528
        %v1545 = vpack.c.b16 %v1529, %v1529
        %v1547 = vshrl.u32 %v1450, 16
        %v1549 = vshll.u32 %v1450, 16
        %v1551 = vrot.slane %v1549, 1
        %v1552 = vor.u32 %v1547, %v1551
        %v1554 = vshll.u32 %v1530, 16
        %v1556 = vrot.slane %v1554, 1
        %v1557 = vsel %vm520, %v1552, %v1556
        %v1559 = vshrl.u32 %v1451, 16
        %v1561 = vshll.u32 %v1451, 16
        %v1563 = vrot.slane %v1561, 1
        %v1564 = vor.u32 %v1559, %v1563
        %v1566 = vshll.u32 %v1531, 16
        %v1568 = vrot.slane %v1566, 1
        %v1569 = vsel %vm520, %v1564, %v1568
        %v1571 = vshrl.u32 %v1452, 16
        %v1573 = vshll.u32 %v1452, 16
        %v1575 = vrot.slane %v1573, 1
        %v1576 = vor.u32 %v1571, %v1575
        %v1578 = vshll.u32 %v1532, 16
        %v1580 = vrot.slane %v1578, 1
        %v1581 = vsel %vm520, %v1576, %v1580
        %v1583 = vshrl.u32 %v1453, 16
        %v1585 = vshll.u32 %v1453, 16
        %v1587 = vrot.slane %v1585, 1
        %v1588 = vor.u32 %v1583, %v1587
        %v1590 = vshll.u32 %v1533, 16
        %v1592 = vrot.slane %v1590, 1
        %v1593 = vsel %vm520, %v1588, %v1592
        %v1595 = vshrl.u32 %v1454, 16
        %v1597 = vshll.u32 %v1454, 16
        %v1599 = vrot.slane %v1597, 1
        %v1600 = vor.u32 %v1595, %v1599
        %v1602 = vshll.u32 %v1534, 16
        %v1604 = vrot.slane %v1602, 1
        %v1605 = vsel %vm520, %v1600, %v1604
        %v1607 = vshrl.u32 %v1455, 16
        %v1609 = vshll.u32 %v1455, 16
        %v1611 = vrot.slane %v1609, 1
        %v1612 = vor.u32 %v1607, %v1611
        %v1614 = vshll.u32 %v1535, 16
        %v1616 = vrot.slane %v1614, 1
        %v1617 = vsel %vm520, %v1612, %v1616
        %v1619 = vshrl.u32 %v1456, 16
        %v1621 = vshll.u32 %v1456, 16
        %v1623 = vrot.slane %v1621, 1
        %v1624 = vor.u32 %v1619, %v1623
        %v1626 = vshll.u32 %v1536, 16
        %v1628 = vrot.slane %v1626, 1
        %v1629 = vsel %vm520, %v1624, %v1628
        %v1631 = vshrl.u32 %v1457, 16
        %v1633 = vshll.u32 %v1457, 16
        %v1635 = vrot.slane %v1633, 1
        %v1636 = vor.u32 %v1631, %v1635
        %v1638 = vshll.u32 %v1537, 16
        %v1640 = vrot.slane %v1638, 1
        %v1641 = vsel %vm520, %v1636, %v1640
        %v1643 = vshrl.u32 %v1458, 16
        %v1645 = vshll.u32 %v1458, 16
        %v1647 = vrot.slane %v1645, 1
        %v1648 = vor.u32 %v1643, %v1647
        %v1650 = vshll.u32 %v1538, 16
        %v1652 = vrot.slane %v1650, 1
        %v1653 = vsel %vm520, %v1648, %v1652
        %v1655 = vshrl.u32 %v1459, 16
        %v1657 = vshll.u32 %v1459, 16
        %v1659 = vrot.slane %v1657, 1
        %v1660 = vor.u32 %v1655, %v1659
        %v1662 = vshll.u32 %v1539, 16
        %v1664 = vrot.slane %v1662, 1
        %v1665 = vsel %vm520, %v1660, %v1664
        %v1667 = vshrl.u32 %v1460, 16
        %v1669 = vshll.u32 %v1460, 16
        %v1671 = vrot.slane %v1669, 1
        %v1672 = vor.u32 %v1667, %v1671
        %v1674 = vshll.u32 %v1540, 16
        %v1676 = vrot.slane %v1674, 1
        %v1677 = vsel %vm520, %v1672, %v1676
        %v1679 = vshrl.u32 %v1461, 16
        %v1681 = vshll.u32 %v1461, 16
        %v1683 = vrot.slane %v1681, 1
        %v1684 = vor.u32 %v1679, %v1683
        %v1686 = vshll.u32 %v1541, 16
        %v1688 = vrot.slane %v1686, 1
        %v1689 = vsel %vm520, %v1684, %v1688
        %v1691 = vshrl.u32 %v1462, 16
        %v1693 = vshll.u32 %v1462, 16
        %v1695 = vrot.slane %v1693, 1
        %v1696 = vor.u32 %v1691, %v1695
        %v1698 = vshll.u32 %v1542, 16
        %v1700 = vrot.slane %v1698, 1
        %v1701 = vsel %vm520, %v1696, %v1700
        %v1703 = vshrl.u32 %v1463, 16
        %v1705 = vshll.u32 %v1463, 16
        %v1707 = vrot.slane %v1705, 1
        %v1708 = vor.u32 %v1703, %v1707
        %v1710 = vshll.u32 %v1543, 16
        %v1712 = vrot.slane %v1710, 1
        %v1713 = vsel %vm520, %v1708, %v1712
        %v1715 = vshrl.u32 %v1464, 16
        %v1717 = vshll.u32 %v1464, 16
        %v1719 = vrot.slane %v1717, 1
        %v1720 = vor.u32 %v1715, %v1719
        %v1722 = vshll.u32 %v1544, 16
        %v1724 = vrot.slane %v1722, 1
        %v1725 = vsel %vm520, %v1720, %v1724
        %v1727 = vshrl.u32 %v1465, 16
        %v1729 = vshll.u32 %v1465, 16
        %v1731 = vrot.slane %v1729, 1
        %v1732 = vor.u32 %v1727, %v1731
        %v1734 = vshll.u32 %v1545, 16
        %v1736 = vrot.slane %v1734, 1
        %v1737 = vsel %vm520, %v1732, %v1736
        %1738 = vrot.lane.b32.xlu0 %v1557, 56
        %v1739 = vpop.permute.xlu0 %1738
        %1740 = vrot.lane.b32.xlu0 %v1569, 56
        %v1741 = vpop.permute.xlu0 %1740
        %1742 = vrot.lane.b32.xlu0 %v1581, 56
        %v1743 = vpop.permute.xlu0 %1742
        %1744 = vrot.lane.b32.xlu0 %v1593, 56
        %v1745 = vpop.permute.xlu0 %1744
        %1746 = vrot.lane.b32.xlu0 %v1605, 56
        %v1747 = vpop.permute.xlu0 %1746
        %1748 = vrot.lane.b32.xlu0 %v1617, 56
        %v1749 = vpop.permute.xlu0 %1748
        %1750 = vrot.lane.b32.xlu0 %v1629, 56
        %v1751 = vpop.permute.xlu0 %1750
        %1752 = vrot.lane.b32.xlu0 %v1641, 56
        %v1753 = vpop.permute.xlu0 %1752
        %1754 = vrot.lane.b32.xlu0 %v1653, 56
        %v1755 = vpop.permute.xlu0 %1754
        %1756 = vrot.lane.b32.xlu0 %v1665, 56
        %v1757 = vpop.permute.xlu0 %1756
        %1758 = vrot.lane.b32.xlu0 %v1677, 56
        %v1759 = vpop.permute.xlu0 %1758
        %1760 = vrot.lane.b32.xlu0 %v1689, 56
        %v1761 = vpop.permute.xlu0 %1760
        %1762 = vrot.lane.b32.xlu0 %v1701, 56
        %v1763 = vpop.permute.xlu0 %1762
        %1764 = vrot.lane.b32.xlu0 %v1713, 56
        %v1765 = vpop.permute.xlu0 %1764
        %1766 = vrot.lane.b32.xlu0 %v1725, 56
        %v1767 = vpop.permute.xlu0 %1766
        %1768 = vrot.lane.b32.xlu0 %v1737, 56
        %v1769 = vpop.permute.xlu0 %1768
        %v1786 = vunpack.c.l.b16 %v376
        %v1787 = vunpack.c.l.b16 %v377
        %v1788 = vunpack.c.l.b16 %v378
        %v1789 = vunpack.c.l.b16 %v379
        %v1790 = vunpack.c.l.b16 %v380
        %v1791 = vunpack.c.l.b16 %v381
        %v1792 = vunpack.c.l.b16 %v382
        %v1793 = vunpack.c.l.b16 %v383
        %v1794 = vunpack.c.l.b16 %v384
        %v1795 = vunpack.c.l.b16 %v385
        %v1796 = vunpack.c.l.b16 %v386
        %v1797 = vunpack.c.l.b16 %v387
        %v1798 = vunpack.c.l.b16 %v388
        %v1799 = vunpack.c.l.b16 %v389
        %v1800 = vunpack.c.l.b16 %v390
        %v1801 = vunpack.c.l.b16 %v391
        %v1802 = vpack.c.b16 %v1419, %v1786
        %v1803 = vpack.c.b16 %v1421, %v1787
        %v1804 = vpack.c.b16 %v1423, %v1788
        %v1805 = vpack.c.b16 %v1425, %v1789
        %v1806 = vpack.c.b16 %v1427, %v1790
        %v1807 = vpack.c.b16 %v1429, %v1791
        %v1808 = vpack.c.b16 %v1431, %v1792
        %v1809 = vpack.c.b16 %v1433, %v1793
        %v1810 = vpack.c.b16 %v1435, %v1794
        %v1811 = vpack.c.b16 %v1437, %v1795
        %v1812 = vpack.c.b16 %v1439, %v1796
        %v1813 = vpack.c.b16 %v1441, %v1797
        %v1814 = vpack.c.b16 %v1443, %v1798
        %v1815 = vpack.c.b16 %v1445, %v1799
        %v1816 = vpack.c.b16 %v1447, %v1800
        %v1817 = vpack.c.b16 %v1449, %v1801
        %v1818 = vrot.slane %v1802, 1
        %v1819 = vrot.slane %v1530, 1
        %v1820 = vsel %vm793, %v1818, %v1819
        %v1821 = vrot.slane %v1803, 1
        %v1822 = vrot.slane %v1531, 1
        %v1823 = vsel %vm793, %v1821, %v1822
        %v1824 = vrot.slane %v1804, 1
        %v1825 = vrot.slane %v1532, 1
        %v1826 = vsel %vm793, %v1824, %v1825
        %v1827 = vrot.slane %v1805, 1
        %v1828 = vrot.slane %v1533, 1
        %v1829 = vsel %vm793, %v1827, %v1828
        %v1830 = vrot.slane %v1806, 1
        %v1831 = vrot.slane %v1534, 1
        %v1832 = vsel %vm793, %v1830, %v1831
        %v1833 = vrot.slane %v1807, 1
        %v1834 = vrot.slane %v1535, 1
        %v1835 = vsel %vm793, %v1833, %v1834
        %v1836 = vrot.slane %v1808, 1
        %v1837 = vrot.slane %v1536, 1
        %v1838 = vsel %vm793, %v1836, %v1837
        %v1839 = vrot.slane %v1809, 1
        %v1840 = vrot.slane %v1537, 1
        %v1841 = vsel %vm793, %v1839, %v1840
        %v1842 = vrot.slane %v1810, 1
        %v1843 = vrot.slane %v1538, 1
        %v1844 = vsel %vm793, %v1842, %v1843
        %v1845 = vrot.slane %v1811, 1
        %v1846 = vrot.slane %v1539, 1
        %v1847 = vsel %vm793, %v1845, %v1846
        %v1848 = vrot.slane %v1812, 1
        %v1849 = vrot.slane %v1540, 1
        %v1850 = vsel %vm793, %v1848, %v1849
        %v1851 = vrot.slane %v1813, 1
        %v1852 = vrot.slane %v1541, 1
        %v1853 = vsel %vm793, %v1851, %v1852
        %v1854 = vrot.slane %v1814, 1
        %v1855 = vrot.slane %v1542, 1
        %v1856 = vsel %vm793, %v1854, %v1855
        %v1857 = vrot.slane %v1815, 1
        %v1858 = vrot.slane %v1543, 1
        %v1859 = vsel %vm793, %v1857, %v1858
        %v1860 = vrot.slane %v1816, 1
        %v1861 = vrot.slane %v1544, 1
        %v1862 = vsel %vm793, %v1860, %v1861
        %v1863 = vrot.slane %v1817, 1
        %v1864 = vrot.slane %v1545, 1
        %v1865 = vsel %vm793, %v1863, %v1864
        %1866 = vrot.lane.b32.xlu0 %v1820, 64
        %v1867 = vpop.permute.xlu0 %1866
        %1868 = vrot.lane.b32.xlu0 %v1823, 64
        %v1869 = vpop.permute.xlu0 %1868
        %1870 = vrot.lane.b32.xlu0 %v1826, 64
        %v1871 = vpop.permute.xlu0 %1870
        %1872 = vrot.lane.b32.xlu0 %v1829, 64
        %v1873 = vpop.permute.xlu0 %1872
        %1874 = vrot.lane.b32.xlu0 %v1832, 64
        %v1875 = vpop.permute.xlu0 %1874
        %1876 = vrot.lane.b32.xlu0 %v1835, 64
        %v1877 = vpop.permute.xlu0 %1876
        %1878 = vrot.lane.b32.xlu0 %v1838, 64
        %v1879 = vpop.permute.xlu0 %1878
        %1880 = vrot.lane.b32.xlu0 %v1841, 64
        %v1881 = vpop.permute.xlu0 %1880
        %1882 = vrot.lane.b32.xlu0 %v1844, 64
        %v1883 = vpop.permute.xlu0 %1882
        %1884 = vrot.lane.b32.xlu0 %v1847, 64
        %v1885 = vpop.permute.xlu0 %1884
        %1886 = vrot.lane.b32.xlu0 %v1850, 64
        %v1887 = vpop.permute.xlu0 %1886
        %1888 = vrot.lane.b32.xlu0 %v1853, 64
        %v1889 = vpop.permute.xlu0 %1888
        %1890 = vrot.lane.b32.xlu0 %v1856, 64
        %v1891 = vpop.permute.xlu0 %1890
        %1892 = vrot.lane.b32.xlu0 %v1859, 64
        %v1893 = vpop.permute.xlu0 %1892
        %1894 = vrot.lane.b32.xlu0 %v1862, 64
        %v1895 = vpop.permute.xlu0 %1894
        %1896 = vrot.lane.b32.xlu0 %v1865, 64
        %v1897 = vpop.permute.xlu0 %1896
        %vm1898 = vcmask 64512
        %v1900 = vsel %vm1898, %v456, %v714
        %v1902 = vsel %vm1898, %v457, %v716
        %v1904 = vsel %vm1898, %v458, %v718
        %v1906 = vsel %vm1898, %v459, %v720
        %v1908 = vsel %vm1898, %v460, %v722
        %v1910 = vsel %vm1898, %v461, %v724
        %v1912 = vsel %vm1898, %v462, %v726
        %v1914 = vsel %vm1898, %v463, %v728
        %v1916 = vsel %vm1898, %v464, %v730
        %v1918 = vsel %vm1898, %v465, %v732
        %v1920 = vsel %vm1898, %v466, %v734
        %v1922 = vsel %vm1898, %v467, %v736
        %v1924 = vsel %vm1898, %v468, %v738
        %v1926 = vsel %vm1898, %v469, %v740
        %v1928 = vsel %vm1898, %v470, %v742
        %v1930 = vsel %vm1898, %v471, %v744
        %vm1931 = vcmask 130048
        %v1933 = vsel %vm1931, %v1900, %v843
        %v1935 = vsel %vm1931, %v1902, %v845
        %v1937 = vsel %vm1931, %v1904, %v847
        %v1939 = vsel %vm1931, %v1906, %v849
        %v1941 = vsel %vm1931, %v1908, %v851
        %v1943 = vsel %vm1931, %v1910, %v853
        %v1945 = vsel %vm1931, %v1912, %v855
        %v1947 = vsel %vm1931, %v1914, %v857
        %v1949 = vsel %vm1931, %v1916, %v859
        %v1951 = vsel %vm1931, %v1918, %v861
        %v1953 = vsel %vm1931, %v1920, %v863
        %v1955 = vsel %vm1931, %v1922, %v865
        %v1957 = vsel %vm1931, %v1924, %v867
        %v1959 = vsel %vm1931, %v1926, %v869
        %v1961 = vsel %vm1931, %v1928, %v871
        %v1963 = vsel %vm1931, %v1930, %v873
        %vm1964 = vcmask 195584
        %v1966 = vsel %vm1964, %v1933, %v955
        %v1968 = vsel %vm1964, %v1935, %v957
        %v1970 = vsel %vm1964, %v1937, %v959
        %v1972 = vsel %vm1964, %v1939, %v961
        %v1974 = vsel %vm1964, %v1941, %v963
        %v1976 = vsel %vm1964, %v1943, %v965
        %v1978 = vsel %vm1964, %v1945, %v967
        %v1980 = vsel %vm1964, %v1947, %v969
        %v1982 = vsel %vm1964, %v1949, %v971
        %v1984 = vsel %vm1964, %v1951, %v973
        %v1986 = vsel %vm1964, %v1953, %v975
        %v1988 = vsel %vm1964, %v1955, %v977
        %v1990 = vsel %vm1964, %v1957, %v979
        %v1992 = vsel %vm1964, %v1959, %v981
        %v1994 = vsel %vm1964, %v1961, %v983
        %v1996 = vsel %vm1964, %v1963, %v985
        %vm1997 = vcmask 261120
        %v1999 = vsel %vm1997, %v1966, %v1227
        %v2001 = vsel %vm1997, %v1968, %v1229
        %v2003 = vsel %vm1997, %v1970, %v1231
        %v2005 = vsel %vm1997, %v1972, %v1233
        %v2007 = vsel %vm1997, %v1974, %v1235
        %v2009 = vsel %vm1997, %v1976, %v1237
        %v2011 = vsel %vm1997, %v1978, %v1239
        %v2013 = vsel %vm1997, %v1980, %v1241
        %v2015 = vsel %vm1997, %v1982, %v1243
        %v2017 = vsel %vm1997, %v1984, %v1245
        %v2019 = vsel %vm1997, %v1986, %v1247
        %v2021 = vsel %vm1997, %v1988, %v1249
        %v2023 = vsel %vm1997, %v1990, %v1251
        %v2025 = vsel %vm1997, %v1992, %v1253
        %v2027 = vsel %vm1997, %v1994, %v1255
        %v2029 = vsel %vm1997, %v1996, %v1257
        %vm2030 = vcmask 326656
        %v2032 = vsel %vm2030, %v1999, %v1355
        %v2034 = vsel %vm2030, %v2001, %v1357
        %v2036 = vsel %vm2030, %v2003, %v1359
        %v2038 = vsel %vm2030, %v2005, %v1361
        %v2040 = vsel %vm2030, %v2007, %v1363
        %v2042 = vsel %vm2030, %v2009, %v1365
        %v2044 = vsel %vm2030, %v2011, %v1367
        %v2046 = vsel %vm2030, %v2013, %v1369
        %v2048 = vsel %vm2030, %v2015, %v1371
        %v2050 = vsel %vm2030, %v2017, %v1373
        %v2052 = vsel %vm2030, %v2019, %v1375
        %v2054 = vsel %vm2030, %v2021, %v1377
        %v2056 = vsel %vm2030, %v2023, %v1379
        %v2058 = vsel %vm2030, %v2025, %v1381
        %v2060 = vsel %vm2030, %v2027, %v1383
        %v2062 = vsel %vm2030, %v2029, %v1385
        %vm2063 = vcmask 392192
        %v2065 = vsel %vm2063, %v2032, %v1467
        %v2067 = vsel %vm2063, %v2034, %v1469
        %v2069 = vsel %vm2063, %v2036, %v1471
        %v2071 = vsel %vm2063, %v2038, %v1473
        %v2073 = vsel %vm2063, %v2040, %v1475
        %v2075 = vsel %vm2063, %v2042, %v1477
        %v2077 = vsel %vm2063, %v2044, %v1479
        %v2079 = vsel %vm2063, %v2046, %v1481
        %v2081 = vsel %vm2063, %v2048, %v1483
        %v2083 = vsel %vm2063, %v2050, %v1485
        %v2085 = vsel %vm2063, %v2052, %v1487
        %v2087 = vsel %vm2063, %v2054, %v1489
        %v2089 = vsel %vm2063, %v2056, %v1491
        %v2091 = vsel %vm2063, %v2058, %v1493
        %v2093 = vsel %vm2063, %v2060, %v1495
        %v2095 = vsel %vm2063, %v2062, %v1497
        %vm2096 = vcmask 457728
        %v2098 = vsel %vm2096, %v2065, %v1739
        %v2100 = vsel %vm2096, %v2067, %v1741
        %v2102 = vsel %vm2096, %v2069, %v1743
        %v2104 = vsel %vm2096, %v2071, %v1745
        %v2106 = vsel %vm2096, %v2073, %v1747
        %v2108 = vsel %vm2096, %v2075, %v1749
        %v2110 = vsel %vm2096, %v2077, %v1751
        %v2112 = vsel %vm2096, %v2079, %v1753
        %v2114 = vsel %vm2096, %v2081, %v1755
        %v2116 = vsel %vm2096, %v2083, %v1757
        %v2118 = vsel %vm2096, %v2085, %v1759
        %v2120 = vsel %vm2096, %v2087, %v1761
        %v2122 = vsel %vm2096, %v2089, %v1763
        %v2124 = vsel %vm2096, %v2091, %v1765
        %v2126 = vsel %vm2096, %v2093, %v1767
        %v2128 = vsel %vm2096, %v2095, %v1769
        %vm2129 = vcmask 523264
        %v2131 = vsel %vm2129, %v2098, %v1867
        %v2133 = vsel %vm2129, %v2100, %v1869
        %v2135 = vsel %vm2129, %v2102, %v1871
        %v2137 = vsel %vm2129, %v2104, %v1873
        %v2139 = vsel %vm2129, %v2106, %v1875
        %v2141 = vsel %vm2129, %v2108, %v1877
        %v2143 = vsel %vm2129, %v2110, %v1879
        %v2145 = vsel %vm2129, %v2112, %v1881
        %v2147 = vsel %vm2129, %v2114, %v1883
        %v2149 = vsel %vm2129, %v2116, %v1885
        %v2151 = vsel %vm2129, %v2118, %v1887
        %v2153 = vsel %vm2129, %v2120, %v1889
        %v2155 = vsel %vm2129, %v2122, %v1891
        %v2157 = vsel %vm2129, %v2124, %v1893
        %v2159 = vsel %vm2129, %v2126, %v1895
        %v2161 = vsel %vm2129, %v2128, %v1897
        %vm2162 = vcmask 588800
        %v2164 = vsel %vm2162, %v2131, 0
        %v2166 = vsel %vm2162, %v2133, 0
        %v2168 = vsel %vm2162, %v2135, 0
        %v2170 = vsel %vm2162, %v2137, 0
        %v2172 = vsel %vm2162, %v2139, 0
        %v2174 = vsel %vm2162, %v2141, 0
        %v2176 = vsel %vm2162, %v2143, 0
        %v2178 = vsel %vm2162, %v2145, 0
        %v2180 = vsel %vm2162, %v2147, 0
        %v2182 = vsel %vm2162, %v2149, 0
        %v2184 = vsel %vm2162, %v2151, 0
        %v2186 = vsel %vm2162, %v2153, 0
        %v2188 = vsel %vm2162, %v2155, 0
        %v2190 = vsel %vm2162, %v2157, 0
        %v2192 = vsel %vm2162, %v2159, 0
        %v2194 = vsel %vm2162, %v2161, 0
        %v2196 = vld [vmem:[%s1] sm:$0xf]
        %v2197 = vld [vmem:[%s1 + $0x4] sm:$0xf]
        %v2198 = vld [vmem:[%s1 + $0x8] sm:$0xf]
        %v2199 = vld [vmem:[%s1 + $0xc] sm:$0xf]
        %v2200 = vld [vmem:[%s1 + $0x10] sm:$0xf]
        %v2201 = vld [vmem:[%s1 + $0x14] sm:$0xf]
        %v2202 = vld [vmem:[%s1 + $0x18] sm:$0xf]
        %v2203 = vld [vmem:[%s1 + $0x1c] sm:$0xf]
        %v2204 = vld [vmem:[%s1 + $0x20] sm:$0xf]
        %v2205 = vld [vmem:[%s1 + $0x24] sm:$0xf]
        %v2206 = vld [vmem:[%s1 + $0x28] sm:$0xf]
        %v2207 = vld [vmem:[%s1 + $0x2c] sm:$0xf]
        %v2208 = vld [vmem:[%s1 + $0x30] sm:$0xf]
        %v2209 = vld [vmem:[%s1 + $0x34] sm:$0xf]
        %v2210 = vld [vmem:[%s1 + $0x38] sm:$0xf]
        %v2211 = vld [vmem:[%s1 + $0x3c] sm:$0xf]
        %v2212 = vld [vmem:[%s2] sm:$0x1]
        %v2214 = vlaneseq
        %v2215 = vshrl.u32 %v2214, 7
        %v2216 = vsub.s32 0, %v2215
        %v2217 = vrot.slane %v2212, %v2216
        %v2235 = vunpack.c.l.b16 %v2196
        %v2236 = vunpack.c.l.b16 %v2197
        %v2237 = vunpack.c.l.b16 %v2198
        %v2238 = vunpack.c.l.b16 %v2199
        %v2239 = vunpack.c.l.b16 %v2200
        %v2240 = vunpack.c.l.b16 %v2201
        %v2241 = vunpack.c.l.b16 %v2202
        %v2242 = vunpack.c.l.b16 %v2203
        %v2243 = vunpack.c.l.b16 %v2204
        %v2244 = vunpack.c.l.b16 %v2205
        %v2245 = vunpack.c.l.b16 %v2206
        %v2246 = vunpack.c.l.b16 %v2207
        %v2247 = vunpack.c.l.b16 %v2208
        %v2248 = vunpack.c.l.b16 %v2209
        %v2249 = vunpack.c.l.b16 %v2210
        %v2250 = vunpack.c.l.b16 %v2211
        %v2251 = vpack.c.b16 %v2236, %v2235
        %v2252 = vpack.c.b16 %v2238, %v2237
        %v2253 = vpack.c.b16 %v2240, %v2239
        %v2254 = vpack.c.b16 %v2242, %v2241
        %v2255 = vpack.c.b16 %v2244, %v2243
        %v2256 = vpack.c.b16 %v2246, %v2245
        %v2257 = vpack.c.b16 %v2248, %v2247
        %v2258 = vpack.c.b16 %v2250, %v2249
        %2267 = vmatprep.subr.bf16.mxu0 0
        %2268 = vmatpush1.bf16.msra.mxu0 %v2251
        %2269 = vmatprep.subr.bf16.mxu0 0
        %2270 = vmatpush1.bf16.msra.mxu0 %v2252
        %2271 = vmatprep.subr.bf16.mxu0 0
        %2272 = vmatpush1.bf16.msra.mxu0 %v2253
        %2273 = vmatprep.subr.bf16.mxu0 0
        %2274 = vmatpush1.bf16.msra.mxu0 %v2254
        %2275 = vmatprep.subr.bf16.mxu0 0
        %2276 = vmatpush1.bf16.msra.mxu0 %v2255
        %2277 = vmatprep.subr.bf16.mxu0 0
        %2278 = vmatpush1.bf16.msra.mxu0 %v2256
        %2279 = vmatprep.subr.bf16.mxu0 0
        %2280 = vmatpush1.bf16.msra.mxu0 %v2257
        %2281 = vmatprep.subr.bf16.mxu0 0
        %2282 = vmatpush1.bf16.msra.mxu0 %v2258
        %2283 = vmatprep.subr.bf16.mxu0 0
        %2284 = vmatpush1.bf16.msra.mxu0 0
        %2285 = vmatprep.subr.bf16.mxu0 0
        %2286 = vmatpush1.bf16.msra.mxu0 0
        %2287 = vmatprep.subr.bf16.mxu0 0
        %2288 = vmatpush1.bf16.msra.mxu0 0
        %2289 = vmatprep.subr.bf16.mxu0 0
        %2290 = vmatpush1.bf16.msra.mxu0 0
        %2291 = vmatprep.subr.bf16.mxu0 0
        %2292 = vmatpush1.bf16.msra.mxu0 0
        %2293 = vmatprep.subr.bf16.mxu0 0
        %2294 = vmatpush1.bf16.msra.mxu0 0
        %2295 = vmatprep.subr.bf16.mxu0 0
        %2296 = vmatpush1.bf16.msra.mxu0 0
        %2297 = vmatprep.subr.bf16.mxu0 0
        %2298 = vmatpush1.bf16.msra.mxu0 0
        %2299 = vmatprep.mubr.bf16.mxu0 0
        %2300 = vmatmul.mubr.bf16.gmra.mrb[0].mxu0 %v2164
        %v2301 = vpop.f32.mrb[0].mxu0
        %v2302 = vadd.f32 %v2217, %v2301
        %v2303 = vpop.f32.mrb[0].mxu0
        %v2304 = vpop.f32.mrb[0].mxu0
        %v2305 = vadd.f32 %v2217, %v2304
        %v2306 = vpop.f32.mrb[0].mxu0
        %2307 = vmatprep.mubr.bf16.mxu0 0
        %2308 = vmatmul.mubr.bf16.gmra.mrb[0].mxu0 %v2166
        %v2309 = vpop.f32.mrb[0].mxu0
        %v2310 = vadd.f32 %v2217, %v2309
        %v2311 = vpop.f32.mrb[0].mxu0
        %v2312 = vpop.f32.mrb[0].mxu0
        %v2313 = vadd.f32 %v2217, %v2312
        %v2314 = vpop.f32.mrb[0].mxu0
        %2315 = vmatprep.mubr.bf16.mxu0 0
        %2316 = vmatmul.mubr.bf16.gmra.mrb[0].mxu0 %v2168
        %v2317 = vpop.f32.mrb[0].mxu0
        %v2318 = vadd.f32 %v2217, %v2317
        %v2319 = vpop.f32.mrb[0].mxu0
        %v2320 = vpop.f32.mrb[0].mxu0
        %v2321 = vadd.f32 %v2217, %v2320
        %v2322 = vpop.f32.mrb[0].mxu0
        %2323 = vmatprep.mubr.bf16.mxu0 0
        %2324 = vmatmul.mubr.bf16.gmra.mrb[0].mxu0 %v2170
        %v2325 = vpop.f32.mrb[0].mxu0
        %v2326 = vadd.f32 %v2217, %v2325
        %v2327 = vpop.f32.mrb[0].mxu0
        %v2328 = vpop.f32.mrb[0].mxu0
        %v2329 = vadd.f32 %v2217, %v2328
        %v2330 = vpop.f32.mrb[0].mxu0
        %2331 = vmatprep.mubr.bf16.mxu0 0
        %2332 = vmatmul.mubr.bf16.gmra.mrb[0].mxu0 %v2172
        %v2333 = vpop.f32.mrb[0].mxu0
        %v2334 = vadd.f32 %v2217, %v2333
        %v2335 = vpop.f32.mrb[0].mxu0
        %v2336 = vpop.f32.mrb[0].mxu0
        %v2337 = vadd.f32 %v2217, %v2336
        %v2338 = vpop.f32.mrb[0].mxu0
        %2339 = vmatprep.mubr.bf16.mxu0 0
        %2340 = vmatmul.mubr.bf16.gmra.mrb[0].mxu0 %v2174
        %v2341 = vpop.f32.mrb[0].mxu0
        %v2342 = vadd.f32 %v2217, %v2341
        %v2343 = vpop.f32.mrb[0].mxu0
        %v2344 = vpop.f32.mrb[0].mxu0
        %v2345 = vadd.f32 %v2217, %v2344
        %v2346 = vpop.f32.mrb[0].mxu0
        %2347 = vmatprep.mubr.bf16.mxu0 0
        %2348 = vmatmul.mubr.bf16.gmra.mrb[0].mxu0 %v2176
        %v2349 = vpop.f32.mrb[0].mxu0
        %v2350 = vadd.f32 %v2217, %v2349
        %v2351 = vpop.f32.mrb[0].mxu0
        %v2352 = vpop.f32.mrb[0].mxu0
        %v2353 = vadd.f32 %v2217, %v2352
        %v2354 = vpop.f32.mrb[0].mxu0
        %2355 = vmatprep.mubr.bf16.mxu0 0
        %2356 = vmatmul.mubr.bf16.gmra.mrb[0].mxu0 %v2178
        %v2357 = vpop.f32.mrb[0].mxu0
        %v2358 = vadd.f32 %v2217, %v2357
        %v2359 = vpop.f32.mrb[0].mxu0
        %v2360 = vpop.f32.mrb[0].mxu0
        %v2361 = vadd.f32 %v2217, %v2360
        %v2362 = vpop.f32.mrb[0].mxu0
        %2363 = vmatprep.mubr.bf16.mxu0 0
        %2364 = vmatmul.mubr.bf16.gmra.mrb[0].mxu0 %v2180
        %v2365 = vpop.f32.mrb[0].mxu0
        %v2366 = vadd.f32 %v2217, %v2365
        %v2367 = vpop.f32.mrb[0].mxu0
        %v2368 = vpop.f32.mrb[0].mxu0
        %v2369 = vadd.f32 %v2217, %v2368
        %v2370 = vpop.f32.mrb[0].mxu0
        %2371 = vmatprep.mubr.bf16.mxu0 0
        %2372 = vmatmul.mubr.bf16.gmra.mrb[0].mxu0 %v2182
        %v2373 = vpop.f32.mrb[0].mxu0
        %v2374 = vadd.f32 %v2217, %v2373
        %v2375 = vpop.f32.mrb[0].mxu0
        %v2376 = vpop.f32.mrb[0].mxu0
        %v2377 = vadd.f32 %v2217, %v2376
        %v2378 = vpop.f32.mrb[0].mxu0
        %2379 = vmatprep.mubr.bf16.mxu0 0
        %2380 = vmatmul.mubr.bf16.gmra.mrb[0].mxu0 %v2184
        %v2381 = vpop.f32.mrb[0].mxu0
        %v2382 = vadd.f32 %v2217, %v2381
        %v2383 = vpop.f32.mrb[0].mxu0
        %v2384 = vpop.f32.mrb[0].mxu0
        %v2385 = vadd.f32 %v2217, %v2384
        %v2386 = vpop.f32.mrb[0].mxu0
        %2387 = vmatprep.mubr.bf16.mxu0 0
        %2388 = vmatmul.mubr.bf16.gmra.mrb[0].mxu0 %v2186
        %v2389 = vpop.f32.mrb[0].mxu0
        %v2390 = vadd.f32 %v2217, %v2389
        %v2391 = vpop.f32.mrb[0].mxu0
        %v2392 = vpop.f32.mrb[0].mxu0
        %v2393 = vadd.f32 %v2217, %v2392
        %v2394 = vpop.f32.mrb[0].mxu0
        %2395 = vmatprep.mubr.bf16.mxu0 0
        %2396 = vmatmul.mubr.bf16.gmra.mrb[0].mxu0 %v2188
        %v2397 = vpop.f32.mrb[0].mxu0
        %v2398 = vadd.f32 %v2217, %v2397
        %v2399 = vpop.f32.mrb[0].mxu0
        %v2400 = vpop.f32.mrb[0].mxu0
        %v2401 = vadd.f32 %v2217, %v2400
        %v2402 = vpop.f32.mrb[0].mxu0
        %2403 = vmatprep.mubr.bf16.mxu0 0
        %2404 = vmatmul.mubr.bf16.gmra.mrb[0].mxu0 %v2190
        %v2405 = vpop.f32.mrb[0].mxu0
        %v2406 = vadd.f32 %v2217, %v2405
        %v2407 = vpop.f32.mrb[0].mxu0
        %v2408 = vpop.f32.mrb[0].mxu0
        %v2409 = vadd.f32 %v2217, %v2408
        %v2410 = vpop.f32.mrb[0].mxu0
        %2411 = vmatprep.mubr.bf16.mxu0 0
        %2412 = vmatmul.mubr.bf16.gmra.mrb[0].mxu0 %v2192
        %v2413 = vpop.f32.mrb[0].mxu0
        %v2414 = vadd.f32 %v2217, %v2413
        %v2415 = vpop.f32.mrb[0].mxu0
        %v2416 = vpop.f32.mrb[0].mxu0
        %v2417 = vadd.f32 %v2217, %v2416
        %v2418 = vpop.f32.mrb[0].mxu0
        %2419 = vmatprep.mubr.bf16.mxu0 0
        %2420 = vmatmul.mubr.bf16.gmra.mrb[0].mxu0 %v2194
        %v2421 = vpop.f32.mrb[0].mxu0
        %v2422 = vadd.f32 %v2217, %v2421
        %v2423 = vpop.f32.mrb[0].mxu0
        %v2424 = vpop.f32.mrb[0].mxu0
        %v2425 = vadd.f32 %v2217, %v2424
        %v2426 = vpop.f32.mrb[0].mxu0
        %2427 = vdwg.mxu0
        %vm2428 = vcmp.ge.f32.partialorder %v2302, 0.0
        %vm2429 = vcmp.ge.f32.partialorder %v2305, 0.0
        %vm2430 = vcmp.ge.f32.partialorder %v2310, 0.0
        %vm2431 = vcmp.ge.f32.partialorder %v2313, 0.0
        %vm2432 = vcmp.ge.f32.partialorder %v2318, 0.0
        %vm2433 = vcmp.ge.f32.partialorder %v2321, 0.0
        %vm2434 = vcmp.ge.f32.partialorder %v2326, 0.0
        %vm2435 = vcmp.ge.f32.partialorder %v2329, 0.0
        %vm2436 = vcmp.ge.f32.partialorder %v2334, 0.0
        %vm2437 = vcmp.ge.f32.partialorder %v2337, 0.0
        %vm2438 = vcmp.ge.f32.partialorder %v2342, 0.0
        %vm2439 = vcmp.ge.f32.partialorder %v2345, 0.0
        %vm2440 = vcmp.ge.f32.partialorder %v2350, 0.0
        %vm2441 = vcmp.ge.f32.partialorder %v2353, 0.0
        %vm2442 = vcmp.ge.f32.partialorder %v2358, 0.0
        %vm2443 = vcmp.ge.f32.partialorder %v2361, 0.0
        %vm2444 = vcmp.ge.f32.partialorder %v2366, 0.0
        %vm2445 = vcmp.ge.f32.partialorder %v2369, 0.0
        %vm2446 = vcmp.ge.f32.partialorder %v2374, 0.0
        %vm2447 = vcmp.ge.f32.partialorder %v2377, 0.0
        %vm2448 = vcmp.ge.f32.partialorder %v2382, 0.0
        %vm2449 = vcmp.ge.f32.partialorder %v2385, 0.0
        %vm2450 = vcmp.ge.f32.partialorder %v2390, 0.0
        %vm2451 = vcmp.ge.f32.partialorder %v2393, 0.0
        %vm2452 = vcmp.ge.f32.partialorder %v2398, 0.0
        %vm2453 = vcmp.ge.f32.partialorder %v2401, 0.0
        %vm2454 = vcmp.ge.f32.partialorder %v2406, 0.0
        %vm2455 = vcmp.ge.f32.partialorder %v2409, 0.0
        %vm2456 = vcmp.ge.f32.partialorder %v2414, 0.0
        %vm2457 = vcmp.ge.f32.partialorder %v2417, 0.0
        %vm2458 = vcmp.ge.f32.partialorder %v2422, 0.0
        %vm2459 = vcmp.ge.f32.partialorder %v2425, 0.0
        %v2460 = vmul.f32 %v2302, 0.1
        %v2461 = vmul.f32 %v2305, 0.1
        %v2462 = vmul.f32 %v2310, 0.1
        %v2463 = vmul.f32 %v2313, 0.1
        %v2464 = vmul.f32 %v2318, 0.1
        %v2465 = vmul.f32 %v2321, 0.1
        %v2466 = vmul.f32 %v2326, 0.1
        %v2467 = vmul.f32 %v2329, 0.1
        %v2468 = vmul.f32 %v2334, 0.1
        %v2469 = vmul.f32 %v2337, 0.1
        %v2470 = vmul.f32 %v2342, 0.1
        %v2471 = vmul.f32 %v2345, 0.1
        %v2472 = vmul.f32 %v2350, 0.1
        %v2473 = vmul.f32 %v2353, 0.1
        %v2474 = vmul.f32 %v2358, 0.1
        %v2475 = vmul.f32 %v2361, 0.1
        %v2476 = vmul.f32 %v2366, 0.1
        %v2477 = vmul.f32 %v2369, 0.1
        %v2478 = vmul.f32 %v2374, 0.1
        %v2479 = vmul.f32 %v2377, 0.1
        %v2480 = vmul.f32 %v2382, 0.1
        %v2481 = vmul.f32 %v2385, 0.1
        %v2482 = vmul.f32 %v2390, 0.1
        %v2483 = vmul.f32 %v2393, 0.1
        %v2484 = vmul.f32 %v2398, 0.1
        %v2485 = vmul.f32 %v2401, 0.1
        %v2486 = vmul.f32 %v2406, 0.1
        %v2487 = vmul.f32 %v2409, 0.1
        %v2488 = vmul.f32 %v2414, 0.1
        %v2489 = vmul.f32 %v2417, 0.1
        %v2490 = vmul.f32 %v2422, 0.1
        %v2491 = vmul.f32 %v2425, 0.1
        %v2492 = vsel %vm2428, %v2302, %v2460
        %v2493 = vsel %vm2429, %v2305, %v2461
        %v2494 = vsel %vm2430, %v2310, %v2462
        %v2495 = vsel %vm2431, %v2313, %v2463
        %v2496 = vsel %vm2432, %v2318, %v2464
        %v2497 = vsel %vm2433, %v2321, %v2465
        %v2498 = vsel %vm2434, %v2326, %v2466
        %v2499 = vsel %vm2435, %v2329, %v2467
        %v2500 = vsel %vm2436, %v2334, %v2468
        %v2501 = vsel %vm2437, %v2337, %v2469
        %v2502 = vsel %vm2438, %v2342, %v2470
        %v2503 = vsel %vm2439, %v2345, %v2471
        %v2504 = vsel %vm2440, %v2350, %v2472
        %v2505 = vsel %vm2441, %v2353, %v2473
        %v2506 = vsel %vm2442, %v2358, %v2474
        %v2507 = vsel %vm2443, %v2361, %v2475
        %v2508 = vsel %vm2444, %v2366, %v2476
        %v2509 = vsel %vm2445, %v2369, %v2477
        %v2510 = vsel %vm2446, %v2374, %v2478
        %v2511 = vsel %vm2447, %v2377, %v2479
        %v2512 = vsel %vm2448, %v2382, %v2480
        %v2513 = vsel %vm2449, %v2385, %v2481
        %v2514 = vsel %vm2450, %v2390, %v2482
        %v2515 = vsel %vm2451, %v2393, %v2483
        %v2516 = vsel %vm2452, %v2398, %v2484
        %v2517 = vsel %vm2453, %v2401, %v2485
        %v2518 = vsel %vm2454, %v2406, %v2486
        %v2519 = vsel %vm2455, %v2409, %v2487
        %v2520 = vsel %vm2456, %v2414, %v2488
        %v2521 = vsel %vm2457, %v2417, %v2489
        %v2522 = vsel %vm2458, %v2422, %v2490
        %v2523 = vsel %vm2459, %v2425, %v2491
        %2524 = vst [vmem:[%s187] sm:$0xff] %v2492
        %2525 = vst [vmem:[%s187 + $0x8] sm:$0xff] %v2493
        %2526 = vst [vmem:[%s187 + $0x10] sm:$0xff] %v2494
        %2527 = vst [vmem:[%s187 + $0x18] sm:$0xff] %v2495
        %2528 = vst [vmem:[%s187 + $0x20] sm:$0xff] %v2496
        %2529 = vst [vmem:[%s187 + $0x28] sm:$0xff] %v2497
        %2530 = vst [vmem:[%s187 + $0x30] sm:$0xff] %v2498
        %2531 = vst [vmem:[%s187 + $0x38] sm:$0xff] %v2499
        %2532 = vst [vmem:[%s187 + $0x40] sm:$0xff] %v2500
        %2533 = vst [vmem:[%s187 + $0x48] sm:$0xff] %v2501
        %2534 = vst [vmem:[%s187 + $0x50] sm:$0xff] %v2502
        %2535 = vst [vmem:[%s187 + $0x58] sm:$0xff] %v2503
        %2536 = vst [vmem:[%s187 + $0x60] sm:$0xff] %v2504
        %2537 = vst [vmem:[%s187 + $0x68] sm:$0xff] %v2505
        %2538 = vst [vmem:[%s187 + $0x70] sm:$0xff] %v2506
        %2539 = vst [vmem:[%s187 + $0x78] sm:$0xff] %v2507
        %2540 = vst [vmem:[%s187 + $0x80] sm:$0xff] %v2508
        %2541 = vst [vmem:[%s187 + $0x88] sm:$0xff] %v2509
        %2542 = vst [vmem:[%s187 + $0x90] sm:$0xff] %v2510
        %2543 = vst [vmem:[%s187 + $0x98] sm:$0xff] %v2511
        %2544 = vst [vmem:[%s187 + $0xa0] sm:$0xff] %v2512
        %2545 = vst [vmem:[%s187 + $0xa8] sm:$0xff] %v2513
        %2546 = vst [vmem:[%s187 + $0xb0] sm:$0xff] %v2514
        %2547 = vst [vmem:[%s187 + $0xb8] sm:$0xff] %v2515
        %2548 = vst [vmem:[%s187 + $0xc0] sm:$0xff] %v2516
        %2549 = vst [vmem:[%s187 + $0xc8] sm:$0xff] %v2517
        %2550 = vst [vmem:[%s187 + $0xd0] sm:$0xff] %v2518
        %2551 = vst [vmem:[%s187 + $0xd8] sm:$0xff] %v2519
        %2552 = vst [vmem:[%s187 + $0xe0] sm:$0xff] %v2520
        %2553 = vst [vmem:[%s187 + $0xe8] sm:$0xff] %v2521
        %2554 = vst [vmem:[%s187 + $0xf0] sm:$0xff] %v2522
        %2555 = vst [vmem:[%s187 + $0xf8] sm:$0xff] %v2523
        %s2556 = sand.u32 %s109, 1
        %s2557 = scalar_lea.sflag [#allocation3], %s2556
        %s2558 = sand.u32 %s109, 1
        %s2559 = smul.addr %s2558, 256
        %s2560 = scalar_lea.vmem [#allocation2], %s2559
        // Predicated region
        $region33: #{tpu_custom_call.1} parent=31 // pred_check
          %p2561 = pneg %p119
        $region34: #{tpu_custom_call.1} parent=31 // pred_check_branch
          %2563 = sbr.rel (%p2561) target = $region36
        $region35: #{tpu_custom_call.1} parent=31 // pred_region
          %s2565 = ssub.s32 4096, 4096
          %2566 = vsyncadd %s2557, %s2565
          %s2567 = smul.addr %s22, 32
          %s2568 = smul.addr %s21, 32
          %s2569 = sadd.s32 %s2567, %s2568
          %s2570 = smul.addr %s2569, 128
          %s2571 = scalar_lea.hbm %s3, %s2570
          %s2572 = sshll.u32 %s2560, 4
          %s2573 = int_to_ptr.vmem [resolvable:$true] %s2572
          %2578 = dma.vmem_to_hbm [thread:$0]  %s2573, 4096, %s2571, %s2557, 128, 128, 8
        $region36: #{tpu_custom_call.1} parent=31 // pred_fallthru
          _
      $region32: #{tpu_custom_call.1} parent=5 // pred_fallthru
        _
      %p2579 = scmp.le.s32.totalorder 2, %s12
      // Predicated region
      $region37: #{tpu_custom_call.1} parent=5 // pred_check
        %p2580 = pneg %p2579
      $region38: #{tpu_custom_call.1} parent=5 // pred_check_branch
        %2582 = sbr.rel (%p2580) target = $region40
      $region39: #{tpu_custom_call.1} parent=5 // pred_region
        %s2583 = ssub.s32 %s12, 2
        // Predicated region
        $region41: #{tpu_custom_call.1} parent=39 // pred_check
          %p2584 = pneg %p125
        $region42: #{tpu_custom_call.1} parent=39 // pred_check_branch
          %2586 = sbr.rel (%p2584) target = $region44
        $region43: #{tpu_custom_call.1} parent=39 // pred_region
          %s2587 = sand.u32 %s110, 1
          %s2588 = scalar_lea.sflag [#allocation3], %s2587
          %s2589 = sand.u32 %s110, 1
          %s2590 = smul.addr %s2589, 256
          %s2591 = scalar_lea.vmem [#allocation2], %s2590
          %2592 = dma.done %s2588, 4096
        $region44: #{tpu_custom_call.1} parent=39 // pred_fallthru
          _
      $region40: #{tpu_custom_call.1} parent=5 // pred_fallthru
        _
    $region6: #{tpu_custom_call.1} parent=1 // loop_footer
      %s16 = sadd.s32 1, %s12
    $region7: #{tpu_custom_call.1} parent=1 // loop_footer_branch
      %11 = sbr.rel target = $region3
    $region8: #{tpu_custom_call.1} parent=1 // loop_exit
      _
    %2593 = vsyncpa [#allocation3], 1
    %s2594 = scalar_lea.sflag [#allocation3], 1
    %2595 = vsyncpa %s2594, 1

// kernel: tpu_custom_call.1
$region0: #{tpu_custom_call.1}
  #allocation0 [shape = 'u32[]', space=smem, size = 0x4, offset = 0x4, fixed_abs, tag = 'smem constant byte address 0x4 - core index']
  #allocation1 [shape = 'u32[144,128]{1,0:T(1,128)}', space=vmem, size = 0x12000, scoped, tag = 'internal scratch']
  %s0 = inlined_call_operand.vmem [shape: bf16[2,1,18,18,8], index: 0, kind: input, shape index: {}]
  %s1 = inlined_call_operand.vmem [shape: bf16[128,128], index: 1, kind: input, shape index: {}]
  %s2 = inlined_call_operand.vmem [shape: f32[1,128], index: 2, kind: input, shape index: {}]
  %s3 = inlined_call_operand.hbm [shape: f32[2,1,256,128], index: 3, kind: output, shape index: {}]
  %s4 = sld [smem:[#allocation0]]
  $region45: #{tpu_custom_call.1} parent=0
    _
  %s6 = ssub.s32 1, %s4
  %s7 = scalar_select 0, %s6, %s4
  $region1: #{tpu_custom_call.1} parent=0
    #allocation2 [shape = 'u8[262144]{0}', space=vmem, size = 0x40000, scoped, tag = 'output window, operand 0']
    #allocation3 [shape = 's32[2]{0}', space=sflag, size = 0x8, scoped, tag = 'scoped memory for tpu_custom_call.1']
    %8 = vsyncpa [#allocation3], 0
    %s9 = scalar_lea.sflag [#allocation3], 1
    %10 = vsyncpa %s9, 0
    loop: start=0, step=1, limit=4
    $region2: #{tpu_custom_call.1} parent=1 // loop_pre_header
      _
    $region3: #{tpu_custom_call.1} parent=1 // loop_header
      %s12 = sphi 0, %s16
      %p13 = scmp.ge.s32.totalorder %s12, 4
      %s19 = sphi 0, %s31
      %s20 = sphi 0, %s27
      %s21 = sphi 0, %s19
      %s22 = sphi 0, %s20
      %s23 = sphi 0, %s21
      %s24 = sphi 0, %s22
      %s36 = sphi 0, %s38
      %s39 = sphi 0, %s36
      %s40 = sphi 0, %s39
      %s56 = sphi 0, %s40
      %s60 = sphi 0, %s60
      %s62 = sphi 0, %s60
      %s63 = sphi 0, %s62
      %s77 = sphi 0, %s63
      %s81 = sphi 0, %s81
      %s83 = sphi 0, %s81
      %s84 = sphi 0, %s83
      %s98 = sphi 0, %s84
      %s106 = sphi 0, %s108
      %s109 = sphi 0, %s106
      %s110 = sphi 0, %s109
      %s126 = sphi 0, %s110
    $region4: #{tpu_custom_call.1} parent=1 // loop_header_branch
      %15 = sbr.rel (%p13) target = $region8
    $region5: #{tpu_custom_call.1} parent=1 // loop_body
      %s17 = ssub.s32 %s12, 1
      %s18 = ssub.s32 %s12, 2
      %s25 = sadd.s32 1, %s20
      %p26 = scmp.ge.s32.totalorder %s25, 1
      %s27 = scalar_select %p26, 0, %s25
      %s28 = sadd.s32 1, %s19
      %s29 = scalar_select %p26, %s28, %s19
      %p30 = scmp.ge.s32.totalorder %s29, 2
      %s31 = scalar_select %p30, 0, %s29
      %s32 = ssub.s32 %s19, %s31
      %s33 = ssub.s32 %s20, %s27
      %s34 = sor.u32 %s32, %s33
      %p35 = scmp.eq.s32.totalorder %s34, 0
      %s37 = sadd.s32 %s36, 1
      %s38 = scalar_select %p35, %s36, %s37
      %p41 = pneg %p35
      %p42 = scmp.eq.s32.totalorder %s12, 1
      %p43 = por %p41, %p42
      %p44 = scmp.ne.s32.totalorder %s36, %s39
      %p45 = scmp.eq.s32.totalorder %s12, 0
      %p46 = por %p44, %p45
      %p47 = scmp.ne.s32.totalorder %s36, %s39
      %p48 = scmp.eq.s32.totalorder %s17, 1
      %p49 = por %p47, %p48
      %p50 = scmp.ne.s32.totalorder %s39, %s40
      %p51 = scmp.eq.s32.totalorder %s17, 0
      %p52 = por %p50, %p51
      %p53 = scmp.ne.s32.totalorder %s39, %s40
      %p54 = scmp.eq.s32.totalorder %s18, 1
      %p55 = por %p53, %p54
      %p57 = scmp.ne.s32.totalorder %s40, %s56
      %p58 = scmp.eq.s32.totalorder %s18, 0
      %p59 = por %p57, %p58
      %s61 = sadd.s32 %s60, 1
      %p64 = scmp.eq.s32.totalorder %s12, 1
      %p65 = scmp.ne.s32.totalorder %s60, %s62
      %p66 = scmp.eq.s32.totalorder %s12, 0
      %p67 = por %p65, %p66
      %p68 = scmp.ne.s32.totalorder %s60, %s62
      %p69 = scmp.eq.s32.totalorder %s17, 1
      %p70 = por %p68, %p69
      %p71 = scmp.ne.s32.totalorder %s62, %s63
      %p72 = scmp.eq.s32.totalorder %s17, 0
      %p73 = por %p71, %p72
      %p74 = scmp.ne.s32.totalorder %s62, %s63
      %p75 = scmp.eq.s32.totalorder %s18, 1
      %p76 = por %p74, %p75
      %p78 = scmp.ne.s32.totalorder %s63, %s77
      %p79 = scmp.eq.s32.totalorder %s18, 0
      %p80 = por %p78, %p79
      %s82 = sadd.s32 %s81, 1
      %p85 = scmp.eq.s32.totalorder %s12, 1
      %p86 = scmp.ne.s32.totalorder %s81, %s83
      %p87 = scmp.eq.s32.totalorder %s12, 0
      %p88 = por %p86, %p87
      %p89 = scmp.ne.s32.totalorder %s81, %s83
      %p90 = scmp.eq.s32.totalorder %s17, 1
      %p91 = por %p89, %p90
      %p92 = scmp.ne.s32.totalorder %s83, %s84
      %p93 = scmp.eq.s32.totalorder %s17, 0
      %p94 = por %p92, %p93
      %p95 = scmp.ne.s32.totalorder %s83, %s84
      %p96 = scmp.eq.s32.totalorder %s18, 1
      %p97 = por %p95, %p96
      %p99 = scmp.ne.s32.totalorder %s84, %s98
      %p100 = scmp.eq.s32.totalorder %s18, 0
      %p101 = por %p99, %p100
      %s102 = ssub.s32 %s19, %s31
      %s103 = ssub.s32 %s20, %s27
      %s104 = sor.u32 %s102, %s103
      %p105 = scmp.eq.s32.totalorder %s104, 0
      %s107 = sadd.s32 %s106, 1
      %s108 = scalar_select %p105, %s106, %s107
      %p111 = pneg %p105
      %p112 = scmp.eq.s32.totalorder %s12, 1
      %p113 = por %p111, %p112
      %p114 = scmp.ne.s32.totalorder %s106, %s109
      %p115 = scmp.eq.s32.totalorder %s12, 0
      %p116 = por %p114, %p115
      %p117 = scmp.ne.s32.totalorder %s106, %s109
      %p118 = scmp.eq.s32.totalorder %s17, 1
      %p119 = por %p117, %p118
      %p120 = scmp.ne.s32.totalorder %s109, %s110
      %p121 = scmp.eq.s32.totalorder %s17, 0
      %p122 = por %p120, %p121
      %p123 = scmp.ne.s32.totalorder %s109, %s110
      %p124 = scmp.eq.s32.totalorder %s18, 1
      %p125 = por %p123, %p124
      %p127 = scmp.ne.s32.totalorder %s110, %s126
      %p128 = scmp.eq.s32.totalorder %s18, 0
      %p129 = por %p127, %p128
      %p130 = scmp.le.s32.totalorder 1, %s12
      %p131 = scmp.lt.s32.totalorder %s12, 3
      %p132 = pnand %p130, %p131
      %p133 = pneg %p132
      // Predicated region
      $region9: #{tpu_custom_call.1} parent=5 // pred_check
        _
      $region10: #{tpu_custom_call.1} parent=5 // pred_check_branch
        %135 = sbr.rel (%p132) target = $region12
      $region11: #{tpu_custom_call.1} parent=5 // pred_region
        %s136 = ssub.s32 %s12, 1
        // Predicated region
        $region13: #{tpu_custom_call.1} parent=11 // pred_check
          %p137 = pneg %p73
        $region14: #{tpu_custom_call.1} parent=11 // pred_check_branch
          %139 = sbr.rel (%p137) target = $region16
        $region15: #{tpu_custom_call.1} parent=11 // pred_region
          _
        $region16: #{tpu_custom_call.1} parent=11 // pred_fallthru
          _
        // Predicated region
        $region17: #{tpu_custom_call.1} parent=11 // pred_check
          %p140 = pneg %p94
        $region18: #{tpu_custom_call.1} parent=11 // pred_check_branch
          %142 = sbr.rel (%p140) target = $region20
        $region19: #{tpu_custom_call.1} parent=11 // pred_region
          _
        $region20: #{tpu_custom_call.1} parent=11 // pred_fallthru
          _
      $region12: #{tpu_custom_call.1} parent=5 // pred_fallthru
        _
      %p143 = scmp.lt.s32.totalorder %s12, 2
      // Predicated region
      $region21: #{tpu_custom_call.1} parent=5 // pred_check
        %p144 = pneg %p143
      $region22: #{tpu_custom_call.1} parent=5 // pred_check_branch
        %146 = sbr.rel (%p144) target = $region24
      $region23: #{tpu_custom_call.1} parent=5 // pred_region
        // Predicated region
        $region25: #{tpu_custom_call.1} parent=23 // pred_check
          %p147 = pneg %p46
        $region26: #{tpu_custom_call.1} parent=23 // pred_check_branch
          %149 = sbr.rel (%p147) target = $region28
        $region27: #{tpu_custom_call.1} parent=23 // pred_region
          %p150 = scmp.lt.s32.totalorder %s19, 1
          %s151 = scalar_select %p150, %s19, 1
          %p152 = scmp.lt.s32.totalorder %s20, 0
          %s153 = scalar_select %p152, %s20, 0
          %s154 = smul.addr %s153, 54
          %s155 = smul.addr %s151, 54
          %s156 = sadd.s32 %s154, %s155
          %s157 = smul.addr %s156, 4
          %s158 = scalar_lea.vmem %s0, %s157
        $region28: #{tpu_custom_call.1} parent=23 // pred_fallthru
          _
      $region24: #{tpu_custom_call.1} parent=5 // pred_fallthru
        _
      %p159 = scmp.le.s32.totalorder 1, %s12
      %p160 = scmp.lt.s32.totalorder %s12, 3
      %p161 = pnand %p159, %p160
      %p162 = pneg %p161
      // Predicated region
      $region29: #{tpu_custom_call.1} parent=5 // pred_check
        _
      $region30: #{tpu_custom_call.1} parent=5 // pred_check_branch
        %164 = sbr.rel (%p161) target = $region32
      $region31: #{tpu_custom_call.1} parent=5 // pred_region
        %s165 = ssub.s32 %s12, 1
        %p166 = scmp.lt.s32.totalorder %s21, 1
        %s167 = scalar_select %p166, %s21, 1
        %p168 = scmp.lt.s32.totalorder %s22, 0
        %s169 = scalar_select %p168, %s22, 0
        %s170 = smul.addr %s169, 54
        %s171 = smul.addr %s167, 54
        %s172 = sadd.s32 %s170, %s171
        %s173 = smul.addr %s172, 4
        %s174 = scalar_lea.vmem %s0, %s173
        %p175 = pneg %p52
        %p176 = pneg %p49
        %p177 = pneg %p73
        %p178 = pneg %p70
        %p179 = pneg %p94
        %p180 = pneg %p91
        %p181 = pneg %p122
        %p182 = pneg %p119
        %s183 = sand.u32 %s109, 1
        %s184 = scalar_lea.sflag [#allocation3], %s183
        %s185 = sand.u32 %s109, 1
        %s186 = smul.addr %s185, 256
        %s187 = scalar_lea.vmem [#allocation2], %s186
        %p188 = scmp.lt.s32.totalorder %s21, 1
        %s189 = scalar_select %p188, %s21, 1
        %p190 = scmp.lt.s32.totalorder %s22, 0
        %s191 = scalar_select %p190, %s22, 0
        %s192 = smul.addr %s191, 54
        %s193 = smul.addr %s189, 54
        %s194 = sadd.s32 %s192, %s193
        %s195 = smul.addr %s194, 4
        %s196 = scalar_lea.vmem %s0, %s195
        %v198 = vld [vmem:[%s196] sm:$0xf]
        %v199 = vld [vmem:[%s196 + $0x4] sm:$0xf]
        %v200 = vld [vmem:[%s196 + $0xc] sm:$0xf]
        %v201 = vld [vmem:[%s196 + $0x10] sm:$0xf]
        %v202 = vld [vmem:[%s196 + $0x18] sm:$0xf]
        %v203 = vld [vmem:[%s196 + $0x1c] sm:$0xf]
        %v204 = vld [vmem:[%s196 + $0x24] sm:$0xf]
        %v205 = vld [vmem:[%s196 + $0x28] sm:$0xf]
        %v206 = vld [vmem:[%s196 + $0x30] sm:$0xf]
        %v207 = vld [vmem:[%s196 + $0x34] sm:$0xf]
        %v208 = vld [vmem:[%s196 + $0x3c] sm:$0xf]
        %v209 = vld [vmem:[%s196 + $0x40] sm:$0xf]
        %v210 = vld [vmem:[%s196 + $0x48] sm:$0xf]
        %v211 = vld [vmem:[%s196 + $0x4c] sm:$0xf]
        %v212 = vld [vmem:[%s196 + $0x54] sm:$0xf]
        %v213 = vld [vmem:[%s196 + $0x58] sm:$0xf]
        %v214 = vld [vmem:[%s196 + $0x60] sm:$0xf]
        %v215 = vld [vmem:[%s196 + $0x64] sm:$0xf]
        %v216 = vld [vmem:[%s196 + $0x6c] sm:$0xf]
        %v217 = vld [vmem:[%s196 + $0x70] sm:$0xf]
        %v218 = vld [vmem:[%s196 + $0x78] sm:$0xf]
        %v219 = vld [vmem:[%s196 + $0x7c] sm:$0xf]
        %v220 = vld [vmem:[%s196 + $0x84] sm:$0xf]
        %v221 = vld [vmem:[%s196 + $0x88] sm:$0xf]
        %v222 = vld [vmem:[%s196 + $0x90] sm:$0xf]
        %v223 = vld [vmem:[%s196 + $0x94] sm:$0xf]
        %v224 = vld [vmem:[%s196 + $0x9c] sm:$0xf]
        %v225 = vld [vmem:[%s196 + $0xa0] sm:$0xf]
        %v226 = vld [vmem:[%s196 + $0xa8] sm:$0xf]
        %v227 = vld [vmem:[%s196 + $0xac] sm:$0xf]
        %v228 = vld [vmem:[%s196 + $0xb4] sm:$0xf]
        %v229 = vld [vmem:[%s196 + $0xb8] sm:$0xf]
        %v230 = vld [vmem:[%s196 + $0x8] sm:$0x1]
        %v231 = vld [vmem:[%s196 + $0x14] sm:$0x1]
        %v232 = vld [vmem:[%s196 + $0x20] sm:$0x1]
        %v233 = vld [vmem:[%s196 + $0x2c] sm:$0x1]
        %v234 = vld [vmem:[%s196 + $0x38] sm:$0x1]
        %v235 = vld [vmem:[%s196 + $0x44] sm:$0x1]
        %v236 = vld [vmem:[%s196 + $0x50] sm:$0x1]
        %v237 = vld [vmem:[%s196 + $0x5c] sm:$0x1]
        %v238 = vld [vmem:[%s196 + $0x68] sm:$0x1]
        %v239 = vld [vmem:[%s196 + $0x74] sm:$0x1]
        %v240 = vld [vmem:[%s196 + $0x80] sm:$0x1]
        %v241 = vld [vmem:[%s196 + $0x8c] sm:$0x1]
        %v242 = vld [vmem:[%s196 + $0x98] sm:$0x1]
        %v243 = vld [vmem:[%s196 + $0xa4] sm:$0x1]
        %v244 = vld [vmem:[%s196 + $0xb0] sm:$0x1]
        %v245 = vld [vmem:[%s196 + $0xbc] sm:$0x1]
        %v246 = vld [vmem:[%s196] sm:$0xe]
        %v247 = vld [vmem:[%s196 + $0xc] sm:$0xe]
        %v248 = vld [vmem:[%s196 + $0x18] sm:$0xe]
        %v249 = vld [vmem:[%s196 + $0x24] sm:$0xe]
        %v250 = vld [vmem:[%s196 + $0x30] sm:$0xe]
        %v251 = vld [vmem:[%s196 + $0x3c] sm:$0xe]
        %v252 = vld [vmem:[%s196 + $0x48] sm:$0xe]
        %v253 = vld [vmem:[%s196 + $0x54] sm:$0xe]
        %v254 = vld [vmem:[%s196 + $0x60] sm:$0xe]
        %v255 = vld [vmem:[%s196 + $0x6c] sm:$0xe]
        %v256 = vld [vmem:[%s196 + $0x78] sm:$0xe]
        %v257 = vld [vmem:[%s196 + $0x84] sm:$0xe]
        %v258 = vld [vmem:[%s196 + $0x90] sm:$0xe]
        %v259 = vld [vmem:[%s196 + $0x9c] sm:$0xe]
        %v260 = vld [vmem:[%s196 + $0xa8] sm:$0xe]
        %v261 = vld [vmem:[%s196 + $0xb4] sm:$0xe]
        %s262 = scalar_lea.vmem %s196, 12
        %v263 = vld [vmem:[%s262] sm:$0xf]
        %v264 = vld [vmem:[%s262 + $0x4] sm:$0xf]
        %v265 = vld [vmem:[%s262 + $0xc] sm:$0xf]
        %v266 = vld [vmem:[%s262 + $0x10] sm:$0xf]
        %v267 = vld [vmem:[%s262 + $0x18] sm:$0xf]
        %v268 = vld [vmem:[%s262 + $0x1c] sm:$0xf]
        %v269 = vld [vmem:[%s262 + $0x24] sm:$0xf]
        %v270 = vld [vmem:[%s262 + $0x28] sm:$0xf]
        %v271 = vld [vmem:[%s262 + $0x30] sm:$0xf]
        %v272 = vld [vmem:[%s262 + $0x34] sm:$0xf]
        %v273 = vld [vmem:[%s262 + $0x3c] sm:$0xf]
        %v274 = vld [vmem:[%s262 + $0x40] sm:$0xf]
        %v275 = vld [vmem:[%s262 + $0x48] sm:$0xf]
        %v276 = vld [vmem:[%s262 + $0x4c] sm:$0xf]
        %v277 = vld [vmem:[%s262 + $0x54] sm:$0xf]
        %v278 = vld [vmem:[%s262 + $0x58] sm:$0xf]
        %v279 = vld [vmem:[%s262 + $0x60] sm:$0xf]
        %v280 = vld [vmem:[%s262 + $0x64] sm:$0xf]
        %v281 = vld [vmem:[%s262 + $0x6c] sm:$0xf]
        %v282 = vld [vmem:[%s262 + $0x70] sm:$0xf]
        %v283 = vld [vmem:[%s262 + $0x78] sm:$0xf]
        %v284 = vld [vmem:[%s262 + $0x7c] sm:$0xf]
        %v285 = vld [vmem:[%s262 + $0x84] sm:$0xf]
        %v286 = vld [vmem:[%s262 + $0x88] sm:$0xf]
        %v287 = vld [vmem:[%s262 + $0x90] sm:$0xf]
        %v288 = vld [vmem:[%s262 + $0x94] sm:$0xf]
        %v289 = vld [vmem:[%s262 + $0x9c] sm:$0xf]
        %v290 = vld [vmem:[%s262 + $0xa0] sm:$0xf]
        %v291 = vld [vmem:[%s262 + $0xa8] sm:$0xf]
        %v292 = vld [vmem:[%s262 + $0xac] sm:$0xf]
        %v293 = vld [vmem:[%s262 + $0xb4] sm:$0xf]
        %v294 = vld [vmem:[%s262 + $0xb8] sm:$0xf]
        %v295 = vld [vmem:[%s262 + $0x8] sm:$0x1]
        %v296 = vld [vmem:[%s262 + $0x14] sm:$0x1]
        %v297 = vld [vmem:[%s262 + $0x20] sm:$0x1]
        %v298 = vld [vmem:[%s262 + $0x2c] sm:$0x1]
        %v299 = vld [vmem:[%s262 + $0x38] sm:$0x1]
        %v300 = vld [vmem:[%s262 + $0x44] sm:$0x1]
        %v301 = vld [vmem:[%s262 + $0x50] sm:$0x1]
        %v302 = vld [vmem:[%s262 + $0x5c] sm:$0x1]
        %v303 = vld [vmem:[%s262 + $0x68] sm:$0x1]
        %v304 = vld [vmem:[%s262 + $0x74] sm:$0x1]
        %v305 = vld [vmem:[%s262 + $0x80] sm:$0x1]
        %v306 = vld [vmem:[%s262 + $0x8c] sm:$0x1]
        %v307 = vld [vmem:[%s262 + $0x98] sm:$0x1]
        %v308 = vld [vmem:[%s262 + $0xa4] sm:$0x1]
        %v309 = vld [vmem:[%s262 + $0xb0] sm:$0x1]
        %v310 = vld [vmem:[%s262 + $0xbc] sm:$0x1]
        %v311 = vld [vmem:[%s262] sm:$0xe]
        %v312 = vld [vmem:[%s262 + $0xc] sm:$0xe]
        %v313 = vld [vmem:[%s262 + $0x18] sm:$0xe]
        %v314 = vld [vmem:[%s262 + $0x24] sm:$0xe]
        %v315 = vld [vmem:[%s262 + $0x30] sm:$0xe]
        %v316 = vld [vmem:[%s262 + $0x3c] sm:$0xe]
        %v317 = vld [vmem:[%s262 + $0x48] sm:$0xe]
        %v318 = vld [vmem:[%s262 + $0x54] sm:$0xe]
        %v319 = vld [vmem:[%s262 + $0x60] sm:$0xe]
        %v320 = vld [vmem:[%s262 + $0x6c] sm:$0xe]
        %v321 = vld [vmem:[%s262 + $0x78] sm:$0xe]
        %v322 = vld [vmem:[%s262 + $0x84] sm:$0xe]
        %v323 = vld [vmem:[%s262 + $0x90] sm:$0xe]
        %v324 = vld [vmem:[%s262 + $0x9c] sm:$0xe]
        %v325 = vld [vmem:[%s262 + $0xa8] sm:$0xe]
        %v326 = vld [vmem:[%s262 + $0xb4] sm:$0xe]
        %s327 = scalar_lea.vmem %s196, 24
        %v328 = vld [vmem:[%s327] sm:$0xf]
        %v329 = vld [vmem:[%s327 + $0x4] sm:$0xf]
        %v330 = vld [vmem:[%s327 + $0xc] sm:$0xf]
        %v331 = vld [vmem:[%s327 + $0x10] sm:$0xf]
        %v332 = vld [vmem:[%s327 + $0x18] sm:$0xf]
        %v333 = vld [vmem:[%s327 + $0x1c] sm:$0xf]
        %v334 = vld [vmem:[%s327 + $0x24] sm:$0xf]
        %v335 = vld [vmem:[%s327 + $0x28] sm:$0xf]
        %v336 = vld [vmem:[%s327 + $0x30] sm:$0xf]
        %v337 = vld [vmem:[%s327 + $0x34] sm:$0xf]
        %v338 = vld [vmem:[%s327 + $0x3c] sm:$0xf]
        %v339 = vld [vmem:[%s327 + $0x40] sm:$0xf]
        %v340 = vld [vmem:[%s327 + $0x48] sm:$0xf]
        %v341 = vld [vmem:[%s327 + $0x4c] sm:$0xf]
        %v342 = vld [vmem:[%s327 + $0x54] sm:$0xf]
        %v343 = vld [vmem:[%s327 + $0x58] sm:$0xf]
        %v344 = vld [vmem:[%s327 + $0x60] sm:$0xf]
        %v345 = vld [vmem:[%s327 + $0x64] sm:$0xf]
        %v346 = vld [vmem:[%s327 + $0x6c] sm:$0xf]
        %v347 = vld [vmem:[%s327 + $0x70] sm:$0xf]
        %v348 = vld [vmem:[%s327 + $0x78] sm:$0xf]
        %v349 = vld [vmem:[%s327 + $0x7c] sm:$0xf]
        %v350 = vld [vmem:[%s327 + $0x84] sm:$0xf]
        %v351 = vld [vmem:[%s327 + $0x88] sm:$0xf]
        %v352 = vld [vmem:[%s327 + $0x90] sm:$0xf]
        %v353 = vld [vmem:[%s327 + $0x94] sm:$0xf]
        %v354 = vld [vmem:[%s327 + $0x9c] sm:$0xf]
        %v355 = vld [vmem:[%s327 + $0xa0] sm:$0xf]
        %v356 = vld [vmem:[%s327 + $0xa8] sm:$0xf]
        %v357 = vld [vmem:[%s327 + $0xac] sm:$0xf]
        %v358 = vld [vmem:[%s327 + $0xb4] sm:$0xf]
        %v359 = vld [vmem:[%s327 + $0xb8] sm:$0xf]
        %v360 = vld [vmem:[%s327 + $0x8] sm:$0x1]
        %v361 = vld [vmem:[%s327 + $0x14] sm:$0x1]
        %v362 = vld [vmem:[%s327 + $0x20] sm:$0x1]
        %v363 = vld [vmem:[%s327 + $0x2c] sm:$0x1]
        %v364 = vld [vmem:[%s327 + $0x38] sm:$0x1]
        %v365 = vld [vmem:[%s327 + $0x44] sm:$0x1]
        %v366 = vld [vmem:[%s327 + $0x50] sm:$0x1]
        %v367 = vld [vmem:[%s327 + $0x5c] sm:$0x1]
        %v368 = vld [vmem:[%s327 + $0x68] sm:$0x1]
        %v369 = vld [vmem:[%s327 + $0x74] sm:$0x1]
        %v370 = vld [vmem:[%s327 + $0x80] sm:$0x1]
        %v371 = vld [vmem:[%s327 + $0x8c] sm:$0x1]
        %v372 = vld [vmem:[%s327 + $0x98] sm:$0x1]
        %v373 = vld [vmem:[%s327 + $0xa4] sm:$0x1]
        %v374 = vld [vmem:[%s327 + $0xb0] sm:$0x1]
        %v375 = vld [vmem:[%s327 + $0xbc] sm:$0x1]
        %v376 = vld [vmem:[%s327] sm:$0xe]
        %v377 = vld [vmem:[%s327 + $0xc] sm:$0xe]
        %v378 = vld [vmem:[%s327 + $0x18] sm:$0xe]
        %v379 = vld [vmem:[%s327 + $0x24] sm:$0xe]
        %v380 = vld [vmem:[%s327 + $0x30] sm:$0xe]
        %v381 = vld [vmem:[%s327 + $0x3c] sm:$0xe]
        %v382 = vld [vmem:[%s327 + $0x48] sm:$0xe]
        %v383 = vld [vmem:[%s327 + $0x54] sm:$0xe]
        %v384 = vld [vmem:[%s327 + $0x60] sm:$0xe]
        %v385 = vld [vmem:[%s327 + $0x6c] sm:$0xe]
        %v386 = vld [vmem:[%s327 + $0x78] sm:$0xe]
        %v387 = vld [vmem:[%s327 + $0x84] sm:$0xe]
        %v388 = vld [vmem:[%s327 + $0x90] sm:$0xe]
        %v389 = vld [vmem:[%s327 + $0x9c] sm:$0xe]
        %v390 = vld [vmem:[%s327 + $0xa8] sm:$0xe]
        %v391 = vld [vmem:[%s327 + $0xb4] sm:$0xe]
        %v424 = vunpack.c.l.b16 %v198
        %v425 = vunpack.c.l.b16 %v199
        %v426 = vunpack.c.l.b16 %v200
        %v427 = vunpack.c.l.b16 %v201
        %v428 = vunpack.c.l.b16 %v202
        %v429 = vunpack.c.l.b16 %v203
        %v430 = vunpack.c.l.b16 %v204
        %v431 = vunpack.c.l.b16 %v205
        %v432 = vunpack.c.l.b16 %v206
        %v433 = vunpack.c.l.b16 %v207
        %v434 = vunpack.c.l.b16 %v208
        %v435 = vunpack.c.l.b16 %v209
        %v436 = vunpack.c.l.b16 %v210
        %v437 = vunpack.c.l.b16 %v211
        %v438 = vunpack.c.l.b16 %v212
        %v439 = vunpack.c.l.b16 %v213
        %v440 = vunpack.c.l.b16 %v214
        %v441 = vunpack.c.l.b16 %v215
        %v442 = vunpack.c.l.b16 %v216
        %v443 = vunpack.c.l.b16 %v217
        %v444 = vunpack.c.l.b16 %v218
        %v445 = vunpack.c.l.b16 %v219
        %v446 = vunpack.c.l.b16 %v220
        %v447 = vunpack.c.l.b16 %v221
        %v448 = vunpack.c.l.b16 %v222
        %v449 = vunpack.c.l.b16 %v223
        %v450 = vunpack.c.l.b16 %v224
        %v451 = vunpack.c.l.b16 %v225
        %v452 = vunpack.c.l.b16 %v226
        %v453 = vunpack.c.l.b16 %v227
        %v454 = vunpack.c.l.b16 %v228
        %v455 = vunpack.c.l.b16 %v229
        %v456 = vpack.c.b16 %v425, %v424
        %v457 = vpack.c.b16 %v427, %v426
        %v458 = vpack.c.b16 %v429, %v428
        %v459 = vpack.c.b16 %v431, %v430
        %v460 = vpack.c.b16 %v433, %v432
        %v461 = vpack.c.b16 %v435, %v434
        %v462 = vpack.c.b16 %v437, %v436
        %v463 = vpack.c.b16 %v439, %v438
        %v464 = vpack.c.b16 %v441, %v440
        %v465 = vpack.c.b16 %v443, %v442
        %v466 = vpack.c.b16 %v445, %v444
        %v467 = vpack.c.b16 %v447, %v446
        %v468 = vpack.c.b16 %v449, %v448
        %v469 = vpack.c.b16 %v451, %v450
        %v470 = vpack.c.b16 %v453, %v452
        %v471 = vpack.c.b16 %v455, %v454
        %v488 = vunpack.c.l.b16 %v230
        %v489 = vunpack.c.l.b16 %v231
        %v490 = vunpack.c.l.b16 %v232
        %v491 = vunpack.c.l.b16 %v233
        %v492 = vunpack.c.l.b16 %v234
        %v493 = vunpack.c.l.b16 %v235
        %v494 = vunpack.c.l.b16 %v236
        %v495 = vunpack.c.l.b16 %v237
        %v496 = vunpack.c.l.b16 %v238
        %v497 = vunpack.c.l.b16 %v239
        %v498 = vunpack.c.l.b16 %v240
        %v499 = vunpack.c.l.b16 %v241
        %v500 = vunpack.c.l.b16 %v242
        %v501 = vunpack.c.l.b16 %v243
        %v502 = vunpack.c.l.b16 %v244
        %v503 = vunpack.c.l.b16 %v245
        %v504 = vpack.c.b16 %v488, %v488
        %v505 = vpack.c.b16 %v489, %v489
        %v506 = vpack.c.b16 %v490, %v490
        %v507 = vpack.c.b16 %v491, %v491
        %v508 = vpack.c.b16 %v492, %v492
        %v509 = vpack.c.b16 %v493, %v493
        %v510 = vpack.c.b16 %v494, %v494
        %v511 = vpack.c.b16 %v495, %v495
        %v512 = vpack.c.b16 %v496, %v496
        %v513 = vpack.c.b16 %v497, %v497
        %v514 = vpack.c.b16 %v498, %v498
        %v515 = vpack.c.b16 %v499, %v499
        %v516 = vpack.c.b16 %v500, %v500
        %v517 = vpack.c.b16 %v501, %v501
        %v518 = vpack.c.b16 %v502, %v502
        %v519 = vpack.c.b16 %v503, %v503
        %vm520 = vsmask.f32 7424
        %v522 = vshrl.u32 %v456, 16
        %v524 = vshll.u32 %v456, 16
        %v526 = vrot.slane %v524, 1
        %v527 = vor.u32 %v522, %v526
        %v529 = vshll.u32 %v504, 16
        %v531 = vrot.slane %v529, 1
        %v532 = vsel %vm520, %v527, %v531
        %v534 = vshrl.u32 %v457, 16
        %v536 = vshll.u32 %v457, 16
        %v538 = vrot.slane %v536, 1
        %v539 = vor.u32 %v534, %v538
        %v541 = vshll.u32 %v505, 16
        %v543 = vrot.slane %v541, 1
        %v544 = vsel %vm520, %v539, %v543
        %v546 = vshrl.u32 %v458, 16
        %v548 = vshll.u32 %v458, 16
        %v550 = vrot.slane %v548, 1
        %v551 = vor.u32 %v546, %v550
        %v553 = vshll.u32 %v506, 16
        %v555 = vrot.slane %v553, 1
        %v556 = vsel %vm520, %v551, %v555
        %v558 = vshrl.u32 %v459, 16
        %v560 = vshll.u32 %v459, 16
        %v562 = vrot.slane %v560, 1
        %v563 = vor.u32 %v558, %v562
        %v565 = vshll.u32 %v507, 16
        %v567 = vrot.slane %v565, 1
        %v568 = vsel %vm520, %v563, %v567
        %v570 = vshrl.u32 %v460, 16
        %v572 = vshll.u32 %v460, 16
        %v574 = vrot.slane %v572, 1
        %v575 = vor.u32 %v570, %v574
        %v577 = vshll.u32 %v508, 16
        %v579 = vrot.slane %v577, 1
        %v580 = vsel %vm520, %v575, %v579
        %v582 = vshrl.u32 %v461, 16
        %v584 = vshll.u32 %v461, 16
        %v586 = vrot.slane %v584, 1
        %v587 = vor.u32 %v582, %v586
        %v589 = vshll.u32 %v509, 16
        %v591 = vrot.slane %v589, 1
        %v592 = vsel %vm520, %v587, %v591
        %v594 = vshrl.u32 %v462, 16
        %v596 = vshll.u32 %v462, 16
        %v598 = vrot.slane %v596, 1
        %v599 = vor.u32 %v594, %v598
        %v601 = vshll.u32 %v510, 16
        %v603 = vrot.slane %v601, 1
        %v604 = vsel %vm520, %v599, %v603
        %v606 = vshrl.u32 %v463, 16
        %v608 = vshll.u32 %v463, 16
        %v610 = vrot.slane %v608, 1
        %v611 = vor.u32 %v606, %v610
        %v613 = vshll.u32 %v511, 16
        %v615 = vrot.slane %v613, 1
        %v616 = vsel %vm520, %v611, %v615
        %v618 = vshrl.u32 %v464, 16
        %v620 = vshll.u32 %v464, 16
        %v622 = vrot.slane %v620, 1
        %v623 = vor.u32 %v618, %v622
        %v625 = vshll.u32 %v512, 16
        %v627 = vrot.slane %v625, 1
        %v628 = vsel %vm520, %v623, %v627
        %v630 = vshrl.u32 %v465, 16
        %v632 = vshll.u32 %v465, 16
        %v634 = vrot.slane %v632, 1
        %v635 = vor.u32 %v630, %v634
        %v637 = vshll.u32 %v513, 16
        %v639 = vrot.slane %v637, 1
        %v640 = vsel %vm520, %v635, %v639
        %v642 = vshrl.u32 %v466, 16
        %v644 = vshll.u32 %v466, 16
        %v646 = vrot.slane %v644, 1
        %v647 = vor.u32 %v642, %v646
        %v649 = vshll.u32 %v514, 16
        %v651 = vrot.slane %v649, 1
        %v652 = vsel %vm520, %v647, %v651
        %v654 = vshrl.u32 %v467, 16
        %v656 = vshll.u32 %v467, 16
        %v658 = vrot.slane %v656, 1
        %v659 = vor.u32 %v654, %v658
        %v661 = vshll.u32 %v515, 16
        %v663 = vrot.slane %v661, 1
        %v664 = vsel %vm520, %v659, %v663
        %v666 = vshrl.u32 %v468, 16
        %v668 = vshll.u32 %v468, 16
        %v670 = vrot.slane %v668, 1
        %v671 = vor.u32 %v666, %v670
        %v673 = vshll.u32 %v516, 16
        %v675 = vrot.slane %v673, 1
        %v676 = vsel %vm520, %v671, %v675
        %v678 = vshrl.u32 %v469, 16
        %v680 = vshll.u32 %v469, 16
        %v682 = vrot.slane %v680, 1
        %v683 = vor.u32 %v678, %v682
        %v685 = vshll.u32 %v517, 16
        %v687 = vrot.slane %v685, 1
        %v688 = vsel %vm520, %v683, %v687
        %v690 = vshrl.u32 %v470, 16
        %v692 = vshll.u32 %v470, 16
        %v694 = vrot.slane %v692, 1
        %v695 = vor.u32 %v690, %v694
        %v697 = vshll.u32 %v518, 16
        %v699 = vrot.slane %v697, 1
        %v700 = vsel %vm520, %v695, %v699
        %v702 = vshrl.u32 %v471, 16
        %v704 = vshll.u32 %v471, 16
        %v706 = vrot.slane %v704, 1
        %v707 = vor.u32 %v702, %v706
        %v709 = vshll.u32 %v519, 16
        %v711 = vrot.slane %v709, 1
        %v712 = vsel %vm520, %v707, %v711
        %713 = vrot.lane.b32.xlu0 %v532, 8
        %v714 = vpop.permute.xlu0 %713
        %715 = vrot.lane.b32.xlu0 %v544, 8
        %v716 = vpop.permute.xlu0 %715
        %717 = vrot.lane.b32.xlu0 %v556, 8
        %v718 = vpop.permute.xlu0 %717
        %719 = vrot.lane.b32.xlu0 %v568, 8
        %v720 = vpop.permute.xlu0 %719
        %721 = vrot.lane.b32.xlu0 %v580, 8
        %v722 = vpop.permute.xlu0 %721
        %723 = vrot.lane.b32.xlu0 %v592, 8
        %v724 = vpop.permute.xlu0 %723
        %725 = vrot.lane.b32.xlu0 %v604, 8
        %v726 = vpop.permute.xlu0 %725
        %727 = vrot.lane.b32.xlu0 %v616, 8
        %v728 = vpop.permute.xlu0 %727
        %729 = vrot.lane.b32.xlu0 %v628, 8
        %v730 = vpop.permute.xlu0 %729
        %731 = vrot.lane.b32.xlu0 %v640, 8
        %v732 = vpop.permute.xlu0 %731
        %733 = vrot.lane.b32.xlu0 %v652, 8
        %v734 = vpop.permute.xlu0 %733
        %735 = vrot.lane.b32.xlu0 %v664, 8
        %v736 = vpop.permute.xlu0 %735
        %737 = vrot.lane.b32.xlu0 %v676, 8
        %v738 = vpop.permute.xlu0 %737
        %739 = vrot.lane.b32.xlu0 %v688, 8
        %v740 = vpop.permute.xlu0 %739
        %741 = vrot.lane.b32.xlu0 %v700, 8
        %v742 = vpop.permute.xlu0 %741
        %743 = vrot.lane.b32.xlu0 %v712, 8
        %v744 = vpop.permute.xlu0 %743
        %v761 = vunpack.c.l.b16 %v246
        %v762 = vunpack.c.l.b16 %v247
        %v763 = vunpack.c.l.b16 %v248
        %v764 = vunpack.c.l.b16 %v249
        %v765 = vunpack.c.l.b16 %v250
        %v766 = vunpack.c.l.b16 %v251
        %v767 = vunpack.c.l.b16 %v252
        %v768 = vunpack.c.l.b16 %v253
        %v769 = vunpack.c.l.b16 %v254
        %v770 = vunpack.c.l.b16 %v255
        %v771 = vunpack.c.l.b16 %v256
        %v772 = vunpack.c.l.b16 %v257
        %v773 = vunpack.c.l.b16 %v258
        %v774 = vunpack.c.l.b16 %v259
        %v775 = vunpack.c.l.b16 %v260
        %v776 = vunpack.c.l.b16 %v261
        %v777 = vpack.c.b16 %v425, %v761
        %v778 = vpack.c.b16 %v427, %v762
        %v779 = vpack.c.b16 %v429, %v763
        %v780 = vpack.c.b16 %v431, %v764
        %v781 = vpack.c.b16 %v433, %v765
        %v782 = vpack.c.b16 %v435, %v766
        %v783 = vpack.c.b16 %v437, %v767
        %v784 = vpack.c.b16 %v439, %v768
        %v785 = vpack.c.b16 %v441, %v769
        %v786 = vpack.c.b16 %v443, %v770
        %v787 = vpack.c.b16 %v445, %v771
        %v788 = vpack.c.b16 %v447, %v772
        %v789 = vpack.c.b16 %v449, %v773
        %v790 = vpack.c.b16 %v451, %v774
        %v791 = vpack.c.b16 %v453, %v775
        %v792 = vpack.c.b16 %v455, %v776
        %vm793 = vcmask 1046528
        %v794 = vrot.slane %v777, 1
        %v795 = vrot.slane %v504, 1
        %v796 = vsel %vm793, %v794, %v795
        %v797 = vrot.slane %v778, 1
        %v798 = vrot.slane %v505, 1
        %v799 = vsel %vm793, %v797, %v798
        %v800 = vrot.slane %v779, 1
        %v801 = vrot.slane %v506, 1
        %v802 = vsel %vm793, %v800, %v801
        %v803 = vrot.slane %v780, 1
        %v804 = vrot.slane %v507, 1
        %v805 = vsel %vm793, %v803, %v804
        %v806 = vrot.slane %v781, 1
        %v807 = vrot.slane %v508, 1
        %v808 = vsel %vm793, %v806, %v807
        %v809 = vrot.slane %v782, 1
        %v810 = vrot.slane %v509, 1
        %v811 = vsel %vm793, %v809, %v810
        %v812 = vrot.slane %v783, 1
        %v813 = vrot.slane %v510, 1
        %v814 = vsel %vm793, %v812, %v813
        %v815 = vrot.slane %v784, 1
        %v816 = vrot.slane %v511, 1
        %v817 = vsel %vm793, %v815, %v816
        %v818 = vrot.slane %v785, 1
        %v819 = vrot.slane %v512, 1
        %v820 = vsel %vm793, %v818, %v819
        %v821 = vrot.slane %v786, 1
        %v822 = vrot.slane %v513, 1
        %v823 = vsel %vm793, %v821, %v822
        %v824 = vrot.slane %v787, 1
        %v825 = vrot.slane %v514, 1
        %v826 = vsel %vm793, %v824, %v825
        %v827 = vrot.slane %v788, 1
        %v828 = vrot.slane %v515, 1
        %v829 = vsel %vm793, %v827, %v828
        %v830 = vrot.slane %v789, 1
        %v831 = vrot.slane %v516, 1
        %v832 = vsel %vm793, %v830, %v831
        %v833 = vrot.slane %v790, 1
        %v834 = vrot.slane %v517, 1
        %v835 = vsel %vm793, %v833, %v834
        %v836 = vrot.slane %v791, 1
        %v837 = vrot.slane %v518, 1
        %v838 = vsel %vm793, %v836, %v837
        %v839 = vrot.slane %v792, 1
        %v840 = vrot.slane %v519, 1
        %v841 = vsel %vm793, %v839, %v840
        %842 = vrot.lane.b32.xlu0 %v796, 16
        %v843 = vpop.permute.xlu0 %842
        %844 = vrot.lane.b32.xlu0 %v799, 16
        %v845 = vpop.permute.xlu0 %844
        %846 = vrot.lane.b32.xlu0 %v802, 16
        %v847 = vpop.permute.xlu0 %846
        %848 = vrot.lane.b32.xlu0 %v805, 16
        %v849 = vpop.permute.xlu0 %848
        %850 = vrot.lane.b32.xlu0 %v808, 16
        %v851 = vpop.permute.xlu0 %850
        %852 = vrot.lane.b32.xlu0 %v811, 16
        %v853 = vpop.permute.xlu0 %852
        %854 = vrot.lane.b32.xlu0 %v814, 16
        %v855 = vpop.permute.xlu0 %854
        %856 = vrot.lane.b32.xlu0 %v817, 16
        %v857 = vpop.permute.xlu0 %856
        %858 = vrot.lane.b32.xlu0 %v820, 16
        %v859 = vpop.permute.xlu0 %858
        %860 = vrot.lane.b32.xlu0 %v823, 16
        %v861 = vpop.permute.xlu0 %860
        %862 = vrot.lane.b32.xlu0 %v826, 16
        %v863 = vpop.permute.xlu0 %862
        %864 = vrot.lane.b32.xlu0 %v829, 16
        %v865 = vpop.permute.xlu0 %864
        %866 = vrot.lane.b32.xlu0 %v832, 16
        %v867 = vpop.permute.xlu0 %866
        %868 = vrot.lane.b32.xlu0 %v835, 16
        %v869 = vpop.permute.xlu0 %868
        %870 = vrot.lane.b32.xlu0 %v838, 16
        %v871 = vpop.permute.xlu0 %870
        %872 = vrot.lane.b32.xlu0 %v841, 16
        %v873 = vpop.permute.xlu0 %872
        %v906 = vunpack.c.l.b16 %v263
        %v907 = vunpack.c.l.b16 %v264
        %v908 = vunpack.c.l.b16 %v265
        %v909 = vunpack.c.l.b16 %v266
        %v910 = vunpack.c.l.b16 %v267
        %v911 = vunpack.c.l.b16 %v268
        %v912 = vunpack.c.l.b16 %v269
        %v913 = vunpack.c.l.b16 %v270
        %v914 = vunpack.c.l.b16 %v271
        %v915 = vunpack.c.l.b16 %v272
        %v916 = vunpack.c.l.b16 %v273
        %v917 = vunpack.c.l.b16 %v274
        %v918 = vunpack.c.l.b16 %v275
        %v919 = vunpack.c.l.b16 %v276
        %v920 = vunpack.c.l.b16 %v277
        %v921 = vunpack.c.l.b16 %v278
        %v922 = vunpack.c.l.b16 %v279
        %v923 = vunpack.c.l.b16 %v280
        %v924 = vunpack.c.l.b16 %v281
        %v925 = vunpack.c.l.b16 %v282
        %v926 = vunpack.c.l.b16 %v283
        %v927 = vunpack.c.l.b16 %v284
        %v928 = vunpack.c.l.b16 %v285
        %v929 = vunpack.c.l.b16 %v286
        %v930 = vunpack.c.l.b16 %v287
        %v931 = vunpack.c.l.b16 %v288
        %v932 = vunpack.c.l.b16 %v289
        %v933 = vunpack.c.l.b16 %v290
        %v934 = vunpack.c.l.b16 %v291
        %v935 = vunpack.c.l.b16 %v292
        %v936 = vunpack.c.l.b16 %v293
        %v937 = vunpack.c.l.b16 %v294
        %v938 = vpack.c.b16 %v907, %v906
        %v939 = vpack.c.b16 %v909, %v908
        %v940 = vpack.c.b16 %v911, %v910
        %v941 = vpack.c.b16 %v913, %v912
        %v942 = vpack.c.b16 %v915, %v914
        %v943 = vpack.c.b16 %v917, %v916
        %v944 = vpack.c.b16 %v919, %v918
        %v945 = vpack.c.b16 %v921, %v920
        %v946 = vpack.c.b16 %v923, %v922
        %v947 = vpack.c.b16 %v925, %v924
        %v948 = vpack.c.b16 %v927, %v926
        %v949 = vpack.c.b16 %v929, %v928
        %v950 = vpack.c.b16 %v931, %v930
        %v951 = vpack.c.b16 %v933, %v932
        %v952 = vpack.c.b16 %v935, %v934
        %v953 = vpack.c.b16 %v937, %v936
        %954 = vrot.lane.b32.xlu0 %v938, 24
        %v955 = vpop.permute.xlu0 %954
        %956 = vrot.lane.b32.xlu0 %v939, 24
        %v957 = vpop.permute.xlu0 %956
        %958 = vrot.lane.b32.xlu0 %v940, 24
        %v959 = vpop.permute.xlu0 %958
        %960 = vrot.lane.b32.xlu0 %v941, 24
        %v961 = vpop.permute.xlu0 %960
        %962 = vrot.lane.b32.xlu0 %v942, 24
        %v963 = vpop.permute.xlu0 %962
        %964 = vrot.lane.b32.xlu0 %v943, 24
        %v965 = vpop.permute.xlu0 %964
        %966 = vrot.lane.b32.xlu0 %v944, 24
        %v967 = vpop.permute.xlu0 %966
        %968 = vrot.lane.b32.xlu0 %v945, 24
        %v969 = vpop.permute.xlu0 %968
        %970 = vrot.lane.b32.xlu0 %v946, 24
        %v971 = vpop.permute.xlu0 %970
        %972 = vrot.lane.b32.xlu0 %v947, 24
        %v973 = vpop.permute.xlu0 %972
        %974 = vrot.lane.b32.xlu0 %v948, 24
        %v975 = vpop.permute.xlu0 %974
        %976 = vrot.lane.b32.xlu0 %v949, 24
        %v977 = vpop.permute.xlu0 %976
        %978 = vrot.lane.b32.xlu0 %v950, 24
        %v979 = vpop.permute.xlu0 %978
        %980 = vrot.lane.b32.xlu0 %v951, 24
        %v981 = vpop.permute.xlu0 %980
        %982 = vrot.lane.b32.xlu0 %v952, 24
        %v983 = vpop.permute.xlu0 %982
        %984 = vrot.lane.b32.xlu0 %v953, 24
        %v985 = vpop.permute.xlu0 %984
        %v1002 = vunpack.c.l.b16 %v295
        %v1003 = vunpack.c.l.b16 %v296
        %v1004 = vunpack.c.l.b16 %v297
        %v1005 = vunpack.c.l.b16 %v298
        %v1006 = vunpack.c.l.b16 %v299
        %v1007 = vunpack.c.l.b16 %v300
        %v1008 = vunpack.c.l.b16 %v301
        %v1009 = vunpack.c.l.b16 %v302
        %v1010 = vunpack.c.l.b16 %v303
        %v1011 = vunpack.c.l.b16 %v304
        %v1012 = vunpack.c.l.b16 %v305
        %v1013 = vunpack.c.l.b16 %v306
        %v1014 = vunpack.c.l.b16 %v307
        %v1015 = vunpack.c.l.b16 %v308
        %v1016 = vunpack.c.l.b16 %v309
        %v1017 = vunpack.c.l.b16 %v310
        %v1018 = vpack.c.b16 %v1002, %v1002
        %v1019 = vpack.c.b16 %v1003, %v1003
        %v1020 = vpack.c.b16 %v1004, %v1004
        %v1021 = vpack.c.b16 %v1005, %v1005
        %v1022 = vpack.c.b16 %v1006, %v1006
        %v1023 = vpack.c.b16 %v1007, %v1007
        %v1024 = vpack.c.b16 %v1008, %v1008
        %v1025 = vpack.c.b16 %v1009, %v1009
        %v1026 = vpack.c.b16 %v1010, %v1010
        %v1027 = vpack.c.b16 %v1011, %v1011
        %v1028 = vpack.c.b16 %v1012, %v1012
        %v1029 = vpack.c.b16 %v1013, %v1013
        %v1030 = vpack.c.b16 %v1014, %v1014
        %v1031 = vpack.c.b16 %v1015, %v1015
        %v1032 = vpack.c.b16 %v1016, %v1016
        %v1033 = vpack.c.b16 %v1017, %v1017
        %v1035 = vshrl.u32 %v938, 16
        %v1037 = vshll.u32 %v938, 16
        %v1039 = vrot.slane %v1037, 1
        %v1040 = vor.u32 %v1035, %v1039
        %v1042 = vshll.u32 %v1018, 16
        %v1044 = vrot.slane %v1042, 1
        %v1045 = vsel %vm520, %v1040, %v1044
        %v1047 = vshrl.u32 %v939, 16
        %v1049 = vshll.u32 %v939, 16
        %v1051 = vrot.slane %v1049, 1
        %v1052 = vor.u32 %v1047, %v1051
        %v1054 = vshll.u32 %v1019, 16
        %v1056 = vrot.slane %v1054, 1
        %v1057 = vsel %vm520, %v1052, %v1056
        %v1059 = vshrl.u32 %v940, 16
        %v1061 = vshll.u32 %v940, 16
        %v1063 = vrot.slane %v1061, 1
        %v1064 = vor.u32 %v1059, %v1063
        %v1066 = vshll.u32 %v1020, 16
        %v1068 = vrot.slane %v1066, 1
        %v1069 = vsel %vm520, %v1064, %v1068
        %v1071 = vshrl.u32 %v941, 16
        %v1073 = vshll.u32 %v941, 16
        %v1075 = vrot.slane %v1073, 1
        %v1076 = vor.u32 %v1071, %v1075
        %v1078 = vshll.u32 %v1021, 16
        %v1080 = vrot.slane %v1078, 1
        %v1081 = vsel %vm520, %v1076, %v1080
        %v1083 = vshrl.u32 %v942, 16
        %v1085 = vshll.u32 %v942, 16
        %v1087 = vrot.slane %v1085, 1
        %v1088 = vor.u32 %v1083, %v1087
        %v1090 = vshll.u32 %v1022, 16
        %v1092 = vrot.slane %v1090, 1
        %v1093 = vsel %vm520, %v1088, %v1092
        %v1095 = vshrl.u32 %v943, 16
        %v1097 = vshll.u32 %v943, 16
        %v1099 = vrot.slane %v1097, 1
        %v1100 = vor.u32 %v1095, %v1099
        %v1102 = vshll.u32 %v1023, 16
        %v1104 = vrot.slane %v1102, 1
        %v1105 = vsel %vm520, %v1100, %v1104
        %v1107 = vshrl.u32 %v944, 16
        %v1109 = vshll.u32 %v944, 16
        %v1111 = vrot.slane %v1109, 1
        %v1112 = vor.u32 %v1107, %v1111
        %v1114 = vshll.u32 %v1024, 16
        %v1116 = vrot.slane %v1114, 1
        %v1117 = vsel %vm520, %v1112, %v1116
        %v1119 = vshrl.u32 %v945, 16
        %v1121 = vshll.u32 %v945, 16
        %v1123 = vrot.slane %v1121, 1
        %v1124 = vor.u32 %v1119, %v1123
        %v1126 = vshll.u32 %v1025, 16
        %v1128 = vrot.slane %v1126, 1
        %v1129 = vsel %vm520, %v1124, %v1128
        %v1131 = vshrl.u32 %v946, 16
        %v1133 = vshll.u32 %v946, 16
        %v1135 = vrot.slane %v1133, 1
        %v1136 = vor.u32 %v1131, %v1135
        %v1138 = vshll.u32 %v1026, 16
        %v1140 = vrot.slane %v1138, 1
        %v1141 = vsel %vm520, %v1136, %v1140
        %v1143 = vshrl.u32 %v947, 16
        %v1145 = vshll.u32 %v947, 16
        %v1147 = vrot.slane %v1145, 1
        %v1148 = vor.u32 %v1143, %v1147
        %v1150 = vshll.u32 %v1027, 16
        %v1152 = vrot.slane %v1150, 1
        %v1153 = vsel %vm520, %v1148, %v1152
        %v1155 = vshrl.u32 %v948, 16
        %v1157 = vshll.u32 %v948, 16
        %v1159 = vrot.slane %v1157, 1
        %v1160 = vor.u32 %v1155, %v1159
        %v1162 = vshll.u32 %v1028, 16
        %v1164 = vrot.slane %v1162, 1
        %v1165 = vsel %vm520, %v1160, %v1164
        %v1167 = vshrl.u32 %v949, 16
        %v1169 = vshll.u32 %v949, 16
        %v1171 = vrot.slane %v1169, 1
        %v1172 = vor.u32 %v1167, %v1171
        %v1174 = vshll.u32 %v1029, 16
        %v1176 = vrot.slane %v1174, 1
        %v1177 = vsel %vm520, %v1172, %v1176
        %v1179 = vshrl.u32 %v950, 16
        %v1181 = vshll.u32 %v950, 16
        %v1183 = vrot.slane %v1181, 1
        %v1184 = vor.u32 %v1179, %v1183
        %v1186 = vshll.u32 %v1030, 16
        %v1188 = vrot.slane %v1186, 1
        %v1189 = vsel %vm520, %v1184, %v1188
        %v1191 = vshrl.u32 %v951, 16
        %v1193 = vshll.u32 %v951, 16
        %v1195 = vrot.slane %v1193, 1
        %v1196 = vor.u32 %v1191, %v1195
        %v1198 = vshll.u32 %v1031, 16
        %v1200 = vrot.slane %v1198, 1
        %v1201 = vsel %vm520, %v1196, %v1200
        %v1203 = vshrl.u32 %v952, 16
        %v1205 = vshll.u32 %v952, 16
        %v1207 = vrot.slane %v1205, 1
        %v1208 = vor.u32 %v1203, %v1207
        %v1210 = vshll.u32 %v1032, 16
        %v1212 = vrot.slane %v1210, 1
        %v1213 = vsel %vm520, %v1208, %v1212
        %v1215 = vshrl.u32 %v953, 16
        %v1217 = vshll.u32 %v953, 16
        %v1219 = vrot.slane %v1217, 1
        %v1220 = vor.u32 %v1215, %v1219
        %v1222 = vshll.u32 %v1033, 16
        %v1224 = vrot.slane %v1222, 1
        %v1225 = vsel %vm520, %v1220, %v1224
        %1226 = vrot.lane.b32.xlu0 %v1045, 32
        %v1227 = vpop.permute.xlu0 %1226
        %1228 = vrot.lane.b32.xlu0 %v1057, 32
        %v1229 = vpop.permute.xlu0 %1228
        %1230 = vrot.lane.b32.xlu0 %v1069, 32
        %v1231 = vpop.permute.xlu0 %1230
        %1232 = vrot.lane.b32.xlu0 %v1081, 32
        %v1233 = vpop.permute.xlu0 %1232
        %1234 = vrot.lane.b32.xlu0 %v1093, 32
        %v1235 = vpop.permute.xlu0 %1234
        %1236 = vrot.lane.b32.xlu0 %v1105, 32
        %v1237 = vpop.permute.xlu0 %1236
        %1238 = vrot.lane.b32.xlu0 %v1117, 32
        %v1239 = vpop.permute.xlu0 %1238
        %1240 = vrot.lane.b32.xlu0 %v1129, 32
        %v1241 = vpop.permute.xlu0 %1240
        %1242 = vrot.lane.b32.xlu0 %v1141, 32
        %v1243 = vpop.permute.xlu0 %1242
        %1244 = vrot.lane.b32.xlu0 %v1153, 32
        %v1245 = vpop.permute.xlu0 %1244
        %1246 = vrot.lane.b32.xlu0 %v1165, 32
        %v1247 = vpop.permute.xlu0 %1246
        %1248 = vrot.lane.b32.xlu0 %v1177, 32
        %v1249 = vpop.permute.xlu0 %1248
        %1250 = vrot.lane.b32.xlu0 %v1189, 32
        %v1251 = vpop.permute.xlu0 %1250
        %1252 = vrot.lane.b32.xlu0 %v1201, 32
        %v1253 = vpop.permute.xlu0 %1252
        %1254 = vrot.lane.b32.xlu0 %v1213, 32
        %v1255 = vpop.permute.xlu0 %1254
        %1256 = vrot.lane.b32.xlu0 %v1225, 32
        %v1257 = vpop.permute.xlu0 %1256
        %v1274 = vunpack.c.l.b16 %v311
        %v1275 = vunpack.c.l.b16 %v312
        %v1276 = vunpack.c.l.b16 %v313
        %v1277 = vunpack.c.l.b16 %v314
        %v1278 = vunpack.c.l.b16 %v315
        %v1279 = vunpack.c.l.b16 %v316
        %v1280 = vunpack.c.l.b16 %v317
        %v1281 = vunpack.c.l.b16 %v318
        %v1282 = vunpack.c.l.b16 %v319
        %v1283 = vunpack.c.l.b16 %v320
        %v1284 = vunpack.c.l.b16 %v321
        %v1285 = vunpack.c.l.b16 %v322
        %v1286 = vunpack.c.l.b16 %v323
        %v1287 = vunpack.c.l.b16 %v324
        %v1288 = vunpack.c.l.b16 %v325
        %v1289 = vunpack.c.l.b16 %v326
        %v1290 = vpack.c.b16 %v907, %v1274
        %v1291 = vpack.c.b16 %v909, %v1275
        %v1292 = vpack.c.b16 %v911, %v1276
        %v1293 = vpack.c.b16 %v913, %v1277
        %v1294 = vpack.c.b16 %v915, %v1278
        %v1295 = vpack.c.b16 %v917, %v1279
        %v1296 = vpack.c.b16 %v919, %v1280
        %v1297 = vpack.c.b16 %v921, %v1281
        %v1298 = vpack.c.b16 %v923, %v1282
        %v1299 = vpack.c.b16 %v925, %v1283
        %v1300 = vpack.c.b16 %v927, %v1284
        %v1301 = vpack.c.b16 %v929, %v1285
        %v1302 = vpack.c.b16 %v931, %v1286
        %v1303 = vpack.c.b16 %v933, %v1287
        %v1304 = vpack.c.b16 %v935, %v1288
        %v1305 = vpack.c.b16 %v937, %v1289
        %v1306 = vrot.slane %v1290, 1
        %v1307 = vrot.slane %v1018, 1
        %v1308 = vsel %vm793, %v1306, %v1307
        %v1309 = vrot.slane %v1291, 1
        %v1310 = vrot.slane %v1019, 1
        %v1311 = vsel %vm793, %v1309, %v1310
        %v1312 = vrot.slane %v1292, 1
        %v1313 = vrot.slane %v1020, 1
        %v1314 = vsel %vm793, %v1312, %v1313
        %v1315 = vrot.slane %v1293, 1
        %v1316 = vrot.slane %v1021, 1
        %v1317 = vsel %vm793, %v1315, %v1316
        %v1318 = vrot.slane %v1294, 1
        %v1319 = vrot.slane %v1022, 1
        %v1320 = vsel %vm793, %v1318, %v1319
        %v1321 = vrot.slane %v1295, 1
        %v1322 = vrot.slane %v1023, 1
        %v1323 = vsel %vm793, %v1321, %v1322
        %v1324 = vrot.slane %v1296, 1
        %v1325 = vrot.slane %v1024, 1
        %v1326 = vsel %vm793, %v1324, %v1325
        %v1327 = vrot.slane %v1297, 1
        %v1328 = vrot.slane %v1025, 1
        %v1329 = vsel %vm793, %v1327, %v1328
        %v1330 = vrot.slane %v1298, 1
        %v1331 = vrot.slane %v1026, 1
        %v1332 = vsel %vm793, %v1330, %v1331
        %v1333 = vrot.slane %v1299, 1
        %v1334 = vrot.slane %v1027, 1
        %v1335 = vsel %vm793, %v1333, %v1334
        %v1336 = vrot.slane %v1300, 1
        %v1337 = vrot.slane %v1028, 1
        %v1338 = vsel %vm793, %v1336, %v1337
        %v1339 = vrot.slane %v1301, 1
        %v1340 = vrot.slane %v1029, 1
        %v1341 = vsel %vm793, %v1339, %v1340
        %v1342 = vrot.slane %v1302, 1
        %v1343 = vrot.slane %v1030, 1
        %v1344 = vsel %vm793, %v1342, %v1343
        %v1345 = vrot.slane %v1303, 1
        %v1346 = vrot.slane %v1031, 1
        %v1347 = vsel %vm793, %v1345, %v1346
        %v1348 = vrot.slane %v1304, 1
        %v1349 = vrot.slane %v1032, 1
        %v1350 = vsel %vm793, %v1348, %v1349
        %v1351 = vrot.slane %v1305, 1
        %v1352 = vrot.slane %v1033, 1
        %v1353 = vsel %vm793, %v1351, %v1352
        %1354 = vrot.lane.b32.xlu0 %v1308, 40
        %v1355 = vpop.permute.xlu0 %1354
        %1356 = vrot.lane.b32.xlu0 %v1311, 40
        %v1357 = vpop.permute.xlu0 %1356
        %1358 = vrot.lane.b32.xlu0 %v1314, 40
        %v1359 = vpop.permute.xlu0 %1358
        %1360 = vrot.lane.b32.xlu0 %v1317, 40
        %v1361 = vpop.permute.xlu0 %1360
        %1362 = vrot.lane.b32.xlu0 %v1320, 40
        %v1363 = vpop.permute.xlu0 %1362
        %1364 = vrot.lane.b32.xlu0 %v1323, 40
        %v1365 = vpop.permute.xlu0 %1364
        %1366 = vrot.lane.b32.xlu0 %v1326, 40
        %v1367 = vpop.permute.xlu0 %1366
        %1368 = vrot.lane.b32.xlu0 %v1329, 40
        %v1369 = vpop.permute.xlu0 %1368
        %1370 = vrot.lane.b32.xlu0 %v1332, 40
        %v1371 = vpop.permute.xlu0 %1370
        %1372 = vrot.lane.b32.xlu0 %v1335, 40
        %v1373 = vpop.permute.xlu0 %1372
        %1374 = vrot.lane.b32.xlu0 %v1338, 40
        %v1375 = vpop.permute.xlu0 %1374
        %1376 = vrot.lane.b32.xlu0 %v1341, 40
        %v1377 = vpop.permute.xlu0 %1376
        %1378 = vrot.lane.b32.xlu0 %v1344, 40
        %v1379 = vpop.permute.xlu0 %1378
        %1380 = vrot.lane.b32.xlu0 %v1347, 40
        %v1381 = vpop.permute.xlu0 %1380
        %1382 = vrot.lane.b32.xlu0 %v1350, 40
        %v1383 = vpop.permute.xlu0 %1382
        %1384 = vrot.lane.b32.xlu0 %v1353, 40
        %v1385 = vpop.permute.xlu0 %1384
        %v1418 = vunpack.c.l.b16 %v328
        %v1419 = vunpack.c.l.b16 %v329
        %v1420 = vunpack.c.l.b16 %v330
        %v1421 = vunpack.c.l.b16 %v331
        %v1422 = vunpack.c.l.b16 %v332
        %v1423 = vunpack.c.l.b16 %v333
        %v1424 = vunpack.c.l.b16 %v334
        %v1425 = vunpack.c.l.b16 %v335
        %v1426 = vunpack.c.l.b16 %v336
        %v1427 = vunpack.c.l.b16 %v337
        %v1428 = vunpack.c.l.b16 %v338
        %v1429 = vunpack.c.l.b16 %v339
        %v1430 = vunpack.c.l.b16 %v340
        %v1431 = vunpack.c.l.b16 %v341
        %v1432 = vunpack.c.l.b16 %v342
        %v1433 = vunpack.c.l.b16 %v343
        %v1434 = vunpack.c.l.b16 %v344
        %v1435 = vunpack.c.l.b16 %v345
        %v1436 = vunpack.c.l.b16 %v346
        %v1437 = vunpack.c.l.b16 %v347
        %v1438 = vunpack.c.l.b16 %v348
        %v1439 = vunpack.c.l.b16 %v349
        %v1440 = vunpack.c.l.b16 %v350
        %v1441 = vunpack.c.l.b16 %v351
        %v1442 = vunpack.c.l.b16 %v352
        %v1443 = vunpack.c.l.b16 %v353
        %v1444 = vunpack.c.l.b16 %v354
        %v1445 = vunpack.c.l.b16 %v355
        %v1446 = vunpack.c.l.b16 %v356
        %v1447 = vunpack.c.l.b16 %v357
        %v1448 = vunpack.c.l.b16 %v358
        %v1449 = vunpack.c.l.b16 %v359
        %v1450 = vpack.c.b16 %v1419, %v1418
        %v1451 = vpack.c.b16 %v1421, %v1420
        %v1452 = vpack.c.b16 %v1423, %v1422
        %v1453 = vpack.c.b16 %v1425, %v1424
        %v1454 = vpack.c.b16 %v1427, %v1426
        %v1455 = vpack.c.b16 %v1429, %v1428
        %v1456 = vpack.c.b16 %v1431, %v1430
        %v1457 = vpack.c.b16 %v1433, %v1432
        %v1458 = vpack.c.b16 %v1435, %v1434
        %v1459 = vpack.c.b16 %v1437, %v1436
        %v1460 = vpack.c.b16 %v1439, %v1438
        %v1461 = vpack.c.b16 %v1441, %v1440
        %v1462 = vpack.c.b16 %v1443, %v1442
        %v1463 = vpack.c.b16 %v1445, %v1444
        %v1464 = vpack.c.b16 %v1447, %v1446
        %v1465 = vpack.c.b16 %v1449, %v1448
        %1466 = vrot.lane.b32.xlu0 %v1450, 48
        %v1467 = vpop.permute.xlu0 %1466
        %1468 = vrot.lane.b32.xlu0 %v1451, 48
        %v1469 = vpop.permute.xlu0 %1468
        %1470 = vrot.lane.b32.xlu0 %v1452, 48
        %v1471 = vpop.permute.xlu0 %1470
        %1472 = vrot.lane.b32.xlu0 %v1453, 48
        %v1473 = vpop.permute.xlu0 %1472
        %1474 = vrot.lane.b32.xlu0 %v1454, 48
        %v1475 = vpop.permute.xlu0 %1474
        %1476 = vrot.lane.b32.xlu0 %v1455, 48
        %v1477 = vpop.permute.xlu0 %1476
        %1478 = vrot.lane.b32.xlu0 %v1456, 48
        %v1479 = vpop.permute.xlu0 %1478
        %1480 = vrot.lane.b32.xlu0 %v1457, 48
        %v1481 = vpop.permute.xlu0 %1480
        %1482 = vrot.lane.b32.xlu0 %v1458, 48
        %v1483 = vpop.permute.xlu0 %1482
        %1484 = vrot.lane.b32.xlu0 %v1459, 48
        %v1485 = vpop.permute.xlu0 %1484
        %1486 = vrot.lane.b32.xlu0 %v1460, 48
        %v1487 = vpop.permute.xlu0 %1486
        %1488 = vrot.lane.b32.xlu0 %v1461, 48
        %v1489 = vpop.permute.xlu0 %1488
        %1490 = vrot.lane.b32.xlu0 %v1462, 48
        %v1491 = vpop.permute.xlu0 %1490
        %1492 = vrot.lane.b32.xlu0 %v1463, 48
        %v1493 = vpop.permute.xlu0 %1492
        %1494 = vrot.lane.b32.xlu0 %v1464, 48
        %v1495 = vpop.permute.xlu0 %1494
        %1496 = vrot.lane.b32.xlu0 %v1465, 48
        %v1497 = vpop.permute.xlu0 %1496
        %v1514 = vunpack.c.l.b16 %v360
        %v1515 = vunpack.c.l.b16 %v361
        %v1516 = vunpack.c.l.b16 %v362
        %v1517 = vunpack.c.l.b16 %v363
        %v1518 = vunpack.c.l.b16 %v364
        %v1519 = vunpack.c.l.b16 %v365
        %v1520 = vunpack.c.l.b16 %v366
        %v1521 = vunpack.c.l.b16 %v367
        %v1522 = vunpack.c.l.b16 %v368
        %v1523 = vunpack.c.l.b16 %v369
        %v1524 = vunpack.c.l.b16 %v370
        %v1525 = vunpack.c.l.b16 %v371
        %v1526 = vunpack.c.l.b16 %v372
        %v1527 = vunpack.c.l.b16 %v373
        %v1528 = vunpack.c.l.b16 %v374
        %v1529 = vunpack.c.l.b16 %v375
        %v1530 = vpack.c.b16 %v1514, %v1514
        %v1531 = vpack.c.b16 %v1515, %v1515
        %v1532 = vpack.c.b16 %v1516, %v1516
        %v1533 = vpack.c.b16 %v1517, %v1517
        %v1534 = vpack.c.b16 %v1518, %v1518
        %v1535 = vpack.c.b16 %v1519, %v1519
        %v1536 = vpack.c.b16 %v1520, %v1520
        %v1537 = vpack.c.b16 %v1521, %v1521
        %v1538 = vpack.c.b16 %v1522, %v1522
        %v1539 = vpack.c.b16 %v1523, %v1523
        %v1540 = vpack.c.b16 %v1524, %v1524
        %v1541 = vpack.c.b16 %v1525, %v1525
        %v1542 = vpack.c.b16 %v1526, %v1526
        %v1543 = vpack.c.b16 %v1527, %v1527
        %v1544 = vpack.c.b16 %v1528, %v1528
        %v1545 = vpack.c.b16 %v1529, %v1529
        %v1547 = vshrl.u32 %v1450, 16
        %v1549 = vshll.u32 %v1450, 16
        %v1551 = vrot.slane %v1549, 1
        %v1552 = vor.u32 %v1547, %v1551
        %v1554 = vshll.u32 %v1530, 16
        %v1556 = vrot.slane %v1554, 1
        %v1557 = vsel %vm520, %v1552, %v1556
        %v1559 = vshrl.u32 %v1451, 16
        %v1561 = vshll.u32 %v1451, 16
        %v1563 = vrot.slane %v1561, 1
        %v1564 = vor.u32 %v1559, %v1563
        %v1566 = vshll.u32 %v1531, 16
        %v1568 = vrot.slane %v1566, 1
        %v1569 = vsel %vm520, %v1564, %v1568
        %v1571 = vshrl.u32 %v1452, 16
        %v1573 = vshll.u32 %v1452, 16
        %v1575 = vrot.slane %v1573, 1
        %v1576 = vor.u32 %v1571, %v1575
        %v1578 = vshll.u32 %v1532, 16
        %v1580 = vrot.slane %v1578, 1
        %v1581 = vsel %vm520, %v1576, %v1580
        %v1583 = vshrl.u32 %v1453, 16
        %v1585 = vshll.u32 %v1453, 16
        %v1587 = vrot.slane %v1585, 1
        %v1588 = vor.u32 %v1583, %v1587
        %v1590 = vshll.u32 %v1533, 16
        %v1592 = vrot.slane %v1590, 1
        %v1593 = vsel %vm520, %v1588, %v1592
        %v1595 = vshrl.u32 %v1454, 16
        %v1597 = vshll.u32 %v1454, 16
        %v1599 = vrot.slane %v1597, 1
        %v1600 = vor.u32 %v1595, %v1599
        %v1602 = vshll.u32 %v1534, 16
        %v1604 = vrot.slane %v1602, 1
        %v1605 = vsel %vm520, %v1600, %v1604
        %v1607 = vshrl.u32 %v1455, 16
        %v1609 = vshll.u32 %v1455, 16
        %v1611 = vrot.slane %v1609, 1
        %v1612 = vor.u32 %v1607, %v1611
        %v1614 = vshll.u32 %v1535, 16
        %v1616 = vrot.slane %v1614, 1
        %v1617 = vsel %vm520, %v1612, %v1616
        %v1619 = vshrl.u32 %v1456, 16
        %v1621 = vshll.u32 %v1456, 16
        %v1623 = vrot.slane %v1621, 1
        %v1624 = vor.u32 %v1619, %v1623
        %v1626 = vshll.u32 %v1536, 16
        %v1628 = vrot.slane %v1626, 1
        %v1629 = vsel %vm520, %v1624, %v1628
        %v1631 = vshrl.u32 %v1457, 16
        %v1633 = vshll.u32 %v1457, 16
        %v1635 = vrot.slane %v1633, 1
        %v1636 = vor.u32 %v1631, %v1635
        %v1638 = vshll.u32 %v1537, 16
        %v1640 = vrot.slane %v1638, 1
        %v1641 = vsel %vm520, %v1636, %v1640
        %v1643 = vshrl.u32 %v1458, 16
        %v1645 = vshll.u32 %v1458, 16
        %v1647 = vrot.slane %v1645, 1
        %v1648 = vor.u32 %v1643, %v1647
        %v1650 = vshll.u32 %v1538, 16
        %v1652 = vrot.slane %v1650, 1
        %v1653 = vsel %vm520, %v1648, %v1652
        %v1655 = vshrl.u32 %v1459, 16
        %v1657 = vshll.u32 %v1459, 16
        %v1659 = vrot.slane %v1657, 1
        %v1660 = vor.u32 %v1655, %v1659
        %v1662 = vshll.u32 %v1539, 16
        %v1664 = vrot.slane %v1662, 1
        %v1665 = vsel %vm520, %v1660, %v1664
        %v1667 = vshrl.u32 %v1460, 16
        %v1669 = vshll.u32 %v1460, 16
        %v1671 = vrot.slane %v1669, 1
        %v1672 = vor.u32 %v1667, %v1671
        %v1674 = vshll.u32 %v1540, 16
        %v1676 = vrot.slane %v1674, 1
        %v1677 = vsel %vm520, %v1672, %v1676
        %v1679 = vshrl.u32 %v1461, 16
        %v1681 = vshll.u32 %v1461, 16
        %v1683 = vrot.slane %v1681, 1
        %v1684 = vor.u32 %v1679, %v1683
        %v1686 = vshll.u32 %v1541, 16
        %v1688 = vrot.slane %v1686, 1
        %v1689 = vsel %vm520, %v1684, %v1688
        %v1691 = vshrl.u32 %v1462, 16
        %v1693 = vshll.u32 %v1462, 16
        %v1695 = vrot.slane %v1693, 1
        %v1696 = vor.u32 %v1691, %v1695
        %v1698 = vshll.u32 %v1542, 16
        %v1700 = vrot.slane %v1698, 1
        %v1701 = vsel %vm520, %v1696, %v1700
        %v1703 = vshrl.u32 %v1463, 16
        %v1705 = vshll.u32 %v1463, 16
        %v1707 = vrot.slane %v1705, 1
        %v1708 = vor.u32 %v1703, %v1707
        %v1710 = vshll.u32 %v1543, 16
        %v1712 = vrot.slane %v1710, 1
        %v1713 = vsel %vm520, %v1708, %v1712
        %v1715 = vshrl.u32 %v1464, 16
        %v1717 = vshll.u32 %v1464, 16
        %v1719 = vrot.slane %v1717, 1
        %v1720 = vor.u32 %v1715, %v1719
        %v1722 = vshll.u32 %v1544, 16
        %v1724 = vrot.slane %v1722, 1
        %v1725 = vsel %vm520, %v1720, %v1724
        %v1727 = vshrl.u32 %v1465, 16
        %v1729 = vshll.u32 %v1465, 16
        %v1731 = vrot.slane %v1729, 1
        %v1732 = vor.u32 %v1727, %v1731
        %v1734 = vshll.u32 %v1545, 16
        %v1736 = vrot.slane %v1734, 1
        %v1737 = vsel %vm520, %v1732, %v1736
        %1738 = vrot.lane.b32.xlu0 %v1557, 56
        %v1739 = vpop.permute.xlu0 %1738
        %1740 = vrot.lane.b32.xlu0 %v1569, 56
        %v1741 = vpop.permute.xlu0 %1740
        %1742 = vrot.lane.b32.xlu0 %v1581, 56
        %v1743 = vpop.permute.xlu0 %1742
        %1744 = vrot.lane.b32.xlu0 %v1593, 56
        %v1745 = vpop.permute.xlu0 %1744
        %1746 = vrot.lane.b32.xlu0 %v1605, 56
        %v1747 = vpop.permute.xlu0 %1746
        %1748 = vrot.lane.b32.xlu0 %v1617, 56
        %v1749 = vpop.permute.xlu0 %1748
        %1750 = vrot.lane.b32.xlu0 %v1629, 56
        %v1751 = vpop.permute.xlu0 %1750
        %1752 = vrot.lane.b32.xlu0 %v1641, 56
        %v1753 = vpop.permute.xlu0 %1752
        %1754 = vrot.lane.b32.xlu0 %v1653, 56
        %v1755 = vpop.permute.xlu0 %1754
        %1756 = vrot.lane.b32.xlu0 %v1665, 56
        %v1757 = vpop.permute.xlu0 %1756
        %1758 = vrot.lane.b32.xlu0 %v1677, 56
        %v1759 = vpop.permute.xlu0 %1758
        %1760 = vrot.lane.b32.xlu0 %v1689, 56
        %v1761 = vpop.permute.xlu0 %1760
        %1762 = vrot.lane.b32.xlu0 %v1701, 56
        %v1763 = vpop.permute.xlu0 %1762
        %1764 = vrot.lane.b32.xlu0 %v1713, 56
        %v1765 = vpop.permute.xlu0 %1764
        %1766 = vrot.lane.b32.xlu0 %v1725, 56
        %v1767 = vpop.permute.xlu0 %1766
        %1768 = vrot.lane.b32.xlu0 %v1737, 56
        %v1769 = vpop.permute.xlu0 %1768
        %v1786 = vunpack.c.l.b16 %v376
        %v1787 = vunpack.c.l.b16 %v377
        %v1788 = vunpack.c.l.b16 %v378
        %v1789 = vunpack.c.l.b16 %v379
        %v1790 = vunpack.c.l.b16 %v380
        %v1791 = vunpack.c.l.b16 %v381
        %v1792 = vunpack.c.l.b16 %v382
        %v1793 = vunpack.c.l.b16 %v383
        %v1794 = vunpack.c.l.b16 %v384
        %v1795 = vunpack.c.l.b16 %v385
        %v1796 = vunpack.c.l.b16 %v386
        %v1797 = vunpack.c.l.b16 %v387
        %v1798 = vunpack.c.l.b16 %v388
        %v1799 = vunpack.c.l.b16 %v389
        %v1800 = vunpack.c.l.b16 %v390
        %v1801 = vunpack.c.l.b16 %v391
        %v1802 = vpack.c.b16 %v1419, %v1786
        %v1803 = vpack.c.b16 %v1421, %v1787
        %v1804 = vpack.c.b16 %v1423, %v1788
        %v1805 = vpack.c.b16 %v1425, %v1789
        %v1806 = vpack.c.b16 %v1427, %v1790
        %v1807 = vpack.c.b16 %v1429, %v1791
        %v1808 = vpack.c.b16 %v1431, %v1792
        %v1809 = vpack.c.b16 %v1433, %v1793
        %v1810 = vpack.c.b16 %v1435, %v1794
        %v1811 = vpack.c.b16 %v1437, %v1795
        %v1812 = vpack.c.b16 %v1439, %v1796
        %v1813 = vpack.c.b16 %v1441, %v1797
        %v1814 = vpack.c.b16 %v1443, %v1798
        %v1815 = vpack.c.b16 %v1445, %v1799
        %v1816 = vpack.c.b16 %v1447, %v1800
        %v1817 = vpack.c.b16 %v1449, %v1801
        %v1818 = vrot.slane %v1802, 1
        %v1819 = vrot.slane %v1530, 1
        %v1820 = vsel %vm793, %v1818, %v1819
        %v1821 = vrot.slane %v1803, 1
        %v1822 = vrot.slane %v1531, 1
        %v1823 = vsel %vm793, %v1821, %v1822
        %v1824 = vrot.slane %v1804, 1
        %v1825 = vrot.slane %v1532, 1
        %v1826 = vsel %vm793, %v1824, %v1825
        %v1827 = vrot.slane %v1805, 1
        %v1828 = vrot.slane %v1533, 1
        %v1829 = vsel %vm793, %v1827, %v1828
        %v1830 = vrot.slane %v1806, 1
        %v1831 = vrot.slane %v1534, 1
        %v1832 = vsel %vm793, %v1830, %v1831
        %v1833 = vrot.slane %v1807, 1
        %v1834 = vrot.slane %v1535, 1
        %v1835 = vsel %vm793, %v1833, %v1834
        %v1836 = vrot.slane %v1808, 1
        %v1837 = vrot.slane %v1536, 1
        %v1838 = vsel %vm793, %v1836, %v1837
        %v1839 = vrot.slane %v1809, 1
        %v1840 = vrot.slane %v1537, 1
        %v1841 = vsel %vm793, %v1839, %v1840
        %v1842 = vrot.slane %v1810, 1
        %v1843 = vrot.slane %v1538, 1
        %v1844 = vsel %vm793, %v1842, %v1843
        %v1845 = vrot.slane %v1811, 1
        %v1846 = vrot.slane %v1539, 1
        %v1847 = vsel %vm793, %v1845, %v1846
        %v1848 = vrot.slane %v1812, 1
        %v1849 = vrot.slane %v1540, 1
        %v1850 = vsel %vm793, %v1848, %v1849
        %v1851 = vrot.slane %v1813, 1
        %v1852 = vrot.slane %v1541, 1
        %v1853 = vsel %vm793, %v1851, %v1852
        %v1854 = vrot.slane %v1814, 1
        %v1855 = vrot.slane %v1542, 1
        %v1856 = vsel %vm793, %v1854, %v1855
        %v1857 = vrot.slane %v1815, 1
        %v1858 = vrot.slane %v1543, 1
        %v1859 = vsel %vm793, %v1857, %v1858
        %v1860 = vrot.slane %v1816, 1
        %v1861 = vrot.slane %v1544, 1
        %v1862 = vsel %vm793, %v1860, %v1861
        %v1863 = vrot.slane %v1817, 1
        %v1864 = vrot.slane %v1545, 1
        %v1865 = vsel %vm793, %v1863, %v1864
        %1866 = vrot.lane.b32.xlu0 %v1820, 64
        %v1867 = vpop.permute.xlu0 %1866
        %1868 = vrot.lane.b32.xlu0 %v1823, 64
        %v1869 = vpop.permute.xlu0 %1868
        %1870 = vrot.lane.b32.xlu0 %v1826, 64
        %v1871 = vpop.permute.xlu0 %1870
        %1872 = vrot.lane.b32.xlu0 %v1829, 64
        %v1873 = vpop.permute.xlu0 %1872
        %1874 = vrot.lane.b32.xlu0 %v1832, 64
        %v1875 = vpop.permute.xlu0 %1874
        %1876 = vrot.lane.b32.xlu0 %v1835, 64
        %v1877 = vpop.permute.xlu0 %1876
        %1878 = vrot.lane.b32.xlu0 %v1838, 64
        %v1879 = vpop.permute.xlu0 %1878
        %1880 = vrot.lane.b32.xlu0 %v1841, 64
        %v1881 = vpop.permute.xlu0 %1880
        %1882 = vrot.lane.b32.xlu0 %v1844, 64
        %v1883 = vpop.permute.xlu0 %1882
        %1884 = vrot.lane.b32.xlu0 %v1847, 64
        %v1885 = vpop.permute.xlu0 %1884
        %1886 = vrot.lane.b32.xlu0 %v1850, 64
        %v1887 = vpop.permute.xlu0 %1886
        %1888 = vrot.lane.b32.xlu0 %v1853, 64
        %v1889 = vpop.permute.xlu0 %1888
        %1890 = vrot.lane.b32.xlu0 %v1856, 64
        %v1891 = vpop.permute.xlu0 %1890
        %1892 = vrot.lane.b32.xlu0 %v1859, 64
        %v1893 = vpop.permute.xlu0 %1892
        %1894 = vrot.lane.b32.xlu0 %v1862, 64
        %v1895 = vpop.permute.xlu0 %1894
        %1896 = vrot.lane.b32.xlu0 %v1865, 64
        %v1897 = vpop.permute.xlu0 %1896
        %vm1898 = vcmask 64512
        %v1900 = vsel %vm1898, %v456, %v714
        %v1902 = vsel %vm1898, %v457, %v716
        %v1904 = vsel %vm1898, %v458, %v718
        %v1906 = vsel %vm1898, %v459, %v720
        %v1908 = vsel %vm1898, %v460, %v722
        %v1910 = vsel %vm1898, %v461, %v724
        %v1912 = vsel %vm1898, %v462, %v726
        %v1914 = vsel %vm1898, %v463, %v728
        %v1916 = vsel %vm1898, %v464, %v730
        %v1918 = vsel %vm1898, %v465, %v732
        %v1920 = vsel %vm1898, %v466, %v734
        %v1922 = vsel %vm1898, %v467, %v736
        %v1924 = vsel %vm1898, %v468, %v738
        %v1926 = vsel %vm1898, %v469, %v740
        %v1928 = vsel %vm1898, %v470, %v742
        %v1930 = vsel %vm1898, %v471, %v744
        %vm1931 = vcmask 130048
        %v1933 = vsel %vm1931, %v1900, %v843
        %v1935 = vsel %vm1931, %v1902, %v845
        %v1937 = vsel %vm1931, %v1904, %v847
        %v1939 = vsel %vm1931, %v1906, %v849
        %v1941 = vsel %vm1931, %v1908, %v851
        %v1943 = vsel %vm1931, %v1910, %v853
        %v1945 = vsel %vm1931, %v1912, %v855
        %v1947 = vsel %vm1931, %v1914, %v857
        %v1949 = vsel %vm1931, %v1916, %v859
        %v1951 = vsel %vm1931, %v1918, %v861
        %v1953 = vsel %vm1931, %v1920, %v863
        %v1955 = vsel %vm1931, %v1922, %v865
        %v1957 = vsel %vm1931, %v1924, %v867
        %v1959 = vsel %vm1931, %v1926, %v869
        %v1961 = vsel %vm1931, %v1928, %v871
        %v1963 = vsel %vm1931, %v1930, %v873
        %vm1964 = vcmask 195584
        %v1966 = vsel %vm1964, %v1933, %v955
        %v1968 = vsel %vm1964, %v1935, %v957
        %v1970 = vsel %vm1964, %v1937, %v959
        %v1972 = vsel %vm1964, %v1939, %v961
        %v1974 = vsel %vm1964, %v1941, %v963
        %v1976 = vsel %vm1964, %v1943, %v965
        %v1978 = vsel %vm1964, %v1945, %v967
        %v1980 = vsel %vm1964, %v1947, %v969
        %v1982 = vsel %vm1964, %v1949, %v971
        %v1984 = vsel %vm1964, %v1951, %v973
        %v1986 = vsel %vm1964, %v1953, %v975
        %v1988 = vsel %vm1964, %v1955, %v977
        %v1990 = vsel %vm1964, %v1957, %v979
        %v1992 = vsel %vm1964, %v1959, %v981
        %v1994 = vsel %vm1964, %v1961, %v983
        %v1996 = vsel %vm1964, %v1963, %v985
        %vm1997 = vcmask 261120
        %v1999 = vsel %vm1997, %v1966, %v1227
        %v2001 = vsel %vm1997, %v1968, %v1229
        %v2003 = vsel %vm1997, %v1970, %v1231
        %v2005 = vsel %vm1997, %v1972, %v1233
        %v2007 = vsel %vm1997, %v1974, %v1235
        %v2009 = vsel %vm1997, %v1976, %v1237
        %v2011 = vsel %vm1997, %v1978, %v1239
        %v2013 = vsel %vm1997, %v1980, %v1241
        %v2015 = vsel %vm1997, %v1982, %v1243
        %v2017 = vsel %vm1997, %v1984, %v1245
        %v2019 = vsel %vm1997, %v1986, %v1247
        %v2021 = vsel %vm1997, %v1988, %v1249
        %v2023 = vsel %vm1997, %v1990, %v1251
        %v2025 = vsel %vm1997, %v1992, %v1253
        %v2027 = vsel %vm1997, %v1994, %v1255
        %v2029 = vsel %vm1997, %v1996, %v1257
        %vm2030 = vcmask 326656
        %v2032 = vsel %vm2030, %v1999, %v1355
        %v2034 = vsel %vm2030, %v2001, %v1357
        %v2036 = vsel %vm2030, %v2003, %v1359
        %v2038 = vsel %vm2030, %v2005, %v1361
        %v2040 = vsel %vm2030, %v2007, %v1363
        %v2042 = vsel %vm2030, %v2009, %v1365
        %v2044 = vsel %vm2030, %v2011, %v1367
        %v2046 = vsel %vm2030, %v2013, %v1369
        %v2048 = vsel %vm2030, %v2015, %v1371
        %v2050 = vsel %vm2030, %v2017, %v1373
        %v2052 = vsel %vm2030, %v2019, %v1375
        %v2054 = vsel %vm2030, %v2021, %v1377
        %v2056 = vsel %vm2030, %v2023, %v1379
        %v2058 = vsel %vm2030, %v2025, %v1381
        %v2060 = vsel %vm2030, %v2027, %v1383
        %v2062 = vsel %vm2030, %v2029, %v1385
        %vm2063 = vcmask 392192
        %v2065 = vsel %vm2063, %v2032, %v1467
        %v2067 = vsel %vm2063, %v2034, %v1469
        %v2069 = vsel %vm2063, %v2036, %v1471
        %v2071 = vsel %vm2063, %v2038, %v1473
        %v2073 = vsel %vm2063, %v2040, %v1475
        %v2075 = vsel %vm2063, %v2042, %v1477
        %v2077 = vsel %vm2063, %v2044, %v1479
        %v2079 = vsel %vm2063, %v2046, %v1481
        %v2081 = vsel %vm2063, %v2048, %v1483
        %v2083 = vsel %vm2063, %v2050, %v1485
        %v2085 = vsel %vm2063, %v2052, %v1487
        %v2087 = vsel %vm2063, %v2054, %v1489
        %v2089 = vsel %vm2063, %v2056, %v1491
        %v2091 = vsel %vm2063, %v2058, %v1493
        %v2093 = vsel %vm2063, %v2060, %v1495
        %v2095 = vsel %vm2063, %v2062, %v1497
        %vm2096 = vcmask 457728
        %v2098 = vsel %vm2096, %v2065, %v1739
        %v2100 = vsel %vm2096, %v2067, %v1741
        %v2102 = vsel %vm2096, %v2069, %v1743
        %v2104 = vsel %vm2096, %v2071, %v1745
        %v2106 = vsel %vm2096, %v2073, %v1747
        %v2108 = vsel %vm2096, %v2075, %v1749
        %v2110 = vsel %vm2096, %v2077, %v1751
        %v2112 = vsel %vm2096, %v2079, %v1753
        %v2114 = vsel %vm2096, %v2081, %v1755
        %v2116 = vsel %vm2096, %v2083, %v1757
        %v2118 = vsel %vm2096, %v2085, %v1759
        %v2120 = vsel %vm2096, %v2087, %v1761
        %v2122 = vsel %vm2096, %v2089, %v1763
        %v2124 = vsel %vm2096, %v2091, %v1765
        %v2126 = vsel %vm2096, %v2093, %v1767
        %v2128 = vsel %vm2096, %v2095, %v1769
        %vm2129 = vcmask 523264
        %v2131 = vsel %vm2129, %v2098, %v1867
        %v2133 = vsel %vm2129, %v2100, %v1869
        %v2135 = vsel %vm2129, %v2102, %v1871
        %v2137 = vsel %vm2129, %v2104, %v1873
        %v2139 = vsel %vm2129, %v2106, %v1875
        %v2141 = vsel %vm2129, %v2108, %v1877
        %v2143 = vsel %vm2129, %v2110, %v1879
        %v2145 = vsel %vm2129, %v2112, %v1881
        %v2147 = vsel %vm2129, %v2114, %v1883
        %v2149 = vsel %vm2129, %v2116, %v1885
        %v2151 = vsel %vm2129, %v2118, %v1887
        %v2153 = vsel %vm2129, %v2120, %v1889
        %v2155 = vsel %vm2129, %v2122, %v1891
        %v2157 = vsel %vm2129, %v2124, %v1893
        %v2159 = vsel %vm2129, %v2126, %v1895
        %v2161 = vsel %vm2129, %v2128, %v1897
        %vm2162 = vcmask 588800
        %v2164 = vsel %vm2162, %v2131, 0
        %v2166 = vsel %vm2162, %v2133, 0
        %v2168 = vsel %vm2162, %v2135, 0
        %v2170 = vsel %vm2162, %v2137, 0
        %v2172 = vsel %vm2162, %v2139, 0
        %v2174 = vsel %vm2162, %v2141, 0
        %v2176 = vsel %vm2162, %v2143, 0
        %v2178 = vsel %vm2162, %v2145, 0
        %v2180 = vsel %vm2162, %v2147, 0
        %v2182 = vsel %vm2162, %v2149, 0
        %v2184 = vsel %vm2162, %v2151, 0
        %v2186 = vsel %vm2162, %v2153, 0
        %v2188 = vsel %vm2162, %v2155, 0
        %v2190 = vsel %vm2162, %v2157, 0
        %v2192 = vsel %vm2162, %v2159, 0
        %v2194 = vsel %vm2162, %v2161, 0
        %v2196 = vld [vmem:[%s1] sm:$0xf]
        %v2197 = vld [vmem:[%s1 + $0x4] sm:$0xf]
        %v2198 = vld [vmem:[%s1 + $0x8] sm:$0xf]
        %v2199 = vld [vmem:[%s1 + $0xc] sm:$0xf]
        %v2200 = vld [vmem:[%s1 + $0x10] sm:$0xf]
        %v2201 = vld [vmem:[%s1 + $0x14] sm:$0xf]
        %v2202 = vld [vmem:[%s1 + $0x18] sm:$0xf]
        %v2203 = vld [vmem:[%s1 + $0x1c] sm:$0xf]
        %v2204 = vld [vmem:[%s1 + $0x20] sm:$0xf]
        %v2205 = vld [vmem:[%s1 + $0x24] sm:$0xf]
        %v2206 = vld [vmem:[%s1 + $0x28] sm:$0xf]
        %v2207 = vld [vmem:[%s1 + $0x2c] sm:$0xf]
        %v2208 = vld [vmem:[%s1 + $0x30] sm:$0xf]
        %v2209 = vld [vmem:[%s1 + $0x34] sm:$0xf]
        %v2210 = vld [vmem:[%s1 + $0x38] sm:$0xf]
        %v2211 = vld [vmem:[%s1 + $0x3c] sm:$0xf]
        %v2212 = vld [vmem:[%s2] sm:$0x1]
        %v2214 = vlaneseq
        %v2215 = vshrl.u32 %v2214, 7
        %v2216 = vsub.s32 0, %v2215
        %v2217 = vrot.slane %v2212, %v2216
        %v2235 = vunpack.c.l.b16 %v2196
        %v2236 = vunpack.c.l.b16 %v2197
        %v2237 = vunpack.c.l.b16 %v2198
        %v2238 = vunpack.c.l.b16 %v2199
        %v2239 = vunpack.c.l.b16 %v2200
        %v2240 = vunpack.c.l.b16 %v2201
        %v2241 = vunpack.c.l.b16 %v2202
        %v2242 = vunpack.c.l.b16 %v2203
        %v2243 = vunpack.c.l.b16 %v2204
        %v2244 = vunpack.c.l.b16 %v2205
        %v2245 = vunpack.c.l.b16 %v2206
        %v2246 = vunpack.c.l.b16 %v2207
        %v2247 = vunpack.c.l.b16 %v2208
        %v2248 = vunpack.c.l.b16 %v2209
        %v2249 = vunpack.c.l.b16 %v2210
        %v2250 = vunpack.c.l.b16 %v2211
        %v2251 = vpack.c.b16 %v2236, %v2235
        %v2252 = vpack.c.b16 %v2238, %v2237
        %v2253 = vpack.c.b16 %v2240, %v2239
        %v2254 = vpack.c.b16 %v2242, %v2241
        %v2255 = vpack.c.b16 %v2244, %v2243
        %v2256 = vpack.c.b16 %v2246, %v2245
        %v2257 = vpack.c.b16 %v2248, %v2247
        %v2258 = vpack.c.b16 %v2250, %v2249
        %2267 = vmatprep.subr.bf16.mxu0 0
        %2268 = vmatpush1.bf16.msra.mxu0 %v2251
        %2269 = vmatprep.subr.bf16.mxu0 0
        %2270 = vmatpush1.bf16.msra.mxu0 %v2252
        %2271 = vmatprep.subr.bf16.mxu0 0
        %2272 = vmatpush1.bf16.msra.mxu0 %v2253
        %2273 = vmatprep.subr.bf16.mxu0 0
        %2274 = vmatpush1.bf16.msra.mxu0 %v2254
        %2275 = vmatprep.subr.bf16.mxu0 0
        %2276 = vmatpush1.bf16.msra.mxu0 %v2255
        %2277 = vmatprep.subr.bf16.mxu0 0
        %2278 = vmatpush1.bf16.msra.mxu0 %v2256
        %2279 = vmatprep.subr.bf16.mxu0 0
        %2280 = vmatpush1.bf16.msra.mxu0 %v2257
        %2281 = vmatprep.subr.bf16.mxu0 0
        %2282 = vmatpush1.bf16.msra.mxu0 %v2258
        %2283 = vmatprep.subr.bf16.mxu0 0
        %2284 = vmatpush1.bf16.msra.mxu0 0
        %2285 = vmatprep.subr.bf16.mxu0 0
        %2286 = vmatpush1.bf16.msra.mxu0 0
        %2287 = vmatprep.subr.bf16.mxu0 0
        %2288 = vmatpush1.bf16.msra.mxu0 0
        %2289 = vmatprep.subr.bf16.mxu0 0
        %2290 = vmatpush1.bf16.msra.mxu0 0
        %2291 = vmatprep.subr.bf16.mxu0 0
        %2292 = vmatpush1.bf16.msra.mxu0 0
        %2293 = vmatprep.subr.bf16.mxu0 0
        %2294 = vmatpush1.bf16.msra.mxu0 0
        %2295 = vmatprep.subr.bf16.mxu0 0
        %2296 = vmatpush1.bf16.msra.mxu0 0
        %2297 = vmatprep.subr.bf16.mxu0 0
        %2298 = vmatpush1.bf16.msra.mxu0 0
        %2299 = vmatprep.mubr.bf16.mxu0 0
        %2300 = vmatmul.mubr.bf16.gmra.mrb[0].mxu0 %v2164
        %v2301 = vpop.f32.mrb[0].mxu0
        %v2302 = vadd.f32 %v2217, %v2301
        %v2303 = vpop.f32.mrb[0].mxu0
        %v2304 = vpop.f32.mrb[0].mxu0
        %v2305 = vadd.f32 %v2217, %v2304
        %v2306 = vpop.f32.mrb[0].mxu0
        %2307 = vmatprep.mubr.bf16.mxu0 0
        %2308 = vmatmul.mubr.bf16.gmra.mrb[0].mxu0 %v2166
        %v2309 = vpop.f32.mrb[0].mxu0
        %v2310 = vadd.f32 %v2217, %v2309
        %v2311 = vpop.f32.mrb[0].mxu0
        %v2312 = vpop.f32.mrb[0].mxu0
        %v2313 = vadd.f32 %v2217, %v2312
        %v2314 = vpop.f32.mrb[0].mxu0
        %2315 = vmatprep.mubr.bf16.mxu0 0
        %2316 = vmatmul.mubr.bf16.gmra.mrb[0].mxu0 %v2168
        %v2317 = vpop.f32.mrb[0].mxu0
        %v2318 = vadd.f32 %v2217, %v2317
        %v2319 = vpop.f32.mrb[0].mxu0
        %v2320 = vpop.f32.mrb[0].mxu0
        %v2321 = vadd.f32 %v2217, %v2320
        %v2322 = vpop.f32.mrb[0].mxu0
        %2323 = vmatprep.mubr.bf16.mxu0 0
        %2324 = vmatmul.mubr.bf16.gmra.mrb[0].mxu0 %v2170
        %v2325 = vpop.f32.mrb[0].mxu0
        %v2326 = vadd.f32 %v2217, %v2325
        %v2327 = vpop.f32.mrb[0].mxu0
        %v2328 = vpop.f32.mrb[0].mxu0
        %v2329 = vadd.f32 %v2217, %v2328
        %v2330 = vpop.f32.mrb[0].mxu0
        %2331 = vmatprep.mubr.bf16.mxu0 0
        %2332 = vmatmul.mubr.bf16.gmra.mrb[0].mxu0 %v2172
        %v2333 = vpop.f32.mrb[0].mxu0
        %v2334 = vadd.f32 %v2217, %v2333
        %v2335 = vpop.f32.mrb[0].mxu0
        %v2336 = vpop.f32.mrb[0].mxu0
        %v2337 = vadd.f32 %v2217, %v2336
        %v2338 = vpop.f32.mrb[0].mxu0
        %2339 = vmatprep.mubr.bf16.mxu0 0
        %2340 = vmatmul.mubr.bf16.gmra.mrb[0].mxu0 %v2174
        %v2341 = vpop.f32.mrb[0].mxu0
        %v2342 = vadd.f32 %v2217, %v2341
        %v2343 = vpop.f32.mrb[0].mxu0
        %v2344 = vpop.f32.mrb[0].mxu0
        %v2345 = vadd.f32 %v2217, %v2344
        %v2346 = vpop.f32.mrb[0].mxu0
        %2347 = vmatprep.mubr.bf16.mxu0 0
        %2348 = vmatmul.mubr.bf16.gmra.mrb[0].mxu0 %v2176
        %v2349 = vpop.f32.mrb[0].mxu0
        %v2350 = vadd.f32 %v2217, %v2349
        %v2351 = vpop.f32.mrb[0].mxu0
        %v2352 = vpop.f32.mrb[0].mxu0
        %v2353 = vadd.f32 %v2217, %v2352
        %v2354 = vpop.f32.mrb[0].mxu0
        %2355 = vmatprep.mubr.bf16.mxu0 0
        %2356 = vmatmul.mubr.bf16.gmra.mrb[0].mxu0 %v2178
        %v2357 = vpop.f32.mrb[0].mxu0
        %v2358 = vadd.f32 %v2217, %v2357
        %v2359 = vpop.f32.mrb[0].mxu0
        %v2360 = vpop.f32.mrb[0].mxu0
        %v2361 = vadd.f32 %v2217, %v2360
        %v2362 = vpop.f32.mrb[0].mxu0
        %2363 = vmatprep.mubr.bf16.mxu0 0
        %2364 = vmatmul.mubr.bf16.gmra.mrb[0].mxu0 %v2180
        %v2365 = vpop.f32.mrb[0].mxu0
        %v2366 = vadd.f32 %v2217, %v2365
        %v2367 = vpop.f32.mrb[0].mxu0
        %v2368 = vpop.f32.mrb[0].mxu0
        %v2369 = vadd.f32 %v2217, %v2368
        %v2370 = vpop.f32.mrb[0].mxu0
        %2371 = vmatprep.mubr.bf16.mxu0 0
        %2372 = vmatmul.mubr.bf16.gmra.mrb[0].mxu0 %v2182
        %v2373 = vpop.f32.mrb[0].mxu0
        %v2374 = vadd.f32 %v2217, %v2373
        %v2375 = vpop.f32.mrb[0].mxu0
        %v2376 = vpop.f32.mrb[0].mxu0
        %v2377 = vadd.f32 %v2217, %v2376
        %v2378 = vpop.f32.mrb[0].mxu0
        %2379 = vmatprep.mubr.bf16.mxu0 0
        %2380 = vmatmul.mubr.bf16.gmra.mrb[0].mxu0 %v2184
        %v2381 = vpop.f32.mrb[0].mxu0
        %v2382 = vadd.f32 %v2217, %v2381
        %v2383 = vpop.f32.mrb[0].mxu0
        %v2384 = vpop.f32.mrb[0].mxu0
        %v2385 = vadd.f32 %v2217, %v2384
        %v2386 = vpop.f32.mrb[0].mxu0
        %2387 = vmatprep.mubr.bf16.mxu0 0
        %2388 = vmatmul.mubr.bf16.gmra.mrb[0].mxu0 %v2186
        %v2389 = vpop.f32.mrb[0].mxu0
        %v2390 = vadd.f32 %v2217, %v2389
        %v2391 = vpop.f32.mrb[0].mxu0
        %v2392 = vpop.f32.mrb[0].mxu0
        %v2393 = vadd.f32 %v2217, %v2392
        %v2394 = vpop.f32.mrb[0].mxu0
        %2395 = vmatprep.mubr.bf16.mxu0 0
        %2396 = vmatmul.mubr.bf16.gmra.mrb[0].mxu0 %v2188
        %v2397 = vpop.f32.mrb[0].mxu0
        %v2398 = vadd.f32 %v2217, %v2397
        %v2399 = vpop.f32.mrb[0].mxu0
        %v2400 = vpop.f32.mrb[0].mxu0
        %v2401 = vadd.f32 %v2217, %v2400
        %v2402 = vpop.f32.mrb[0].mxu0
        %2403 = vmatprep.mubr.bf16.mxu0 0
        %2404 = vmatmul.mubr.bf16.gmra.mrb[0].mxu0 %v2190
        %v2405 = vpop.f32.mrb[0].mxu0
        %v2406 = vadd.f32 %v2217, %v2405
        %v2407 = vpop.f32.mrb[0].mxu0
        %v2408 = vpop.f32.mrb[0].mxu0
        %v2409 = vadd.f32 %v2217, %v2408
        %v2410 = vpop.f32.mrb[0].mxu0
        %2411 = vmatprep.mubr.bf16.mxu0 0
        %2412 = vmatmul.mubr.bf16.gmra.mrb[0].mxu0 %v2192
        %v2413 = vpop.f32.mrb[0].mxu0
        %v2414 = vadd.f32 %v2217, %v2413
        %v2415 = vpop.f32.mrb[0].mxu0
        %v2416 = vpop.f32.mrb[0].mxu0
        %v2417 = vadd.f32 %v2217, %v2416
        %v2418 = vpop.f32.mrb[0].mxu0
        %2419 = vmatprep.mubr.bf16.mxu0 0
        %2420 = vmatmul.mubr.bf16.gmra.mrb[0].mxu0 %v2194
        %v2421 = vpop.f32.mrb[0].mxu0
        %v2422 = vadd.f32 %v2217, %v2421
        %v2423 = vpop.f32.mrb[0].mxu0
        %v2424 = vpop.f32.mrb[0].mxu0
        %v2425 = vadd.f32 %v2217, %v2424
        %v2426 = vpop.f32.mrb[0].mxu0
        %2427 = vdwg.mxu0
        %vm2428 = vcmp.ge.f32.partialorder %v2302, 0.0
        %vm2429 = vcmp.ge.f32.partialorder %v2305, 0.0
        %vm2430 = vcmp.ge.f32.partialorder %v2310, 0.0
        %vm2431 = vcmp.ge.f32.partialorder %v2313, 0.0
        %vm2432 = vcmp.ge.f32.partialorder %v2318, 0.0
        %vm2433 = vcmp.ge.f32.partialorder %v2321, 0.0
        %vm2434 = vcmp.ge.f32.partialorder %v2326, 0.0
        %vm2435 = vcmp.ge.f32.partialorder %v2329, 0.0
        %vm2436 = vcmp.ge.f32.partialorder %v2334, 0.0
        %vm2437 = vcmp.ge.f32.partialorder %v2337, 0.0
        %vm2438 = vcmp.ge.f32.partialorder %v2342, 0.0
        %vm2439 = vcmp.ge.f32.partialorder %v2345, 0.0
        %vm2440 = vcmp.ge.f32.partialorder %v2350, 0.0
        %vm2441 = vcmp.ge.f32.partialorder %v2353, 0.0
        %vm2442 = vcmp.ge.f32.partialorder %v2358, 0.0
        %vm2443 = vcmp.ge.f32.partialorder %v2361, 0.0
        %vm2444 = vcmp.ge.f32.partialorder %v2366, 0.0
        %vm2445 = vcmp.ge.f32.partialorder %v2369, 0.0
        %vm2446 = vcmp.ge.f32.partialorder %v2374, 0.0
        %vm2447 = vcmp.ge.f32.partialorder %v2377, 0.0
        %vm2448 = vcmp.ge.f32.partialorder %v2382, 0.0
        %vm2449 = vcmp.ge.f32.partialorder %v2385, 0.0
        %vm2450 = vcmp.ge.f32.partialorder %v2390, 0.0
        %vm2451 = vcmp.ge.f32.partialorder %v2393, 0.0
        %vm2452 = vcmp.ge.f32.partialorder %v2398, 0.0
        %vm2453 = vcmp.ge.f32.partialorder %v2401, 0.0
        %vm2454 = vcmp.ge.f32.partialorder %v2406, 0.0
        %vm2455 = vcmp.ge.f32.partialorder %v2409, 0.0
        %vm2456 = vcmp.ge.f32.partialorder %v2414, 0.0
        %vm2457 = vcmp.ge.f32.partialorder %v2417, 0.0
        %vm2458 = vcmp.ge.f32.partialorder %v2422, 0.0
        %vm2459 = vcmp.ge.f32.partialorder %v2425, 0.0
        %v2460 = vmul.f32 %v2302, 0.1
        %v2461 = vmul.f32 %v2305, 0.1
        %v2462 = vmul.f32 %v2310, 0.1
        %v2463 = vmul.f32 %v2313, 0.1
        %v2464 = vmul.f32 %v2318, 0.1
        %v2465 = vmul.f32 %v2321, 0.1
        %v2466 = vmul.f32 %v2326, 0.1
        %v2467 = vmul.f32 %v2329, 0.1
        %v2468 = vmul.f32 %v2334, 0.1
        %v2469 = vmul.f32 %v2337, 0.1
        %v2470 = vmul.f32 %v2342, 0.1
        %v2471 = vmul.f32 %v2345, 0.1
        %v2472 = vmul.f32 %v2350, 0.1
        %v2473 = vmul.f32 %v2353, 0.1
        %v2474 = vmul.f32 %v2358, 0.1
        %v2475 = vmul.f32 %v2361, 0.1
        %v2476 = vmul.f32 %v2366, 0.1
        %v2477 = vmul.f32 %v2369, 0.1
        %v2478 = vmul.f32 %v2374, 0.1
        %v2479 = vmul.f32 %v2377, 0.1
        %v2480 = vmul.f32 %v2382, 0.1
        %v2481 = vmul.f32 %v2385, 0.1
        %v2482 = vmul.f32 %v2390, 0.1
        %v2483 = vmul.f32 %v2393, 0.1
        %v2484 = vmul.f32 %v2398, 0.1
        %v2485 = vmul.f32 %v2401, 0.1
        %v2486 = vmul.f32 %v2406, 0.1
        %v2487 = vmul.f32 %v2409, 0.1
        %v2488 = vmul.f32 %v2414, 0.1
        %v2489 = vmul.f32 %v2417, 0.1
        %v2490 = vmul.f32 %v2422, 0.1
        %v2491 = vmul.f32 %v2425, 0.1
        %v2492 = vsel %vm2428, %v2302, %v2460
        %v2493 = vsel %vm2429, %v2305, %v2461
        %v2494 = vsel %vm2430, %v2310, %v2462
        %v2495 = vsel %vm2431, %v2313, %v2463
        %v2496 = vsel %vm2432, %v2318, %v2464
        %v2497 = vsel %vm2433, %v2321, %v2465
        %v2498 = vsel %vm2434, %v2326, %v2466
        %v2499 = vsel %vm2435, %v2329, %v2467
        %v2500 = vsel %vm2436, %v2334, %v2468
        %v2501 = vsel %vm2437, %v2337, %v2469
        %v2502 = vsel %vm2438, %v2342, %v2470
        %v2503 = vsel %vm2439, %v2345, %v2471
        %v2504 = vsel %vm2440, %v2350, %v2472
        %v2505 = vsel %vm2441, %v2353, %v2473
        %v2506 = vsel %vm2442, %v2358, %v2474
        %v2507 = vsel %vm2443, %v2361, %v2475
        %v2508 = vsel %vm2444, %v2366, %v2476
        %v2509 = vsel %vm2445, %v2369, %v2477
        %v2510 = vsel %vm2446, %v2374, %v2478
        %v2511 = vsel %vm2447, %v2377, %v2479
        %v2512 = vsel %vm2448, %v2382, %v2480
        %v2513 = vsel %vm2449, %v2385, %v2481
        %v2514 = vsel %vm2450, %v2390, %v2482
        %v2515 = vsel %vm2451, %v2393, %v2483
        %v2516 = vsel %vm2452, %v2398, %v2484
        %v2517 = vsel %vm2453, %v2401, %v2485
        %v2518 = vsel %vm2454, %v2406, %v2486
        %v2519 = vsel %vm2455, %v2409, %v2487
        %v2520 = vsel %vm2456, %v2414, %v2488
        %v2521 = vsel %vm2457, %v2417, %v2489
        %v2522 = vsel %vm2458, %v2422, %v2490
        %v2523 = vsel %vm2459, %v2425, %v2491
        %2524 = vst [vmem:[%s187] sm:$0xff] %v2492
        %2525 = vst [vmem:[%s187 + $0x8] sm:$0xff] %v2493
        %2526 = vst [vmem:[%s187 + $0x10] sm:$0xff] %v2494
        %2527 = vst [vmem:[%s187 + $0x18] sm:$0xff] %v2495
        %2528 = vst [vmem:[%s187 + $0x20] sm:$0xff] %v2496
        %2529 = vst [vmem:[%s187 + $0x28] sm:$0xff] %v2497
        %2530 = vst [vmem:[%s187 + $0x30] sm:$0xff] %v2498
        %2531 = vst [vmem:[%s187 + $0x38] sm:$0xff] %v2499
        %2532 = vst [vmem:[%s187 + $0x40] sm:$0xff] %v2500
        %2533 = vst [vmem:[%s187 + $0x48] sm:$0xff] %v2501
        %2534 = vst [vmem:[%s187 + $0x50] sm:$0xff] %v2502
        %2535 = vst [vmem:[%s187 + $0x58] sm:$0xff] %v2503
        %2536 = vst [vmem:[%s187 + $0x60] sm:$0xff] %v2504
        %2537 = vst [vmem:[%s187 + $0x68] sm:$0xff] %v2505
        %2538 = vst [vmem:[%s187 + $0x70] sm:$0xff] %v2506
        %2539 = vst [vmem:[%s187 + $0x78] sm:$0xff] %v2507
        %2540 = vst [vmem:[%s187 + $0x80] sm:$0xff] %v2508
        %2541 = vst [vmem:[%s187 + $0x88] sm:$0xff] %v2509
        %2542 = vst [vmem:[%s187 + $0x90] sm:$0xff] %v2510
        %2543 = vst [vmem:[%s187 + $0x98] sm:$0xff] %v2511
        %2544 = vst [vmem:[%s187 + $0xa0] sm:$0xff] %v2512
        %2545 = vst [vmem:[%s187 + $0xa8] sm:$0xff] %v2513
        %2546 = vst [vmem:[%s187 + $0xb0] sm:$0xff] %v2514
        %2547 = vst [vmem:[%s187 + $0xb8] sm:$0xff] %v2515
        %2548 = vst [vmem:[%s187 + $0xc0] sm:$0xff] %v2516
        %2549 = vst [vmem:[%s187 + $0xc8] sm:$0xff] %v2517
        %2550 = vst [vmem:[%s187 + $0xd0] sm:$0xff] %v2518
        %2551 = vst [vmem:[%s187 + $0xd8] sm:$0xff] %v2519
        %2552 = vst [vmem:[%s187 + $0xe0] sm:$0xff] %v2520
        %2553 = vst [vmem:[%s187 + $0xe8] sm:$0xff] %v2521
        %2554 = vst [vmem:[%s187 + $0xf0] sm:$0xff] %v2522
        %2555 = vst [vmem:[%s187 + $0xf8] sm:$0xff] %v2523
        %s2556 = sand.u32 %s109, 1
        %s2557 = scalar_lea.sflag [#allocation3], %s2556
        %s2558 = sand.u32 %s109, 1
        %s2559 = smul.addr %s2558, 256
        %s2560 = scalar_lea.vmem [#allocation2], %s2559
        // Predicated region
        $region33: #{tpu_custom_call.1} parent=31 // pred_check
          %p2561 = pneg %p119
        $region34: #{tpu_custom_call.1} parent=31 // pred_check_branch
          %2563 = sbr.rel (%p2561) target = $region36
        $region35: #{tpu_custom_call.1} parent=31 // pred_region
          %s2565 = ssub.s32 4096, 4096
          %2566 = vsyncadd %s2557, %s2565
          %s2567 = smul.addr %s22, 32
          %s2568 = smul.addr %s21, 32
          %s2569 = sadd.s32 %s2567, %s2568
          %s2570 = smul.addr %s2569, 128
          %s2571 = scalar_lea.hbm %s3, %s2570
          %s2572 = sshll.u32 %s2560, 4
          %s2573 = int_to_ptr.vmem [resolvable:$true] %s2572
          %2578 = dma.vmem_to_hbm [thread:$0]  %s2573, 4096, %s2571, %s2557, 128, 128, 8
        $region36: #{tpu_custom_call.1} parent=31 // pred_fallthru
          _
      $region32: #{tpu_custom_call.1} parent=5 // pred_fallthru
        _
      %p2579 = scmp.le.s32.totalorder 2, %s12
      // Predicated region
      $region37: #{tpu_custom_call.1} parent=5 // pred_check
        %p2580 = pneg %p2579
      $region38: #{tpu_custom_call.1} parent=5 // pred_check_branch
        %2582 = sbr.rel (%p2580) target = $region40
      $region39: #{tpu_custom_call.1} parent=5 // pred_region
        %s2583 = ssub.s32 %s12, 2
        // Predicated region
        $region41: #{tpu_custom_call.1} parent=39 // pred_check
          %p2584 = pneg %p125
        $region42: #{tpu_custom_call.1} parent=39 // pred_check_branch
          %2586 = sbr.rel (%p2584) target = $region44
        $region43: #{tpu_custom_call.1} parent=39 // pred_region
          %s2587 = sand.u32 %s110, 1
          %s2588 = scalar_lea.sflag [#allocation3], %s2587
          %s2589 = sand.u32 %s110, 1
          %s2590 = smul.addr %s2589, 256
          %s2591 = scalar_lea.vmem [#allocation2], %s2590
          %2592 = dma.done %s2588, 4096
        $region44: #{tpu_custom_call.1} parent=39 // pred_fallthru
          _
      $region40: #{tpu_custom_call.1} parent=5 // pred_fallthru
        _
    $region6: #{tpu_custom_call.1} parent=1 // loop_footer
      %s16 = sadd.s32 1, %s12
    $region7: #{tpu_custom_call.1} parent=1 // loop_footer_branch
      %11 = sbr.rel target = $region3
    $region8: #{tpu_custom_call.1} parent=1 // loop_exit
      _
    %2593 = vsyncpa [#allocation3], 1
    %s2594 = scalar_lea.sflag [#allocation3], 1
    %2595 = vsyncpa %s2594, 1

// kernel: tpu_custom_call.1
$region0: #{tpu_custom_call.1}
  #allocation0 [shape = 'u32[]', space=smem, size = 0x4, offset = 0x4, fixed_abs, tag = 'smem constant byte address 0x4 - core index']
  #allocation1 [shape = 'u32[144,128]{1,0:T(1,128)}', space=vmem, size = 0x12000, scoped, tag = 'internal scratch']
  %s0 = inlined_call_operand.vmem [shape: bf16[2,1,18,18,8], index: 0, kind: input, shape index: {}]
  %s1 = inlined_call_operand.vmem [shape: bf16[9,8,128], index: 1, kind: input, shape index: {}]
  %s2 = inlined_call_operand.vmem [shape: f32[1,128], index: 2, kind: input, shape index: {}]
  %s3 = inlined_call_operand.hbm [shape: f32[2,1,256,128], index: 3, kind: output, shape index: {}]
  %s4 = sld [smem:[#allocation0]]
  $region45: #{tpu_custom_call.1} parent=0
    _
  %s6 = ssub.s32 1, %s4
  %s7 = scalar_select 0, %s6, %s4
  $region1: #{tpu_custom_call.1} parent=0
    #allocation2 [shape = 'u8[262144]{0}', space=vmem, size = 0x40000, scoped, tag = 'output window, operand 0']
    #allocation3 [shape = 's32[2]{0}', space=sflag, size = 0x8, scoped, tag = 'scoped memory for tpu_custom_call.1']
    %8 = vsyncpa [#allocation3], 0
    %s9 = scalar_lea.sflag [#allocation3], 1
    %10 = vsyncpa %s9, 0
    loop: start=0, step=1, limit=4
    $region2: #{tpu_custom_call.1} parent=1 // loop_pre_header
      _
    $region3: #{tpu_custom_call.1} parent=1 // loop_header
      %s12 = sphi 0, %s16
      %p13 = scmp.ge.s32.totalorder %s12, 4
      %s19 = sphi 0, %s31
      %s20 = sphi 0, %s27
      %s21 = sphi 0, %s19
      %s22 = sphi 0, %s20
      %s23 = sphi 0, %s21
      %s24 = sphi 0, %s22
      %s36 = sphi 0, %s38
      %s39 = sphi 0, %s36
      %s40 = sphi 0, %s39
      %s56 = sphi 0, %s40
      %s60 = sphi 0, %s60
      %s62 = sphi 0, %s60
      %s63 = sphi 0, %s62
      %s77 = sphi 0, %s63
      %s81 = sphi 0, %s81
      %s83 = sphi 0, %s81
      %s84 = sphi 0, %s83
      %s98 = sphi 0, %s84
      %s106 = sphi 0, %s108
      %s109 = sphi 0, %s106
      %s110 = sphi 0, %s109
      %s126 = sphi 0, %s110
    $region4: #{tpu_custom_call.1} parent=1 // loop_header_branch
      %15 = sbr.rel (%p13) target = $region8
    $region5: #{tpu_custom_call.1} parent=1 // loop_body
      %s17 = ssub.s32 %s12, 1
      %s18 = ssub.s32 %s12, 2
      %s25 = sadd.s32 1, %s20
      %p26 = scmp.ge.s32.totalorder %s25, 1
      %s27 = scalar_select %p26, 0, %s25
      %s28 = sadd.s32 1, %s19
      %s29 = scalar_select %p26, %s28, %s19
      %p30 = scmp.ge.s32.totalorder %s29, 2
      %s31 = scalar_select %p30, 0, %s29
      %s32 = ssub.s32 %s19, %s31
      %s33 = ssub.s32 %s20, %s27
      %s34 = sor.u32 %s32, %s33
      %p35 = scmp.eq.s32.totalorder %s34, 0
      %s37 = sadd.s32 %s36, 1
      %s38 = scalar_select %p35, %s36, %s37
      %p41 = pneg %p35
      %p42 = scmp.eq.s32.totalorder %s12, 1
      %p43 = por %p41, %p42
      %p44 = scmp.ne.s32.totalorder %s36, %s39
      %p45 = scmp.eq.s32.totalorder %s12, 0
      %p46 = por %p44, %p45
      %p47 = scmp.ne.s32.totalorder %s36, %s39
      %p48 = scmp.eq.s32.totalorder %s17, 1
      %p49 = por %p47, %p48
      %p50 = scmp.ne.s32.totalorder %s39, %s40
      %p51 = scmp.eq.s32.totalorder %s17, 0
      %p52 = por %p50, %p51
      %p53 = scmp.ne.s32.totalorder %s39, %s40
      %p54 = scmp.eq.s32.totalorder %s18, 1
      %p55 = por %p53, %p54
      %p57 = scmp.ne.s32.totalorder %s40, %s56
      %p58 = scmp.eq.s32.totalorder %s18, 0
      %p59 = por %p57, %p58
      %s61 = sadd.s32 %s60, 1
      %p64 = scmp.eq.s32.totalorder %s12, 1
      %p65 = scmp.ne.s32.totalorder %s60, %s62
      %p66 = scmp.eq.s32.totalorder %s12, 0
      %p67 = por %p65, %p66
      %p68 = scmp.ne.s32.totalorder %s60, %s62
      %p69 = scmp.eq.s32.totalorder %s17, 1
      %p70 = por %p68, %p69
      %p71 = scmp.ne.s32.totalorder %s62, %s63
      %p72 = scmp.eq.s32.totalorder %s17, 0
      %p73 = por %p71, %p72
      %p74 = scmp.ne.s32.totalorder %s62, %s63
      %p75 = scmp.eq.s32.totalorder %s18, 1
      %p76 = por %p74, %p75
      %p78 = scmp.ne.s32.totalorder %s63, %s77
      %p79 = scmp.eq.s32.totalorder %s18, 0
      %p80 = por %p78, %p79
      %s82 = sadd.s32 %s81, 1
      %p85 = scmp.eq.s32.totalorder %s12, 1
      %p86 = scmp.ne.s32.totalorder %s81, %s83
      %p87 = scmp.eq.s32.totalorder %s12, 0
      %p88 = por %p86, %p87
      %p89 = scmp.ne.s32.totalorder %s81, %s83
      %p90 = scmp.eq.s32.totalorder %s17, 1
      %p91 = por %p89, %p90
      %p92 = scmp.ne.s32.totalorder %s83, %s84
      %p93 = scmp.eq.s32.totalorder %s17, 0
      %p94 = por %p92, %p93
      %p95 = scmp.ne.s32.totalorder %s83, %s84
      %p96 = scmp.eq.s32.totalorder %s18, 1
      %p97 = por %p95, %p96
      %p99 = scmp.ne.s32.totalorder %s84, %s98
      %p100 = scmp.eq.s32.totalorder %s18, 0
      %p101 = por %p99, %p100
      %s102 = ssub.s32 %s19, %s31
      %s103 = ssub.s32 %s20, %s27
      %s104 = sor.u32 %s102, %s103
      %p105 = scmp.eq.s32.totalorder %s104, 0
      %s107 = sadd.s32 %s106, 1
      %s108 = scalar_select %p105, %s106, %s107
      %p111 = pneg %p105
      %p112 = scmp.eq.s32.totalorder %s12, 1
      %p113 = por %p111, %p112
      %p114 = scmp.ne.s32.totalorder %s106, %s109
      %p115 = scmp.eq.s32.totalorder %s12, 0
      %p116 = por %p114, %p115
      %p117 = scmp.ne.s32.totalorder %s106, %s109
      %p118 = scmp.eq.s32.totalorder %s17, 1
      %p119 = por %p117, %p118
      %p120 = scmp.ne.s32.totalorder %s109, %s110
      %p121 = scmp.eq.s32.totalorder %s17, 0
      %p122 = por %p120, %p121
      %p123 = scmp.ne.s32.totalorder %s109, %s110
      %p124 = scmp.eq.s32.totalorder %s18, 1
      %p125 = por %p123, %p124
      %p127 = scmp.ne.s32.totalorder %s110, %s126
      %p128 = scmp.eq.s32.totalorder %s18, 0
      %p129 = por %p127, %p128
      %p130 = scmp.le.s32.totalorder 1, %s12
      %p131 = scmp.lt.s32.totalorder %s12, 3
      %p132 = pnand %p130, %p131
      %p133 = pneg %p132
      // Predicated region
      $region9: #{tpu_custom_call.1} parent=5 // pred_check
        _
      $region10: #{tpu_custom_call.1} parent=5 // pred_check_branch
        %135 = sbr.rel (%p132) target = $region12
      $region11: #{tpu_custom_call.1} parent=5 // pred_region
        %s136 = ssub.s32 %s12, 1
        // Predicated region
        $region13: #{tpu_custom_call.1} parent=11 // pred_check
          %p137 = pneg %p73
        $region14: #{tpu_custom_call.1} parent=11 // pred_check_branch
          %139 = sbr.rel (%p137) target = $region16
        $region15: #{tpu_custom_call.1} parent=11 // pred_region
          _
        $region16: #{tpu_custom_call.1} parent=11 // pred_fallthru
          _
        // Predicated region
        $region17: #{tpu_custom_call.1} parent=11 // pred_check
          %p140 = pneg %p94
        $region18: #{tpu_custom_call.1} parent=11 // pred_check_branch
          %142 = sbr.rel (%p140) target = $region20
        $region19: #{tpu_custom_call.1} parent=11 // pred_region
          _
        $region20: #{tpu_custom_call.1} parent=11 // pred_fallthru
          _
      $region12: #{tpu_custom_call.1} parent=5 // pred_fallthru
        _
      %p143 = scmp.lt.s32.totalorder %s12, 2
      // Predicated region
      $region21: #{tpu_custom_call.1} parent=5 // pred_check
        %p144 = pneg %p143
      $region22: #{tpu_custom_call.1} parent=5 // pred_check_branch
        %146 = sbr.rel (%p144) target = $region24
      $region23: #{tpu_custom_call.1} parent=5 // pred_region
        // Predicated region
        $region25: #{tpu_custom_call.1} parent=23 // pred_check
          %p147 = pneg %p46
        $region26: #{tpu_custom_call.1} parent=23 // pred_check_branch
          %149 = sbr.rel (%p147) target = $region28
        $region27: #{tpu_custom_call.1} parent=23 // pred_region
          %p150 = scmp.lt.s32.totalorder %s19, 1
          %s151 = scalar_select %p150, %s19, 1
          %p152 = scmp.lt.s32.totalorder %s20, 0
          %s153 = scalar_select %p152, %s20, 0
          %s154 = smul.addr %s153, 54
          %s155 = smul.addr %s151, 54
          %s156 = sadd.s32 %s154, %s155
          %s157 = smul.addr %s156, 4
          %s158 = scalar_lea.vmem %s0, %s157
        $region28: #{tpu_custom_call.1} parent=23 // pred_fallthru
          _
      $region24: #{tpu_custom_call.1} parent=5 // pred_fallthru
        _
      %p159 = scmp.le.s32.totalorder 1, %s12
      %p160 = scmp.lt.s32.totalorder %s12, 3
      %p161 = pnand %p159, %p160
      %p162 = pneg %p161
      // Predicated region
      $region29: #{tpu_custom_call.1} parent=5 // pred_check
        _
      $region30: #{tpu_custom_call.1} parent=5 // pred_check_branch
        %164 = sbr.rel (%p161) target = $region32
      $region31: #{tpu_custom_call.1} parent=5 // pred_region
        %s165 = ssub.s32 %s12, 1
        %p166 = scmp.lt.s32.totalorder %s21, 1
        %s167 = scalar_select %p166, %s21, 1
        %p168 = scmp.lt.s32.totalorder %s22, 0
        %s169 = scalar_select %p168, %s22, 0
        %s170 = smul.addr %s169, 54
        %s171 = smul.addr %s167, 54
        %s172 = sadd.s32 %s170, %s171
        %s173 = smul.addr %s172, 4
        %s174 = scalar_lea.vmem %s0, %s173
        %p175 = pneg %p52
        %p176 = pneg %p49
        %p177 = pneg %p73
        %p178 = pneg %p70
        %p179 = pneg %p94
        %p180 = pneg %p91
        %p181 = pneg %p122
        %p182 = pneg %p119
        %s183 = sand.u32 %s109, 1
        %s184 = scalar_lea.sflag [#allocation3], %s183
        %s185 = sand.u32 %s109, 1
        %s186 = smul.addr %s185, 256
        %s187 = scalar_lea.vmem [#allocation2], %s186
        %p188 = scmp.lt.s32.totalorder %s21, 1
        %s189 = scalar_select %p188, %s21, 1
        %p190 = scmp.lt.s32.totalorder %s22, 0
        %s191 = scalar_select %p190, %s22, 0
        %s192 = smul.addr %s191, 54
        %s193 = smul.addr %s189, 54
        %s194 = sadd.s32 %s192, %s193
        %s195 = smul.addr %s194, 4
        %s196 = scalar_lea.vmem %s0, %s195
        %v198 = vld [vmem:[%s196] sm:$0xf]
        %v199 = vld [vmem:[%s196 + $0x4] sm:$0xf]
        %v200 = vld [vmem:[%s196 + $0xc] sm:$0xf]
        %v201 = vld [vmem:[%s196 + $0x10] sm:$0xf]
        %v202 = vld [vmem:[%s196 + $0x18] sm:$0xf]
        %v203 = vld [vmem:[%s196 + $0x1c] sm:$0xf]
        %v204 = vld [vmem:[%s196 + $0x24] sm:$0xf]
        %v205 = vld [vmem:[%s196 + $0x28] sm:$0xf]
        %v206 = vld [vmem:[%s196 + $0x30] sm:$0xf]
        %v207 = vld [vmem:[%s196 + $0x34] sm:$0xf]
        %v208 = vld [vmem:[%s196 + $0x3c] sm:$0xf]
        %v209 = vld [vmem:[%s196 + $0x40] sm:$0xf]
        %v210 = vld [vmem:[%s196 + $0x48] sm:$0xf]
        %v211 = vld [vmem:[%s196 + $0x4c] sm:$0xf]
        %v212 = vld [vmem:[%s196 + $0x54] sm:$0xf]
        %v213 = vld [vmem:[%s196 + $0x58] sm:$0xf]
        %v214 = vld [vmem:[%s196 + $0x60] sm:$0xf]
        %v215 = vld [vmem:[%s196 + $0x64] sm:$0xf]
        %v216 = vld [vmem:[%s196 + $0x6c] sm:$0xf]
        %v217 = vld [vmem:[%s196 + $0x70] sm:$0xf]
        %v218 = vld [vmem:[%s196 + $0x78] sm:$0xf]
        %v219 = vld [vmem:[%s196 + $0x7c] sm:$0xf]
        %v220 = vld [vmem:[%s196 + $0x84] sm:$0xf]
        %v221 = vld [vmem:[%s196 + $0x88] sm:$0xf]
        %v222 = vld [vmem:[%s196 + $0x90] sm:$0xf]
        %v223 = vld [vmem:[%s196 + $0x94] sm:$0xf]
        %v224 = vld [vmem:[%s196 + $0x9c] sm:$0xf]
        %v225 = vld [vmem:[%s196 + $0xa0] sm:$0xf]
        %v226 = vld [vmem:[%s196 + $0xa8] sm:$0xf]
        %v227 = vld [vmem:[%s196 + $0xac] sm:$0xf]
        %v228 = vld [vmem:[%s196 + $0xb4] sm:$0xf]
        %v229 = vld [vmem:[%s196 + $0xb8] sm:$0xf]
        %v230 = vld [vmem:[%s196 + $0x8] sm:$0x1]
        %v231 = vld [vmem:[%s196 + $0x14] sm:$0x1]
        %v232 = vld [vmem:[%s196 + $0x20] sm:$0x1]
        %v233 = vld [vmem:[%s196 + $0x2c] sm:$0x1]
        %v234 = vld [vmem:[%s196 + $0x38] sm:$0x1]
        %v235 = vld [vmem:[%s196 + $0x44] sm:$0x1]
        %v236 = vld [vmem:[%s196 + $0x50] sm:$0x1]
        %v237 = vld [vmem:[%s196 + $0x5c] sm:$0x1]
        %v238 = vld [vmem:[%s196 + $0x68] sm:$0x1]
        %v239 = vld [vmem:[%s196 + $0x74] sm:$0x1]
        %v240 = vld [vmem:[%s196 + $0x80] sm:$0x1]
        %v241 = vld [vmem:[%s196 + $0x8c] sm:$0x1]
        %v242 = vld [vmem:[%s196 + $0x98] sm:$0x1]
        %v243 = vld [vmem:[%s196 + $0xa4] sm:$0x1]
        %v244 = vld [vmem:[%s196 + $0xb0] sm:$0x1]
        %v245 = vld [vmem:[%s196 + $0xbc] sm:$0x1]
        %v246 = vld [vmem:[%s196] sm:$0xe]
        %v247 = vld [vmem:[%s196 + $0xc] sm:$0xe]
        %v248 = vld [vmem:[%s196 + $0x18] sm:$0xe]
        %v249 = vld [vmem:[%s196 + $0x24] sm:$0xe]
        %v250 = vld [vmem:[%s196 + $0x30] sm:$0xe]
        %v251 = vld [vmem:[%s196 + $0x3c] sm:$0xe]
        %v252 = vld [vmem:[%s196 + $0x48] sm:$0xe]
        %v253 = vld [vmem:[%s196 + $0x54] sm:$0xe]
        %v254 = vld [vmem:[%s196 + $0x60] sm:$0xe]
        %v255 = vld [vmem:[%s196 + $0x6c] sm:$0xe]
        %v256 = vld [vmem:[%s196 + $0x78] sm:$0xe]
        %v257 = vld [vmem:[%s196 + $0x84] sm:$0xe]
        %v258 = vld [vmem:[%s196 + $0x90] sm:$0xe]
        %v259 = vld [vmem:[%s196 + $0x9c] sm:$0xe]
        %v260 = vld [vmem:[%s196 + $0xa8] sm:$0xe]
        %v261 = vld [vmem:[%s196 + $0xb4] sm:$0xe]
        %s262 = scalar_lea.vmem %s196, 12
        %v263 = vld [vmem:[%s262] sm:$0xf]
        %v264 = vld [vmem:[%s262 + $0x4] sm:$0xf]
        %v265 = vld [vmem:[%s262 + $0xc] sm:$0xf]
        %v266 = vld [vmem:[%s262 + $0x10] sm:$0xf]
        %v267 = vld [vmem:[%s262 + $0x18] sm:$0xf]
        %v268 = vld [vmem:[%s262 + $0x1c] sm:$0xf]
        %v269 = vld [vmem:[%s262 + $0x24] sm:$0xf]
        %v270 = vld [vmem:[%s262 + $0x28] sm:$0xf]
        %v271 = vld [vmem:[%s262 + $0x30] sm:$0xf]
        %v272 = vld [vmem:[%s262 + $0x34] sm:$0xf]
        %v273 = vld [vmem:[%s262 + $0x3c] sm:$0xf]
        %v274 = vld [vmem:[%s262 + $0x40] sm:$0xf]
        %v275 = vld [vmem:[%s262 + $0x48] sm:$0xf]
        %v276 = vld [vmem:[%s262 + $0x4c] sm:$0xf]
        %v277 = vld [vmem:[%s262 + $0x54] sm:$0xf]
        %v278 = vld [vmem:[%s262 + $0x58] sm:$0xf]
        %v279 = vld [vmem:[%s262 + $0x60] sm:$0xf]
        %v280 = vld [vmem:[%s262 + $0x64] sm:$0xf]
        %v281 = vld [vmem:[%s262 + $0x6c] sm:$0xf]
        %v282 = vld [vmem:[%s262 + $0x70] sm:$0xf]
        %v283 = vld [vmem:[%s262 + $0x78] sm:$0xf]
        %v284 = vld [vmem:[%s262 + $0x7c] sm:$0xf]
        %v285 = vld [vmem:[%s262 + $0x84] sm:$0xf]
        %v286 = vld [vmem:[%s262 + $0x88] sm:$0xf]
        %v287 = vld [vmem:[%s262 + $0x90] sm:$0xf]
        %v288 = vld [vmem:[%s262 + $0x94] sm:$0xf]
        %v289 = vld [vmem:[%s262 + $0x9c] sm:$0xf]
        %v290 = vld [vmem:[%s262 + $0xa0] sm:$0xf]
        %v291 = vld [vmem:[%s262 + $0xa8] sm:$0xf]
        %v292 = vld [vmem:[%s262 + $0xac] sm:$0xf]
        %v293 = vld [vmem:[%s262 + $0xb4] sm:$0xf]
        %v294 = vld [vmem:[%s262 + $0xb8] sm:$0xf]
        %v295 = vld [vmem:[%s262 + $0x8] sm:$0x1]
        %v296 = vld [vmem:[%s262 + $0x14] sm:$0x1]
        %v297 = vld [vmem:[%s262 + $0x20] sm:$0x1]
        %v298 = vld [vmem:[%s262 + $0x2c] sm:$0x1]
        %v299 = vld [vmem:[%s262 + $0x38] sm:$0x1]
        %v300 = vld [vmem:[%s262 + $0x44] sm:$0x1]
        %v301 = vld [vmem:[%s262 + $0x50] sm:$0x1]
        %v302 = vld [vmem:[%s262 + $0x5c] sm:$0x1]
        %v303 = vld [vmem:[%s262 + $0x68] sm:$0x1]
        %v304 = vld [vmem:[%s262 + $0x74] sm:$0x1]
        %v305 = vld [vmem:[%s262 + $0x80] sm:$0x1]
        %v306 = vld [vmem:[%s262 + $0x8c] sm:$0x1]
        %v307 = vld [vmem:[%s262 + $0x98] sm:$0x1]
        %v308 = vld [vmem:[%s262 + $0xa4] sm:$0x1]
        %v309 = vld [vmem:[%s262 + $0xb0] sm:$0x1]
        %v310 = vld [vmem:[%s262 + $0xbc] sm:$0x1]
        %v311 = vld [vmem:[%s262] sm:$0xe]
        %v312 = vld [vmem:[%s262 + $0xc] sm:$0xe]
        %v313 = vld [vmem:[%s262 + $0x18] sm:$0xe]
        %v314 = vld [vmem:[%s262 + $0x24] sm:$0xe]
        %v315 = vld [vmem:[%s262 + $0x30] sm:$0xe]
        %v316 = vld [vmem:[%s262 + $0x3c] sm:$0xe]
        %v317 = vld [vmem:[%s262 + $0x48] sm:$0xe]
        %v318 = vld [vmem:[%s262 + $0x54] sm:$0xe]
        %v319 = vld [vmem:[%s262 + $0x60] sm:$0xe]
        %v320 = vld [vmem:[%s262 + $0x6c] sm:$0xe]
        %v321 = vld [vmem:[%s262 + $0x78] sm:$0xe]
        %v322 = vld [vmem:[%s262 + $0x84] sm:$0xe]
        %v323 = vld [vmem:[%s262 + $0x90] sm:$0xe]
        %v324 = vld [vmem:[%s262 + $0x9c] sm:$0xe]
        %v325 = vld [vmem:[%s262 + $0xa8] sm:$0xe]
        %v326 = vld [vmem:[%s262 + $0xb4] sm:$0xe]
        %s327 = scalar_lea.vmem %s196, 24
        %v328 = vld [vmem:[%s327] sm:$0xf]
        %v329 = vld [vmem:[%s327 + $0x4] sm:$0xf]
        %v330 = vld [vmem:[%s327 + $0xc] sm:$0xf]
        %v331 = vld [vmem:[%s327 + $0x10] sm:$0xf]
        %v332 = vld [vmem:[%s327 + $0x18] sm:$0xf]
        %v333 = vld [vmem:[%s327 + $0x1c] sm:$0xf]
        %v334 = vld [vmem:[%s327 + $0x24] sm:$0xf]
        %v335 = vld [vmem:[%s327 + $0x28] sm:$0xf]
        %v336 = vld [vmem:[%s327 + $0x30] sm:$0xf]
        %v337 = vld [vmem:[%s327 + $0x34] sm:$0xf]
        %v338 = vld [vmem:[%s327 + $0x3c] sm:$0xf]
        %v339 = vld [vmem:[%s327 + $0x40] sm:$0xf]
        %v340 = vld [vmem:[%s327 + $0x48] sm:$0xf]
        %v341 = vld [vmem:[%s327 + $0x4c] sm:$0xf]
        %v342 = vld [vmem:[%s327 + $0x54] sm:$0xf]
        %v343 = vld [vmem:[%s327 + $0x58] sm:$0xf]
        %v344 = vld [vmem:[%s327 + $0x60] sm:$0xf]
        %v345 = vld [vmem:[%s327 + $0x64] sm:$0xf]
        %v346 = vld [vmem:[%s327 + $0x6c] sm:$0xf]
        %v347 = vld [vmem:[%s327 + $0x70] sm:$0xf]
        %v348 = vld [vmem:[%s327 + $0x78] sm:$0xf]
        %v349 = vld [vmem:[%s327 + $0x7c] sm:$0xf]
        %v350 = vld [vmem:[%s327 + $0x84] sm:$0xf]
        %v351 = vld [vmem:[%s327 + $0x88] sm:$0xf]
        %v352 = vld [vmem:[%s327 + $0x90] sm:$0xf]
        %v353 = vld [vmem:[%s327 + $0x94] sm:$0xf]
        %v354 = vld [vmem:[%s327 + $0x9c] sm:$0xf]
        %v355 = vld [vmem:[%s327 + $0xa0] sm:$0xf]
        %v356 = vld [vmem:[%s327 + $0xa8] sm:$0xf]
        %v357 = vld [vmem:[%s327 + $0xac] sm:$0xf]
        %v358 = vld [vmem:[%s327 + $0xb4] sm:$0xf]
        %v359 = vld [vmem:[%s327 + $0xb8] sm:$0xf]
        %v360 = vld [vmem:[%s327 + $0x8] sm:$0x1]
        %v361 = vld [vmem:[%s327 + $0x14] sm:$0x1]
        %v362 = vld [vmem:[%s327 + $0x20] sm:$0x1]
        %v363 = vld [vmem:[%s327 + $0x2c] sm:$0x1]
        %v364 = vld [vmem:[%s327 + $0x38] sm:$0x1]
        %v365 = vld [vmem:[%s327 + $0x44] sm:$0x1]
        %v366 = vld [vmem:[%s327 + $0x50] sm:$0x1]
        %v367 = vld [vmem:[%s327 + $0x5c] sm:$0x1]
        %v368 = vld [vmem:[%s327 + $0x68] sm:$0x1]
        %v369 = vld [vmem:[%s327 + $0x74] sm:$0x1]
        %v370 = vld [vmem:[%s327 + $0x80] sm:$0x1]
        %v371 = vld [vmem:[%s327 + $0x8c] sm:$0x1]
        %v372 = vld [vmem:[%s327 + $0x98] sm:$0x1]
        %v373 = vld [vmem:[%s327 + $0xa4] sm:$0x1]
        %v374 = vld [vmem:[%s327 + $0xb0] sm:$0x1]
        %v375 = vld [vmem:[%s327 + $0xbc] sm:$0x1]
        %v376 = vld [vmem:[%s327] sm:$0xe]
        %v377 = vld [vmem:[%s327 + $0xc] sm:$0xe]
        %v378 = vld [vmem:[%s327 + $0x18] sm:$0xe]
        %v379 = vld [vmem:[%s327 + $0x24] sm:$0xe]
        %v380 = vld [vmem:[%s327 + $0x30] sm:$0xe]
        %v381 = vld [vmem:[%s327 + $0x3c] sm:$0xe]
        %v382 = vld [vmem:[%s327 + $0x48] sm:$0xe]
        %v383 = vld [vmem:[%s327 + $0x54] sm:$0xe]
        %v384 = vld [vmem:[%s327 + $0x60] sm:$0xe]
        %v385 = vld [vmem:[%s327 + $0x6c] sm:$0xe]
        %v386 = vld [vmem:[%s327 + $0x78] sm:$0xe]
        %v387 = vld [vmem:[%s327 + $0x84] sm:$0xe]
        %v388 = vld [vmem:[%s327 + $0x90] sm:$0xe]
        %v389 = vld [vmem:[%s327 + $0x9c] sm:$0xe]
        %v390 = vld [vmem:[%s327 + $0xa8] sm:$0xe]
        %v391 = vld [vmem:[%s327 + $0xb4] sm:$0xe]
        %v392 = vld [vmem:[%s1] sm:$0xf]
        %vm393 = vsmask.f32 3328
        %vm394 = vsmask.f32 7440
        %vm395 = vmor %vm393, %vm394
        %v397 = vshrl.u32 %v198, 16
        %v399 = vrot.slane %v397, 4
        %v400 = vshll.u32 %v198, 16
        %v402 = vrot.slane %v400, 5
        %v403 = vor.u32 %v399, %v402
        %v404 = vrot.slane %v403, 4
        %v406 = vshll.u32 %v199, 16
        %v408 = vrot.slane %v406, 5
        %v409 = vsel %vm395, %v404, %v408
        %v410 = vshrl.u32 %v199, 16
        %v412 = vrot.slane %v410, 4
        %v413 = vor.u32 %v412, %v408
        %v414 = vrot.slane %v413, 4
        %v416 = vshll.u32 %v230, 16
        %v418 = vrot.slane %v416, 5
        %v419 = vsel %vm395, %v414, %v418
        %v421 = vshrl.u32 %v200, 16
        %v423 = vrot.slane %v421, 4
        %v424 = vshll.u32 %v200, 16
        %v426 = vrot.slane %v424, 5
        %v427 = vor.u32 %v423, %v426
        %v428 = vrot.slane %v427, 4
        %v430 = vshll.u32 %v201, 16
        %v432 = vrot.slane %v430, 5
        %v433 = vsel %vm395, %v428, %v432
        %v434 = vshrl.u32 %v201, 16
        %v436 = vrot.slane %v434, 4
        %v437 = vor.u32 %v436, %v432
        %v438 = vrot.slane %v437, 4
        %v440 = vshll.u32 %v231, 16
        %v442 = vrot.slane %v440, 5
        %v443 = vsel %vm395, %v438, %v442
        %v445 = vshrl.u32 %v202, 16
        %v447 = vrot.slane %v445, 4
        %v448 = vshll.u32 %v202, 16
        %v450 = vrot.slane %v448, 5
        %v451 = vor.u32 %v447, %v450
        %v452 = vrot.slane %v451, 4
        %v454 = vshll.u32 %v203, 16
        %v456 = vrot.slane %v454, 5
        %v457 = vsel %vm395, %v452, %v456
        %v458 = vshrl.u32 %v203, 16
        %v460 = vrot.slane %v458, 4
        %v461 = vor.u32 %v460, %v456
        %v462 = vrot.slane %v461, 4
        %v464 = vshll.u32 %v232, 16
        %v466 = vrot.slane %v464, 5
        %v467 = vsel %vm395, %v462, %v466
        %v469 = vshrl.u32 %v204, 16
        %v471 = vrot.slane %v469, 4
        %v472 = vshll.u32 %v204, 16
        %v474 = vrot.slane %v472, 5
        %v475 = vor.u32 %v471, %v474
        %v476 = vrot.slane %v475, 4
        %v478 = vshll.u32 %v205, 16
        %v480 = vrot.slane %v478, 5
        %v481 = vsel %vm395, %v476, %v480
        %v482 = vshrl.u32 %v205, 16
        %v484 = vrot.slane %v482, 4
        %v485 = vor.u32 %v484, %v480
        %v486 = vrot.slane %v485, 4
        %v488 = vshll.u32 %v233, 16
        %v490 = vrot.slane %v488, 5
        %v491 = vsel %vm395, %v486, %v490
        %v493 = vshrl.u32 %v206, 16
        %v495 = vrot.slane %v493, 4
        %v496 = vshll.u32 %v206, 16
        %v498 = vrot.slane %v496, 5
        %v499 = vor.u32 %v495, %v498
        %v500 = vrot.slane %v499, 4
        %v502 = vshll.u32 %v207, 16
        %v504 = vrot.slane %v502, 5
        %v505 = vsel %vm395, %v500, %v504
        %v506 = vshrl.u32 %v207, 16
        %v508 = vrot.slane %v506, 4
        %v509 = vor.u32 %v508, %v504
        %v510 = vrot.slane %v509, 4
        %v512 = vshll.u32 %v234, 16
        %v514 = vrot.slane %v512, 5
        %v515 = vsel %vm395, %v510, %v514
        %v517 = vshrl.u32 %v208, 16
        %v519 = vrot.slane %v517, 4
        %v520 = vshll.u32 %v208, 16
        %v522 = vrot.slane %v520, 5
        %v523 = vor.u32 %v519, %v522
        %v524 = vrot.slane %v523, 4
        %v526 = vshll.u32 %v209, 16
        %v528 = vrot.slane %v526, 5
        %v529 = vsel %vm395, %v524, %v528
        %v530 = vshrl.u32 %v209, 16
        %v532 = vrot.slane %v530, 4
        %v533 = vor.u32 %v532, %v528
        %v534 = vrot.slane %v533, 4
        %v536 = vshll.u32 %v235, 16
        %v538 = vrot.slane %v536, 5
        %v539 = vsel %vm395, %v534, %v538
        %v541 = vshrl.u32 %v210, 16
        %v543 = vrot.slane %v541, 4
        %v544 = vshll.u32 %v210, 16
        %v546 = vrot.slane %v544, 5
        %v547 = vor.u32 %v543, %v546
        %v548 = vrot.slane %v547, 4
        %v550 = vshll.u32 %v211, 16
        %v552 = vrot.slane %v550, 5
        %v553 = vsel %vm395, %v548, %v552
        %v554 = vshrl.u32 %v211, 16
        %v556 = vrot.slane %v554, 4
        %v557 = vor.u32 %v556, %v552
        %v558 = vrot.slane %v557, 4
        %v560 = vshll.u32 %v236, 16
        %v562 = vrot.slane %v560, 5
        %v563 = vsel %vm395, %v558, %v562
        %v565 = vshrl.u32 %v212, 16
        %v567 = vrot.slane %v565, 4
        %v568 = vshll.u32 %v212, 16
        %v570 = vrot.slane %v568, 5
        %v571 = vor.u32 %v567, %v570
        %v572 = vrot.slane %v571, 4
        %v574 = vshll.u32 %v213, 16
        %v576 = vrot.slane %v574, 5
        %v577 = vsel %vm395, %v572, %v576
        %v578 = vshrl.u32 %v213, 16
        %v580 = vrot.slane %v578, 4
        %v581 = vor.u32 %v580, %v576
        %v582 = vrot.slane %v581, 4
        %v584 = vshll.u32 %v237, 16
        %v586 = vrot.slane %v584, 5
        %v587 = vsel %vm395, %v582, %v586
        %v589 = vshrl.u32 %v214, 16
        %v591 = vrot.slane %v589, 4
        %v592 = vshll.u32 %v214, 16
        %v594 = vrot.slane %v592, 5
        %v595 = vor.u32 %v591, %v594
        %v596 = vrot.slane %v595, 4
        %v598 = vshll.u32 %v215, 16
        %v600 = vrot.slane %v598, 5
        %v601 = vsel %vm395, %v596, %v600
        %v602 = vshrl.u32 %v215, 16
        %v604 = vrot.slane %v602, 4
        %v605 = vor.u32 %v604, %v600
        %v606 = vrot.slane %v605, 4
        %v608 = vshll.u32 %v238, 16
        %v610 = vrot.slane %v608, 5
        %v611 = vsel %vm395, %v606, %v610
        %v613 = vshrl.u32 %v216, 16
        %v615 = vrot.slane %v613, 4
        %v616 = vshll.u32 %v216, 16
        %v618 = vrot.slane %v616, 5
        %v619 = vor.u32 %v615, %v618
        %v620 = vrot.slane %v619, 4
        %v622 = vshll.u32 %v217, 16
        %v624 = vrot.slane %v622, 5
        %v625 = vsel %vm395, %v620, %v624
        %v626 = vshrl.u32 %v217, 16
        %v628 = vrot.slane %v626, 4
        %v629 = vor.u32 %v628, %v624
        %v630 = vrot.slane %v629, 4
        %v632 = vshll.u32 %v239, 16
        %v634 = vrot.slane %v632, 5
        %v635 = vsel %vm395, %v630, %v634
        %v637 = vshrl.u32 %v218, 16
        %v639 = vrot.slane %v637, 4
        %v640 = vshll.u32 %v218, 16
        %v642 = vrot.slane %v640, 5
        %v643 = vor.u32 %v639, %v642
        %v644 = vrot.slane %v643, 4
        %v646 = vshll.u32 %v219, 16
        %v648 = vrot.slane %v646, 5
        %v649 = vsel %vm395, %v644, %v648
        %v650 = vshrl.u32 %v219, 16
        %v652 = vrot.slane %v650, 4
        %v653 = vor.u32 %v652, %v648
        %v654 = vrot.slane %v653, 4
        %v656 = vshll.u32 %v240, 16
        %v658 = vrot.slane %v656, 5
        %v659 = vsel %vm395, %v654, %v658
        %v661 = vshrl.u32 %v220, 16
        %v663 = vrot.slane %v661, 4
        %v664 = vshll.u32 %v220, 16
        %v666 = vrot.slane %v664, 5
        %v667 = vor.u32 %v663, %v666
        %v668 = vrot.slane %v667, 4
        %v670 = vshll.u32 %v221, 16
        %v672 = vrot.slane %v670, 5
        %v673 = vsel %vm395, %v668, %v672
        %v674 = vshrl.u32 %v221, 16
        %v676 = vrot.slane %v674, 4
        %v677 = vor.u32 %v676, %v672
        %v678 = vrot.slane %v677, 4
        %v680 = vshll.u32 %v241, 16
        %v682 = vrot.slane %v680, 5
        %v683 = vsel %vm395, %v678, %v682
        %v685 = vshrl.u32 %v222, 16
        %v687 = vrot.slane %v685, 4
        %v688 = vshll.u32 %v222, 16
        %v690 = vrot.slane %v688, 5
        %v691 = vor.u32 %v687, %v690
        %v692 = vrot.slane %v691, 4
        %v694 = vshll.u32 %v223, 16
        %v696 = vrot.slane %v694, 5
        %v697 = vsel %vm395, %v692, %v696
        %v698 = vshrl.u32 %v223, 16
        %v700 = vrot.slane %v698, 4
        %v701 = vor.u32 %v700, %v696
        %v702 = vrot.slane %v701, 4
        %v704 = vshll.u32 %v242, 16
        %v706 = vrot.slane %v704, 5
        %v707 = vsel %vm395, %v702, %v706
        %v709 = vshrl.u32 %v224, 16
        %v711 = vrot.slane %v709, 4
        %v712 = vshll.u32 %v224, 16
        %v714 = vrot.slane %v712, 5
        %v715 = vor.u32 %v711, %v714
        %v716 = vrot.slane %v715, 4
        %v718 = vshll.u32 %v225, 16
        %v720 = vrot.slane %v718, 5
        %v721 = vsel %vm395, %v716, %v720
        %v722 = vshrl.u32 %v225, 16
        %v724 = vrot.slane %v722, 4
        %v725 = vor.u32 %v724, %v720
        %v726 = vrot.slane %v725, 4
        %v728 = vshll.u32 %v243, 16
        %v730 = vrot.slane %v728, 5
        %v731 = vsel %vm395, %v726, %v730
        %v733 = vshrl.u32 %v226, 16
        %v735 = vrot.slane %v733, 4
        %v736 = vshll.u32 %v226, 16
        %v738 = vrot.slane %v736, 5
        %v739 = vor.u32 %v735, %v738
        %v740 = vrot.slane %v739, 4
        %v742 = vshll.u32 %v227, 16
        %v744 = vrot.slane %v742, 5
        %v745 = vsel %vm395, %v740, %v744
        %v746 = vshrl.u32 %v227, 16
        %v748 = vrot.slane %v746, 4
        %v749 = vor.u32 %v748, %v744
        %v750 = vrot.slane %v749, 4
        %v752 = vshll.u32 %v244, 16
        %v754 = vrot.slane %v752, 5
        %v755 = vsel %vm395, %v750, %v754
        %v757 = vshrl.u32 %v228, 16
        %v759 = vrot.slane %v757, 4
        %v760 = vshll.u32 %v228, 16
        %v762 = vrot.slane %v760, 5
        %v763 = vor.u32 %v759, %v762
        %v764 = vrot.slane %v763, 4
        %v766 = vshll.u32 %v229, 16
        %v768 = vrot.slane %v766, 5
        %v769 = vsel %vm395, %v764, %v768
        %v770 = vshrl.u32 %v229, 16
        %v772 = vrot.slane %v770, 4
        %v773 = vor.u32 %v772, %v768
        %v774 = vrot.slane %v773, 4
        %v776 = vshll.u32 %v245, 16
        %v778 = vrot.slane %v776, 5
        %v779 = vsel %vm395, %v774, %v778
        %s780 = scalar_lea.vmem %s1, 4
        %v781 = vld [vmem:[%s780] sm:$0xf]
        %v782 = vunpack.c.l.b16 %v409
        %v783 = vunpack.c.l.b16 %v419
        %v784 = vunpack.c.l.b16 %v433
        %v785 = vunpack.c.l.b16 %v443
        %v786 = vunpack.c.l.b16 %v457
        %v787 = vunpack.c.l.b16 %v467
        %v788 = vunpack.c.l.b16 %v481
        %v789 = vunpack.c.l.b16 %v491
        %v790 = vunpack.c.l.b16 %v505
        %v791 = vunpack.c.l.b16 %v515
        %v792 = vunpack.c.l.b16 %v529
        %v793 = vunpack.c.l.b16 %v539
        %v794 = vunpack.c.l.b16 %v553
        %v795 = vunpack.c.l.b16 %v563
        %v796 = vunpack.c.l.b16 %v577
        %v797 = vunpack.c.l.b16 %v587
        %v798 = vunpack.c.l.b16 %v601
        %v799 = vunpack.c.l.b16 %v611
        %v800 = vunpack.c.l.b16 %v625
        %v801 = vunpack.c.l.b16 %v635
        %v802 = vunpack.c.l.b16 %v649
        %v803 = vunpack.c.l.b16 %v659
        %v804 = vunpack.c.l.b16 %v673
        %v805 = vunpack.c.l.b16 %v683
        %v806 = vunpack.c.l.b16 %v697
        %v807 = vunpack.c.l.b16 %v707
        %v808 = vunpack.c.l.b16 %v721
        %v809 = vunpack.c.l.b16 %v731
        %v810 = vunpack.c.l.b16 %v745
        %v811 = vunpack.c.l.b16 %v755
        %v812 = vunpack.c.l.b16 %v769
        %v813 = vunpack.c.l.b16 %v779
        %v814 = vpack.c.b16 %v783, %v782
        %v815 = vpack.c.b16 %v785, %v784
        %v816 = vpack.c.b16 %v787, %v786
        %v817 = vpack.c.b16 %v789, %v788
        %v818 = vpack.c.b16 %v791, %v790
        %v819 = vpack.c.b16 %v793, %v792
        %v820 = vpack.c.b16 %v795, %v794
        %v821 = vpack.c.b16 %v797, %v796
        %v822 = vpack.c.b16 %v799, %v798
        %v823 = vpack.c.b16 %v801, %v800
        %v824 = vpack.c.b16 %v803, %v802
        %v825 = vpack.c.b16 %v805, %v804
        %v826 = vpack.c.b16 %v807, %v806
        %v827 = vpack.c.b16 %v809, %v808
        %v828 = vpack.c.b16 %v811, %v810
        %v829 = vpack.c.b16 %v813, %v812
        %vm830 = vcmask 64512
        %v832 = vsel %vm830, %v814, 0
        %v835 = vsel %vm830, %v815, 0
        %v838 = vsel %vm830, %v816, 0
        %v841 = vsel %vm830, %v817, 0
        %v844 = vsel %vm830, %v818, 0
        %v847 = vsel %vm830, %v819, 0
        %v850 = vsel %vm830, %v820, 0
        %v853 = vsel %vm830, %v821, 0
        %v856 = vsel %vm830, %v822, 0
        %v859 = vsel %vm830, %v823, 0
        %v862 = vsel %vm830, %v824, 0
        %v865 = vsel %vm830, %v825, 0
        %v868 = vsel %vm830, %v826, 0
        %v871 = vsel %vm830, %v827, 0
        %v874 = vsel %vm830, %v828, 0
        %v877 = vsel %vm830, %v829, 0
        %vm879 = vcmask 1043456
        %v881 = vsel %vm879, %v781, 0
        %883 = vmatprep.subr.bf16.mxu0 0
        %884 = vmatpush1.bf16.msra.mxu0 %v881
        %885 = vmatprep.subr.bf16.mxu0 0
        %886 = vmatpush1.bf16.msra.mxu0 0
        %887 = vmatprep.subr.bf16.mxu0 0
        %888 = vmatpush1.bf16.msra.mxu0 0
        %889 = vmatprep.subr.bf16.mxu0 0
        %890 = vmatpush1.bf16.msra.mxu0 0
        %891 = vmatprep.subr.bf16.mxu0 0
        %892 = vmatpush1.bf16.msra.mxu0 0
        %893 = vmatprep.subr.bf16.mxu0 0
        %894 = vmatpush1.bf16.msra.mxu0 0
        %895 = vmatprep.subr.bf16.mxu0 0
        %896 = vmatpush1.bf16.msra.mxu0 0
        %897 = vmatprep.subr.bf16.mxu0 0
        %898 = vmatpush1.bf16.msra.mxu0 0
        %899 = vmatprep.subr.bf16.mxu0 0
        %900 = vmatpush1.bf16.msra.mxu0 0
        %901 = vmatprep.subr.bf16.mxu0 0
        %902 = vmatpush1.bf16.msra.mxu0 0
        %903 = vmatprep.subr.bf16.mxu0 0
        %904 = vmatpush1.bf16.msra.mxu0 0
        %905 = vmatprep.subr.bf16.mxu0 0
        %906 = vmatpush1.bf16.msra.mxu0 0
        %907 = vmatprep.subr.bf16.mxu0 0
        %908 = vmatpush1.bf16.msra.mxu0 0
        %909 = vmatprep.subr.bf16.mxu0 0
        %910 = vmatpush1.bf16.msra.mxu0 0
        %911 = vmatprep.subr.bf16.mxu0 0
        %912 = vmatpush1.bf16.msra.mxu0 0
        %913 = vmatprep.subr.bf16.mxu0 0
        %914 = vmatpush1.bf16.msra.mxu0 0
        %915 = vmatprep.mubr.bf16.mxu0 0
        %916 = vmatmul.mubr.bf16.gmra.mrb[0].mxu0 %v832
        %v917 = vpop.f32.mrb[0].mxu0
        %v918 = vadd.f32 0.0, %v917
        %v919 = vpop.f32.mrb[0].mxu0
        %v920 = vpop.f32.mrb[0].mxu0
        %v921 = vadd.f32 0.0, %v920
        %v922 = vpop.f32.mrb[0].mxu0
        %923 = vmatprep.mubr.bf16.mxu0 0
        %924 = vmatmul.mubr.bf16.gmra.mrb[0].mxu0 %v835
        %v925 = vpop.f32.mrb[0].mxu0
        %v926 = vadd.f32 0.0, %v925
        %v927 = vpop.f32.mrb[0].mxu0
        %v928 = vpop.f32.mrb[0].mxu0
        %v929 = vadd.f32 0.0, %v928
        %v930 = vpop.f32.mrb[0].mxu0
        %931 = vmatprep.mubr.bf16.mxu0 0
        %932 = vmatmul.mubr.bf16.gmra.mrb[0].mxu0 %v838
        %v933 = vpop.f32.mrb[0].mxu0
        %v934 = vadd.f32 0.0, %v933
        %v935 = vpop.f32.mrb[0].mxu0
        %v936 = vpop.f32.mrb[0].mxu0
        %v937 = vadd.f32 0.0, %v936
        %v938 = vpop.f32.mrb[0].mxu0
        %939 = vmatprep.mubr.bf16.mxu0 0
        %940 = vmatmul.mubr.bf16.gmra.mrb[0].mxu0 %v841
        %v941 = vpop.f32.mrb[0].mxu0
        %v942 = vadd.f32 0.0, %v941
        %v943 = vpop.f32.mrb[0].mxu0
        %v944 = vpop.f32.mrb[0].mxu0
        %v945 = vadd.f32 0.0, %v944
        %v946 = vpop.f32.mrb[0].mxu0
        %947 = vmatprep.mubr.bf16.mxu0 0
        %948 = vmatmul.mubr.bf16.gmra.mrb[0].mxu0 %v844
        %v949 = vpop.f32.mrb[0].mxu0
        %v950 = vadd.f32 0.0, %v949
        %v951 = vpop.f32.mrb[0].mxu0
        %v952 = vpop.f32.mrb[0].mxu0
        %v953 = vadd.f32 0.0, %v952
        %v954 = vpop.f32.mrb[0].mxu0
        %955 = vmatprep.mubr.bf16.mxu0 0
        %956 = vmatmul.mubr.bf16.gmra.mrb[0].mxu0 %v847
        %v957 = vpop.f32.mrb[0].mxu0
        %v958 = vadd.f32 0.0, %v957
        %v959 = vpop.f32.mrb[0].mxu0
        %v960 = vpop.f32.mrb[0].mxu0
        %v961 = vadd.f32 0.0, %v960
        %v962 = vpop.f32.mrb[0].mxu0
        %963 = vmatprep.mubr.bf16.mxu0 0
        %964 = vmatmul.mubr.bf16.gmra.mrb[0].mxu0 %v850
        %v965 = vpop.f32.mrb[0].mxu0
        %v966 = vadd.f32 0.0, %v965
        %v967 = vpop.f32.mrb[0].mxu0
        %v968 = vpop.f32.mrb[0].mxu0
        %v969 = vadd.f32 0.0, %v968
        %v970 = vpop.f32.mrb[0].mxu0
        %971 = vmatprep.mubr.bf16.mxu0 0
        %972 = vmatmul.mubr.bf16.gmra.mrb[0].mxu0 %v853
        %v973 = vpop.f32.mrb[0].mxu0
        %v974 = vadd.f32 0.0, %v973
        %v975 = vpop.f32.mrb[0].mxu0
        %v976 = vpop.f32.mrb[0].mxu0
        %v977 = vadd.f32 0.0, %v976
        %v978 = vpop.f32.mrb[0].mxu0
        %979 = vmatprep.mubr.bf16.mxu0 0
        %980 = vmatmul.mubr.bf16.gmra.mrb[0].mxu0 %v856
        %v981 = vpop.f32.mrb[0].mxu0
        %v982 = vadd.f32 0.0, %v981
        %v983 = vpop.f32.mrb[0].mxu0
        %v984 = vpop.f32.mrb[0].mxu0
        %v985 = vadd.f32 0.0, %v984
        %v986 = vpop.f32.mrb[0].mxu0
        %987 = vmatprep.mubr.bf16.mxu0 0
        %988 = vmatmul.mubr.bf16.gmra.mrb[0].mxu0 %v859
        %v989 = vpop.f32.mrb[0].mxu0
        %v990 = vadd.f32 0.0, %v989
        %v991 = vpop.f32.mrb[0].mxu0
        %v992 = vpop.f32.mrb[0].mxu0
        %v993 = vadd.f32 0.0, %v992
        %v994 = vpop.f32.mrb[0].mxu0
        %995 = vmatprep.mubr.bf16.mxu0 0
        %996 = vmatmul.mubr.bf16.gmra.mrb[0].mxu0 %v862
        %v997 = vpop.f32.mrb[0].mxu0
        %v998 = vadd.f32 0.0, %v997
        %v999 = vpop.f32.mrb[0].mxu0
        %v1000 = vpop.f32.mrb[0].mxu0
        %v1001 = vadd.f32 0.0, %v1000
        %v1002 = vpop.f32.mrb[0].mxu0
        %1003 = vmatprep.mubr.bf16.mxu0 0
        %1004 = vmatmul.mubr.bf16.gmra.mrb[0].mxu0 %v865
        %v1005 = vpop.f32.mrb[0].mxu0
        %v1006 = vadd.f32 0.0, %v1005
        %v1007 = vpop.f32.mrb[0].mxu0
        %v1008 = vpop.f32.mrb[0].mxu0
        %v1009 = vadd.f32 0.0, %v1008
        %v1010 = vpop.f32.mrb[0].mxu0
        %1011 = vmatprep.mubr.bf16.mxu0 0
        %1012 = vmatmul.mubr.bf16.gmra.mrb[0].mxu0 %v868
        %v1013 = vpop.f32.mrb[0].mxu0
        %v1014 = vadd.f32 0.0, %v1013
        %v1015 = vpop.f32.mrb[0].mxu0
        %v1016 = vpop.f32.mrb[0].mxu0
        %v1017 = vadd.f32 0.0, %v1016
        %v1018 = vpop.f32.mrb[0].mxu0
        %1019 = vmatprep.mubr.bf16.mxu0 0
        %1020 = vmatmul.mubr.bf16.gmra.mrb[0].mxu0 %v871
        %v1021 = vpop.f32.mrb[0].mxu0
        %v1022 = vadd.f32 0.0, %v1021
        %v1023 = vpop.f32.mrb[0].mxu0
        %v1024 = vpop.f32.mrb[0].mxu0
        %v1025 = vadd.f32 0.0, %v1024
        %v1026 = vpop.f32.mrb[0].mxu0
        %1027 = vmatprep.mubr.bf16.mxu0 0
        %1028 = vmatmul.mubr.bf16.gmra.mrb[0].mxu0 %v874
        %v1029 = vpop.f32.mrb[0].mxu0
        %v1030 = vadd.f32 0.0, %v1029
        %v1031 = vpop.f32.mrb[0].mxu0
        %v1032 = vpop.f32.mrb[0].mxu0
        %v1033 = vadd.f32 0.0, %v1032
        %v1034 = vpop.f32.mrb[0].mxu0
        %1035 = vmatprep.mubr.bf16.mxu0 0
        %1036 = vmatmul.mubr.bf16.gmra.mrb[0].mxu0 %v877
        %v1037 = vpop.f32.mrb[0].mxu0
        %v1038 = vadd.f32 0.0, %v1037
        %v1039 = vpop.f32.mrb[0].mxu0
        %v1040 = vpop.f32.mrb[0].mxu0
        %v1041 = vadd.f32 0.0, %v1040
        %v1042 = vpop.f32.mrb[0].mxu0
        %1043 = vdwg.mxu0
        %v1076 = vunpack.c.l.b16 %v198
        %v1077 = vunpack.c.l.b16 %v199
        %v1078 = vunpack.c.l.b16 %v200
        %v1079 = vunpack.c.l.b16 %v201
        %v1080 = vunpack.c.l.b16 %v202
        %v1081 = vunpack.c.l.b16 %v203
        %v1082 = vunpack.c.l.b16 %v204
        %v1083 = vunpack.c.l.b16 %v205
        %v1084 = vunpack.c.l.b16 %v206
        %v1085 = vunpack.c.l.b16 %v207
        %v1086 = vunpack.c.l.b16 %v208
        %v1087 = vunpack.c.l.b16 %v209
        %v1088 = vunpack.c.l.b16 %v210
        %v1089 = vunpack.c.l.b16 %v211
        %v1090 = vunpack.c.l.b16 %v212
        %v1091 = vunpack.c.l.b16 %v213
        %v1092 = vunpack.c.l.b16 %v214
        %v1093 = vunpack.c.l.b16 %v215
        %v1094 = vunpack.c.l.b16 %v216
        %v1095 = vunpack.c.l.b16 %v217
        %v1096 = vunpack.c.l.b16 %v218
        %v1097 = vunpack.c.l.b16 %v219
        %v1098 = vunpack.c.l.b16 %v220
        %v1099 = vunpack.c.l.b16 %v221
        %v1100 = vunpack.c.l.b16 %v222
        %v1101 = vunpack.c.l.b16 %v223
        %v1102 = vunpack.c.l.b16 %v224
        %v1103 = vunpack.c.l.b16 %v225
        %v1104 = vunpack.c.l.b16 %v226
        %v1105 = vunpack.c.l.b16 %v227
        %v1106 = vunpack.c.l.b16 %v228
        %v1107 = vunpack.c.l.b16 %v229
        %v1108 = vpack.c.b16 %v1077, %v1076
        %v1109 = vpack.c.b16 %v1079, %v1078
        %v1110 = vpack.c.b16 %v1081, %v1080
        %v1111 = vpack.c.b16 %v1083, %v1082
        %v1112 = vpack.c.b16 %v1085, %v1084
        %v1113 = vpack.c.b16 %v1087, %v1086
        %v1114 = vpack.c.b16 %v1089, %v1088
        %v1115 = vpack.c.b16 %v1091, %v1090
        %v1116 = vpack.c.b16 %v1093, %v1092
        %v1117 = vpack.c.b16 %v1095, %v1094
        %v1118 = vpack.c.b16 %v1097, %v1096
        %v1119 = vpack.c.b16 %v1099, %v1098
        %v1120 = vpack.c.b16 %v1101, %v1100
        %v1121 = vpack.c.b16 %v1103, %v1102
        %v1122 = vpack.c.b16 %v1105, %v1104
        %v1123 = vpack.c.b16 %v1107, %v1106
        %v1125 = vsel %vm830, %v1108, 0
        %v1128 = vsel %vm830, %v1109, 0
        %v1131 = vsel %vm830, %v1110, 0
        %v1134 = vsel %vm830, %v1111, 0
        %v1137 = vsel %vm830, %v1112, 0
        %v1140 = vsel %vm830, %v1113, 0
        %v1143 = vsel %vm830, %v1114, 0
        %v1146 = vsel %vm830, %v1115, 0
        %v1149 = vsel %vm830, %v1116, 0
        %v1152 = vsel %vm830, %v1117, 0
        %v1155 = vsel %vm830, %v1118, 0
        %v1158 = vsel %vm830, %v1119, 0
        %v1161 = vsel %vm830, %v1120, 0
        %v1164 = vsel %vm830, %v1121, 0
        %v1167 = vsel %vm830, %v1122, 0
        %v1170 = vsel %vm830, %v1123, 0
        %v1173 = vsel %vm879, %v392, 0
        %1175 = vmatprep.subr.bf16.mxu0 0
        %1176 = vmatpush1.bf16.msra.mxu0 %v1173
        %1177 = vmatprep.subr.bf16.mxu0 0
        %1178 = vmatpush1.bf16.msra.mxu0 0
        %1179 = vmatprep.subr.bf16.mxu0 0
        %1180 = vmatpush1.bf16.msra.mxu0 0
        %1181 = vmatprep.subr.bf16.mxu0 0
        %1182 = vmatpush1.bf16.msra.mxu0 0
        %1183 = vmatprep.subr.bf16.mxu0 0
        %1184 = vmatpush1.bf16.msra.mxu0 0
        %1185 = vmatprep.subr.bf16.mxu0 0
        %1186 = vmatpush1.bf16.msra.mxu0 0
        %1187 = vmatprep.subr.bf16.mxu0 0
        %1188 = vmatpush1.bf16.msra.mxu0 0
        %1189 = vmatprep.subr.bf16.mxu0 0
        %1190 = vmatpush1.bf16.msra.mxu0 0
        %1191 = vmatprep.subr.bf16.mxu0 0
        %1192 = vmatpush1.bf16.msra.mxu0 0
        %1193 = vmatprep.subr.bf16.mxu0 0
        %1194 = vmatpush1.bf16.msra.mxu0 0
        %1195 = vmatprep.subr.bf16.mxu0 0
        %1196 = vmatpush1.bf16.msra.mxu0 0
        %1197 = vmatprep.subr.bf16.mxu0 0
        %1198 = vmatpush1.bf16.msra.mxu0 0
        %1199 = vmatprep.subr.bf16.mxu0 0
        %1200 = vmatpush1.bf16.msra.mxu0 0
        %1201 = vmatprep.subr.bf16.mxu0 0
        %1202 = vmatpush1.bf16.msra.mxu0 0
        %1203 = vmatprep.subr.bf16.mxu0 0
        %1204 = vmatpush1.bf16.msra.mxu0 0
        %1205 = vmatprep.subr.bf16.mxu0 0
        %1206 = vmatpush1.bf16.msra.mxu0 0
        %1207 = vmatprep.mubr.bf16.mxu0 0
        %1208 = vmatmul.mubr.bf16.gmra.mrb[0].mxu0 %v1125
        %v1209 = vpop.f32.mrb[0].mxu0
        %v1210 = vadd.f32 %v918, %v1209
        %v1211 = vpop.f32.mrb[0].mxu0
        %v1212 = vpop.f32.mrb[0].mxu0
        %v1213 = vadd.f32 %v921, %v1212
        %v1214 = vpop.f32.mrb[0].mxu0
        %1215 = vmatprep.mubr.bf16.mxu0 0
        %1216 = vmatmul.mubr.bf16.gmra.mrb[0].mxu0 %v1128
        %v1217 = vpop.f32.mrb[0].mxu0
        %v1218 = vadd.f32 %v926, %v1217
        %v1219 = vpop.f32.mrb[0].mxu0
        %v1220 = vpop.f32.mrb[0].mxu0
        %v1221 = vadd.f32 %v929, %v1220
        %v1222 = vpop.f32.mrb[0].mxu0
        %1223 = vmatprep.mubr.bf16.mxu0 0
        %1224 = vmatmul.mubr.bf16.gmra.mrb[0].mxu0 %v1131
        %v1225 = vpop.f32.mrb[0].mxu0
        %v1226 = vadd.f32 %v934, %v1225
        %v1227 = vpop.f32.mrb[0].mxu0
        %v1228 = vpop.f32.mrb[0].mxu0
        %v1229 = vadd.f32 %v937, %v1228
        %v1230 = vpop.f32.mrb[0].mxu0
        %1231 = vmatprep.mubr.bf16.mxu0 0
        %1232 = vmatmul.mubr.bf16.gmra.mrb[0].mxu0 %v1134
        %v1233 = vpop.f32.mrb[0].mxu0
        %v1234 = vadd.f32 %v942, %v1233
        %v1235 = vpop.f32.mrb[0].mxu0
        %v1236 = vpop.f32.mrb[0].mxu0
        %v1237 = vadd.f32 %v945, %v1236
        %v1238 = vpop.f32.mrb[0].mxu0
        %1239 = vmatprep.mubr.bf16.mxu0 0
        %1240 = vmatmul.mubr.bf16.gmra.mrb[0].mxu0 %v1137
        %v1241 = vpop.f32.mrb[0].mxu0
        %v1242 = vadd.f32 %v950, %v1241
        %v1243 = vpop.f32.mrb[0].mxu0
        %v1244 = vpop.f32.mrb[0].mxu0
        %v1245 = vadd.f32 %v953, %v1244
        %v1246 = vpop.f32.mrb[0].mxu0
        %1247 = vmatprep.mubr.bf16.mxu0 0
        %1248 = vmatmul.mubr.bf16.gmra.mrb[0].mxu0 %v1140
        %v1249 = vpop.f32.mrb[0].mxu0
        %v1250 = vadd.f32 %v958, %v1249
        %v1251 = vpop.f32.mrb[0].mxu0
        %v1252 = vpop.f32.mrb[0].mxu0
        %v1253 = vadd.f32 %v961, %v1252
        %v1254 = vpop.f32.mrb[0].mxu0
        %1255 = vmatprep.mubr.bf16.mxu0 0
        %1256 = vmatmul.mubr.bf16.gmra.mrb[0].mxu0 %v1143
        %v1257 = vpop.f32.mrb[0].mxu0
        %v1258 = vadd.f32 %v966, %v1257
        %v1259 = vpop.f32.mrb[0].mxu0
        %v1260 = vpop.f32.mrb[0].mxu0
        %v1261 = vadd.f32 %v969, %v1260
        %v1262 = vpop.f32.mrb[0].mxu0
        %1263 = vmatprep.mubr.bf16.mxu0 0
        %1264 = vmatmul.mubr.bf16.gmra.mrb[0].mxu0 %v1146
        %v1265 = vpop.f32.mrb[0].mxu0
        %v1266 = vadd.f32 %v974, %v1265
        %v1267 = vpop.f32.mrb[0].mxu0
        %v1268 = vpop.f32.mrb[0].mxu0
        %v1269 = vadd.f32 %v977, %v1268
        %v1270 = vpop.f32.mrb[0].mxu0
        %1271 = vmatprep.mubr.bf16.mxu0 0
        %1272 = vmatmul.mubr.bf16.gmra.mrb[0].mxu0 %v1149
        %v1273 = vpop.f32.mrb[0].mxu0
        %v1274 = vadd.f32 %v982, %v1273
        %v1275 = vpop.f32.mrb[0].mxu0
        %v1276 = vpop.f32.mrb[0].mxu0
        %v1277 = vadd.f32 %v985, %v1276
        %v1278 = vpop.f32.mrb[0].mxu0
        %1279 = vmatprep.mubr.bf16.mxu0 0
        %1280 = vmatmul.mubr.bf16.gmra.mrb[0].mxu0 %v1152
        %v1281 = vpop.f32.mrb[0].mxu0
        %v1282 = vadd.f32 %v990, %v1281
        %v1283 = vpop.f32.mrb[0].mxu0
        %v1284 = vpop.f32.mrb[0].mxu0
        %v1285 = vadd.f32 %v993, %v1284
        %v1286 = vpop.f32.mrb[0].mxu0
        %1287 = vmatprep.mubr.bf16.mxu0 0
        %1288 = vmatmul.mubr.bf16.gmra.mrb[0].mxu0 %v1155
        %v1289 = vpop.f32.mrb[0].mxu0
        %v1290 = vadd.f32 %v998, %v1289
        %v1291 = vpop.f32.mrb[0].mxu0
        %v1292 = vpop.f32.mrb[0].mxu0
        %v1293 = vadd.f32 %v1001, %v1292
        %v1294 = vpop.f32.mrb[0].mxu0
        %1295 = vmatprep.mubr.bf16.mxu0 0
        %1296 = vmatmul.mubr.bf16.gmra.mrb[0].mxu0 %v1158
        %v1297 = vpop.f32.mrb[0].mxu0
        %v1298 = vadd.f32 %v1006, %v1297
        %v1299 = vpop.f32.mrb[0].mxu0
        %v1300 = vpop.f32.mrb[0].mxu0
        %v1301 = vadd.f32 %v1009, %v1300
        %v1302 = vpop.f32.mrb[0].mxu0
        %1303 = vmatprep.mubr.bf16.mxu0 0
        %1304 = vmatmul.mubr.bf16.gmra.mrb[0].mxu0 %v1161
        %v1305 = vpop.f32.mrb[0].mxu0
        %v1306 = vadd.f32 %v1014, %v1305
        %v1307 = vpop.f32.mrb[0].mxu0
        %v1308 = vpop.f32.mrb[0].mxu0
        %v1309 = vadd.f32 %v1017, %v1308
        %v1310 = vpop.f32.mrb[0].mxu0
        %1311 = vmatprep.mubr.bf16.mxu0 0
        %1312 = vmatmul.mubr.bf16.gmra.mrb[0].mxu0 %v1164
        %v1313 = vpop.f32.mrb[0].mxu0
        %v1314 = vadd.f32 %v1022, %v1313
        %v1315 = vpop.f32.mrb[0].mxu0
        %v1316 = vpop.f32.mrb[0].mxu0
        %v1317 = vadd.f32 %v1025, %v1316
        %v1318 = vpop.f32.mrb[0].mxu0
        %1319 = vmatprep.mubr.bf16.mxu0 0
        %1320 = vmatmul.mubr.bf16.gmra.mrb[0].mxu0 %v1167
        %v1321 = vpop.f32.mrb[0].mxu0
        %v1322 = vadd.f32 %v1030, %v1321
        %v1323 = vpop.f32.mrb[0].mxu0
        %v1324 = vpop.f32.mrb[0].mxu0
        %v1325 = vadd.f32 %v1033, %v1324
        %v1326 = vpop.f32.mrb[0].mxu0
        %1327 = vmatprep.mubr.bf16.mxu0 0
        %1328 = vmatmul.mubr.bf16.gmra.mrb[0].mxu0 %v1170
        %v1329 = vpop.f32.mrb[0].mxu0
        %v1330 = vadd.f32 %v1038, %v1329
        %v1331 = vpop.f32.mrb[0].mxu0
        %v1332 = vpop.f32.mrb[0].mxu0
        %v1333 = vadd.f32 %v1041, %v1332
        %v1334 = vpop.f32.mrb[0].mxu0
        %1335 = vdwg.mxu0
        %vm1368 = vcmask 1042432
        %vm1369 = vcmask 1046532
        %vm1370 = vmor %vm1368, %vm1369
        %v1371 = vrot.slane %v246, 5
        %v1372 = vrot.slane %v1371, 4
        %v1373 = vrot.slane %v199, 5
        %v1374 = vsel %vm1370, %v1372, %v1373
        %v1375 = vrot.slane %v1373, 4
        %v1376 = vrot.slane %v230, 5
        %v1377 = vsel %vm1370, %v1375, %v1376
        %v1378 = vrot.slane %v247, 5
        %v1379 = vrot.slane %v1378, 4
        %v1380 = vrot.slane %v201, 5
        %v1381 = vsel %vm1370, %v1379, %v1380
        %v1382 = vrot.slane %v1380, 4
        %v1383 = vrot.slane %v231, 5
        %v1384 = vsel %vm1370, %v1382, %v1383
        %v1385 = vrot.slane %v248, 5
        %v1386 = vrot.slane %v1385, 4
        %v1387 = vrot.slane %v203, 5
        %v1388 = vsel %vm1370, %v1386, %v1387
        %v1389 = vrot.slane %v1387, 4
        %v1390 = vrot.slane %v232, 5
        %v1391 = vsel %vm1370, %v1389, %v1390
        %v1392 = vrot.slane %v249, 5
        %v1393 = vrot.slane %v1392, 4
        %v1394 = vrot.slane %v205, 5
        %v1395 = vsel %vm1370, %v1393, %v1394
        %v1396 = vrot.slane %v1394, 4
        %v1397 = vrot.slane %v233, 5
        %v1398 = vsel %vm1370, %v1396, %v1397
        %v1399 = vrot.slane %v250, 5
        %v1400 = vrot.slane %v1399, 4
        %v1401 = vrot.slane %v207, 5
        %v1402 = vsel %vm1370, %v1400, %v1401
        %v1403 = vrot.slane %v1401, 4
        %v1404 = vrot.slane %v234, 5
        %v1405 = vsel %vm1370, %v1403, %v1404
        %v1406 = vrot.slane %v251, 5
        %v1407 = vrot.slane %v1406, 4
        %v1408 = vrot.slane %v209, 5
        %v1409 = vsel %vm1370, %v1407, %v1408
        %v1410 = vrot.slane %v1408, 4
        %v1411 = vrot.slane %v235, 5
        %v1412 = vsel %vm1370, %v1410, %v1411
        %v1413 = vrot.slane %v252, 5
        %v1414 = vrot.slane %v1413, 4
        %v1415 = vrot.slane %v211, 5
        %v1416 = vsel %vm1370, %v1414, %v1415
        %v1417 = vrot.slane %v1415, 4
        %v1418 = vrot.slane %v236, 5
        %v1419 = vsel %vm1370, %v1417, %v1418
        %v1420 = vrot.slane %v253, 5
        %v1421 = vrot.slane %v1420, 4
        %v1422 = vrot.slane %v213, 5
        %v1423 = vsel %vm1370, %v1421, %v1422
        %v1424 = vrot.slane %v1422, 4
        %v1425 = vrot.slane %v237, 5
        %v1426 = vsel %vm1370, %v1424, %v1425
        %v1427 = vrot.slane %v254, 5
        %v1428 = vrot.slane %v1427, 4
        %v1429 = vrot.slane %v215, 5
        %v1430 = vsel %vm1370, %v1428, %v1429
        %v1431 = vrot.slane %v1429, 4
        %v1432 = vrot.slane %v238, 5
        %v1433 = vsel %vm1370, %v1431, %v1432
        %v1434 = vrot.slane %v255, 5
        %v1435 = vrot.slane %v1434, 4
        %v1436 = vrot.slane %v217, 5
        %v1437 = vsel %vm1370, %v1435, %v1436
        %v1438 = vrot.slane %v1436, 4
        %v1439 = vrot.slane %v239, 5
        %v1440 = vsel %vm1370, %v1438, %v1439
        %v1441 = vrot.slane %v256, 5
        %v1442 = vrot.slane %v1441, 4
        %v1443 = vrot.slane %v219, 5
        %v1444 = vsel %vm1370, %v1442, %v1443
        %v1445 = vrot.slane %v1443, 4
        %v1446 = vrot.slane %v240, 5
        %v1447 = vsel %vm1370, %v1445, %v1446
        %v1448 = vrot.slane %v257, 5
        %v1449 = vrot.slane %v1448, 4
        %v1450 = vrot.slane %v221, 5
        %v1451 = vsel %vm1370, %v1449, %v1450
        %v1452 = vrot.slane %v1450, 4
        %v1453 = vrot.slane %v241, 5
        %v1454 = vsel %vm1370, %v1452, %v1453
        %v1455 = vrot.slane %v258, 5
        %v1456 = vrot.slane %v1455, 4
        %v1457 = vrot.slane %v223, 5
        %v1458 = vsel %vm1370, %v1456, %v1457
        %v1459 = vrot.slane %v1457, 4
        %v1460 = vrot.slane %v242, 5
        %v1461 = vsel %vm1370, %v1459, %v1460
        %v1462 = vrot.slane %v259, 5
        %v1463 = vrot.slane %v1462, 4
        %v1464 = vrot.slane %v225, 5
        %v1465 = vsel %vm1370, %v1463, %v1464
        %v1466 = vrot.slane %v1464, 4
        %v1467 = vrot.slane %v243, 5
        %v1468 = vsel %vm1370, %v1466, %v1467
        %v1469 = vrot.slane %v260, 5
        %v1470 = vrot.slane %v1469, 4
        %v1471 = vrot.slane %v227, 5
        %v1472 = vsel %vm1370, %v1470, %v1471
        %v1473 = vrot.slane %v1471, 4
        %v1474 = vrot.slane %v244, 5
        %v1475 = vsel %vm1370, %v1473, %v1474
        %v1476 = vrot.slane %v261, 5
        %v1477 = vrot.slane %v1476, 4
        %v1478 = vrot.slane %v229, 5
        %v1479 = vsel %vm1370, %v1477, %v1478
        %v1480 = vrot.slane %v1478, 4
        %v1481 = vrot.slane %v245, 5
        %v1482 = vsel %vm1370, %v1480, %v1481
        %s1483 = scalar_lea.vmem %s1, 8
        %v1484 = vld [vmem:[%s1483] sm:$0xf]
        %v1485 = vunpack.c.l.b16 %v1374
        %v1486 = vunpack.c.l.b16 %v1377
        %v1487 = vunpack.c.l.b16 %v1381
        %v1488 = vunpack.c.l.b16 %v1384
        %v1489 = vunpack.c.l.b16 %v1388
        %v1490 = vunpack.c.l.b16 %v1391
        %v1491 = vunpack.c.l.b16 %v1395
        %v1492 = vunpack.c.l.b16 %v1398
        %v1493 = vunpack.c.l.b16 %v1402
        %v1494 = vunpack.c.l.b16 %v1405
        %v1495 = vunpack.c.l.b16 %v1409
        %v1496 = vunpack.c.l.b16 %v1412
        %v1497 = vunpack.c.l.b16 %v1416
        %v1498 = vunpack.c.l.b16 %v1419
        %v1499 = vunpack.c.l.b16 %v1423
        %v1500 = vunpack.c.l.b16 %v1426
        %v1501 = vunpack.c.l.b16 %v1430
        %v1502 = vunpack.c.l.b16 %v1433
        %v1503 = vunpack.c.l.b16 %v1437
        %v1504 = vunpack.c.l.b16 %v1440
        %v1505 = vunpack.c.l.b16 %v1444
        %v1506 = vunpack.c.l.b16 %v1447
        %v1507 = vunpack.c.l.b16 %v1451
        %v1508 = vunpack.c.l.b16 %v1454
        %v1509 = vunpack.c.l.b16 %v1458
        %v1510 = vunpack.c.l.b16 %v1461
        %v1511 = vunpack.c.l.b16 %v1465
        %v1512 = vunpack.c.l.b16 %v1468
        %v1513 = vunpack.c.l.b16 %v1472
        %v1514 = vunpack.c.l.b16 %v1475
        %v1515 = vunpack.c.l.b16 %v1479
        %v1516 = vunpack.c.l.b16 %v1482
        %v1517 = vpack.c.b16 %v1486, %v1485
        %v1518 = vpack.c.b16 %v1488, %v1487
        %v1519 = vpack.c.b16 %v1490, %v1489
        %v1520 = vpack.c.b16 %v1492, %v1491
        %v1521 = vpack.c.b16 %v1494, %v1493
        %v1522 = vpack.c.b16 %v1496, %v1495
        %v1523 = vpack.c.b16 %v1498, %v1497
        %v1524 = vpack.c.b16 %v1500, %v1499
        %v1525 = vpack.c.b16 %v1502, %v1501
        %v1526 = vpack.c.b16 %v1504, %v1503
        %v1527 = vpack.c.b16 %v1506, %v1505
        %v1528 = vpack.c.b16 %v1508, %v1507
        %v1529 = vpack.c.b16 %v1510, %v1509
        %v1530 = vpack.c.b16 %v1512, %v1511
        %v1531 = vpack.c.b16 %v1514, %v1513
        %v1532 = vpack.c.b16 %v1516, %v1515
        %v1534 = vsel %vm830, %v1517, 0
        %v1537 = vsel %vm830, %v1518, 0
        %v1540 = vsel %vm830, %v1519, 0
        %v1543 = vsel %vm830, %v1520, 0
        %v1546 = vsel %vm830, %v1521, 0
        %v1549 = vsel %vm830, %v1522, 0
        %v1552 = vsel %vm830, %v1523, 0
        %v1555 = vsel %vm830, %v1524, 0
        %v1558 = vsel %vm830, %v1525, 0
        %v1561 = vsel %vm830, %v1526, 0
        %v1564 = vsel %vm830, %v1527, 0
        %v1567 = vsel %vm830, %v1528, 0
        %v1570 = vsel %vm830, %v1529, 0
        %v1573 = vsel %vm830, %v1530, 0
        %v1576 = vsel %vm830, %v1531, 0
        %v1579 = vsel %vm830, %v1532, 0
        %v1582 = vsel %vm879, %v1484, 0
        %1584 = vmatprep.subr.bf16.mxu0 0
        %1585 = vmatpush1.bf16.msra.mxu0 %v1582
        %1586 = vmatprep.subr.bf16.mxu0 0
        %1587 = vmatpush1.bf16.msra.mxu0 0
        %1588 = vmatprep.subr.bf16.mxu0 0
        %1589 = vmatpush1.bf16.msra.mxu0 0
        %1590 = vmatprep.subr.bf16.mxu0 0
        %1591 = vmatpush1.bf16.msra.mxu0 0
        %1592 = vmatprep.subr.bf16.mxu0 0
        %1593 = vmatpush1.bf16.msra.mxu0 0
        %1594 = vmatprep.subr.bf16.mxu0 0
        %1595 = vmatpush1.bf16.msra.mxu0 0
        %1596 = vmatprep.subr.bf16.mxu0 0
        %1597 = vmatpush1.bf16.msra.mxu0 0
        %1598 = vmatprep.subr.bf16.mxu0 0
        %1599 = vmatpush1.bf16.msra.mxu0 0
        %1600 = vmatprep.subr.bf16.mxu0 0
        %1601 = vmatpush1.bf16.msra.mxu0 0
        %1602 = vmatprep.subr.bf16.mxu0 0
        %1603 = vmatpush1.bf16.msra.mxu0 0
        %1604 = vmatprep.subr.bf16.mxu0 0
        %1605 = vmatpush1.bf16.msra.mxu0 0
        %1606 = vmatprep.subr.bf16.mxu0 0
        %1607 = vmatpush1.bf16.msra.mxu0 0
        %1608 = vmatprep.subr.bf16.mxu0 0
        %1609 = vmatpush1.bf16.msra.mxu0 0
        %1610 = vmatprep.subr.bf16.mxu0 0
        %1611 = vmatpush1.bf16.msra.mxu0 0
        %1612 = vmatprep.subr.bf16.mxu0 0
        %1613 = vmatpush1.bf16.msra.mxu0 0
        %1614 = vmatprep.subr.bf16.mxu0 0
        %1615 = vmatpush1.bf16.msra.mxu0 0
        %1616 = vmatprep.mubr.bf16.mxu0 0
        %1617 = vmatmul.mubr.bf16.gmra.mrb[0].mxu0 %v1534
        %v1618 = vpop.f32.mrb[0].mxu0
        %v1619 = vadd.f32 0.0, %v1618
        %v1620 = vpop.f32.mrb[0].mxu0
        %v1621 = vpop.f32.mrb[0].mxu0
        %v1622 = vadd.f32 0.0, %v1621
        %v1623 = vpop.f32.mrb[0].mxu0
        %1624 = vmatprep.mubr.bf16.mxu0 0
        %1625 = vmatmul.mubr.bf16.gmra.mrb[0].mxu0 %v1537
        %v1626 = vpop.f32.mrb[0].mxu0
        %v1627 = vadd.f32 0.0, %v1626
        %v1628 = vpop.f32.mrb[0].mxu0
        %v1629 = vpop.f32.mrb[0].mxu0
        %v1630 = vadd.f32 0.0, %v1629
        %v1631 = vpop.f32.mrb[0].mxu0
        %1632 = vmatprep.mubr.bf16.mxu0 0
        %1633 = vmatmul.mubr.bf16.gmra.mrb[0].mxu0 %v1540
        %v1634 = vpop.f32.mrb[0].mxu0
        %v1635 = vadd.f32 0.0, %v1634
        %v1636 = vpop.f32.mrb[0].mxu0
        %v1637 = vpop.f32.mrb[0].mxu0
        %v1638 = vadd.f32 0.0, %v1637
        %v1639 = vpop.f32.mrb[0].mxu0
        %1640 = vmatprep.mubr.bf16.mxu0 0
        %1641 = vmatmul.mubr.bf16.gmra.mrb[0].mxu0 %v1543
        %v1642 = vpop.f32.mrb[0].mxu0
        %v1643 = vadd.f32 0.0, %v1642
        %v1644 = vpop.f32.mrb[0].mxu0
        %v1645 = vpop.f32.mrb[0].mxu0
        %v1646 = vadd.f32 0.0, %v1645
        %v1647 = vpop.f32.mrb[0].mxu0
        %1648 = vmatprep.mubr.bf16.mxu0 0
        %1649 = vmatmul.mubr.bf16.gmra.mrb[0].mxu0 %v1546
        %v1650 = vpop.f32.mrb[0].mxu0
        %v1651 = vadd.f32 0.0, %v1650
        %v1652 = vpop.f32.mrb[0].mxu0
        %v1653 = vpop.f32.mrb[0].mxu0
        %v1654 = vadd.f32 0.0, %v1653
        %v1655 = vpop.f32.mrb[0].mxu0
        %1656 = vmatprep.mubr.bf16.mxu0 0
        %1657 = vmatmul.mubr.bf16.gmra.mrb[0].mxu0 %v1549
        %v1658 = vpop.f32.mrb[0].mxu0
        %v1659 = vadd.f32 0.0, %v1658
        %v1660 = vpop.f32.mrb[0].mxu0
        %v1661 = vpop.f32.mrb[0].mxu0
        %v1662 = vadd.f32 0.0, %v1661
        %v1663 = vpop.f32.mrb[0].mxu0
        %1664 = vmatprep.mubr.bf16.mxu0 0
        %1665 = vmatmul.mubr.bf16.gmra.mrb[0].mxu0 %v1552
        %v1666 = vpop.f32.mrb[0].mxu0
        %v1667 = vadd.f32 0.0, %v1666
        %v1668 = vpop.f32.mrb[0].mxu0
        %v1669 = vpop.f32.mrb[0].mxu0
        %v1670 = vadd.f32 0.0, %v1669
        %v1671 = vpop.f32.mrb[0].mxu0
        %1672 = vmatprep.mubr.bf16.mxu0 0
        %1673 = vmatmul.mubr.bf16.gmra.mrb[0].mxu0 %v1555
        %v1674 = vpop.f32.mrb[0].mxu0
        %v1675 = vadd.f32 0.0, %v1674
        %v1676 = vpop.f32.mrb[0].mxu0
        %v1677 = vpop.f32.mrb[0].mxu0
        %v1678 = vadd.f32 0.0, %v1677
        %v1679 = vpop.f32.mrb[0].mxu0
        %1680 = vmatprep.mubr.bf16.mxu0 0
        %1681 = vmatmul.mubr.bf16.gmra.mrb[0].mxu0 %v1558
        %v1682 = vpop.f32.mrb[0].mxu0
        %v1683 = vadd.f32 0.0, %v1682
        %v1684 = vpop.f32.mrb[0].mxu0
        %v1685 = vpop.f32.mrb[0].mxu0
        %v1686 = vadd.f32 0.0, %v1685
        %v1687 = vpop.f32.mrb[0].mxu0
        %1688 = vmatprep.mubr.bf16.mxu0 0
        %1689 = vmatmul.mubr.bf16.gmra.mrb[0].mxu0 %v1561
        %v1690 = vpop.f32.mrb[0].mxu0
        %v1691 = vadd.f32 0.0, %v1690
        %v1692 = vpop.f32.mrb[0].mxu0
        %v1693 = vpop.f32.mrb[0].mxu0
        %v1694 = vadd.f32 0.0, %v1693
        %v1695 = vpop.f32.mrb[0].mxu0
        %1696 = vmatprep.mubr.bf16.mxu0 0
        %1697 = vmatmul.mubr.bf16.gmra.mrb[0].mxu0 %v1564
        %v1698 = vpop.f32.mrb[0].mxu0
        %v1699 = vadd.f32 0.0, %v1698
        %v1700 = vpop.f32.mrb[0].mxu0
        %v1701 = vpop.f32.mrb[0].mxu0
        %v1702 = vadd.f32 0.0, %v1701
        %v1703 = vpop.f32.mrb[0].mxu0
        %1704 = vmatprep.mubr.bf16.mxu0 0
        %1705 = vmatmul.mubr.bf16.gmra.mrb[0].mxu0 %v1567
        %v1706 = vpop.f32.mrb[0].mxu0
        %v1707 = vadd.f32 0.0, %v1706
        %v1708 = vpop.f32.mrb[0].mxu0
        %v1709 = vpop.f32.mrb[0].mxu0
        %v1710 = vadd.f32 0.0, %v1709
        %v1711 = vpop.f32.mrb[0].mxu0
        %1712 = vmatprep.mubr.bf16.mxu0 0
        %1713 = vmatmul.mubr.bf16.gmra.mrb[0].mxu0 %v1570
        %v1714 = vpop.f32.mrb[0].mxu0
        %v1715 = vadd.f32 0.0, %v1714
        %v1716 = vpop.f32.mrb[0].mxu0
        %v1717 = vpop.f32.mrb[0].mxu0
        %v1718 = vadd.f32 0.0, %v1717
        %v1719 = vpop.f32.mrb[0].mxu0
        %1720 = vmatprep.mubr.bf16.mxu0 0
        %1721 = vmatmul.mubr.bf16.gmra.mrb[0].mxu0 %v1573
        %v1722 = vpop.f32.mrb[0].mxu0
        %v1723 = vadd.f32 0.0, %v1722
        %v1724 = vpop.f32.mrb[0].mxu0
        %v1725 = vpop.f32.mrb[0].mxu0
        %v1726 = vadd.f32 0.0, %v1725
        %v1727 = vpop.f32.mrb[0].mxu0
        %1728 = vmatprep.mubr.bf16.mxu0 0
        %1729 = vmatmul.mubr.bf16.gmra.mrb[0].mxu0 %v1576
        %v1730 = vpop.f32.mrb[0].mxu0
        %v1731 = vadd.f32 0.0, %v1730
        %v1732 = vpop.f32.mrb[0].mxu0
        %v1733 = vpop.f32.mrb[0].mxu0
        %v1734 = vadd.f32 0.0, %v1733
        %v1735 = vpop.f32.mrb[0].mxu0
        %1736 = vmatprep.mubr.bf16.mxu0 0
        %1737 = vmatmul.mubr.bf16.gmra.mrb[0].mxu0 %v1579
        %v1738 = vpop.f32.mrb[0].mxu0
        %v1739 = vadd.f32 0.0, %v1738
        %v1740 = vpop.f32.mrb[0].mxu0
        %v1741 = vpop.f32.mrb[0].mxu0
        %v1742 = vadd.f32 0.0, %v1741
        %v1743 = vpop.f32.mrb[0].mxu0
        %1744 = vdwg.mxu0
        %v1745 = vadd.f32 %v1210, %v1619
        %v1746 = vadd.f32 %v1213, %v1622
        %v1747 = vadd.f32 %v1218, %v1627
        %v1748 = vadd.f32 %v1221, %v1630
        %v1749 = vadd.f32 %v1226, %v1635
        %v1750 = vadd.f32 %v1229, %v1638
        %v1751 = vadd.f32 %v1234, %v1643
        %v1752 = vadd.f32 %v1237, %v1646
        %v1753 = vadd.f32 %v1242, %v1651
        %v1754 = vadd.f32 %v1245, %v1654
        %v1755 = vadd.f32 %v1250, %v1659
        %v1756 = vadd.f32 %v1253, %v1662
        %v1757 = vadd.f32 %v1258, %v1667
        %v1758 = vadd.f32 %v1261, %v1670
        %v1759 = vadd.f32 %v1266, %v1675
        %v1760 = vadd.f32 %v1269, %v1678
        %v1761 = vadd.f32 %v1274, %v1683
        %v1762 = vadd.f32 %v1277, %v1686
        %v1763 = vadd.f32 %v1282, %v1691
        %v1764 = vadd.f32 %v1285, %v1694
        %v1765 = vadd.f32 %v1290, %v1699
        %v1766 = vadd.f32 %v1293, %v1702
        %v1767 = vadd.f32 %v1298, %v1707
        %v1768 = vadd.f32 %v1301, %v1710
        %v1769 = vadd.f32 %v1306, %v1715
        %v1770 = vadd.f32 %v1309, %v1718
        %v1771 = vadd.f32 %v1314, %v1723
        %v1772 = vadd.f32 %v1317, %v1726
        %v1773 = vadd.f32 %v1322, %v1731
        %v1774 = vadd.f32 %v1325, %v1734
        %v1775 = vadd.f32 %v1330, %v1739
        %v1776 = vadd.f32 %v1333, %v1742
        %s1777 = scalar_lea.vmem %s1, 12
        %v1778 = vld [vmem:[%s1777] sm:$0xf]
        %v1811 = vunpack.c.l.b16 %v263
        %v1812 = vunpack.c.l.b16 %v264
        %v1813 = vunpack.c.l.b16 %v265
        %v1814 = vunpack.c.l.b16 %v266
        %v1815 = vunpack.c.l.b16 %v267
        %v1816 = vunpack.c.l.b16 %v268
        %v1817 = vunpack.c.l.b16 %v269
        %v1818 = vunpack.c.l.b16 %v270
        %v1819 = vunpack.c.l.b16 %v271
        %v1820 = vunpack.c.l.b16 %v272
        %v1821 = vunpack.c.l.b16 %v273
        %v1822 = vunpack.c.l.b16 %v274
        %v1823 = vunpack.c.l.b16 %v275
        %v1824 = vunpack.c.l.b16 %v276
        %v1825 = vunpack.c.l.b16 %v277
        %v1826 = vunpack.c.l.b16 %v278
        %v1827 = vunpack.c.l.b16 %v279
        %v1828 = vunpack.c.l.b16 %v280
        %v1829 = vunpack.c.l.b16 %v281
        %v1830 = vunpack.c.l.b16 %v282
        %v1831 = vunpack.c.l.b16 %v283
        %v1832 = vunpack.c.l.b16 %v284
        %v1833 = vunpack.c.l.b16 %v285
        %v1834 = vunpack.c.l.b16 %v286
        %v1835 = vunpack.c.l.b16 %v287
        %v1836 = vunpack.c.l.b16 %v288
        %v1837 = vunpack.c.l.b16 %v289
        %v1838 = vunpack.c.l.b16 %v290
        %v1839 = vunpack.c.l.b16 %v291
        %v1840 = vunpack.c.l.b16 %v292
        %v1841 = vunpack.c.l.b16 %v293
        %v1842 = vunpack.c.l.b16 %v294
        %v1843 = vpack.c.b16 %v1812, %v1811
        %v1844 = vpack.c.b16 %v1814, %v1813
        %v1845 = vpack.c.b16 %v1816, %v1815
        %v1846 = vpack.c.b16 %v1818, %v1817
        %v1847 = vpack.c.b16 %v1820, %v1819
        %v1848 = vpack.c.b16 %v1822, %v1821
        %v1849 = vpack.c.b16 %v1824, %v1823
        %v1850 = vpack.c.b16 %v1826, %v1825
        %v1851 = vpack.c.b16 %v1828, %v1827
        %v1852 = vpack.c.b16 %v1830, %v1829
        %v1853 = vpack.c.b16 %v1832, %v1831
        %v1854 = vpack.c.b16 %v1834, %v1833
        %v1855 = vpack.c.b16 %v1836, %v1835
        %v1856 = vpack.c.b16 %v1838, %v1837
        %v1857 = vpack.c.b16 %v1840, %v1839
        %v1858 = vpack.c.b16 %v1842, %v1841
        %v1860 = vsel %vm830, %v1843, 0
        %v1863 = vsel %vm830, %v1844, 0
        %v1866 = vsel %vm830, %v1845, 0
        %v1869 = vsel %vm830, %v1846, 0
        %v1872 = vsel %vm830, %v1847, 0
        %v1875 = vsel %vm830, %v1848, 0
        %v1878 = vsel %vm830, %v1849, 0
        %v1881 = vsel %vm830, %v1850, 0
        %v1884 = vsel %vm830, %v1851, 0
        %v1887 = vsel %vm830, %v1852, 0
        %v1890 = vsel %vm830, %v1853, 0
        %v1893 = vsel %vm830, %v1854, 0
        %v1896 = vsel %vm830, %v1855, 0
        %v1899 = vsel %vm830, %v1856, 0
        %v1902 = vsel %vm830, %v1857, 0
        %v1905 = vsel %vm830, %v1858, 0
        %v1908 = vsel %vm879, %v1778, 0
        %1910 = vmatprep.subr.bf16.mxu0 0
        %1911 = vmatpush1.bf16.msra.mxu0 %v1908
        %1912 = vmatprep.subr.bf16.mxu0 0
        %1913 = vmatpush1.bf16.msra.mxu0 0
        %1914 = vmatprep.subr.bf16.mxu0 0
        %1915 = vmatpush1.bf16.msra.mxu0 0
        %1916 = vmatprep.subr.bf16.mxu0 0
        %1917 = vmatpush1.bf16.msra.mxu0 0
        %1918 = vmatprep.subr.bf16.mxu0 0
        %1919 = vmatpush1.bf16.msra.mxu0 0
        %1920 = vmatprep.subr.bf16.mxu0 0
        %1921 = vmatpush1.bf16.msra.mxu0 0
        %1922 = vmatprep.subr.bf16.mxu0 0
        %1923 = vmatpush1.bf16.msra.mxu0 0
        %1924 = vmatprep.subr.bf16.mxu0 0
        %1925 = vmatpush1.bf16.msra.mxu0 0
        %1926 = vmatprep.subr.bf16.mxu0 0
        %1927 = vmatpush1.bf16.msra.mxu0 0
        %1928 = vmatprep.subr.bf16.mxu0 0
        %1929 = vmatpush1.bf16.msra.mxu0 0
        %1930 = vmatprep.subr.bf16.mxu0 0
        %1931 = vmatpush1.bf16.msra.mxu0 0
        %1932 = vmatprep.subr.bf16.mxu0 0
        %1933 = vmatpush1.bf16.msra.mxu0 0
        %1934 = vmatprep.subr.bf16.mxu0 0
        %1935 = vmatpush1.bf16.msra.mxu0 0
        %1936 = vmatprep.subr.bf16.mxu0 0
        %1937 = vmatpush1.bf16.msra.mxu0 0
        %1938 = vmatprep.subr.bf16.mxu0 0
        %1939 = vmatpush1.bf16.msra.mxu0 0
        %1940 = vmatprep.subr.bf16.mxu0 0
        %1941 = vmatpush1.bf16.msra.mxu0 0
        %1942 = vmatprep.mubr.bf16.mxu0 0
        %1943 = vmatmul.mubr.bf16.gmra.mrb[0].mxu0 %v1860
        %v1944 = vpop.f32.mrb[0].mxu0
        %v1945 = vadd.f32 0.0, %v1944
        %v1946 = vpop.f32.mrb[0].mxu0
        %v1947 = vpop.f32.mrb[0].mxu0
        %v1948 = vadd.f32 0.0, %v1947
        %v1949 = vpop.f32.mrb[0].mxu0
        %1950 = vmatprep.mubr.bf16.mxu0 0
        %1951 = vmatmul.mubr.bf16.gmra.mrb[0].mxu0 %v1863
        %v1952 = vpop.f32.mrb[0].mxu0
        %v1953 = vadd.f32 0.0, %v1952
        %v1954 = vpop.f32.mrb[0].mxu0
        %v1955 = vpop.f32.mrb[0].mxu0
        %v1956 = vadd.f32 0.0, %v1955
        %v1957 = vpop.f32.mrb[0].mxu0
        %1958 = vmatprep.mubr.bf16.mxu0 0
        %1959 = vmatmul.mubr.bf16.gmra.mrb[0].mxu0 %v1866
        %v1960 = vpop.f32.mrb[0].mxu0
        %v1961 = vadd.f32 0.0, %v1960
        %v1962 = vpop.f32.mrb[0].mxu0
        %v1963 = vpop.f32.mrb[0].mxu0
        %v1964 = vadd.f32 0.0, %v1963
        %v1965 = vpop.f32.mrb[0].mxu0
        %1966 = vmatprep.mubr.bf16.mxu0 0
        %1967 = vmatmul.mubr.bf16.gmra.mrb[0].mxu0 %v1869
        %v1968 = vpop.f32.mrb[0].mxu0
        %v1969 = vadd.f32 0.0, %v1968
        %v1970 = vpop.f32.mrb[0].mxu0
        %v1971 = vpop.f32.mrb[0].mxu0
        %v1972 = vadd.f32 0.0, %v1971
        %v1973 = vpop.f32.mrb[0].mxu0
        %1974 = vmatprep.mubr.bf16.mxu0 0
        %1975 = vmatmul.mubr.bf16.gmra.mrb[0].mxu0 %v1872
        %v1976 = vpop.f32.mrb[0].mxu0
        %v1977 = vadd.f32 0.0, %v1976
        %v1978 = vpop.f32.mrb[0].mxu0
        %v1979 = vpop.f32.mrb[0].mxu0
        %v1980 = vadd.f32 0.0, %v1979
        %v1981 = vpop.f32.mrb[0].mxu0
        %1982 = vmatprep.mubr.bf16.mxu0 0
        %1983 = vmatmul.mubr.bf16.gmra.mrb[0].mxu0 %v1875
        %v1984 = vpop.f32.mrb[0].mxu0
        %v1985 = vadd.f32 0.0, %v1984
        %v1986 = vpop.f32.mrb[0].mxu0
        %v1987 = vpop.f32.mrb[0].mxu0
        %v1988 = vadd.f32 0.0, %v1987
        %v1989 = vpop.f32.mrb[0].mxu0
        %1990 = vmatprep.mubr.bf16.mxu0 0
        %1991 = vmatmul.mubr.bf16.gmra.mrb[0].mxu0 %v1878
        %v1992 = vpop.f32.mrb[0].mxu0
        %v1993 = vadd.f32 0.0, %v1992
        %v1994 = vpop.f32.mrb[0].mxu0
        %v1995 = vpop.f32.mrb[0].mxu0
        %v1996 = vadd.f32 0.0, %v1995
        %v1997 = vpop.f32.mrb[0].mxu0
        %1998 = vmatprep.mubr.bf16.mxu0 0
        %1999 = vmatmul.mubr.bf16.gmra.mrb[0].mxu0 %v1881
        %v2000 = vpop.f32.mrb[0].mxu0
        %v2001 = vadd.f32 0.0, %v2000
        %v2002 = vpop.f32.mrb[0].mxu0
        %v2003 = vpop.f32.mrb[0].mxu0
        %v2004 = vadd.f32 0.0, %v2003
        %v2005 = vpop.f32.mrb[0].mxu0
        %2006 = vmatprep.mubr.bf16.mxu0 0
        %2007 = vmatmul.mubr.bf16.gmra.mrb[0].mxu0 %v1884
        %v2008 = vpop.f32.mrb[0].mxu0
        %v2009 = vadd.f32 0.0, %v2008
        %v2010 = vpop.f32.mrb[0].mxu0
        %v2011 = vpop.f32.mrb[0].mxu0
        %v2012 = vadd.f32 0.0, %v2011
        %v2013 = vpop.f32.mrb[0].mxu0
        %2014 = vmatprep.mubr.bf16.mxu0 0
        %2015 = vmatmul.mubr.bf16.gmra.mrb[0].mxu0 %v1887
        %v2016 = vpop.f32.mrb[0].mxu0
        %v2017 = vadd.f32 0.0, %v2016
        %v2018 = vpop.f32.mrb[0].mxu0
        %v2019 = vpop.f32.mrb[0].mxu0
        %v2020 = vadd.f32 0.0, %v2019
        %v2021 = vpop.f32.mrb[0].mxu0
        %2022 = vmatprep.mubr.bf16.mxu0 0
        %2023 = vmatmul.mubr.bf16.gmra.mrb[0].mxu0 %v1890
        %v2024 = vpop.f32.mrb[0].mxu0
        %v2025 = vadd.f32 0.0, %v2024
        %v2026 = vpop.f32.mrb[0].mxu0
        %v2027 = vpop.f32.mrb[0].mxu0
        %v2028 = vadd.f32 0.0, %v2027
        %v2029 = vpop.f32.mrb[0].mxu0
        %2030 = vmatprep.mubr.bf16.mxu0 0
        %2031 = vmatmul.mubr.bf16.gmra.mrb[0].mxu0 %v1893
        %v2032 = vpop.f32.mrb[0].mxu0
        %v2033 = vadd.f32 0.0, %v2032
        %v2034 = vpop.f32.mrb[0].mxu0
        %v2035 = vpop.f32.mrb[0].mxu0
        %v2036 = vadd.f32 0.0, %v2035
        %v2037 = vpop.f32.mrb[0].mxu0
        %2038 = vmatprep.mubr.bf16.mxu0 0
        %2039 = vmatmul.mubr.bf16.gmra.mrb[0].mxu0 %v1896
        %v2040 = vpop.f32.mrb[0].mxu0
        %v2041 = vadd.f32 0.0, %v2040
        %v2042 = vpop.f32.mrb[0].mxu0
        %v2043 = vpop.f32.mrb[0].mxu0
        %v2044 = vadd.f32 0.0, %v2043
        %v2045 = vpop.f32.mrb[0].mxu0
        %2046 = vmatprep.mubr.bf16.mxu0 0
        %2047 = vmatmul.mubr.bf16.gmra.mrb[0].mxu0 %v1899
        %v2048 = vpop.f32.mrb[0].mxu0
        %v2049 = vadd.f32 0.0, %v2048
        %v2050 = vpop.f32.mrb[0].mxu0
        %v2051 = vpop.f32.mrb[0].mxu0
        %v2052 = vadd.f32 0.0, %v2051
        %v2053 = vpop.f32.mrb[0].mxu0
        %2054 = vmatprep.mubr.bf16.mxu0 0
        %2055 = vmatmul.mubr.bf16.gmra.mrb[0].mxu0 %v1902
        %v2056 = vpop.f32.mrb[0].mxu0
        %v2057 = vadd.f32 0.0, %v2056
        %v2058 = vpop.f32.mrb[0].mxu0
        %v2059 = vpop.f32.mrb[0].mxu0
        %v2060 = vadd.f32 0.0, %v2059
        %v2061 = vpop.f32.mrb[0].mxu0
        %2062 = vmatprep.mubr.bf16.mxu0 0
        %2063 = vmatmul.mubr.bf16.gmra.mrb[0].mxu0 %v1905
        %v2064 = vpop.f32.mrb[0].mxu0
        %v2065 = vadd.f32 0.0, %v2064
        %v2066 = vpop.f32.mrb[0].mxu0
        %v2067 = vpop.f32.mrb[0].mxu0
        %v2068 = vadd.f32 0.0, %v2067
        %v2069 = vpop.f32.mrb[0].mxu0
        %2070 = vdwg.mxu0
        %v2071 = vadd.f32 %v1745, %v1945
        %v2072 = vadd.f32 %v1746, %v1948
        %v2073 = vadd.f32 %v1747, %v1953
        %v2074 = vadd.f32 %v1748, %v1956
        %v2075 = vadd.f32 %v1749, %v1961
        %v2076 = vadd.f32 %v1750, %v1964
        %v2077 = vadd.f32 %v1751, %v1969
        %v2078 = vadd.f32 %v1752, %v1972
        %v2079 = vadd.f32 %v1753, %v1977
        %v2080 = vadd.f32 %v1754, %v1980
        %v2081 = vadd.f32 %v1755, %v1985
        %v2082 = vadd.f32 %v1756, %v1988
        %v2083 = vadd.f32 %v1757, %v1993
        %v2084 = vadd.f32 %v1758, %v1996
        %v2085 = vadd.f32 %v1759, %v2001
        %v2086 = vadd.f32 %v1760, %v2004
        %v2087 = vadd.f32 %v1761, %v2009
        %v2088 = vadd.f32 %v1762, %v2012
        %v2089 = vadd.f32 %v1763, %v2017
        %v2090 = vadd.f32 %v1764, %v2020
        %v2091 = vadd.f32 %v1765, %v2025
        %v2092 = vadd.f32 %v1766, %v2028
        %v2093 = vadd.f32 %v1767, %v2033
        %v2094 = vadd.f32 %v1768, %v2036
        %v2095 = vadd.f32 %v1769, %v2041
        %v2096 = vadd.f32 %v1770, %v2044
        %v2097 = vadd.f32 %v1771, %v2049
        %v2098 = vadd.f32 %v1772, %v2052
        %v2099 = vadd.f32 %v1773, %v2057
        %v2100 = vadd.f32 %v1774, %v2060
        %v2101 = vadd.f32 %v1775, %v2065
        %v2102 = vadd.f32 %v1776, %v2068
        %v2104 = vshrl.u32 %v263, 16
        %v2106 = vrot.slane %v2104, 4
        %v2107 = vshll.u32 %v263, 16
        %v2109 = vrot.slane %v2107, 5
        %v2110 = vor.u32 %v2106, %v2109
        %v2111 = vrot.slane %v2110, 4
        %v2113 = vshll.u32 %v264, 16
        %v2115 = vrot.slane %v2113, 5
        %v2116 = vsel %vm395, %v2111, %v2115
        %v2117 = vshrl.u32 %v264, 16
        %v2119 = vrot.slane %v2117, 4
        %v2120 = vor.u32 %v2119, %v2115
        %v2121 = vrot.slane %v2120, 4
        %v2123 = vshll.u32 %v295, 16
        %v2125 = vrot.slane %v2123, 5
        %v2126 = vsel %vm395, %v2121, %v2125
        %v2128 = vshrl.u32 %v265, 16
        %v2130 = vrot.slane %v2128, 4
        %v2131 = vshll.u32 %v265, 16
        %v2133 = vrot.slane %v2131, 5
        %v2134 = vor.u32 %v2130, %v2133
        %v2135 = vrot.slane %v2134, 4
        %v2137 = vshll.u32 %v266, 16
        %v2139 = vrot.slane %v2137, 5
        %v2140 = vsel %vm395, %v2135, %v2139
        %v2141 = vshrl.u32 %v266, 16
        %v2143 = vrot.slane %v2141, 4
        %v2144 = vor.u32 %v2143, %v2139
        %v2145 = vrot.slane %v2144, 4
        %v2147 = vshll.u32 %v296, 16
        %v2149 = vrot.slane %v2147, 5
        %v2150 = vsel %vm395, %v2145, %v2149
        %v2152 = vshrl.u32 %v267, 16
        %v2154 = vrot.slane %v2152, 4
        %v2155 = vshll.u32 %v267, 16
        %v2157 = vrot.slane %v2155, 5
        %v2158 = vor.u32 %v2154, %v2157
        %v2159 = vrot.slane %v2158, 4
        %v2161 = vshll.u32 %v268, 16
        %v2163 = vrot.slane %v2161, 5
        %v2164 = vsel %vm395, %v2159, %v2163
        %v2165 = vshrl.u32 %v268, 16
        %v2167 = vrot.slane %v2165, 4
        %v2168 = vor.u32 %v2167, %v2163
        %v2169 = vrot.slane %v2168, 4
        %v2171 = vshll.u32 %v297, 16
        %v2173 = vrot.slane %v2171, 5
        %v2174 = vsel %vm395, %v2169, %v2173
        %v2176 = vshrl.u32 %v269, 16
        %v2178 = vrot.slane %v2176, 4
        %v2179 = vshll.u32 %v269, 16
        %v2181 = vrot.slane %v2179, 5
        %v2182 = vor.u32 %v2178, %v2181
        %v2183 = vrot.slane %v2182, 4
        %v2185 = vshll.u32 %v270, 16
        %v2187 = vrot.slane %v2185, 5
        %v2188 = vsel %vm395, %v2183, %v2187
        %v2189 = vshrl.u32 %v270, 16
        %v2191 = vrot.slane %v2189, 4
        %v2192 = vor.u32 %v2191, %v2187
        %v2193 = vrot.slane %v2192, 4
        %v2195 = vshll.u32 %v298, 16
        %v2197 = vrot.slane %v2195, 5
        %v2198 = vsel %vm395, %v2193, %v2197
        %v2200 = vshrl.u32 %v271, 16
        %v2202 = vrot.slane %v2200, 4
        %v2203 = vshll.u32 %v271, 16
        %v2205 = vrot.slane %v2203, 5
        %v2206 = vor.u32 %v2202, %v2205
        %v2207 = vrot.slane %v2206, 4
        %v2209 = vshll.u32 %v272, 16
        %v2211 = vrot.slane %v2209, 5
        %v2212 = vsel %vm395, %v2207, %v2211
        %v2213 = vshrl.u32 %v272, 16
        %v2215 = vrot.slane %v2213, 4
        %v2216 = vor.u32 %v2215, %v2211
        %v2217 = vrot.slane %v2216, 4
        %v2219 = vshll.u32 %v299, 16
        %v2221 = vrot.slane %v2219, 5
        %v2222 = vsel %vm395, %v2217, %v2221
        %v2224 = vshrl.u32 %v273, 16
        %v2226 = vrot.slane %v2224, 4
        %v2227 = vshll.u32 %v273, 16
        %v2229 = vrot.slane %v2227, 5
        %v2230 = vor.u32 %v2226, %v2229
        %v2231 = vrot.slane %v2230, 4
        %v2233 = vshll.u32 %v274, 16
        %v2235 = vrot.slane %v2233, 5
        %v2236 = vsel %vm395, %v2231, %v2235
        %v2237 = vshrl.u32 %v274, 16
        %v2239 = vrot.slane %v2237, 4
        %v2240 = vor.u32 %v2239, %v2235
        %v2241 = vrot.slane %v2240, 4
        %v2243 = vshll.u32 %v300, 16
        %v2245 = vrot.slane %v2243, 5
        %v2246 = vsel %vm395, %v2241, %v2245
        %v2248 = vshrl.u32 %v275, 16
        %v2250 = vrot.slane %v2248, 4
        %v2251 = vshll.u32 %v275, 16
        %v2253 = vrot.slane %v2251, 5
        %v2254 = vor.u32 %v2250, %v2253
        %v2255 = vrot.slane %v2254, 4
        %v2257 = vshll.u32 %v276, 16
        %v2259 = vrot.slane %v2257, 5
        %v2260 = vsel %vm395, %v2255, %v2259
        %v2261 = vshrl.u32 %v276, 16
        %v2263 = vrot.slane %v2261, 4
        %v2264 = vor.u32 %v2263, %v2259
        %v2265 = vrot.slane %v2264, 4
        %v2267 = vshll.u32 %v301, 16
        %v2269 = vrot.slane %v2267, 5
        %v2270 = vsel %vm395, %v2265, %v2269
        %v2272 = vshrl.u32 %v277, 16
        %v2274 = vrot.slane %v2272, 4
        %v2275 = vshll.u32 %v277, 16
        %v2277 = vrot.slane %v2275, 5
        %v2278 = vor.u32 %v2274, %v2277
        %v2279 = vrot.slane %v2278, 4
        %v2281 = vshll.u32 %v278, 16
        %v2283 = vrot.slane %v2281, 5
        %v2284 = vsel %vm395, %v2279, %v2283
        %v2285 = vshrl.u32 %v278, 16
        %v2287 = vrot.slane %v2285, 4
        %v2288 = vor.u32 %v2287, %v2283
        %v2289 = vrot.slane %v2288, 4
        %v2291 = vshll.u32 %v302, 16
        %v2293 = vrot.slane %v2291, 5
        %v2294 = vsel %vm395, %v2289, %v2293
        %v2296 = vshrl.u32 %v279, 16
        %v2298 = vrot.slane %v2296, 4
        %v2299 = vshll.u32 %v279, 16
        %v2301 = vrot.slane %v2299, 5
        %v2302 = vor.u32 %v2298, %v2301
        %v2303 = vrot.slane %v2302, 4
        %v2305 = vshll.u32 %v280, 16
        %v2307 = vrot.slane %v2305, 5
        %v2308 = vsel %vm395, %v2303, %v2307
        %v2309 = vshrl.u32 %v280, 16
        %v2311 = vrot.slane %v2309, 4
        %v2312 = vor.u32 %v2311, %v2307
        %v2313 = vrot.slane %v2312, 4
        %v2315 = vshll.u32 %v303, 16
        %v2317 = vrot.slane %v2315, 5
        %v2318 = vsel %vm395, %v2313, %v2317
        %v2320 = vshrl.u32 %v281, 16
        %v2322 = vrot.slane %v2320, 4
        %v2323 = vshll.u32 %v281, 16
        %v2325 = vrot.slane %v2323, 5
        %v2326 = vor.u32 %v2322, %v2325
        %v2327 = vrot.slane %v2326, 4
        %v2329 = vshll.u32 %v282, 16
        %v2331 = vrot.slane %v2329, 5
        %v2332 = vsel %vm395, %v2327, %v2331
        %v2333 = vshrl.u32 %v282, 16
        %v2335 = vrot.slane %v2333, 4
        %v2336 = vor.u32 %v2335, %v2331
        %v2337 = vrot.slane %v2336, 4
        %v2339 = vshll.u32 %v304, 16
        %v2341 = vrot.slane %v2339, 5
        %v2342 = vsel %vm395, %v2337, %v2341
        %v2344 = vshrl.u32 %v283, 16
        %v2346 = vrot.slane %v2344, 4
        %v2347 = vshll.u32 %v283, 16
        %v2349 = vrot.slane %v2347, 5
        %v2350 = vor.u32 %v2346, %v2349
        %v2351 = vrot.slane %v2350, 4
        %v2353 = vshll.u32 %v284, 16
        %v2355 = vrot.slane %v2353, 5
        %v2356 = vsel %vm395, %v2351, %v2355
        %v2357 = vshrl.u32 %v284, 16
        %v2359 = vrot.slane %v2357, 4
        %v2360 = vor.u32 %v2359, %v2355
        %v2361 = vrot.slane %v2360, 4
        %v2363 = vshll.u32 %v305, 16
        %v2365 = vrot.slane %v2363, 5
        %v2366 = vsel %vm395, %v2361, %v2365
        %v2368 = vshrl.u32 %v285, 16
        %v2370 = vrot.slane %v2368, 4
        %v2371 = vshll.u32 %v285, 16
        %v2373 = vrot.slane %v2371, 5
        %v2374 = vor.u32 %v2370, %v2373
        %v2375 = vrot.slane %v2374, 4
        %v2377 = vshll.u32 %v286, 16
        %v2379 = vrot.slane %v2377, 5
        %v2380 = vsel %vm395, %v2375, %v2379
        %v2381 = vshrl.u32 %v286, 16
        %v2383 = vrot.slane %v2381, 4
        %v2384 = vor.u32 %v2383, %v2379
        %v2385 = vrot.slane %v2384, 4
        %v2387 = vshll.u32 %v306, 16
        %v2389 = vrot.slane %v2387, 5
        %v2390 = vsel %vm395, %v2385, %v2389
        %v2392 = vshrl.u32 %v287, 16
        %v2394 = vrot.slane %v2392, 4
        %v2395 = vshll.u32 %v287, 16
        %v2397 = vrot.slane %v2395, 5
        %v2398 = vor.u32 %v2394, %v2397
        %v2399 = vrot.slane %v2398, 4
        %v2401 = vshll.u32 %v288, 16
        %v2403 = vrot.slane %v2401, 5
        %v2404 = vsel %vm395, %v2399, %v2403
        %v2405 = vshrl.u32 %v288, 16
        %v2407 = vrot.slane %v2405, 4
        %v2408 = vor.u32 %v2407, %v2403
        %v2409 = vrot.slane %v2408, 4
        %v2411 = vshll.u32 %v307, 16
        %v2413 = vrot.slane %v2411, 5
        %v2414 = vsel %vm395, %v2409, %v2413
        %v2416 = vshrl.u32 %v289, 16
        %v2418 = vrot.slane %v2416, 4
        %v2419 = vshll.u32 %v289, 16
        %v2421 = vrot.slane %v2419, 5
        %v2422 = vor.u32 %v2418, %v2421
        %v2423 = vrot.slane %v2422, 4
        %v2425 = vshll.u32 %v290, 16
        %v2427 = vrot.slane %v2425, 5
        %v2428 = vsel %vm395, %v2423, %v2427
        %v2429 = vshrl.u32 %v290, 16
        %v2431 = vrot.slane %v2429, 4
        %v2432 = vor.u32 %v2431, %v2427
        %v2433 = vrot.slane %v2432, 4
        %v2435 = vshll.u32 %v308, 16
        %v2437 = vrot.slane %v2435, 5
        %v2438 = vsel %vm395, %v2433, %v2437
        %v2440 = vshrl.u32 %v291, 16
        %v2442 = vrot.slane %v2440, 4
        %v2443 = vshll.u32 %v291, 16
        %v2445 = vrot.slane %v2443, 5
        %v2446 = vor.u32 %v2442, %v2445
        %v2447 = vrot.slane %v2446, 4
        %v2449 = vshll.u32 %v292, 16
        %v2451 = vrot.slane %v2449, 5
        %v2452 = vsel %vm395, %v2447, %v2451
        %v2453 = vshrl.u32 %v292, 16
        %v2455 = vrot.slane %v2453, 4
        %v2456 = vor.u32 %v2455, %v2451
        %v2457 = vrot.slane %v2456, 4
        %v2459 = vshll.u32 %v309, 16
        %v2461 = vrot.slane %v2459, 5
        %v2462 = vsel %vm395, %v2457, %v2461
        %v2464 = vshrl.u32 %v293, 16
        %v2466 = vrot.slane %v2464, 4
        %v2467 = vshll.u32 %v293, 16
        %v2469 = vrot.slane %v2467, 5
        %v2470 = vor.u32 %v2466, %v2469
        %v2471 = vrot.slane %v2470, 4
        %v2473 = vshll.u32 %v294, 16
        %v2475 = vrot.slane %v2473, 5
        %v2476 = vsel %vm395, %v2471, %v2475
        %v2477 = vshrl.u32 %v294, 16
        %v2479 = vrot.slane %v2477, 4
        %v2480 = vor.u32 %v2479, %v2475
        %v2481 = vrot.slane %v2480, 4
        %v2483 = vshll.u32 %v310, 16
        %v2485 = vrot.slane %v2483, 5
        %v2486 = vsel %vm395, %v2481, %v2485
        %s2487 = scalar_lea.vmem %s1, 16
        %v2488 = vld [vmem:[%s2487] sm:$0xf]
        %v2489 = vunpack.c.l.b16 %v2116
        %v2490 = vunpack.c.l.b16 %v2126
        %v2491 = vunpack.c.l.b16 %v2140
        %v2492 = vunpack.c.l.b16 %v2150
        %v2493 = vunpack.c.l.b16 %v2164
        %v2494 = vunpack.c.l.b16 %v2174
        %v2495 = vunpack.c.l.b16 %v2188
        %v2496 = vunpack.c.l.b16 %v2198
        %v2497 = vunpack.c.l.b16 %v2212
        %v2498 = vunpack.c.l.b16 %v2222
        %v2499 = vunpack.c.l.b16 %v2236
        %v2500 = vunpack.c.l.b16 %v2246
        %v2501 = vunpack.c.l.b16 %v2260
        %v2502 = vunpack.c.l.b16 %v2270
        %v2503 = vunpack.c.l.b16 %v2284
        %v2504 = vunpack.c.l.b16 %v2294
        %v2505 = vunpack.c.l.b16 %v2308
        %v2506 = vunpack.c.l.b16 %v2318
        %v2507 = vunpack.c.l.b16 %v2332
        %v2508 = vunpack.c.l.b16 %v2342
        %v2509 = vunpack.c.l.b16 %v2356
        %v2510 = vunpack.c.l.b16 %v2366
        %v2511 = vunpack.c.l.b16 %v2380
        %v2512 = vunpack.c.l.b16 %v2390
        %v2513 = vunpack.c.l.b16 %v2404
        %v2514 = vunpack.c.l.b16 %v2414
        %v2515 = vunpack.c.l.b16 %v2428
        %v2516 = vunpack.c.l.b16 %v2438
        %v2517 = vunpack.c.l.b16 %v2452
        %v2518 = vunpack.c.l.b16 %v2462
        %v2519 = vunpack.c.l.b16 %v2476
        %v2520 = vunpack.c.l.b16 %v2486
        %v2521 = vpack.c.b16 %v2490, %v2489
        %v2522 = vpack.c.b16 %v2492, %v2491
        %v2523 = vpack.c.b16 %v2494, %v2493
        %v2524 = vpack.c.b16 %v2496, %v2495
        %v2525 = vpack.c.b16 %v2498, %v2497
        %v2526 = vpack.c.b16 %v2500, %v2499
        %v2527 = vpack.c.b16 %v2502, %v2501
        %v2528 = vpack.c.b16 %v2504, %v2503
        %v2529 = vpack.c.b16 %v2506, %v2505
        %v2530 = vpack.c.b16 %v2508, %v2507
        %v2531 = vpack.c.b16 %v2510, %v2509
        %v2532 = vpack.c.b16 %v2512, %v2511
        %v2533 = vpack.c.b16 %v2514, %v2513
        %v2534 = vpack.c.b16 %v2516, %v2515
        %v2535 = vpack.c.b16 %v2518, %v2517
        %v2536 = vpack.c.b16 %v2520, %v2519
        %v2538 = vsel %vm830, %v2521, 0
        %v2541 = vsel %vm830, %v2522, 0
        %v2544 = vsel %vm830, %v2523, 0
        %v2547 = vsel %vm830, %v2524, 0
        %v2550 = vsel %vm830, %v2525, 0
        %v2553 = vsel %vm830, %v2526, 0
        %v2556 = vsel %vm830, %v2527, 0
        %v2559 = vsel %vm830, %v2528, 0
        %v2562 = vsel %vm830, %v2529, 0
        %v2565 = vsel %vm830, %v2530, 0
        %v2568 = vsel %vm830, %v2531, 0
        %v2571 = vsel %vm830, %v2532, 0
        %v2574 = vsel %vm830, %v2533, 0
        %v2577 = vsel %vm830, %v2534, 0
        %v2580 = vsel %vm830, %v2535, 0
        %v2583 = vsel %vm830, %v2536, 0
        %v2586 = vsel %vm879, %v2488, 0
        %2588 = vmatprep.subr.bf16.mxu0 0
        %2589 = vmatpush1.bf16.msra.mxu0 %v2586
        %2590 = vmatprep.subr.bf16.mxu0 0
        %2591 = vmatpush1.bf16.msra.mxu0 0
        %2592 = vmatprep.subr.bf16.mxu0 0
        %2593 = vmatpush1.bf16.msra.mxu0 0
        %2594 = vmatprep.subr.bf16.mxu0 0
        %2595 = vmatpush1.bf16.msra.mxu0 0
        %2596 = vmatprep.subr.bf16.mxu0 0
        %2597 = vmatpush1.bf16.msra.mxu0 0
        %2598 = vmatprep.subr.bf16.mxu0 0
        %2599 = vmatpush1.bf16.msra.mxu0 0
        %2600 = vmatprep.subr.bf16.mxu0 0
        %2601 = vmatpush1.bf16.msra.mxu0 0
        %2602 = vmatprep.subr.bf16.mxu0 0
        %2603 = vmatpush1.bf16.msra.mxu0 0
        %2604 = vmatprep.subr.bf16.mxu0 0
        %2605 = vmatpush1.bf16.msra.mxu0 0
        %2606 = vmatprep.subr.bf16.mxu0 0
        %2607 = vmatpush1.bf16.msra.mxu0 0
        %2608 = vmatprep.subr.bf16.mxu0 0
        %2609 = vmatpush1.bf16.msra.mxu0 0
        %2610 = vmatprep.subr.bf16.mxu0 0
        %2611 = vmatpush1.bf16.msra.mxu0 0
        %2612 = vmatprep.subr.bf16.mxu0 0
        %2613 = vmatpush1.bf16.msra.mxu0 0
        %2614 = vmatprep.subr.bf16.mxu0 0
        %2615 = vmatpush1.bf16.msra.mxu0 0
        %2616 = vmatprep.subr.bf16.mxu0 0
        %2617 = vmatpush1.bf16.msra.mxu0 0
        %2618 = vmatprep.subr.bf16.mxu0 0
        %2619 = vmatpush1.bf16.msra.mxu0 0
        %2620 = vmatprep.mubr.bf16.mxu0 0
        %2621 = vmatmul.mubr.bf16.gmra.mrb[0].mxu0 %v2538
        %v2622 = vpop.f32.mrb[0].mxu0
        %v2623 = vadd.f32 0.0, %v2622
        %v2624 = vpop.f32.mrb[0].mxu0
        %v2625 = vpop.f32.mrb[0].mxu0
        %v2626 = vadd.f32 0.0, %v2625
        %v2627 = vpop.f32.mrb[0].mxu0
        %2628 = vmatprep.mubr.bf16.mxu0 0
        %2629 = vmatmul.mubr.bf16.gmra.mrb[0].mxu0 %v2541
        %v2630 = vpop.f32.mrb[0].mxu0
        %v2631 = vadd.f32 0.0, %v2630
        %v2632 = vpop.f32.mrb[0].mxu0
        %v2633 = vpop.f32.mrb[0].mxu0
        %v2634 = vadd.f32 0.0, %v2633
        %v2635 = vpop.f32.mrb[0].mxu0
        %2636 = vmatprep.mubr.bf16.mxu0 0
        %2637 = vmatmul.mubr.bf16.gmra.mrb[0].mxu0 %v2544
        %v2638 = vpop.f32.mrb[0].mxu0
        %v2639 = vadd.f32 0.0, %v2638
        %v2640 = vpop.f32.mrb[0].mxu0
        %v2641 = vpop.f32.mrb[0].mxu0
        %v2642 = vadd.f32 0.0, %v2641
        %v2643 = vpop.f32.mrb[0].mxu0
        %2644 = vmatprep.mubr.bf16.mxu0 0
        %2645 = vmatmul.mubr.bf16.gmra.mrb[0].mxu0 %v2547
        %v2646 = vpop.f32.mrb[0].mxu0
        %v2647 = vadd.f32 0.0, %v2646
        %v2648 = vpop.f32.mrb[0].mxu0
        %v2649 = vpop.f32.mrb[0].mxu0
        %v2650 = vadd.f32 0.0, %v2649
        %v2651 = vpop.f32.mrb[0].mxu0
        %2652 = vmatprep.mubr.bf16.mxu0 0
        %2653 = vmatmul.mubr.bf16.gmra.mrb[0].mxu0 %v2550
        %v2654 = vpop.f32.mrb[0].mxu0
        %v2655 = vadd.f32 0.0, %v2654
        %v2656 = vpop.f32.mrb[0].mxu0
        %v2657 = vpop.f32.mrb[0].mxu0
        %v2658 = vadd.f32 0.0, %v2657
        %v2659 = vpop.f32.mrb[0].mxu0
        %2660 = vmatprep.mubr.bf16.mxu0 0
        %2661 = vmatmul.mubr.bf16.gmra.mrb[0].mxu0 %v2553
        %v2662 = vpop.f32.mrb[0].mxu0
        %v2663 = vadd.f32 0.0, %v2662
        %v2664 = vpop.f32.mrb[0].mxu0
        %v2665 = vpop.f32.mrb[0].mxu0
        %v2666 = vadd.f32 0.0, %v2665
        %v2667 = vpop.f32.mrb[0].mxu0
        %2668 = vmatprep.mubr.bf16.mxu0 0
        %2669 = vmatmul.mubr.bf16.gmra.mrb[0].mxu0 %v2556
        %v2670 = vpop.f32.mrb[0].mxu0
        %v2671 = vadd.f32 0.0, %v2670
        %v2672 = vpop.f32.mrb[0].mxu0
        %v2673 = vpop.f32.mrb[0].mxu0
        %v2674 = vadd.f32 0.0, %v2673
        %v2675 = vpop.f32.mrb[0].mxu0
        %2676 = vmatprep.mubr.bf16.mxu0 0
        %2677 = vmatmul.mubr.bf16.gmra.mrb[0].mxu0 %v2559
        %v2678 = vpop.f32.mrb[0].mxu0
        %v2679 = vadd.f32 0.0, %v2678
        %v2680 = vpop.f32.mrb[0].mxu0
        %v2681 = vpop.f32.mrb[0].mxu0
        %v2682 = vadd.f32 0.0, %v2681
        %v2683 = vpop.f32.mrb[0].mxu0
        %2684 = vmatprep.mubr.bf16.mxu0 0
        %2685 = vmatmul.mubr.bf16.gmra.mrb[0].mxu0 %v2562
        %v2686 = vpop.f32.mrb[0].mxu0
        %v2687 = vadd.f32 0.0, %v2686
        %v2688 = vpop.f32.mrb[0].mxu0
        %v2689 = vpop.f32.mrb[0].mxu0
        %v2690 = vadd.f32 0.0, %v2689
        %v2691 = vpop.f32.mrb[0].mxu0
        %2692 = vmatprep.mubr.bf16.mxu0 0
        %2693 = vmatmul.mubr.bf16.gmra.mrb[0].mxu0 %v2565
        %v2694 = vpop.f32.mrb[0].mxu0
        %v2695 = vadd.f32 0.0, %v2694
        %v2696 = vpop.f32.mrb[0].mxu0
        %v2697 = vpop.f32.mrb[0].mxu0
        %v2698 = vadd.f32 0.0, %v2697
        %v2699 = vpop.f32.mrb[0].mxu0
        %2700 = vmatprep.mubr.bf16.mxu0 0
        %2701 = vmatmul.mubr.bf16.gmra.mrb[0].mxu0 %v2568
        %v2702 = vpop.f32.mrb[0].mxu0
        %v2703 = vadd.f32 0.0, %v2702
        %v2704 = vpop.f32.mrb[0].mxu0
        %v2705 = vpop.f32.mrb[0].mxu0
        %v2706 = vadd.f32 0.0, %v2705
        %v2707 = vpop.f32.mrb[0].mxu0
        %2708 = vmatprep.mubr.bf16.mxu0 0
        %2709 = vmatmul.mubr.bf16.gmra.mrb[0].mxu0 %v2571
        %v2710 = vpop.f32.mrb[0].mxu0
        %v2711 = vadd.f32 0.0, %v2710
        %v2712 = vpop.f32.mrb[0].mxu0
        %v2713 = vpop.f32.mrb[0].mxu0
        %v2714 = vadd.f32 0.0, %v2713
        %v2715 = vpop.f32.mrb[0].mxu0
        %2716 = vmatprep.mubr.bf16.mxu0 0
        %2717 = vmatmul.mubr.bf16.gmra.mrb[0].mxu0 %v2574
        %v2718 = vpop.f32.mrb[0].mxu0
        %v2719 = vadd.f32 0.0, %v2718
        %v2720 = vpop.f32.mrb[0].mxu0
        %v2721 = vpop.f32.mrb[0].mxu0
        %v2722 = vadd.f32 0.0, %v2721
        %v2723 = vpop.f32.mrb[0].mxu0
        %2724 = vmatprep.mubr.bf16.mxu0 0
        %2725 = vmatmul.mubr.bf16.gmra.mrb[0].mxu0 %v2577
        %v2726 = vpop.f32.mrb[0].mxu0
        %v2727 = vadd.f32 0.0, %v2726
        %v2728 = vpop.f32.mrb[0].mxu0
        %v2729 = vpop.f32.mrb[0].mxu0
        %v2730 = vadd.f32 0.0, %v2729
        %v2731 = vpop.f32.mrb[0].mxu0
        %2732 = vmatprep.mubr.bf16.mxu0 0
        %2733 = vmatmul.mubr.bf16.gmra.mrb[0].mxu0 %v2580
        %v2734 = vpop.f32.mrb[0].mxu0
        %v2735 = vadd.f32 0.0, %v2734
        %v2736 = vpop.f32.mrb[0].mxu0
        %v2737 = vpop.f32.mrb[0].mxu0
        %v2738 = vadd.f32 0.0, %v2737
        %v2739 = vpop.f32.mrb[0].mxu0
        %2740 = vmatprep.mubr.bf16.mxu0 0
        %2741 = vmatmul.mubr.bf16.gmra.mrb[0].mxu0 %v2583
        %v2742 = vpop.f32.mrb[0].mxu0
        %v2743 = vadd.f32 0.0, %v2742
        %v2744 = vpop.f32.mrb[0].mxu0
        %v2745 = vpop.f32.mrb[0].mxu0
        %v2746 = vadd.f32 0.0, %v2745
        %v2747 = vpop.f32.mrb[0].mxu0
        %2748 = vdwg.mxu0
        %v2749 = vadd.f32 %v2071, %v2623
        %v2750 = vadd.f32 %v2072, %v2626
        %v2751 = vadd.f32 %v2073, %v2631
        %v2752 = vadd.f32 %v2074, %v2634
        %v2753 = vadd.f32 %v2075, %v2639
        %v2754 = vadd.f32 %v2076, %v2642
        %v2755 = vadd.f32 %v2077, %v2647
        %v2756 = vadd.f32 %v2078, %v2650
        %v2757 = vadd.f32 %v2079, %v2655
        %v2758 = vadd.f32 %v2080, %v2658
        %v2759 = vadd.f32 %v2081, %v2663
        %v2760 = vadd.f32 %v2082, %v2666
        %v2761 = vadd.f32 %v2083, %v2671
        %v2762 = vadd.f32 %v2084, %v2674
        %v2763 = vadd.f32 %v2085, %v2679
        %v2764 = vadd.f32 %v2086, %v2682
        %v2765 = vadd.f32 %v2087, %v2687
        %v2766 = vadd.f32 %v2088, %v2690
        %v2767 = vadd.f32 %v2089, %v2695
        %v2768 = vadd.f32 %v2090, %v2698
        %v2769 = vadd.f32 %v2091, %v2703
        %v2770 = vadd.f32 %v2092, %v2706
        %v2771 = vadd.f32 %v2093, %v2711
        %v2772 = vadd.f32 %v2094, %v2714
        %v2773 = vadd.f32 %v2095, %v2719
        %v2774 = vadd.f32 %v2096, %v2722
        %v2775 = vadd.f32 %v2097, %v2727
        %v2776 = vadd.f32 %v2098, %v2730
        %v2777 = vadd.f32 %v2099, %v2735
        %v2778 = vadd.f32 %v2100, %v2738
        %v2779 = vadd.f32 %v2101, %v2743
        %v2780 = vadd.f32 %v2102, %v2746
        %v2813 = vrot.slane %v311, 5
        %v2814 = vrot.slane %v2813, 4
        %v2815 = vrot.slane %v264, 5
        %v2816 = vsel %vm1370, %v2814, %v2815
        %v2817 = vrot.slane %v2815, 4
        %v2818 = vrot.slane %v295, 5
        %v2819 = vsel %vm1370, %v2817, %v2818
        %v2820 = vrot.slane %v312, 5
        %v2821 = vrot.slane %v2820, 4
        %v2822 = vrot.slane %v266, 5
        %v2823 = vsel %vm1370, %v2821, %v2822
        %v2824 = vrot.slane %v2822, 4
        %v2825 = vrot.slane %v296, 5
        %v2826 = vsel %vm1370, %v2824, %v2825
        %v2827 = vrot.slane %v313, 5
        %v2828 = vrot.slane %v2827, 4
        %v2829 = vrot.slane %v268, 5
        %v2830 = vsel %vm1370, %v2828, %v2829
        %v2831 = vrot.slane %v2829, 4
        %v2832 = vrot.slane %v297, 5
        %v2833 = vsel %vm1370, %v2831, %v2832
        %v2834 = vrot.slane %v314, 5
        %v2835 = vrot.slane %v2834, 4
        %v2836 = vrot.slane %v270, 5
        %v2837 = vsel %vm1370, %v2835, %v2836
        %v2838 = vrot.slane %v2836, 4
        %v2839 = vrot.slane %v298, 5
        %v2840 = vsel %vm1370, %v2838, %v2839
        %v2841 = vrot.slane %v315, 5
        %v2842 = vrot.slane %v2841, 4
        %v2843 = vrot.slane %v272, 5
        %v2844 = vsel %vm1370, %v2842, %v2843
        %v2845 = vrot.slane %v2843, 4
        %v2846 = vrot.slane %v299, 5
        %v2847 = vsel %vm1370, %v2845, %v2846
        %v2848 = vrot.slane %v316, 5
        %v2849 = vrot.slane %v2848, 4
        %v2850 = vrot.slane %v274, 5
        %v2851 = vsel %vm1370, %v2849, %v2850
        %v2852 = vrot.slane %v2850, 4
        %v2853 = vrot.slane %v300, 5
        %v2854 = vsel %vm1370, %v2852, %v2853
        %v2855 = vrot.slane %v317, 5
        %v2856 = vrot.slane %v2855, 4
        %v2857 = vrot.slane %v276, 5
        %v2858 = vsel %vm1370, %v2856, %v2857
        %v2859 = vrot.slane %v2857, 4
        %v2860 = vrot.slane %v301, 5
        %v2861 = vsel %vm1370, %v2859, %v2860
        %v2862 = vrot.slane %v318, 5
        %v2863 = vrot.slane %v2862, 4
        %v2864 = vrot.slane %v278, 5
        %v2865 = vsel %vm1370, %v2863, %v2864
        %v2866 = vrot.slane %v2864, 4
        %v2867 = vrot.slane %v302, 5
        %v2868 = vsel %vm1370, %v2866, %v2867
        %v2869 = vrot.slane %v319, 5
        %v2870 = vrot.slane %v2869, 4
        %v2871 = vrot.slane %v280, 5
        %v2872 = vsel %vm1370, %v2870, %v2871
        %v2873 = vrot.slane %v2871, 4
        %v2874 = vrot.slane %v303, 5
        %v2875 = vsel %vm1370, %v2873, %v2874
        %v2876 = vrot.slane %v320, 5
        %v2877 = vrot.slane %v2876, 4
        %v2878 = vrot.slane %v282, 5
        %v2879 = vsel %vm1370, %v2877, %v2878
        %v2880 = vrot.slane %v2878, 4
        %v2881 = vrot.slane %v304, 5
        %v2882 = vsel %vm1370, %v2880, %v2881
        %v2883 = vrot.slane %v321, 5
        %v2884 = vrot.slane %v2883, 4
        %v2885 = vrot.slane %v284, 5
        %v2886 = vsel %vm1370, %v2884, %v2885
        %v2887 = vrot.slane %v2885, 4
        %v2888 = vrot.slane %v305, 5
        %v2889 = vsel %vm1370, %v2887, %v2888
        %v2890 = vrot.slane %v322, 5
        %v2891 = vrot.slane %v2890, 4
        %v2892 = vrot.slane %v286, 5
        %v2893 = vsel %vm1370, %v2891, %v2892
        %v2894 = vrot.slane %v2892, 4
        %v2895 = vrot.slane %v306, 5
        %v2896 = vsel %vm1370, %v2894, %v2895
        %v2897 = vrot.slane %v323, 5
        %v2898 = vrot.slane %v2897, 4
        %v2899 = vrot.slane %v288, 5
        %v2900 = vsel %vm1370, %v2898, %v2899
        %v2901 = vrot.slane %v2899, 4
        %v2902 = vrot.slane %v307, 5
        %v2903 = vsel %vm1370, %v2901, %v2902
        %v2904 = vrot.slane %v324, 5
        %v2905 = vrot.slane %v2904, 4
        %v2906 = vrot.slane %v290, 5
        %v2907 = vsel %vm1370, %v2905, %v2906
        %v2908 = vrot.slane %v2906, 4
        %v2909 = vrot.slane %v308, 5
        %v2910 = vsel %vm1370, %v2908, %v2909
        %v2911 = vrot.slane %v325, 5
        %v2912 = vrot.slane %v2911, 4
        %v2913 = vrot.slane %v292, 5
        %v2914 = vsel %vm1370, %v2912, %v2913
        %v2915 = vrot.slane %v2913, 4
        %v2916 = vrot.slane %v309, 5
        %v2917 = vsel %vm1370, %v2915, %v2916
        %v2918 = vrot.slane %v326, 5
        %v2919 = vrot.slane %v2918, 4
        %v2920 = vrot.slane %v294, 5
        %v2921 = vsel %vm1370, %v2919, %v2920
        %v2922 = vrot.slane %v2920, 4
        %v2923 = vrot.slane %v310, 5
        %v2924 = vsel %vm1370, %v2922, %v2923
        %s2925 = scalar_lea.vmem %s1, 20
        %v2926 = vld [vmem:[%s2925] sm:$0xf]
        %v2927 = vunpack.c.l.b16 %v2816
        %v2928 = vunpack.c.l.b16 %v2819
        %v2929 = vunpack.c.l.b16 %v2823
        %v2930 = vunpack.c.l.b16 %v2826
        %v2931 = vunpack.c.l.b16 %v2830
        %v2932 = vunpack.c.l.b16 %v2833
        %v2933 = vunpack.c.l.b16 %v2837
        %v2934 = vunpack.c.l.b16 %v2840
        %v2935 = vunpack.c.l.b16 %v2844
        %v2936 = vunpack.c.l.b16 %v2847
        %v2937 = vunpack.c.l.b16 %v2851
        %v2938 = vunpack.c.l.b16 %v2854
        %v2939 = vunpack.c.l.b16 %v2858
        %v2940 = vunpack.c.l.b16 %v2861
        %v2941 = vunpack.c.l.b16 %v2865
        %v2942 = vunpack.c.l.b16 %v2868
        %v2943 = vunpack.c.l.b16 %v2872
        %v2944 = vunpack.c.l.b16 %v2875
        %v2945 = vunpack.c.l.b16 %v2879
        %v2946 = vunpack.c.l.b16 %v2882
        %v2947 = vunpack.c.l.b16 %v2886
        %v2948 = vunpack.c.l.b16 %v2889
        %v2949 = vunpack.c.l.b16 %v2893
        %v2950 = vunpack.c.l.b16 %v2896
        %v2951 = vunpack.c.l.b16 %v2900
        %v2952 = vunpack.c.l.b16 %v2903
        %v2953 = vunpack.c.l.b16 %v2907
        %v2954 = vunpack.c.l.b16 %v2910
        %v2955 = vunpack.c.l.b16 %v2914
        %v2956 = vunpack.c.l.b16 %v2917
        %v2957 = vunpack.c.l.b16 %v2921
        %v2958 = vunpack.c.l.b16 %v2924
        %v2959 = vpack.c.b16 %v2928, %v2927
        %v2960 = vpack.c.b16 %v2930, %v2929
        %v2961 = vpack.c.b16 %v2932, %v2931
        %v2962 = vpack.c.b16 %v2934, %v2933
        %v2963 = vpack.c.b16 %v2936, %v2935
        %v2964 = vpack.c.b16 %v2938, %v2937
        %v2965 = vpack.c.b16 %v2940, %v2939
        %v2966 = vpack.c.b16 %v2942, %v2941
        %v2967 = vpack.c.b16 %v2944, %v2943
        %v2968 = vpack.c.b16 %v2946, %v2945
        %v2969 = vpack.c.b16 %v2948, %v2947
        %v2970 = vpack.c.b16 %v2950, %v2949
        %v2971 = vpack.c.b16 %v2952, %v2951
        %v2972 = vpack.c.b16 %v2954, %v2953
        %v2973 = vpack.c.b16 %v2956, %v2955
        %v2974 = vpack.c.b16 %v2958, %v2957
        %v2976 = vsel %vm830, %v2959, 0
        %v2979 = vsel %vm830, %v2960, 0
        %v2982 = vsel %vm830, %v2961, 0
        %v2985 = vsel %vm830, %v2962, 0
        %v2988 = vsel %vm830, %v2963, 0
        %v2991 = vsel %vm830, %v2964, 0
        %v2994 = vsel %vm830, %v2965, 0
        %v2997 = vsel %vm830, %v2966, 0
        %v3000 = vsel %vm830, %v2967, 0
        %v3003 = vsel %vm830, %v2968, 0
        %v3006 = vsel %vm830, %v2969, 0
        %v3009 = vsel %vm830, %v2970, 0
        %v3012 = vsel %vm830, %v2971, 0
        %v3015 = vsel %vm830, %v2972, 0
        %v3018 = vsel %vm830, %v2973, 0
        %v3021 = vsel %vm830, %v2974, 0
        %v3024 = vsel %vm879, %v2926, 0
        %3026 = vmatprep.subr.bf16.mxu0 0
        %3027 = vmatpush1.bf16.msra.mxu0 %v3024
        %3028 = vmatprep.subr.bf16.mxu0 0
        %3029 = vmatpush1.bf16.msra.mxu0 0
        %3030 = vmatprep.subr.bf16.mxu0 0
        %3031 = vmatpush1.bf16.msra.mxu0 0
        %3032 = vmatprep.subr.bf16.mxu0 0
        %3033 = vmatpush1.bf16.msra.mxu0 0
        %3034 = vmatprep.subr.bf16.mxu0 0
        %3035 = vmatpush1.bf16.msra.mxu0 0
        %3036 = vmatprep.subr.bf16.mxu0 0
        %3037 = vmatpush1.bf16.msra.mxu0 0
        %3038 = vmatprep.subr.bf16.mxu0 0
        %3039 = vmatpush1.bf16.msra.mxu0 0
        %3040 = vmatprep.subr.bf16.mxu0 0
        %3041 = vmatpush1.bf16.msra.mxu0 0
        %3042 = vmatprep.subr.bf16.mxu0 0
        %3043 = vmatpush1.bf16.msra.mxu0 0
        %3044 = vmatprep.subr.bf16.mxu0 0
        %3045 = vmatpush1.bf16.msra.mxu0 0
        %3046 = vmatprep.subr.bf16.mxu0 0
        %3047 = vmatpush1.bf16.msra.mxu0 0
        %3048 = vmatprep.subr.bf16.mxu0 0
        %3049 = vmatpush1.bf16.msra.mxu0 0
        %3050 = vmatprep.subr.bf16.mxu0 0
        %3051 = vmatpush1.bf16.msra.mxu0 0
        %3052 = vmatprep.subr.bf16.mxu0 0
        %3053 = vmatpush1.bf16.msra.mxu0 0
        %3054 = vmatprep.subr.bf16.mxu0 0
        %3055 = vmatpush1.bf16.msra.mxu0 0
        %3056 = vmatprep.subr.bf16.mxu0 0
        %3057 = vmatpush1.bf16.msra.mxu0 0
        %3058 = vmatprep.mubr.bf16.mxu0 0
        %3059 = vmatmul.mubr.bf16.gmra.mrb[0].mxu0 %v2976
        %v3060 = vpop.f32.mrb[0].mxu0
        %v3061 = vadd.f32 0.0, %v3060
        %v3062 = vpop.f32.mrb[0].mxu0
        %v3063 = vpop.f32.mrb[0].mxu0
        %v3064 = vadd.f32 0.0, %v3063
        %v3065 = vpop.f32.mrb[0].mxu0
        %3066 = vmatprep.mubr.bf16.mxu0 0
        %3067 = vmatmul.mubr.bf16.gmra.mrb[0].mxu0 %v2979
        %v3068 = vpop.f32.mrb[0].mxu0
        %v3069 = vadd.f32 0.0, %v3068
        %v3070 = vpop.f32.mrb[0].mxu0
        %v3071 = vpop.f32.mrb[0].mxu0
        %v3072 = vadd.f32 0.0, %v3071
        %v3073 = vpop.f32.mrb[0].mxu0
        %3074 = vmatprep.mubr.bf16.mxu0 0
        %3075 = vmatmul.mubr.bf16.gmra.mrb[0].mxu0 %v2982
        %v3076 = vpop.f32.mrb[0].mxu0
        %v3077 = vadd.f32 0.0, %v3076
        %v3078 = vpop.f32.mrb[0].mxu0
        %v3079 = vpop.f32.mrb[0].mxu0
        %v3080 = vadd.f32 0.0, %v3079
        %v3081 = vpop.f32.mrb[0].mxu0
        %3082 = vmatprep.mubr.bf16.mxu0 0
        %3083 = vmatmul.mubr.bf16.gmra.mrb[0].mxu0 %v2985
        %v3084 = vpop.f32.mrb[0].mxu0
        %v3085 = vadd.f32 0.0, %v3084
        %v3086 = vpop.f32.mrb[0].mxu0
        %v3087 = vpop.f32.mrb[0].mxu0
        %v3088 = vadd.f32 0.0, %v3087
        %v3089 = vpop.f32.mrb[0].mxu0
        %3090 = vmatprep.mubr.bf16.mxu0 0
        %3091 = vmatmul.mubr.bf16.gmra.mrb[0].mxu0 %v2988
        %v3092 = vpop.f32.mrb[0].mxu0
        %v3093 = vadd.f32 0.0, %v3092
        %v3094 = vpop.f32.mrb[0].mxu0
        %v3095 = vpop.f32.mrb[0].mxu0
        %v3096 = vadd.f32 0.0, %v3095
        %v3097 = vpop.f32.mrb[0].mxu0
        %3098 = vmatprep.mubr.bf16.mxu0 0
        %3099 = vmatmul.mubr.bf16.gmra.mrb[0].mxu0 %v2991
        %v3100 = vpop.f32.mrb[0].mxu0
        %v3101 = vadd.f32 0.0, %v3100
        %v3102 = vpop.f32.mrb[0].mxu0
        %v3103 = vpop.f32.mrb[0].mxu0
        %v3104 = vadd.f32 0.0, %v3103
        %v3105 = vpop.f32.mrb[0].mxu0
        %3106 = vmatprep.mubr.bf16.mxu0 0
        %3107 = vmatmul.mubr.bf16.gmra.mrb[0].mxu0 %v2994
        %v3108 = vpop.f32.mrb[0].mxu0
        %v3109 = vadd.f32 0.0, %v3108
        %v3110 = vpop.f32.mrb[0].mxu0
        %v3111 = vpop.f32.mrb[0].mxu0
        %v3112 = vadd.f32 0.0, %v3111
        %v3113 = vpop.f32.mrb[0].mxu0
        %3114 = vmatprep.mubr.bf16.mxu0 0
        %3115 = vmatmul.mubr.bf16.gmra.mrb[0].mxu0 %v2997
        %v3116 = vpop.f32.mrb[0].mxu0
        %v3117 = vadd.f32 0.0, %v3116
        %v3118 = vpop.f32.mrb[0].mxu0
        %v3119 = vpop.f32.mrb[0].mxu0
        %v3120 = vadd.f32 0.0, %v3119
        %v3121 = vpop.f32.mrb[0].mxu0
        %3122 = vmatprep.mubr.bf16.mxu0 0
        %3123 = vmatmul.mubr.bf16.gmra.mrb[0].mxu0 %v3000
        %v3124 = vpop.f32.mrb[0].mxu0
        %v3125 = vadd.f32 0.0, %v3124
        %v3126 = vpop.f32.mrb[0].mxu0
        %v3127 = vpop.f32.mrb[0].mxu0
        %v3128 = vadd.f32 0.0, %v3127
        %v3129 = vpop.f32.mrb[0].mxu0
        %3130 = vmatprep.mubr.bf16.mxu0 0
        %3131 = vmatmul.mubr.bf16.gmra.mrb[0].mxu0 %v3003
        %v3132 = vpop.f32.mrb[0].mxu0
        %v3133 = vadd.f32 0.0, %v3132
        %v3134 = vpop.f32.mrb[0].mxu0
        %v3135 = vpop.f32.mrb[0].mxu0
        %v3136 = vadd.f32 0.0, %v3135
        %v3137 = vpop.f32.mrb[0].mxu0
        %3138 = vmatprep.mubr.bf16.mxu0 0
        %3139 = vmatmul.mubr.bf16.gmra.mrb[0].mxu0 %v3006
        %v3140 = vpop.f32.mrb[0].mxu0
        %v3141 = vadd.f32 0.0, %v3140
        %v3142 = vpop.f32.mrb[0].mxu0
        %v3143 = vpop.f32.mrb[0].mxu0
        %v3144 = vadd.f32 0.0, %v3143
        %v3145 = vpop.f32.mrb[0].mxu0
        %3146 = vmatprep.mubr.bf16.mxu0 0
        %3147 = vmatmul.mubr.bf16.gmra.mrb[0].mxu0 %v3009
        %v3148 = vpop.f32.mrb[0].mxu0
        %v3149 = vadd.f32 0.0, %v3148
        %v3150 = vpop.f32.mrb[0].mxu0
        %v3151 = vpop.f32.mrb[0].mxu0
        %v3152 = vadd.f32 0.0, %v3151
        %v3153 = vpop.f32.mrb[0].mxu0
        %3154 = vmatprep.mubr.bf16.mxu0 0
        %3155 = vmatmul.mubr.bf16.gmra.mrb[0].mxu0 %v3012
        %v3156 = vpop.f32.mrb[0].mxu0
        %v3157 = vadd.f32 0.0, %v3156
        %v3158 = vpop.f32.mrb[0].mxu0
        %v3159 = vpop.f32.mrb[0].mxu0
        %v3160 = vadd.f32 0.0, %v3159
        %v3161 = vpop.f32.mrb[0].mxu0
        %3162 = vmatprep.mubr.bf16.mxu0 0
        %3163 = vmatmul.mubr.bf16.gmra.mrb[0].mxu0 %v3015
        %v3164 = vpop.f32.mrb[0].mxu0
        %v3165 = vadd.f32 0.0, %v3164
        %v3166 = vpop.f32.mrb[0].mxu0
        %v3167 = vpop.f32.mrb[0].mxu0
        %v3168 = vadd.f32 0.0, %v3167
        %v3169 = vpop.f32.mrb[0].mxu0
        %3170 = vmatprep.mubr.bf16.mxu0 0
        %3171 = vmatmul.mubr.bf16.gmra.mrb[0].mxu0 %v3018
        %v3172 = vpop.f32.mrb[0].mxu0
        %v3173 = vadd.f32 0.0, %v3172
        %v3174 = vpop.f32.mrb[0].mxu0
        %v3175 = vpop.f32.mrb[0].mxu0
        %v3176 = vadd.f32 0.0, %v3175
        %v3177 = vpop.f32.mrb[0].mxu0
        %3178 = vmatprep.mubr.bf16.mxu0 0
        %3179 = vmatmul.mubr.bf16.gmra.mrb[0].mxu0 %v3021
        %v3180 = vpop.f32.mrb[0].mxu0
        %v3181 = vadd.f32 0.0, %v3180
        %v3182 = vpop.f32.mrb[0].mxu0
        %v3183 = vpop.f32.mrb[0].mxu0
        %v3184 = vadd.f32 0.0, %v3183
        %v3185 = vpop.f32.mrb[0].mxu0
        %3186 = vdwg.mxu0
        %v3187 = vadd.f32 %v2749, %v3061
        %v3188 = vadd.f32 %v2750, %v3064
        %v3189 = vadd.f32 %v2751, %v3069
        %v3190 = vadd.f32 %v2752, %v3072
        %v3191 = vadd.f32 %v2753, %v3077
        %v3192 = vadd.f32 %v2754, %v3080
        %v3193 = vadd.f32 %v2755, %v3085
        %v3194 = vadd.f32 %v2756, %v3088
        %v3195 = vadd.f32 %v2757, %v3093
        %v3196 = vadd.f32 %v2758, %v3096
        %v3197 = vadd.f32 %v2759, %v3101
        %v3198 = vadd.f32 %v2760, %v3104
        %v3199 = vadd.f32 %v2761, %v3109
        %v3200 = vadd.f32 %v2762, %v3112
        %v3201 = vadd.f32 %v2763, %v3117
        %v3202 = vadd.f32 %v2764, %v3120
        %v3203 = vadd.f32 %v2765, %v3125
        %v3204 = vadd.f32 %v2766, %v3128
        %v3205 = vadd.f32 %v2767, %v3133
        %v3206 = vadd.f32 %v2768, %v3136
        %v3207 = vadd.f32 %v2769, %v3141
        %v3208 = vadd.f32 %v2770, %v3144
        %v3209 = vadd.f32 %v2771, %v3149
        %v3210 = vadd.f32 %v2772, %v3152
        %v3211 = vadd.f32 %v2773, %v3157
        %v3212 = vadd.f32 %v2774, %v3160
        %v3213 = vadd.f32 %v2775, %v3165
        %v3214 = vadd.f32 %v2776, %v3168
        %v3215 = vadd.f32 %v2777, %v3173
        %v3216 = vadd.f32 %v2778, %v3176
        %v3217 = vadd.f32 %v2779, %v3181
        %v3218 = vadd.f32 %v2780, %v3184
        %s3219 = scalar_lea.vmem %s1, 24
        %v3220 = vld [vmem:[%s3219] sm:$0xf]
        %v3253 = vunpack.c.l.b16 %v328
        %v3254 = vunpack.c.l.b16 %v329
        %v3255 = vunpack.c.l.b16 %v330
        %v3256 = vunpack.c.l.b16 %v331
        %v3257 = vunpack.c.l.b16 %v332
        %v3258 = vunpack.c.l.b16 %v333
        %v3259 = vunpack.c.l.b16 %v334
        %v3260 = vunpack.c.l.b16 %v335
        %v3261 = vunpack.c.l.b16 %v336
        %v3262 = vunpack.c.l.b16 %v337
        %v3263 = vunpack.c.l.b16 %v338
        %v3264 = vunpack.c.l.b16 %v339
        %v3265 = vunpack.c.l.b16 %v340
        %v3266 = vunpack.c.l.b16 %v341
        %v3267 = vunpack.c.l.b16 %v342
        %v3268 = vunpack.c.l.b16 %v343
        %v3269 = vunpack.c.l.b16 %v344
        %v3270 = vunpack.c.l.b16 %v345
        %v3271 = vunpack.c.l.b16 %v346
        %v3272 = vunpack.c.l.b16 %v347
        %v3273 = vunpack.c.l.b16 %v348
        %v3274 = vunpack.c.l.b16 %v349
        %v3275 = vunpack.c.l.b16 %v350
        %v3276 = vunpack.c.l.b16 %v351
        %v3277 = vunpack.c.l.b16 %v352
        %v3278 = vunpack.c.l.b16 %v353
        %v3279 = vunpack.c.l.b16 %v354
        %v3280 = vunpack.c.l.b16 %v355
        %v3281 = vunpack.c.l.b16 %v356
        %v3282 = vunpack.c.l.b16 %v357
        %v3283 = vunpack.c.l.b16 %v358
        %v3284 = vunpack.c.l.b16 %v359
        %v3285 = vpack.c.b16 %v3254, %v3253
        %v3286 = vpack.c.b16 %v3256, %v3255
        %v3287 = vpack.c.b16 %v3258, %v3257
        %v3288 = vpack.c.b16 %v3260, %v3259
        %v3289 = vpack.c.b16 %v3262, %v3261
        %v3290 = vpack.c.b16 %v3264, %v3263
        %v3291 = vpack.c.b16 %v3266, %v3265
        %v3292 = vpack.c.b16 %v3268, %v3267
        %v3293 = vpack.c.b16 %v3270, %v3269
        %v3294 = vpack.c.b16 %v3272, %v3271
        %v3295 = vpack.c.b16 %v3274, %v3273
        %v3296 = vpack.c.b16 %v3276, %v3275
        %v3297 = vpack.c.b16 %v3278, %v3277
        %v3298 = vpack.c.b16 %v3280, %v3279
        %v3299 = vpack.c.b16 %v3282, %v3281
        %v3300 = vpack.c.b16 %v3284, %v3283
        %v3302 = vsel %vm830, %v3285, 0
        %v3305 = vsel %vm830, %v3286, 0
        %v3308 = vsel %vm830, %v3287, 0
        %v3311 = vsel %vm830, %v3288, 0
        %v3314 = vsel %vm830, %v3289, 0
        %v3317 = vsel %vm830, %v3290, 0
        %v3320 = vsel %vm830, %v3291, 0
        %v3323 = vsel %vm830, %v3292, 0
        %v3326 = vsel %vm830, %v3293, 0
        %v3329 = vsel %vm830, %v3294, 0
        %v3332 = vsel %vm830, %v3295, 0
        %v3335 = vsel %vm830, %v3296, 0
        %v3338 = vsel %vm830, %v3297, 0
        %v3341 = vsel %vm830, %v3298, 0
        %v3344 = vsel %vm830, %v3299, 0
        %v3347 = vsel %vm830, %v3300, 0
        %v3350 = vsel %vm879, %v3220, 0
        %3352 = vmatprep.subr.bf16.mxu0 0
        %3353 = vmatpush1.bf16.msra.mxu0 %v3350
        %3354 = vmatprep.subr.bf16.mxu0 0
        %3355 = vmatpush1.bf16.msra.mxu0 0
        %3356 = vmatprep.subr.bf16.mxu0 0
        %3357 = vmatpush1.bf16.msra.mxu0 0
        %3358 = vmatprep.subr.bf16.mxu0 0
        %3359 = vmatpush1.bf16.msra.mxu0 0
        %3360 = vmatprep.subr.bf16.mxu0 0
        %3361 = vmatpush1.bf16.msra.mxu0 0
        %3362 = vmatprep.subr.bf16.mxu0 0
        %3363 = vmatpush1.bf16.msra.mxu0 0
        %3364 = vmatprep.subr.bf16.mxu0 0
        %3365 = vmatpush1.bf16.msra.mxu0 0
        %3366 = vmatprep.subr.bf16.mxu0 0
        %3367 = vmatpush1.bf16.msra.mxu0 0
        %3368 = vmatprep.subr.bf16.mxu0 0
        %3369 = vmatpush1.bf16.msra.mxu0 0
        %3370 = vmatprep.subr.bf16.mxu0 0
        %3371 = vmatpush1.bf16.msra.mxu0 0
        %3372 = vmatprep.subr.bf16.mxu0 0
        %3373 = vmatpush1.bf16.msra.mxu0 0
        %3374 = vmatprep.subr.bf16.mxu0 0
        %3375 = vmatpush1.bf16.msra.mxu0 0
        %3376 = vmatprep.subr.bf16.mxu0 0
        %3377 = vmatpush1.bf16.msra.mxu0 0
        %3378 = vmatprep.subr.bf16.mxu0 0
        %3379 = vmatpush1.bf16.msra.mxu0 0
        %3380 = vmatprep.subr.bf16.mxu0 0
        %3381 = vmatpush1.bf16.msra.mxu0 0
        %3382 = vmatprep.subr.bf16.mxu0 0
        %3383 = vmatpush1.bf16.msra.mxu0 0
        %3384 = vmatprep.mubr.bf16.mxu0 0
        %3385 = vmatmul.mubr.bf16.gmra.mrb[0].mxu0 %v3302
        %v3386 = vpop.f32.mrb[0].mxu0
        %v3387 = vadd.f32 0.0, %v3386
        %v3388 = vpop.f32.mrb[0].mxu0
        %v3389 = vpop.f32.mrb[0].mxu0
        %v3390 = vadd.f32 0.0, %v3389
        %v3391 = vpop.f32.mrb[0].mxu0
        %3392 = vmatprep.mubr.bf16.mxu0 0
        %3393 = vmatmul.mubr.bf16.gmra.mrb[0].mxu0 %v3305
        %v3394 = vpop.f32.mrb[0].mxu0
        %v3395 = vadd.f32 0.0, %v3394
        %v3396 = vpop.f32.mrb[0].mxu0
        %v3397 = vpop.f32.mrb[0].mxu0
        %v3398 = vadd.f32 0.0, %v3397
        %v3399 = vpop.f32.mrb[0].mxu0
        %3400 = vmatprep.mubr.bf16.mxu0 0
        %3401 = vmatmul.mubr.bf16.gmra.mrb[0].mxu0 %v3308
        %v3402 = vpop.f32.mrb[0].mxu0
        %v3403 = vadd.f32 0.0, %v3402
        %v3404 = vpop.f32.mrb[0].mxu0
        %v3405 = vpop.f32.mrb[0].mxu0
        %v3406 = vadd.f32 0.0, %v3405
        %v3407 = vpop.f32.mrb[0].mxu0
        %3408 = vmatprep.mubr.bf16.mxu0 0
        %3409 = vmatmul.mubr.bf16.gmra.mrb[0].mxu0 %v3311
        %v3410 = vpop.f32.mrb[0].mxu0
        %v3411 = vadd.f32 0.0, %v3410
        %v3412 = vpop.f32.mrb[0].mxu0
        %v3413 = vpop.f32.mrb[0].mxu0
        %v3414 = vadd.f32 0.0, %v3413
        %v3415 = vpop.f32.mrb[0].mxu0
        %3416 = vmatprep.mubr.bf16.mxu0 0
        %3417 = vmatmul.mubr.bf16.gmra.mrb[0].mxu0 %v3314
        %v3418 = vpop.f32.mrb[0].mxu0
        %v3419 = vadd.f32 0.0, %v3418
        %v3420 = vpop.f32.mrb[0].mxu0
        %v3421 = vpop.f32.mrb[0].mxu0
        %v3422 = vadd.f32 0.0, %v3421
        %v3423 = vpop.f32.mrb[0].mxu0
        %3424 = vmatprep.mubr.bf16.mxu0 0
        %3425 = vmatmul.mubr.bf16.gmra.mrb[0].mxu0 %v3317
        %v3426 = vpop.f32.mrb[0].mxu0
        %v3427 = vadd.f32 0.0, %v3426
        %v3428 = vpop.f32.mrb[0].mxu0
        %v3429 = vpop.f32.mrb[0].mxu0
        %v3430 = vadd.f32 0.0, %v3429
        %v3431 = vpop.f32.mrb[0].mxu0
        %3432 = vmatprep.mubr.bf16.mxu0 0
        %3433 = vmatmul.mubr.bf16.gmra.mrb[0].mxu0 %v3320
        %v3434 = vpop.f32.mrb[0].mxu0
        %v3435 = vadd.f32 0.0, %v3434
        %v3436 = vpop.f32.mrb[0].mxu0
        %v3437 = vpop.f32.mrb[0].mxu0
        %v3438 = vadd.f32 0.0, %v3437
        %v3439 = vpop.f32.mrb[0].mxu0
        %3440 = vmatprep.mubr.bf16.mxu0 0
        %3441 = vmatmul.mubr.bf16.gmra.mrb[0].mxu0 %v3323
        %v3442 = vpop.f32.mrb[0].mxu0
        %v3443 = vadd.f32 0.0, %v3442
        %v3444 = vpop.f32.mrb[0].mxu0
        %v3445 = vpop.f32.mrb[0].mxu0
        %v3446 = vadd.f32 0.0, %v3445
        %v3447 = vpop.f32.mrb[0].mxu0
        %3448 = vmatprep.mubr.bf16.mxu0 0
        %3449 = vmatmul.mubr.bf16.gmra.mrb[0].mxu0 %v3326
        %v3450 = vpop.f32.mrb[0].mxu0
        %v3451 = vadd.f32 0.0, %v3450
        %v3452 = vpop.f32.mrb[0].mxu0
        %v3453 = vpop.f32.mrb[0].mxu0
        %v3454 = vadd.f32 0.0, %v3453
        %v3455 = vpop.f32.mrb[0].mxu0
        %3456 = vmatprep.mubr.bf16.mxu0 0
        %3457 = vmatmul.mubr.bf16.gmra.mrb[0].mxu0 %v3329
        %v3458 = vpop.f32.mrb[0].mxu0
        %v3459 = vadd.f32 0.0, %v3458
        %v3460 = vpop.f32.mrb[0].mxu0
        %v3461 = vpop.f32.mrb[0].mxu0
        %v3462 = vadd.f32 0.0, %v3461
        %v3463 = vpop.f32.mrb[0].mxu0
        %3464 = vmatprep.mubr.bf16.mxu0 0
        %3465 = vmatmul.mubr.bf16.gmra.mrb[0].mxu0 %v3332
        %v3466 = vpop.f32.mrb[0].mxu0
        %v3467 = vadd.f32 0.0, %v3466
        %v3468 = vpop.f32.mrb[0].mxu0
        %v3469 = vpop.f32.mrb[0].mxu0
        %v3470 = vadd.f32 0.0, %v3469
        %v3471 = vpop.f32.mrb[0].mxu0
        %3472 = vmatprep.mubr.bf16.mxu0 0
        %3473 = vmatmul.mubr.bf16.gmra.mrb[0].mxu0 %v3335
        %v3474 = vpop.f32.mrb[0].mxu0
        %v3475 = vadd.f32 0.0, %v3474
        %v3476 = vpop.f32.mrb[0].mxu0
        %v3477 = vpop.f32.mrb[0].mxu0
        %v3478 = vadd.f32 0.0, %v3477
        %v3479 = vpop.f32.mrb[0].mxu0
        %3480 = vmatprep.mubr.bf16.mxu0 0
        %3481 = vmatmul.mubr.bf16.gmra.mrb[0].mxu0 %v3338
        %v3482 = vpop.f32.mrb[0].mxu0
        %v3483 = vadd.f32 0.0, %v3482
        %v3484 = vpop.f32.mrb[0].mxu0
        %v3485 = vpop.f32.mrb[0].mxu0
        %v3486 = vadd.f32 0.0, %v3485
        %v3487 = vpop.f32.mrb[0].mxu0
        %3488 = vmatprep.mubr.bf16.mxu0 0
        %3489 = vmatmul.mubr.bf16.gmra.mrb[0].mxu0 %v3341
        %v3490 = vpop.f32.mrb[0].mxu0
        %v3491 = vadd.f32 0.0, %v3490
        %v3492 = vpop.f32.mrb[0].mxu0
        %v3493 = vpop.f32.mrb[0].mxu0
        %v3494 = vadd.f32 0.0, %v3493
        %v3495 = vpop.f32.mrb[0].mxu0
        %3496 = vmatprep.mubr.bf16.mxu0 0
        %3497 = vmatmul.mubr.bf16.gmra.mrb[0].mxu0 %v3344
        %v3498 = vpop.f32.mrb[0].mxu0
        %v3499 = vadd.f32 0.0, %v3498
        %v3500 = vpop.f32.mrb[0].mxu0
        %v3501 = vpop.f32.mrb[0].mxu0
        %v3502 = vadd.f32 0.0, %v3501
        %v3503 = vpop.f32.mrb[0].mxu0
        %3504 = vmatprep.mubr.bf16.mxu0 0
        %3505 = vmatmul.mubr.bf16.gmra.mrb[0].mxu0 %v3347
        %v3506 = vpop.f32.mrb[0].mxu0
        %v3507 = vadd.f32 0.0, %v3506
        %v3508 = vpop.f32.mrb[0].mxu0
        %v3509 = vpop.f32.mrb[0].mxu0
        %v3510 = vadd.f32 0.0, %v3509
        %v3511 = vpop.f32.mrb[0].mxu0
        %3512 = vdwg.mxu0
        %v3513 = vadd.f32 %v3187, %v3387
        %v3514 = vadd.f32 %v3188, %v3390
        %v3515 = vadd.f32 %v3189, %v3395
        %v3516 = vadd.f32 %v3190, %v3398
        %v3517 = vadd.f32 %v3191, %v3403
        %v3518 = vadd.f32 %v3192, %v3406
        %v3519 = vadd.f32 %v3193, %v3411
        %v3520 = vadd.f32 %v3194, %v3414
        %v3521 = vadd.f32 %v3195, %v3419
        %v3522 = vadd.f32 %v3196, %v3422
        %v3523 = vadd.f32 %v3197, %v3427
        %v3524 = vadd.f32 %v3198, %v3430
        %v3525 = vadd.f32 %v3199, %v3435
        %v3526 = vadd.f32 %v3200, %v3438
        %v3527 = vadd.f32 %v3201, %v3443
        %v3528 = vadd.f32 %v3202, %v3446
        %v3529 = vadd.f32 %v3203, %v3451
        %v3530 = vadd.f32 %v3204, %v3454
        %v3531 = vadd.f32 %v3205, %v3459
        %v3532 = vadd.f32 %v3206, %v3462
        %v3533 = vadd.f32 %v3207, %v3467
        %v3534 = vadd.f32 %v3208, %v3470
        %v3535 = vadd.f32 %v3209, %v3475
        %v3536 = vadd.f32 %v3210, %v3478
        %v3537 = vadd.f32 %v3211, %v3483
        %v3538 = vadd.f32 %v3212, %v3486
        %v3539 = vadd.f32 %v3213, %v3491
        %v3540 = vadd.f32 %v3214, %v3494
        %v3541 = vadd.f32 %v3215, %v3499
        %v3542 = vadd.f32 %v3216, %v3502
        %v3543 = vadd.f32 %v3217, %v3507
        %v3544 = vadd.f32 %v3218, %v3510
        %v3546 = vshrl.u32 %v328, 16
        %v3548 = vrot.slane %v3546, 4
        %v3549 = vshll.u32 %v328, 16
        %v3551 = vrot.slane %v3549, 5
        %v3552 = vor.u32 %v3548, %v3551
        %v3553 = vrot.slane %v3552, 4
        %v3555 = vshll.u32 %v329, 16
        %v3557 = vrot.slane %v3555, 5
        %v3558 = vsel %vm395, %v3553, %v3557
        %v3559 = vshrl.u32 %v329, 16
        %v3561 = vrot.slane %v3559, 4
        %v3562 = vor.u32 %v3561, %v3557
        %v3563 = vrot.slane %v3562, 4
        %v3565 = vshll.u32 %v360, 16
        %v3567 = vrot.slane %v3565, 5
        %v3568 = vsel %vm395, %v3563, %v3567
        %v3570 = vshrl.u32 %v330, 16
        %v3572 = vrot.slane %v3570, 4
        %v3573 = vshll.u32 %v330, 16
        %v3575 = vrot.slane %v3573, 5
        %v3576 = vor.u32 %v3572, %v3575
        %v3577 = vrot.slane %v3576, 4
        %v3579 = vshll.u32 %v331, 16
        %v3581 = vrot.slane %v3579, 5
        %v3582 = vsel %vm395, %v3577, %v3581
        %v3583 = vshrl.u32 %v331, 16
        %v3585 = vrot.slane %v3583, 4
        %v3586 = vor.u32 %v3585, %v3581
        %v3587 = vrot.slane %v3586, 4
        %v3589 = vshll.u32 %v361, 16
        %v3591 = vrot.slane %v3589, 5
        %v3592 = vsel %vm395, %v3587, %v3591
        %v3594 = vshrl.u32 %v332, 16
        %v3596 = vrot.slane %v3594, 4
        %v3597 = vshll.u32 %v332, 16
        %v3599 = vrot.slane %v3597, 5
        %v3600 = vor.u32 %v3596, %v3599
        %v3601 = vrot.slane %v3600, 4
        %v3603 = vshll.u32 %v333, 16
        %v3605 = vrot.slane %v3603, 5
        %v3606 = vsel %vm395, %v3601, %v3605
        %v3607 = vshrl.u32 %v333, 16
        %v3609 = vrot.slane %v3607, 4
        %v3610 = vor.u32 %v3609, %v3605
        %v3611 = vrot.slane %v3610, 4
        %v3613 = vshll.u32 %v362, 16
        %v3615 = vrot.slane %v3613, 5
        %v3616 = vsel %vm395, %v3611, %v3615
        %v3618 = vshrl.u32 %v334, 16
        %v3620 = vrot.slane %v3618, 4
        %v3621 = vshll.u32 %v334, 16
        %v3623 = vrot.slane %v3621, 5
        %v3624 = vor.u32 %v3620, %v3623
        %v3625 = vrot.slane %v3624, 4
        %v3627 = vshll.u32 %v335, 16
        %v3629 = vrot.slane %v3627, 5
        %v3630 = vsel %vm395, %v3625, %v3629
        %v3631 = vshrl.u32 %v335, 16
        %v3633 = vrot.slane %v3631, 4
        %v3634 = vor.u32 %v3633, %v3629
        %v3635 = vrot.slane %v3634, 4
        %v3637 = vshll.u32 %v363, 16
        %v3639 = vrot.slane %v3637, 5
        %v3640 = vsel %vm395, %v3635, %v3639
        %v3642 = vshrl.u32 %v336, 16
        %v3644 = vrot.slane %v3642, 4
        %v3645 = vshll.u32 %v336, 16
        %v3647 = vrot.slane %v3645, 5
        %v3648 = vor.u32 %v3644, %v3647
        %v3649 = vrot.slane %v3648, 4
        %v3651 = vshll.u32 %v337, 16
        %v3653 = vrot.slane %v3651, 5
        %v3654 = vsel %vm395, %v3649, %v3653
        %v3655 = vshrl.u32 %v337, 16
        %v3657 = vrot.slane %v3655, 4
        %v3658 = vor.u32 %v3657, %v3653
        %v3659 = vrot.slane %v3658, 4
        %v3661 = vshll.u32 %v364, 16
        %v3663 = vrot.slane %v3661, 5
        %v3664 = vsel %vm395, %v3659, %v3663
        %v3666 = vshrl.u32 %v338, 16
        %v3668 = vrot.slane %v3666, 4
        %v3669 = vshll.u32 %v338, 16
        %v3671 = vrot.slane %v3669, 5
        %v3672 = vor.u32 %v3668, %v3671
        %v3673 = vrot.slane %v3672, 4
        %v3675 = vshll.u32 %v339, 16
        %v3677 = vrot.slane %v3675, 5
        %v3678 = vsel %vm395, %v3673, %v3677
        %v3679 = vshrl.u32 %v339, 16
        %v3681 = vrot.slane %v3679, 4
        %v3682 = vor.u32 %v3681, %v3677
        %v3683 = vrot.slane %v3682, 4
        %v3685 = vshll.u32 %v365, 16
        %v3687 = vrot.slane %v3685, 5
        %v3688 = vsel %vm395, %v3683, %v3687
        %v3690 = vshrl.u32 %v340, 16
        %v3692 = vrot.slane %v3690, 4
        %v3693 = vshll.u32 %v340, 16
        %v3695 = vrot.slane %v3693, 5
        %v3696 = vor.u32 %v3692, %v3695
        %v3697 = vrot.slane %v3696, 4
        %v3699 = vshll.u32 %v341, 16
        %v3701 = vrot.slane %v3699, 5
        %v3702 = vsel %vm395, %v3697, %v3701
        %v3703 = vshrl.u32 %v341, 16
        %v3705 = vrot.slane %v3703, 4
        %v3706 = vor.u32 %v3705, %v3701
        %v3707 = vrot.slane %v3706, 4
        %v3709 = vshll.u32 %v366, 16
        %v3711 = vrot.slane %v3709, 5
        %v3712 = vsel %vm395, %v3707, %v3711
        %v3714 = vshrl.u32 %v342, 16
        %v3716 = vrot.slane %v3714, 4
        %v3717 = vshll.u32 %v342, 16
        %v3719 = vrot.slane %v3717, 5
        %v3720 = vor.u32 %v3716, %v3719
        %v3721 = vrot.slane %v3720, 4
        %v3723 = vshll.u32 %v343, 16
        %v3725 = vrot.slane %v3723, 5
        %v3726 = vsel %vm395, %v3721, %v3725
        %v3727 = vshrl.u32 %v343, 16
        %v3729 = vrot.slane %v3727, 4
        %v3730 = vor.u32 %v3729, %v3725
        %v3731 = vrot.slane %v3730, 4
        %v3733 = vshll.u32 %v367, 16
        %v3735 = vrot.slane %v3733, 5
        %v3736 = vsel %vm395, %v3731, %v3735
        %v3738 = vshrl.u32 %v344, 16
        %v3740 = vrot.slane %v3738, 4
        %v3741 = vshll.u32 %v344, 16
        %v3743 = vrot.slane %v3741, 5
        %v3744 = vor.u32 %v3740, %v3743
        %v3745 = vrot.slane %v3744, 4
        %v3747 = vshll.u32 %v345, 16
        %v3749 = vrot.slane %v3747, 5
        %v3750 = vsel %vm395, %v3745, %v3749
        %v3751 = vshrl.u32 %v345, 16
        %v3753 = vrot.slane %v3751, 4
        %v3754 = vor.u32 %v3753, %v3749
        %v3755 = vrot.slane %v3754, 4
        %v3757 = vshll.u32 %v368, 16
        %v3759 = vrot.slane %v3757, 5
        %v3760 = vsel %vm395, %v3755, %v3759
        %v3762 = vshrl.u32 %v346, 16
        %v3764 = vrot.slane %v3762, 4
        %v3765 = vshll.u32 %v346, 16
        %v3767 = vrot.slane %v3765, 5
        %v3768 = vor.u32 %v3764, %v3767
        %v3769 = vrot.slane %v3768, 4
        %v3771 = vshll.u32 %v347, 16
        %v3773 = vrot.slane %v3771, 5
        %v3774 = vsel %vm395, %v3769, %v3773
        %v3775 = vshrl.u32 %v347, 16
        %v3777 = vrot.slane %v3775, 4
        %v3778 = vor.u32 %v3777, %v3773
        %v3779 = vrot.slane %v3778, 4
        %v3781 = vshll.u32 %v369, 16
        %v3783 = vrot.slane %v3781, 5
        %v3784 = vsel %vm395, %v3779, %v3783
        %v3786 = vshrl.u32 %v348, 16
        %v3788 = vrot.slane %v3786, 4
        %v3789 = vshll.u32 %v348, 16
        %v3791 = vrot.slane %v3789, 5
        %v3792 = vor.u32 %v3788, %v3791
        %v3793 = vrot.slane %v3792, 4
        %v3795 = vshll.u32 %v349, 16
        %v3797 = vrot.slane %v3795, 5
        %v3798 = vsel %vm395, %v3793, %v3797
        %v3799 = vshrl.u32 %v349, 16
        %v3801 = vrot.slane %v3799, 4
        %v3802 = vor.u32 %v3801, %v3797
        %v3803 = vrot.slane %v3802, 4
        %v3805 = vshll.u32 %v370, 16
        %v3807 = vrot.slane %v3805, 5
        %v3808 = vsel %vm395, %v3803, %v3807
        %v3810 = vshrl.u32 %v350, 16
        %v3812 = vrot.slane %v3810, 4
        %v3813 = vshll.u32 %v350, 16
        %v3815 = vrot.slane %v3813, 5
        %v3816 = vor.u32 %v3812, %v3815
        %v3817 = vrot.slane %v3816, 4
        %v3819 = vshll.u32 %v351, 16
        %v3821 = vrot.slane %v3819, 5
        %v3822 = vsel %vm395, %v3817, %v3821
        %v3823 = vshrl.u32 %v351, 16
        %v3825 = vrot.slane %v3823, 4
        %v3826 = vor.u32 %v3825, %v3821
        %v3827 = vrot.slane %v3826, 4
        %v3829 = vshll.u32 %v371, 16
        %v3831 = vrot.slane %v3829, 5
        %v3832 = vsel %vm395, %v3827, %v3831
        %v3834 = vshrl.u32 %v352, 16
        %v3836 = vrot.slane %v3834, 4
        %v3837 = vshll.u32 %v352, 16
        %v3839 = vrot.slane %v3837, 5
        %v3840 = vor.u32 %v3836, %v3839
        %v3841 = vrot.slane %v3840, 4
        %v3843 = vshll.u32 %v353, 16
        %v3845 = vrot.slane %v3843, 5
        %v3846 = vsel %vm395, %v3841, %v3845
        %v3847 = vshrl.u32 %v353, 16
        %v3849 = vrot.slane %v3847, 4
        %v3850 = vor.u32 %v3849, %v3845
        %v3851 = vrot.slane %v3850, 4
        %v3853 = vshll.u32 %v372, 16
        %v3855 = vrot.slane %v3853, 5
        %v3856 = vsel %vm395, %v3851, %v3855
        %v3858 = vshrl.u32 %v354, 16
        %v3860 = vrot.slane %v3858, 4
        %v3861 = vshll.u32 %v354, 16
        %v3863 = vrot.slane %v3861, 5
        %v3864 = vor.u32 %v3860, %v3863
        %v3865 = vrot.slane %v3864, 4
        %v3867 = vshll.u32 %v355, 16
        %v3869 = vrot.slane %v3867, 5
        %v3870 = vsel %vm395, %v3865, %v3869
        %v3871 = vshrl.u32 %v355, 16
        %v3873 = vrot.slane %v3871, 4
        %v3874 = vor.u32 %v3873, %v3869
        %v3875 = vrot.slane %v3874, 4
        %v3877 = vshll.u32 %v373, 16
        %v3879 = vrot.slane %v3877, 5
        %v3880 = vsel %vm395, %v3875, %v3879
        %v3882 = vshrl.u32 %v356, 16
        %v3884 = vrot.slane %v3882, 4
        %v3885 = vshll.u32 %v356, 16
        %v3887 = vrot.slane %v3885, 5
        %v3888 = vor.u32 %v3884, %v3887
        %v3889 = vrot.slane %v3888, 4
        %v3891 = vshll.u32 %v357, 16
        %v3893 = vrot.slane %v3891, 5
        %v3894 = vsel %vm395, %v3889, %v3893
        %v3895 = vshrl.u32 %v357, 16
        %v3897 = vrot.slane %v3895, 4
        %v3898 = vor.u32 %v3897, %v3893
        %v3899 = vrot.slane %v3898, 4
        %v3901 = vshll.u32 %v374, 16
        %v3903 = vrot.slane %v3901, 5
        %v3904 = vsel %vm395, %v3899, %v3903
        %v3906 = vshrl.u32 %v358, 16
        %v3908 = vrot.slane %v3906, 4
        %v3909 = vshll.u32 %v358, 16
        %v3911 = vrot.slane %v3909, 5
        %v3912 = vor.u32 %v3908, %v3911
        %v3913 = vrot.slane %v3912, 4
        %v3915 = vshll.u32 %v359, 16
        %v3917 = vrot.slane %v3915, 5
        %v3918 = vsel %vm395, %v3913, %v3917
        %v3919 = vshrl.u32 %v359, 16
        %v3921 = vrot.slane %v3919, 4
        %v3922 = vor.u32 %v3921, %v3917
        %v3923 = vrot.slane %v3922, 4
        %v3925 = vshll.u32 %v375, 16
        %v3927 = vrot.slane %v3925, 5
        %v3928 = vsel %vm395, %v3923, %v3927
        %s3929 = scalar_lea.vmem %s1, 28
        %v3930 = vld [vmem:[%s3929] sm:$0xf]
        %v3931 = vunpack.c.l.b16 %v3558
        %v3932 = vunpack.c.l.b16 %v3568
        %v3933 = vunpack.c.l.b16 %v3582
        %v3934 = vunpack.c.l.b16 %v3592
        %v3935 = vunpack.c.l.b16 %v3606
        %v3936 = vunpack.c.l.b16 %v3616
        %v3937 = vunpack.c.l.b16 %v3630
        %v3938 = vunpack.c.l.b16 %v3640
        %v3939 = vunpack.c.l.b16 %v3654
        %v3940 = vunpack.c.l.b16 %v3664
        %v3941 = vunpack.c.l.b16 %v3678
        %v3942 = vunpack.c.l.b16 %v3688
        %v3943 = vunpack.c.l.b16 %v3702
        %v3944 = vunpack.c.l.b16 %v3712
        %v3945 = vunpack.c.l.b16 %v3726
        %v3946 = vunpack.c.l.b16 %v3736
        %v3947 = vunpack.c.l.b16 %v3750
        %v3948 = vunpack.c.l.b16 %v3760
        %v3949 = vunpack.c.l.b16 %v3774
        %v3950 = vunpack.c.l.b16 %v3784
        %v3951 = vunpack.c.l.b16 %v3798
        %v3952 = vunpack.c.l.b16 %v3808
        %v3953 = vunpack.c.l.b16 %v3822
        %v3954 = vunpack.c.l.b16 %v3832
        %v3955 = vunpack.c.l.b16 %v3846
        %v3956 = vunpack.c.l.b16 %v3856
        %v3957 = vunpack.c.l.b16 %v3870
        %v3958 = vunpack.c.l.b16 %v3880
        %v3959 = vunpack.c.l.b16 %v3894
        %v3960 = vunpack.c.l.b16 %v3904
        %v3961 = vunpack.c.l.b16 %v3918
        %v3962 = vunpack.c.l.b16 %v3928
        %v3963 = vpack.c.b16 %v3932, %v3931
        %v3964 = vpack.c.b16 %v3934, %v3933
        %v3965 = vpack.c.b16 %v3936, %v3935
        %v3966 = vpack.c.b16 %v3938, %v3937
        %v3967 = vpack.c.b16 %v3940, %v3939
        %v3968 = vpack.c.b16 %v3942, %v3941
        %v3969 = vpack.c.b16 %v3944, %v3943
        %v3970 = vpack.c.b16 %v3946, %v3945
        %v3971 = vpack.c.b16 %v3948, %v3947
        %v3972 = vpack.c.b16 %v3950, %v3949
        %v3973 = vpack.c.b16 %v3952, %v3951
        %v3974 = vpack.c.b16 %v3954, %v3953
        %v3975 = vpack.c.b16 %v3956, %v3955
        %v3976 = vpack.c.b16 %v3958, %v3957
        %v3977 = vpack.c.b16 %v3960, %v3959
        %v3978 = vpack.c.b16 %v3962, %v3961
        %v3980 = vsel %vm830, %v3963, 0
        %v3983 = vsel %vm830, %v3964, 0
        %v3986 = vsel %vm830, %v3965, 0
        %v3989 = vsel %vm830, %v3966, 0
        %v3992 = vsel %vm830, %v3967, 0
        %v3995 = vsel %vm830, %v3968, 0
        %v3998 = vsel %vm830, %v3969, 0
        %v4001 = vsel %vm830, %v3970, 0
        %v4004 = vsel %vm830, %v3971, 0
        %v4007 = vsel %vm830, %v3972, 0
        %v4010 = vsel %vm830, %v3973, 0
        %v4013 = vsel %vm830, %v3974, 0
        %v4016 = vsel %vm830, %v3975, 0
        %v4019 = vsel %vm830, %v3976, 0
        %v4022 = vsel %vm830, %v3977, 0
        %v4025 = vsel %vm830, %v3978, 0
        %v4028 = vsel %vm879, %v3930, 0
        %4030 = vmatprep.subr.bf16.mxu0 0
        %4031 = vmatpush1.bf16.msra.mxu0 %v4028
        %4032 = vmatprep.subr.bf16.mxu0 0
        %4033 = vmatpush1.bf16.msra.mxu0 0
        %4034 = vmatprep.subr.bf16.mxu0 0
        %4035 = vmatpush1.bf16.msra.mxu0 0
        %4036 = vmatprep.subr.bf16.mxu0 0
        %4037 = vmatpush1.bf16.msra.mxu0 0
        %4038 = vmatprep.subr.bf16.mxu0 0
        %4039 = vmatpush1.bf16.msra.mxu0 0
        %4040 = vmatprep.subr.bf16.mxu0 0
        %4041 = vmatpush1.bf16.msra.mxu0 0
        %4042 = vmatprep.subr.bf16.mxu0 0
        %4043 = vmatpush1.bf16.msra.mxu0 0
        %4044 = vmatprep.subr.bf16.mxu0 0
        %4045 = vmatpush1.bf16.msra.mxu0 0
        %4046 = vmatprep.subr.bf16.mxu0 0
        %4047 = vmatpush1.bf16.msra.mxu0 0
        %4048 = vmatprep.subr.bf16.mxu0 0
        %4049 = vmatpush1.bf16.msra.mxu0 0
        %4050 = vmatprep.subr.bf16.mxu0 0
        %4051 = vmatpush1.bf16.msra.mxu0 0
        %4052 = vmatprep.subr.bf16.mxu0 0
        %4053 = vmatpush1.bf16.msra.mxu0 0
        %4054 = vmatprep.subr.bf16.mxu0 0
        %4055 = vmatpush1.bf16.msra.mxu0 0
        %4056 = vmatprep.subr.bf16.mxu0 0
        %4057 = vmatpush1.bf16.msra.mxu0 0
        %4058 = vmatprep.subr.bf16.mxu0 0
        %4059 = vmatpush1.bf16.msra.mxu0 0
        %4060 = vmatprep.subr.bf16.mxu0 0
        %4061 = vmatpush1.bf16.msra.mxu0 0
        %4062 = vmatprep.mubr.bf16.mxu0 0
        %4063 = vmatmul.mubr.bf16.gmra.mrb[0].mxu0 %v3980
        %v4064 = vpop.f32.mrb[0].mxu0
        %v4065 = vadd.f32 0.0, %v4064
        %v4066 = vpop.f32.mrb[0].mxu0
        %v4067 = vpop.f32.mrb[0].mxu0
        %v4068 = vadd.f32 0.0, %v4067
        %v4069 = vpop.f32.mrb[0].mxu0
        %4070 = vmatprep.mubr.bf16.mxu0 0
        %4071 = vmatmul.mubr.bf16.gmra.mrb[0].mxu0 %v3983
        %v4072 = vpop.f32.mrb[0].mxu0
        %v4073 = vadd.f32 0.0, %v4072
        %v4074 = vpop.f32.mrb[0].mxu0
        %v4075 = vpop.f32.mrb[0].mxu0
        %v4076 = vadd.f32 0.0, %v4075
        %v4077 = vpop.f32.mrb[0].mxu0
        %4078 = vmatprep.mubr.bf16.mxu0 0
        %4079 = vmatmul.mubr.bf16.gmra.mrb[0].mxu0 %v3986
        %v4080 = vpop.f32.mrb[0].mxu0
        %v4081 = vadd.f32 0.0, %v4080
        %v4082 = vpop.f32.mrb[0].mxu0
        %v4083 = vpop.f32.mrb[0].mxu0
        %v4084 = vadd.f32 0.0, %v4083
        %v4085 = vpop.f32.mrb[0].mxu0
        %4086 = vmatprep.mubr.bf16.mxu0 0
        %4087 = vmatmul.mubr.bf16.gmra.mrb[0].mxu0 %v3989
        %v4088 = vpop.f32.mrb[0].mxu0
        %v4089 = vadd.f32 0.0, %v4088
        %v4090 = vpop.f32.mrb[0].mxu0
        %v4091 = vpop.f32.mrb[0].mxu0
        %v4092 = vadd.f32 0.0, %v4091
        %v4093 = vpop.f32.mrb[0].mxu0
        %4094 = vmatprep.mubr.bf16.mxu0 0
        %4095 = vmatmul.mubr.bf16.gmra.mrb[0].mxu0 %v3992
        %v4096 = vpop.f32.mrb[0].mxu0
        %v4097 = vadd.f32 0.0, %v4096
        %v4098 = vpop.f32.mrb[0].mxu0
        %v4099 = vpop.f32.mrb[0].mxu0
        %v4100 = vadd.f32 0.0, %v4099
        %v4101 = vpop.f32.mrb[0].mxu0
        %4102 = vmatprep.mubr.bf16.mxu0 0
        %4103 = vmatmul.mubr.bf16.gmra.mrb[0].mxu0 %v3995
        %v4104 = vpop.f32.mrb[0].mxu0
        %v4105 = vadd.f32 0.0, %v4104
        %v4106 = vpop.f32.mrb[0].mxu0
        %v4107 = vpop.f32.mrb[0].mxu0
        %v4108 = vadd.f32 0.0, %v4107
        %v4109 = vpop.f32.mrb[0].mxu0
        %4110 = vmatprep.mubr.bf16.mxu0 0
        %4111 = vmatmul.mubr.bf16.gmra.mrb[0].mxu0 %v3998
        %v4112 = vpop.f32.mrb[0].mxu0
        %v4113 = vadd.f32 0.0, %v4112
        %v4114 = vpop.f32.mrb[0].mxu0
        %v4115 = vpop.f32.mrb[0].mxu0
        %v4116 = vadd.f32 0.0, %v4115
        %v4117 = vpop.f32.mrb[0].mxu0
        %4118 = vmatprep.mubr.bf16.mxu0 0
        %4119 = vmatmul.mubr.bf16.gmra.mrb[0].mxu0 %v4001
        %v4120 = vpop.f32.mrb[0].mxu0
        %v4121 = vadd.f32 0.0, %v4120
        %v4122 = vpop.f32.mrb[0].mxu0
        %v4123 = vpop.f32.mrb[0].mxu0
        %v4124 = vadd.f32 0.0, %v4123
        %v4125 = vpop.f32.mrb[0].mxu0
        %4126 = vmatprep.mubr.bf16.mxu0 0
        %4127 = vmatmul.mubr.bf16.gmra.mrb[0].mxu0 %v4004
        %v4128 = vpop.f32.mrb[0].mxu0
        %v4129 = vadd.f32 0.0, %v4128
        %v4130 = vpop.f32.mrb[0].mxu0
        %v4131 = vpop.f32.mrb[0].mxu0
        %v4132 = vadd.f32 0.0, %v4131
        %v4133 = vpop.f32.mrb[0].mxu0
        %4134 = vmatprep.mubr.bf16.mxu0 0
        %4135 = vmatmul.mubr.bf16.gmra.mrb[0].mxu0 %v4007
        %v4136 = vpop.f32.mrb[0].mxu0
        %v4137 = vadd.f32 0.0, %v4136
        %v4138 = vpop.f32.mrb[0].mxu0
        %v4139 = vpop.f32.mrb[0].mxu0
        %v4140 = vadd.f32 0.0, %v4139
        %v4141 = vpop.f32.mrb[0].mxu0
        %4142 = vmatprep.mubr.bf16.mxu0 0
        %4143 = vmatmul.mubr.bf16.gmra.mrb[0].mxu0 %v4010
        %v4144 = vpop.f32.mrb[0].mxu0
        %v4145 = vadd.f32 0.0, %v4144
        %v4146 = vpop.f32.mrb[0].mxu0
        %v4147 = vpop.f32.mrb[0].mxu0
        %v4148 = vadd.f32 0.0, %v4147
        %v4149 = vpop.f32.mrb[0].mxu0
        %4150 = vmatprep.mubr.bf16.mxu0 0
        %4151 = vmatmul.mubr.bf16.gmra.mrb[0].mxu0 %v4013
        %v4152 = vpop.f32.mrb[0].mxu0
        %v4153 = vadd.f32 0.0, %v4152
        %v4154 = vpop.f32.mrb[0].mxu0
        %v4155 = vpop.f32.mrb[0].mxu0
        %v4156 = vadd.f32 0.0, %v4155
        %v4157 = vpop.f32.mrb[0].mxu0
        %4158 = vmatprep.mubr.bf16.mxu0 0
        %4159 = vmatmul.mubr.bf16.gmra.mrb[0].mxu0 %v4016
        %v4160 = vpop.f32.mrb[0].mxu0
        %v4161 = vadd.f32 0.0, %v4160
        %v4162 = vpop.f32.mrb[0].mxu0
        %v4163 = vpop.f32.mrb[0].mxu0
        %v4164 = vadd.f32 0.0, %v4163
        %v4165 = vpop.f32.mrb[0].mxu0
        %4166 = vmatprep.mubr.bf16.mxu0 0
        %4167 = vmatmul.mubr.bf16.gmra.mrb[0].mxu0 %v4019
        %v4168 = vpop.f32.mrb[0].mxu0
        %v4169 = vadd.f32 0.0, %v4168
        %v4170 = vpop.f32.mrb[0].mxu0
        %v4171 = vpop.f32.mrb[0].mxu0
        %v4172 = vadd.f32 0.0, %v4171
        %v4173 = vpop.f32.mrb[0].mxu0
        %4174 = vmatprep.mubr.bf16.mxu0 0
        %4175 = vmatmul.mubr.bf16.gmra.mrb[0].mxu0 %v4022
        %v4176 = vpop.f32.mrb[0].mxu0
        %v4177 = vadd.f32 0.0, %v4176
        %v4178 = vpop.f32.mrb[0].mxu0
        %v4179 = vpop.f32.mrb[0].mxu0
        %v4180 = vadd.f32 0.0, %v4179
        %v4181 = vpop.f32.mrb[0].mxu0
        %4182 = vmatprep.mubr.bf16.mxu0 0
        %4183 = vmatmul.mubr.bf16.gmra.mrb[0].mxu0 %v4025
        %v4184 = vpop.f32.mrb[0].mxu0
        %v4185 = vadd.f32 0.0, %v4184
        %v4186 = vpop.f32.mrb[0].mxu0
        %v4187 = vpop.f32.mrb[0].mxu0
        %v4188 = vadd.f32 0.0, %v4187
        %v4189 = vpop.f32.mrb[0].mxu0
        %4190 = vdwg.mxu0
        %v4191 = vadd.f32 %v3513, %v4065
        %v4192 = vadd.f32 %v3514, %v4068
        %v4193 = vadd.f32 %v3515, %v4073
        %v4194 = vadd.f32 %v3516, %v4076
        %v4195 = vadd.f32 %v3517, %v4081
        %v4196 = vadd.f32 %v3518, %v4084
        %v4197 = vadd.f32 %v3519, %v4089
        %v4198 = vadd.f32 %v3520, %v4092
        %v4199 = vadd.f32 %v3521, %v4097
        %v4200 = vadd.f32 %v3522, %v4100
        %v4201 = vadd.f32 %v3523, %v4105
        %v4202 = vadd.f32 %v3524, %v4108
        %v4203 = vadd.f32 %v3525, %v4113
        %v4204 = vadd.f32 %v3526, %v4116
        %v4205 = vadd.f32 %v3527, %v4121
        %v4206 = vadd.f32 %v3528, %v4124
        %v4207 = vadd.f32 %v3529, %v4129
        %v4208 = vadd.f32 %v3530, %v4132
        %v4209 = vadd.f32 %v3531, %v4137
        %v4210 = vadd.f32 %v3532, %v4140
        %v4211 = vadd.f32 %v3533, %v4145
        %v4212 = vadd.f32 %v3534, %v4148
        %v4213 = vadd.f32 %v3535, %v4153
        %v4214 = vadd.f32 %v3536, %v4156
        %v4215 = vadd.f32 %v3537, %v4161
        %v4216 = vadd.f32 %v3538, %v4164
        %v4217 = vadd.f32 %v3539, %v4169
        %v4218 = vadd.f32 %v3540, %v4172
        %v4219 = vadd.f32 %v3541, %v4177
        %v4220 = vadd.f32 %v3542, %v4180
        %v4221 = vadd.f32 %v3543, %v4185
        %v4222 = vadd.f32 %v3544, %v4188
        %v4255 = vrot.slane %v376, 5
        %v4256 = vrot.slane %v4255, 4
        %v4257 = vrot.slane %v329, 5
        %v4258 = vsel %vm1370, %v4256, %v4257
        %v4259 = vrot.slane %v4257, 4
        %v4260 = vrot.slane %v360, 5
        %v4261 = vsel %vm1370, %v4259, %v4260
        %v4262 = vrot.slane %v377, 5
        %v4263 = vrot.slane %v4262, 4
        %v4264 = vrot.slane %v331, 5
        %v4265 = vsel %vm1370, %v4263, %v4264
        %v4266 = vrot.slane %v4264, 4
        %v4267 = vrot.slane %v361, 5
        %v4268 = vsel %vm1370, %v4266, %v4267
        %v4269 = vrot.slane %v378, 5
        %v4270 = vrot.slane %v4269, 4
        %v4271 = vrot.slane %v333, 5
        %v4272 = vsel %vm1370, %v4270, %v4271
        %v4273 = vrot.slane %v4271, 4
        %v4274 = vrot.slane %v362, 5
        %v4275 = vsel %vm1370, %v4273, %v4274
        %v4276 = vrot.slane %v379, 5
        %v4277 = vrot.slane %v4276, 4
        %v4278 = vrot.slane %v335, 5
        %v4279 = vsel %vm1370, %v4277, %v4278
        %v4280 = vrot.slane %v4278, 4
        %v4281 = vrot.slane %v363, 5
        %v4282 = vsel %vm1370, %v4280, %v4281
        %v4283 = vrot.slane %v380, 5
        %v4284 = vrot.slane %v4283, 4
        %v4285 = vrot.slane %v337, 5
        %v4286 = vsel %vm1370, %v4284, %v4285
        %v4287 = vrot.slane %v4285, 4
        %v4288 = vrot.slane %v364, 5
        %v4289 = vsel %vm1370, %v4287, %v4288
        %v4290 = vrot.slane %v381, 5
        %v4291 = vrot.slane %v4290, 4
        %v4292 = vrot.slane %v339, 5
        %v4293 = vsel %vm1370, %v4291, %v4292
        %v4294 = vrot.slane %v4292, 4
        %v4295 = vrot.slane %v365, 5
        %v4296 = vsel %vm1370, %v4294, %v4295
        %v4297 = vrot.slane %v382, 5
        %v4298 = vrot.slane %v4297, 4
        %v4299 = vrot.slane %v341, 5
        %v4300 = vsel %vm1370, %v4298, %v4299
        %v4301 = vrot.slane %v4299, 4
        %v4302 = vrot.slane %v366, 5
        %v4303 = vsel %vm1370, %v4301, %v4302
        %v4304 = vrot.slane %v383, 5
        %v4305 = vrot.slane %v4304, 4
        %v4306 = vrot.slane %v343, 5
        %v4307 = vsel %vm1370, %v4305, %v4306
        %v4308 = vrot.slane %v4306, 4
        %v4309 = vrot.slane %v367, 5
        %v4310 = vsel %vm1370, %v4308, %v4309
        %v4311 = vrot.slane %v384, 5
        %v4312 = vrot.slane %v4311, 4
        %v4313 = vrot.slane %v345, 5
        %v4314 = vsel %vm1370, %v4312, %v4313
        %v4315 = vrot.slane %v4313, 4
        %v4316 = vrot.slane %v368, 5
        %v4317 = vsel %vm1370, %v4315, %v4316
        %v4318 = vrot.slane %v385, 5
        %v4319 = vrot.slane %v4318, 4
        %v4320 = vrot.slane %v347, 5
        %v4321 = vsel %vm1370, %v4319, %v4320
        %v4322 = vrot.slane %v4320, 4
        %v4323 = vrot.slane %v369, 5
        %v4324 = vsel %vm1370, %v4322, %v4323
        %v4325 = vrot.slane %v386, 5
        %v4326 = vrot.slane %v4325, 4
        %v4327 = vrot.slane %v349, 5
        %v4328 = vsel %vm1370, %v4326, %v4327
        %v4329 = vrot.slane %v4327, 4
        %v4330 = vrot.slane %v370, 5
        %v4331 = vsel %vm1370, %v4329, %v4330
        %v4332 = vrot.slane %v387, 5
        %v4333 = vrot.slane %v4332, 4
        %v4334 = vrot.slane %v351, 5
        %v4335 = vsel %vm1370, %v4333, %v4334
        %v4336 = vrot.slane %v4334, 4
        %v4337 = vrot.slane %v371, 5
        %v4338 = vsel %vm1370, %v4336, %v4337
        %v4339 = vrot.slane %v388, 5
        %v4340 = vrot.slane %v4339, 4
        %v4341 = vrot.slane %v353, 5
        %v4342 = vsel %vm1370, %v4340, %v4341
        %v4343 = vrot.slane %v4341, 4
        %v4344 = vrot.slane %v372, 5
        %v4345 = vsel %vm1370, %v4343, %v4344
        %v4346 = vrot.slane %v389, 5
        %v4347 = vrot.slane %v4346, 4
        %v4348 = vrot.slane %v355, 5
        %v4349 = vsel %vm1370, %v4347, %v4348
        %v4350 = vrot.slane %v4348, 4
        %v4351 = vrot.slane %v373, 5
        %v4352 = vsel %vm1370, %v4350, %v4351
        %v4353 = vrot.slane %v390, 5
        %v4354 = vrot.slane %v4353, 4
        %v4355 = vrot.slane %v357, 5
        %v4356 = vsel %vm1370, %v4354, %v4355
        %v4357 = vrot.slane %v4355, 4
        %v4358 = vrot.slane %v374, 5
        %v4359 = vsel %vm1370, %v4357, %v4358
        %v4360 = vrot.slane %v391, 5
        %v4361 = vrot.slane %v4360, 4
        %v4362 = vrot.slane %v359, 5
        %v4363 = vsel %vm1370, %v4361, %v4362
        %v4364 = vrot.slane %v4362, 4
        %v4365 = vrot.slane %v375, 5
        %v4366 = vsel %vm1370, %v4364, %v4365
        %s4367 = scalar_lea.vmem %s1, 32
        %v4368 = vld [vmem:[%s4367] sm:$0xf]
        %v4369 = vunpack.c.l.b16 %v4258
        %v4370 = vunpack.c.l.b16 %v4261
        %v4371 = vunpack.c.l.b16 %v4265
        %v4372 = vunpack.c.l.b16 %v4268
        %v4373 = vunpack.c.l.b16 %v4272
        %v4374 = vunpack.c.l.b16 %v4275
        %v4375 = vunpack.c.l.b16 %v4279
        %v4376 = vunpack.c.l.b16 %v4282
        %v4377 = vunpack.c.l.b16 %v4286
        %v4378 = vunpack.c.l.b16 %v4289
        %v4379 = vunpack.c.l.b16 %v4293
        %v4380 = vunpack.c.l.b16 %v4296
        %v4381 = vunpack.c.l.b16 %v4300
        %v4382 = vunpack.c.l.b16 %v4303
        %v4383 = vunpack.c.l.b16 %v4307
        %v4384 = vunpack.c.l.b16 %v4310
        %v4385 = vunpack.c.l.b16 %v4314
        %v4386 = vunpack.c.l.b16 %v4317
        %v4387 = vunpack.c.l.b16 %v4321
        %v4388 = vunpack.c.l.b16 %v4324
        %v4389 = vunpack.c.l.b16 %v4328
        %v4390 = vunpack.c.l.b16 %v4331
        %v4391 = vunpack.c.l.b16 %v4335
        %v4392 = vunpack.c.l.b16 %v4338
        %v4393 = vunpack.c.l.b16 %v4342
        %v4394 = vunpack.c.l.b16 %v4345
        %v4395 = vunpack.c.l.b16 %v4349
        %v4396 = vunpack.c.l.b16 %v4352
        %v4397 = vunpack.c.l.b16 %v4356
        %v4398 = vunpack.c.l.b16 %v4359
        %v4399 = vunpack.c.l.b16 %v4363
        %v4400 = vunpack.c.l.b16 %v4366
        %v4401 = vpack.c.b16 %v4370, %v4369
        %v4402 = vpack.c.b16 %v4372, %v4371
        %v4403 = vpack.c.b16 %v4374, %v4373
        %v4404 = vpack.c.b16 %v4376, %v4375
        %v4405 = vpack.c.b16 %v4378, %v4377
        %v4406 = vpack.c.b16 %v4380, %v4379
        %v4407 = vpack.c.b16 %v4382, %v4381
        %v4408 = vpack.c.b16 %v4384, %v4383
        %v4409 = vpack.c.b16 %v4386, %v4385
        %v4410 = vpack.c.b16 %v4388, %v4387
        %v4411 = vpack.c.b16 %v4390, %v4389
        %v4412 = vpack.c.b16 %v4392, %v4391
        %v4413 = vpack.c.b16 %v4394, %v4393
        %v4414 = vpack.c.b16 %v4396, %v4395
        %v4415 = vpack.c.b16 %v4398, %v4397
        %v4416 = vpack.c.b16 %v4400, %v4399
        %v4418 = vsel %vm830, %v4401, 0
        %v4421 = vsel %vm830, %v4402, 0
        %v4424 = vsel %vm830, %v4403, 0
        %v4427 = vsel %vm830, %v4404, 0
        %v4430 = vsel %vm830, %v4405, 0
        %v4433 = vsel %vm830, %v4406, 0
        %v4436 = vsel %vm830, %v4407, 0
        %v4439 = vsel %vm830, %v4408, 0
        %v4442 = vsel %vm830, %v4409, 0
        %v4445 = vsel %vm830, %v4410, 0
        %v4448 = vsel %vm830, %v4411, 0
        %v4451 = vsel %vm830, %v4412, 0
        %v4454 = vsel %vm830, %v4413, 0
        %v4457 = vsel %vm830, %v4414, 0
        %v4460 = vsel %vm830, %v4415, 0
        %v4463 = vsel %vm830, %v4416, 0
        %v4466 = vsel %vm879, %v4368, 0
        %4468 = vmatprep.subr.bf16.mxu0 0
        %4469 = vmatpush1.bf16.msra.mxu0 %v4466
        %4470 = vmatprep.subr.bf16.mxu0 0
        %4471 = vmatpush1.bf16.msra.mxu0 0
        %4472 = vmatprep.subr.bf16.mxu0 0
        %4473 = vmatpush1.bf16.msra.mxu0 0
        %4474 = vmatprep.subr.bf16.mxu0 0
        %4475 = vmatpush1.bf16.msra.mxu0 0
        %4476 = vmatprep.subr.bf16.mxu0 0
        %4477 = vmatpush1.bf16.msra.mxu0 0
        %4478 = vmatprep.subr.bf16.mxu0 0
        %4479 = vmatpush1.bf16.msra.mxu0 0
        %4480 = vmatprep.subr.bf16.mxu0 0
        %4481 = vmatpush1.bf16.msra.mxu0 0
        %4482 = vmatprep.subr.bf16.mxu0 0
        %4483 = vmatpush1.bf16.msra.mxu0 0
        %4484 = vmatprep.subr.bf16.mxu0 0
        %4485 = vmatpush1.bf16.msra.mxu0 0
        %4486 = vmatprep.subr.bf16.mxu0 0
        %4487 = vmatpush1.bf16.msra.mxu0 0
        %4488 = vmatprep.subr.bf16.mxu0 0
        %4489 = vmatpush1.bf16.msra.mxu0 0
        %4490 = vmatprep.subr.bf16.mxu0 0
        %4491 = vmatpush1.bf16.msra.mxu0 0
        %4492 = vmatprep.subr.bf16.mxu0 0
        %4493 = vmatpush1.bf16.msra.mxu0 0
        %4494 = vmatprep.subr.bf16.mxu0 0
        %4495 = vmatpush1.bf16.msra.mxu0 0
        %4496 = vmatprep.subr.bf16.mxu0 0
        %4497 = vmatpush1.bf16.msra.mxu0 0
        %4498 = vmatprep.subr.bf16.mxu0 0
        %4499 = vmatpush1.bf16.msra.mxu0 0
        %4500 = vmatprep.mubr.bf16.mxu0 0
        %4501 = vmatmul.mubr.bf16.gmra.mrb[0].mxu0 %v4418
        %v4502 = vpop.f32.mrb[0].mxu0
        %v4503 = vadd.f32 0.0, %v4502
        %v4504 = vpop.f32.mrb[0].mxu0
        %v4505 = vpop.f32.mrb[0].mxu0
        %v4506 = vadd.f32 0.0, %v4505
        %v4507 = vpop.f32.mrb[0].mxu0
        %4508 = vmatprep.mubr.bf16.mxu0 0
        %4509 = vmatmul.mubr.bf16.gmra.mrb[0].mxu0 %v4421
        %v4510 = vpop.f32.mrb[0].mxu0
        %v4511 = vadd.f32 0.0, %v4510
        %v4512 = vpop.f32.mrb[0].mxu0
        %v4513 = vpop.f32.mrb[0].mxu0
        %v4514 = vadd.f32 0.0, %v4513
        %v4515 = vpop.f32.mrb[0].mxu0
        %4516 = vmatprep.mubr.bf16.mxu0 0
        %4517 = vmatmul.mubr.bf16.gmra.mrb[0].mxu0 %v4424
        %v4518 = vpop.f32.mrb[0].mxu0
        %v4519 = vadd.f32 0.0, %v4518
        %v4520 = vpop.f32.mrb[0].mxu0
        %v4521 = vpop.f32.mrb[0].mxu0
        %v4522 = vadd.f32 0.0, %v4521
        %v4523 = vpop.f32.mrb[0].mxu0
        %4524 = vmatprep.mubr.bf16.mxu0 0
        %4525 = vmatmul.mubr.bf16.gmra.mrb[0].mxu0 %v4427
        %v4526 = vpop.f32.mrb[0].mxu0
        %v4527 = vadd.f32 0.0, %v4526
        %v4528 = vpop.f32.mrb[0].mxu0
        %v4529 = vpop.f32.mrb[0].mxu0
        %v4530 = vadd.f32 0.0, %v4529
        %v4531 = vpop.f32.mrb[0].mxu0
        %4532 = vmatprep.mubr.bf16.mxu0 0
        %4533 = vmatmul.mubr.bf16.gmra.mrb[0].mxu0 %v4430
        %v4534 = vpop.f32.mrb[0].mxu0
        %v4535 = vadd.f32 0.0, %v4534
        %v4536 = vpop.f32.mrb[0].mxu0
        %v4537 = vpop.f32.mrb[0].mxu0
        %v4538 = vadd.f32 0.0, %v4537
        %v4539 = vpop.f32.mrb[0].mxu0
        %4540 = vmatprep.mubr.bf16.mxu0 0
        %4541 = vmatmul.mubr.bf16.gmra.mrb[0].mxu0 %v4433
        %v4542 = vpop.f32.mrb[0].mxu0
        %v4543 = vadd.f32 0.0, %v4542
        %v4544 = vpop.f32.mrb[0].mxu0
        %v4545 = vpop.f32.mrb[0].mxu0
        %v4546 = vadd.f32 0.0, %v4545
        %v4547 = vpop.f32.mrb[0].mxu0
        %4548 = vmatprep.mubr.bf16.mxu0 0
        %4549 = vmatmul.mubr.bf16.gmra.mrb[0].mxu0 %v4436
        %v4550 = vpop.f32.mrb[0].mxu0
        %v4551 = vadd.f32 0.0, %v4550
        %v4552 = vpop.f32.mrb[0].mxu0
        %v4553 = vpop.f32.mrb[0].mxu0
        %v4554 = vadd.f32 0.0, %v4553
        %v4555 = vpop.f32.mrb[0].mxu0
        %4556 = vmatprep.mubr.bf16.mxu0 0
        %4557 = vmatmul.mubr.bf16.gmra.mrb[0].mxu0 %v4439
        %v4558 = vpop.f32.mrb[0].mxu0
        %v4559 = vadd.f32 0.0, %v4558
        %v4560 = vpop.f32.mrb[0].mxu0
        %v4561 = vpop.f32.mrb[0].mxu0
        %v4562 = vadd.f32 0.0, %v4561
        %v4563 = vpop.f32.mrb[0].mxu0
        %4564 = vmatprep.mubr.bf16.mxu0 0
        %4565 = vmatmul.mubr.bf16.gmra.mrb[0].mxu0 %v4442
        %v4566 = vpop.f32.mrb[0].mxu0
        %v4567 = vadd.f32 0.0, %v4566
        %v4568 = vpop.f32.mrb[0].mxu0
        %v4569 = vpop.f32.mrb[0].mxu0
        %v4570 = vadd.f32 0.0, %v4569
        %v4571 = vpop.f32.mrb[0].mxu0
        %4572 = vmatprep.mubr.bf16.mxu0 0
        %4573 = vmatmul.mubr.bf16.gmra.mrb[0].mxu0 %v4445
        %v4574 = vpop.f32.mrb[0].mxu0
        %v4575 = vadd.f32 0.0, %v4574
        %v4576 = vpop.f32.mrb[0].mxu0
        %v4577 = vpop.f32.mrb[0].mxu0
        %v4578 = vadd.f32 0.0, %v4577
        %v4579 = vpop.f32.mrb[0].mxu0
        %4580 = vmatprep.mubr.bf16.mxu0 0
        %4581 = vmatmul.mubr.bf16.gmra.mrb[0].mxu0 %v4448
        %v4582 = vpop.f32.mrb[0].mxu0
        %v4583 = vadd.f32 0.0, %v4582
        %v4584 = vpop.f32.mrb[0].mxu0
        %v4585 = vpop.f32.mrb[0].mxu0
        %v4586 = vadd.f32 0.0, %v4585
        %v4587 = vpop.f32.mrb[0].mxu0
        %4588 = vmatprep.mubr.bf16.mxu0 0
        %4589 = vmatmul.mubr.bf16.gmra.mrb[0].mxu0 %v4451
        %v4590 = vpop.f32.mrb[0].mxu0
        %v4591 = vadd.f32 0.0, %v4590
        %v4592 = vpop.f32.mrb[0].mxu0
        %v4593 = vpop.f32.mrb[0].mxu0
        %v4594 = vadd.f32 0.0, %v4593
        %v4595 = vpop.f32.mrb[0].mxu0
        %4596 = vmatprep.mubr.bf16.mxu0 0
        %4597 = vmatmul.mubr.bf16.gmra.mrb[0].mxu0 %v4454
        %v4598 = vpop.f32.mrb[0].mxu0
        %v4599 = vadd.f32 0.0, %v4598
        %v4600 = vpop.f32.mrb[0].mxu0
        %v4601 = vpop.f32.mrb[0].mxu0
        %v4602 = vadd.f32 0.0, %v4601
        %v4603 = vpop.f32.mrb[0].mxu0
        %4604 = vmatprep.mubr.bf16.mxu0 0
        %4605 = vmatmul.mubr.bf16.gmra.mrb[0].mxu0 %v4457
        %v4606 = vpop.f32.mrb[0].mxu0
        %v4607 = vadd.f32 0.0, %v4606
        %v4608 = vpop.f32.mrb[0].mxu0
        %v4609 = vpop.f32.mrb[0].mxu0
        %v4610 = vadd.f32 0.0, %v4609
        %v4611 = vpop.f32.mrb[0].mxu0
        %4612 = vmatprep.mubr.bf16.mxu0 0
        %4613 = vmatmul.mubr.bf16.gmra.mrb[0].mxu0 %v4460
        %v4614 = vpop.f32.mrb[0].mxu0
        %v4615 = vadd.f32 0.0, %v4614
        %v4616 = vpop.f32.mrb[0].mxu0
        %v4617 = vpop.f32.mrb[0].mxu0
        %v4618 = vadd.f32 0.0, %v4617
        %v4619 = vpop.f32.mrb[0].mxu0
        %4620 = vmatprep.mubr.bf16.mxu0 0
        %4621 = vmatmul.mubr.bf16.gmra.mrb[0].mxu0 %v4463
        %v4622 = vpop.f32.mrb[0].mxu0
        %v4623 = vadd.f32 0.0, %v4622
        %v4624 = vpop.f32.mrb[0].mxu0
        %v4625 = vpop.f32.mrb[0].mxu0
        %v4626 = vadd.f32 0.0, %v4625
        %v4627 = vpop.f32.mrb[0].mxu0
        %4628 = vdwg.mxu0
        %v4629 = vadd.f32 %v4191, %v4503
        %v4630 = vadd.f32 %v4192, %v4506
        %v4631 = vadd.f32 %v4193, %v4511
        %v4632 = vadd.f32 %v4194, %v4514
        %v4633 = vadd.f32 %v4195, %v4519
        %v4634 = vadd.f32 %v4196, %v4522
        %v4635 = vadd.f32 %v4197, %v4527
        %v4636 = vadd.f32 %v4198, %v4530
        %v4637 = vadd.f32 %v4199, %v4535
        %v4638 = vadd.f32 %v4200, %v4538
        %v4639 = vadd.f32 %v4201, %v4543
        %v4640 = vadd.f32 %v4202, %v4546
        %v4641 = vadd.f32 %v4203, %v4551
        %v4642 = vadd.f32 %v4204, %v4554
        %v4643 = vadd.f32 %v4205, %v4559
        %v4644 = vadd.f32 %v4206, %v4562
        %v4645 = vadd.f32 %v4207, %v4567
        %v4646 = vadd.f32 %v4208, %v4570
        %v4647 = vadd.f32 %v4209, %v4575
        %v4648 = vadd.f32 %v4210, %v4578
        %v4649 = vadd.f32 %v4211, %v4583
        %v4650 = vadd.f32 %v4212, %v4586
        %v4651 = vadd.f32 %v4213, %v4591
        %v4652 = vadd.f32 %v4214, %v4594
        %v4653 = vadd.f32 %v4215, %v4599
        %v4654 = vadd.f32 %v4216, %v4602
        %v4655 = vadd.f32 %v4217, %v4607
        %v4656 = vadd.f32 %v4218, %v4610
        %v4657 = vadd.f32 %v4219, %v4615
        %v4658 = vadd.f32 %v4220, %v4618
        %v4659 = vadd.f32 %v4221, %v4623
        %v4660 = vadd.f32 %v4222, %v4626
        %v4661 = vld [vmem:[%s2] sm:$0x1]
        %v4663 = vlaneseq
        %v4664 = vshrl.u32 %v4663, 7
        %v4665 = vsub.s32 0, %v4664
        %v4666 = vrot.slane %v4661, %v4665
        %v4668 = vadd.f32 %v4629, %v4666
        %v4669 = vadd.f32 %v4630, %v4666
        %v4670 = vadd.f32 %v4631, %v4666
        %v4671 = vadd.f32 %v4632, %v4666
        %v4672 = vadd.f32 %v4633, %v4666
        %v4673 = vadd.f32 %v4634, %v4666
        %v4674 = vadd.f32 %v4635, %v4666
        %v4675 = vadd.f32 %v4636, %v4666
        %v4676 = vadd.f32 %v4637, %v4666
        %v4677 = vadd.f32 %v4638, %v4666
        %v4678 = vadd.f32 %v4639, %v4666
        %v4679 = vadd.f32 %v4640, %v4666
        %v4680 = vadd.f32 %v4641, %v4666
        %v4681 = vadd.f32 %v4642, %v4666
        %v4682 = vadd.f32 %v4643, %v4666
        %v4683 = vadd.f32 %v4644, %v4666
        %v4684 = vadd.f32 %v4645, %v4666
        %v4685 = vadd.f32 %v4646, %v4666
        %v4686 = vadd.f32 %v4647, %v4666
        %v4687 = vadd.f32 %v4648, %v4666
        %v4688 = vadd.f32 %v4649, %v4666
        %v4689 = vadd.f32 %v4650, %v4666
        %v4690 = vadd.f32 %v4651, %v4666
        %v4691 = vadd.f32 %v4652, %v4666
        %v4692 = vadd.f32 %v4653, %v4666
        %v4693 = vadd.f32 %v4654, %v4666
        %v4694 = vadd.f32 %v4655, %v4666
        %v4695 = vadd.f32 %v4656, %v4666
        %v4696 = vadd.f32 %v4657, %v4666
        %v4697 = vadd.f32 %v4658, %v4666
        %v4698 = vadd.f32 %v4659, %v4666
        %v4699 = vadd.f32 %v4660, %v4666
        %vm4700 = vcmp.ge.f32.partialorder %v4668, 0.0
        %vm4701 = vcmp.ge.f32.partialorder %v4669, 0.0
        %vm4702 = vcmp.ge.f32.partialorder %v4670, 0.0
        %vm4703 = vcmp.ge.f32.partialorder %v4671, 0.0
        %vm4704 = vcmp.ge.f32.partialorder %v4672, 0.0
        %vm4705 = vcmp.ge.f32.partialorder %v4673, 0.0
        %vm4706 = vcmp.ge.f32.partialorder %v4674, 0.0
        %vm4707 = vcmp.ge.f32.partialorder %v4675, 0.0
        %vm4708 = vcmp.ge.f32.partialorder %v4676, 0.0
        %vm4709 = vcmp.ge.f32.partialorder %v4677, 0.0
        %vm4710 = vcmp.ge.f32.partialorder %v4678, 0.0
        %vm4711 = vcmp.ge.f32.partialorder %v4679, 0.0
        %vm4712 = vcmp.ge.f32.partialorder %v4680, 0.0
        %vm4713 = vcmp.ge.f32.partialorder %v4681, 0.0
        %vm4714 = vcmp.ge.f32.partialorder %v4682, 0.0
        %vm4715 = vcmp.ge.f32.partialorder %v4683, 0.0
        %vm4716 = vcmp.ge.f32.partialorder %v4684, 0.0
        %vm4717 = vcmp.ge.f32.partialorder %v4685, 0.0
        %vm4718 = vcmp.ge.f32.partialorder %v4686, 0.0
        %vm4719 = vcmp.ge.f32.partialorder %v4687, 0.0
        %vm4720 = vcmp.ge.f32.partialorder %v4688, 0.0
        %vm4721 = vcmp.ge.f32.partialorder %v4689, 0.0
        %vm4722 = vcmp.ge.f32.partialorder %v4690, 0.0
        %vm4723 = vcmp.ge.f32.partialorder %v4691, 0.0
        %vm4724 = vcmp.ge.f32.partialorder %v4692, 0.0
        %vm4725 = vcmp.ge.f32.partialorder %v4693, 0.0
        %vm4726 = vcmp.ge.f32.partialorder %v4694, 0.0
        %vm4727 = vcmp.ge.f32.partialorder %v4695, 0.0
        %vm4728 = vcmp.ge.f32.partialorder %v4696, 0.0
        %vm4729 = vcmp.ge.f32.partialorder %v4697, 0.0
        %vm4730 = vcmp.ge.f32.partialorder %v4698, 0.0
        %vm4731 = vcmp.ge.f32.partialorder %v4699, 0.0
        %v4732 = vmul.f32 %v4668, 0.1
        %v4733 = vmul.f32 %v4669, 0.1
        %v4734 = vmul.f32 %v4670, 0.1
        %v4735 = vmul.f32 %v4671, 0.1
        %v4736 = vmul.f32 %v4672, 0.1
        %v4737 = vmul.f32 %v4673, 0.1
        %v4738 = vmul.f32 %v4674, 0.1
        %v4739 = vmul.f32 %v4675, 0.1
        %v4740 = vmul.f32 %v4676, 0.1
        %v4741 = vmul.f32 %v4677, 0.1
        %v4742 = vmul.f32 %v4678, 0.1
        %v4743 = vmul.f32 %v4679, 0.1
        %v4744 = vmul.f32 %v4680, 0.1
        %v4745 = vmul.f32 %v4681, 0.1
        %v4746 = vmul.f32 %v4682, 0.1
        %v4747 = vmul.f32 %v4683, 0.1
        %v4748 = vmul.f32 %v4684, 0.1
        %v4749 = vmul.f32 %v4685, 0.1
        %v4750 = vmul.f32 %v4686, 0.1
        %v4751 = vmul.f32 %v4687, 0.1
        %v4752 = vmul.f32 %v4688, 0.1
        %v4753 = vmul.f32 %v4689, 0.1
        %v4754 = vmul.f32 %v4690, 0.1
        %v4755 = vmul.f32 %v4691, 0.1
        %v4756 = vmul.f32 %v4692, 0.1
        %v4757 = vmul.f32 %v4693, 0.1
        %v4758 = vmul.f32 %v4694, 0.1
        %v4759 = vmul.f32 %v4695, 0.1
        %v4760 = vmul.f32 %v4696, 0.1
        %v4761 = vmul.f32 %v4697, 0.1
        %v4762 = vmul.f32 %v4698, 0.1
        %v4763 = vmul.f32 %v4699, 0.1
        %v4764 = vsel %vm4700, %v4668, %v4732
        %v4765 = vsel %vm4701, %v4669, %v4733
        %v4766 = vsel %vm4702, %v4670, %v4734
        %v4767 = vsel %vm4703, %v4671, %v4735
        %v4768 = vsel %vm4704, %v4672, %v4736
        %v4769 = vsel %vm4705, %v4673, %v4737
        %v4770 = vsel %vm4706, %v4674, %v4738
        %v4771 = vsel %vm4707, %v4675, %v4739
        %v4772 = vsel %vm4708, %v4676, %v4740
        %v4773 = vsel %vm4709, %v4677, %v4741
        %v4774 = vsel %vm4710, %v4678, %v4742
        %v4775 = vsel %vm4711, %v4679, %v4743
        %v4776 = vsel %vm4712, %v4680, %v4744
        %v4777 = vsel %vm4713, %v4681, %v4745
        %v4778 = vsel %vm4714, %v4682, %v4746
        %v4779 = vsel %vm4715, %v4683, %v4747
        %v4780 = vsel %vm4716, %v4684, %v4748
        %v4781 = vsel %vm4717, %v4685, %v4749
        %v4782 = vsel %vm4718, %v4686, %v4750
        %v4783 = vsel %vm4719, %v4687, %v4751
        %v4784 = vsel %vm4720, %v4688, %v4752
        %v4785 = vsel %vm4721, %v4689, %v4753
        %v4786 = vsel %vm4722, %v4690, %v4754
        %v4787 = vsel %vm4723, %v4691, %v4755
        %v4788 = vsel %vm4724, %v4692, %v4756
        %v4789 = vsel %vm4725, %v4693, %v4757
        %v4790 = vsel %vm4726, %v4694, %v4758
        %v4791 = vsel %vm4727, %v4695, %v4759
        %v4792 = vsel %vm4728, %v4696, %v4760
        %v4793 = vsel %vm4729, %v4697, %v4761
        %v4794 = vsel %vm4730, %v4698, %v4762
        %v4795 = vsel %vm4731, %v4699, %v4763
        %4796 = vst [vmem:[%s187] sm:$0xff] %v4764
        %4797 = vst [vmem:[%s187 + $0x8] sm:$0xff] %v4765
        %4798 = vst [vmem:[%s187 + $0x10] sm:$0xff] %v4766
        %4799 = vst [vmem:[%s187 + $0x18] sm:$0xff] %v4767
        %4800 = vst [vmem:[%s187 + $0x20] sm:$0xff] %v4768
        %4801 = vst [vmem:[%s187 + $0x28] sm:$0xff] %v4769
        %4802 = vst [vmem:[%s187 + $0x30] sm:$0xff] %v4770
        %4803 = vst [vmem:[%s187 + $0x38] sm:$0xff] %v4771
        %4804 = vst [vmem:[%s187 + $0x40] sm:$0xff] %v4772
        %4805 = vst [vmem:[%s187 + $0x48] sm:$0xff] %v4773
        %4806 = vst [vmem:[%s187 + $0x50] sm:$0xff] %v4774
        %4807 = vst [vmem:[%s187 + $0x58] sm:$0xff] %v4775
        %4808 = vst [vmem:[%s187 + $0x60] sm:$0xff] %v4776
        %4809 = vst [vmem:[%s187 + $0x68] sm:$0xff] %v4777
        %4810 = vst [vmem:[%s187 + $0x70] sm:$0xff] %v4778
        %4811 = vst [vmem:[%s187 + $0x78] sm:$0xff] %v4779
        %4812 = vst [vmem:[%s187 + $0x80] sm:$0xff] %v4780
        %4813 = vst [vmem:[%s187 + $0x88] sm:$0xff] %v4781
        %4814 = vst [vmem:[%s187 + $0x90] sm:$0xff] %v4782
        %4815 = vst [vmem:[%s187 + $0x98] sm:$0xff] %v4783
        %4816 = vst [vmem:[%s187 + $0xa0] sm:$0xff] %v4784
        %4817 = vst [vmem:[%s187 + $0xa8] sm:$0xff] %v4785
        %4818 = vst [vmem:[%s187 + $0xb0] sm:$0xff] %v4786
        %4819 = vst [vmem:[%s187 + $0xb8] sm:$0xff] %v4787
        %4820 = vst [vmem:[%s187 + $0xc0] sm:$0xff] %v4788
        %4821 = vst [vmem:[%s187 + $0xc8] sm:$0xff] %v4789
        %4822 = vst [vmem:[%s187 + $0xd0] sm:$0xff] %v4790
        %4823 = vst [vmem:[%s187 + $0xd8] sm:$0xff] %v4791
        %4824 = vst [vmem:[%s187 + $0xe0] sm:$0xff] %v4792
        %4825 = vst [vmem:[%s187 + $0xe8] sm:$0xff] %v4793
        %4826 = vst [vmem:[%s187 + $0xf0] sm:$0xff] %v4794
        %4827 = vst [vmem:[%s187 + $0xf8] sm:$0xff] %v4795
        %s4828 = sand.u32 %s109, 1
        %s4829 = scalar_lea.sflag [#allocation3], %s4828
        %s4830 = sand.u32 %s109, 1
        %s4831 = smul.addr %s4830, 256
        %s4832 = scalar_lea.vmem [#allocation2], %s4831
        // Predicated region
        $region33: #{tpu_custom_call.1} parent=31 // pred_check
          %p4833 = pneg %p119
        $region34: #{tpu_custom_call.1} parent=31 // pred_check_branch
          %4835 = sbr.rel (%p4833) target = $region36
        $region35: #{tpu_custom_call.1} parent=31 // pred_region
          %s4837 = ssub.s32 4096, 4096
          %4838 = vsyncadd %s4829, %s4837
          %s4839 = smul.addr %s22, 32
          %s4840 = smul.addr %s21, 32
          %s4841 = sadd.s32 %s4839, %s4840
          %s4842 = smul.addr %s4841, 128
          %s4843 = scalar_lea.hbm %s3, %s4842
          %s4844 = sshll.u32 %s4832, 4
          %s4845 = int_to_ptr.vmem [resolvable:$true] %s4844
          %4850 = dma.vmem_to_hbm [thread:$0]  %s4845, 4096, %s4843, %s4829, 128, 128, 8
        $region36: #{tpu_custom_call.1} parent=31 // pred_fallthru
          _
      $region32: #{tpu_custom_call.1} parent=5 // pred_fallthru
        _
      %p4851 = scmp.le.s32.totalorder 2, %s12
      // Predicated region
      $region37: #{tpu_custom_call.1} parent=5 // pred_check
        %p4852 = pneg %p4851
      $region38: #{tpu_custom_call.1} parent=5 // pred_check_branch
        %4854 = sbr.rel (%p4852) target = $region40
      $region39: #{tpu_custom_call.1} parent=5 // pred_region
        %s4855 = ssub.s32 %s12, 2
        // Predicated region
        $region41: #{tpu_custom_call.1} parent=39 // pred_check
          %p4856 = pneg %p125
        $region42: #{tpu_custom_call.1} parent=39 // pred_check_branch
          %4858 = sbr.rel (%p4856) target = $region44
        $region43: #{tpu_custom_call.1} parent=39 // pred_region
          %s4859 = sand.u32 %s110, 1
          %s4860 = scalar_lea.sflag [#allocation3], %s4859
          %s4861 = sand.u32 %s110, 1
          %s4862 = smul.addr %s4861, 256
          %s4863 = scalar_lea.vmem [#allocation2], %s4862
          %4864 = dma.done %s4860, 4096
        $region44: #{tpu_custom_call.1} parent=39 // pred_fallthru
          _
      $region40: #{tpu_custom_call.1} parent=5 // pred_fallthru
        _
    $region6: #{tpu_custom_call.1} parent=1 // loop_footer
      %s16 = sadd.s32 1, %s12
    $region7: #{tpu_custom_call.1} parent=1 // loop_footer_branch
      %11 = sbr.rel target = $region3
    $region8: #{tpu_custom_call.1} parent=1 // loop_exit
      _
    %4865 = vsyncpa [#allocation3], 1
    %s4866 = scalar_lea.sflag [#allocation3], 1
    %4867 = vsyncpa %s4866, 1

</llo_original>
